<compile_context>
chip_gen: v7x
topology: tpu7x:2x2x1
jax: 0.10.0
libtpu: 0.0.40
codegen_flags: <defaults>
</compile_context>

<pallas_src>
import jax
import jax.numpy as jnp
import numpy as np
from jax import lax
from jax.experimental import pallas as pl
from jax.experimental.pallas import tpu as pltpu


# ----------------------------------------------------------------------------
# Fused Pallas kernel: conv1+ReLU -> conv2+ReLU -> conv3+ReLU -> Linear
# ----------------------------------------------------------------------------
def _critic_kernel(x_ref, w1_ref, b1_ref, w2_ref, b2_ref, w3_ref, b3_ref,
                   w4_ref, b4_ref, out_ref, a1_ref, a2_ref):
    f32 = jnp.float32
    bf16 = jnp.bfloat16

    # -------- conv1 + ReLU: quadrant-ordered, K=256, 8 chunks of M=128 --------
    # a1 row layout: q*256 + i*16 + j  <->  conv1 output (oh, ow) = (2i+q//2, 2j+q%2)
    w1 = w1_ref[...]                                        # (256, 128) bf16
    b1 = b1_ref[...]                                        # (1, 128)   f32
    for c in range(8):
        lhs = x_ref[pl.ds(c * 128, 128), :]                 # (128, 256) bf16
        acc = jnp.dot(lhs, w1, preferred_element_type=f32)  # (128, 128) f32
        a1_ref[pl.ds(c * 128, 128), :] = jnp.maximum(acc + b1, 0.0)

    # -------- conv2 + ReLU: 16 shift-and-accumulate taps, each M=224 ----------
    # Tap (dh, dw) lives entirely in quadrant q = 2*(dh%2) + (dw%2); the stride-2
    # access collapses to one contiguous slice of the flattened quadrant.
    acc2 = jnp.zeros((224, 128), f32)
    for dh in range(4):
        for dw in range(4):
            q = 2 * (dh % 2) + (dw % 2)
            base = q * 256 + (dh // 2) * 16 + (dw // 2)
            lhs = a1_ref[pl.ds(base, 224), :].astype(bf16)  # (224, 128)
            acc2 = acc2 + jnp.dot(lhs, w2_ref[dh * 4 + dw],
                                  preferred_element_type=f32)
    a2_ref[pl.ds(0, 224), :] = jnp.maximum(acc2 + b2_ref[...], 0.0)
    # Zero pad rows so conv3's shifted slices never read uninitialized VMEM.
    a2_ref[pl.ds(224, 16), :] = jnp.zeros((16, 128), f32)

    # -------- conv3 + ReLU fused with Linear(9216 -> 1): 9 taps of M=192 ------
    acc3 = jnp.zeros((192, 128), f32)
    for dh in range(3):
        for dw in range(3):
            lhs = a2_ref[pl.ds(dh * 16 + dw, 192), :].astype(bf16)
            acc3 = acc3 + jnp.dot(lhs, w3_ref[dh * 3 + dw],
                                  preferred_element_type=f32)
    h3 = jnp.maximum(acc3 + b3_ref[...], 0.0)               # (192, 128) f32
    # Final Linear: elementwise multiply + full reduce against the pre-permuted
    # w4 (zero at padded columns/channels, so garbage positions contribute 0).
    partial = jnp.sum(h3 * w4_ref[...], axis=0, keepdims=True)   # (1, 128)
    out_ref[...] = jnp.sum(partial, axis=1, keepdims=True) + b4_ref[...]


# ----------------------------------------------------------------------------
# Trace-time (XLA) preparation: reshape / transpose / pad / concat of the input
# image and the tiny weight tensors only (no compute is moved out of the kernel).
# ----------------------------------------------------------------------------
def _prepare_inputs(x_chw, params):
    f32, bf16 = jnp.float32, jnp.bfloat16
    x = jnp.asarray(x_chw, f32)                              # (4, 128, 128)

    # Space-to-depth: xb[i, j, c*16 + r*4 + s] = x[c, 4i + r, 4j + s]
    xb = x.reshape(4, 32, 4, 32, 4).transpose(1, 3, 0, 2, 4).reshape(32, 32, 64)
    xbp = jnp.pad(xb, ((0, 1), (0, 1), (0, 0)))              # (33, 33, 64)

    # conv1 LHS: all four 2x2 block taps concatenated along K (=256); output
    # positions grouped by (row-parity, col-parity) quadrant and flattened to
    # M = 4*16*16 = 1024 so conv2's stride-2 taps become contiguous slices.
    def quad(rp, cp):
        parts = []
        for bdh in (0, 1):
            for bdw in (0, 1):
                parts.append(xbp[rp + bdh: rp + bdh + 32: 2,
                                 cp + bdw: cp + bdw + 32: 2, :])   # (16,16,64)
        return jnp.concatenate(parts, axis=-1)                     # (16,16,256)

    xcat = jnp.stack([quad(0, 0), quad(0, 1), quad(1, 0), quad(1, 1)], axis=0)
    xcat = xcat.reshape(1024, 256).astype(bf16)

    # conv1 weights: w1cat[(bdh*2+bdw)*64 + (c*16+r*4+s), o] = w1[o,c,4bdh+r,4bdw+s]
    w1 = params["w1"].astype(f32)                            # (32, 4, 8, 8)
    w1cat = w1.reshape(32, 4, 2, 4, 2, 4).transpose(2, 4, 1, 3, 5, 0).reshape(256, 32)
    w1cat = jnp.pad(w1cat, ((0, 0), (0, 96))).astype(bf16)   # N -> 128 (lane-dense)
    b1 = jnp.pad(params["b1"].astype(f32).reshape(1, 32), ((0, 0), (0, 96)))

    # conv2 weights: w2m[dh*4+dw, cin, cout] = w2[cout, cin, dh, dw]; K,N -> 128
    w2 = params["w2"].astype(f32)                            # (64, 32, 4, 4)
    w2m = w2.transpose(2, 3, 1, 0).reshape(16, 32, 64)
    w2m = jnp.pad(w2m, ((0, 0), (0, 96), (0, 64))).astype(bf16)
    b2 = jnp.pad(params["b2"].astype(f32).reshape(1, 64), ((0, 0), (0, 64)))

    # conv3 weights: w3m[dh*3+dw, cin, cout] = w3[cout, cin, dh, dw]; K,N -> 128
    w3 = params["w3"].astype(f32)                            # (64, 64, 3, 3)
    w3m = w3.transpose(2, 3, 1, 0).reshape(9, 64, 64)
    w3m = jnp.pad(w3m, ((0, 0), (0, 64), (0, 64))).astype(bf16)
    b3 = jnp.pad(params["b3"].astype(f32).reshape(1, 64), ((0, 0), (0, 64)))

    # Final Linear, permuted to HWC (torch Flatten(start_dim=0) on CHW gives
    # flat index c*144 + h*12 + w) and padded to the kernel's (12,16,128) flat
    # conv3 layout; padded positions get zero weight.
    w4 = params["w4"].astype(f32).reshape(64, 12, 12).transpose(1, 2, 0)
    w4p = jnp.pad(w4, ((0, 0), (0, 4), (0, 64))).reshape(192, 128)
    b4 = params["b4"].astype(f32).reshape(1, 1)

    return xcat, w1cat, b1, w2m, b2, w3m, b3, w4p, b4


def critic_forward(x_chw, params):
    args = _prepare_inputs(x_chw, params)
    out = pl.pallas_call(
        _critic_kernel,
        out_shape=jax.ShapeDtypeStruct((1, 1), jnp.float32),
        scratch_shapes=[
            pltpu.VMEM((1024, 128), jnp.float32),   # conv1 out (quadrant-ordered)
            pltpu.VMEM((240, 128), jnp.float32),    # conv2 out (+16 zero pad rows)
        ],
    )(*args)
    # TODO(synk): a batched variant could add a leading "parallel" grid axis to
    # use both v7x TensorCores; the module's forward is unbatched, so omitted.
    return out.reshape(1)                           # matches torch: shape (1,)


# ----------------------------------------------------------------------------
# Pure-XLA reference (high precision) for correctness checking
# ----------------------------------------------------------------------------
def critic_forward_ref(x_chw, params):
    x = jnp.asarray(x_chw, jnp.float32)[None]       # (1, 4, 128, 128)

    def conv(h, w, b, s):
        y = lax.conv_general_dilated(
            h, w, (s, s), "VALID",
            dimension_numbers=("NCHW", "OIHW", "NCHW"),
            precision=lax.Precision.HIGHEST)
        return jax.nn.relu(y + b[None, :, None, None])

    h = conv(x, params["w1"], params["b1"], 4)      # (1, 32, 31, 31)
    h = conv(h, params["w2"], params["b2"], 2)      # (1, 64, 14, 14)
    h = conv(h, params["w3"], params["b3"], 1)      # (1, 64, 12, 12)
    flat = h.reshape(-1)                            # CHW flatten -> (9216,)
    return jnp.dot(params["w4"], flat,
                   precision=lax.Precision.HIGHEST) + params["b4"]


# ----------------------------------------------------------------------------
# Deterministic parameter init (PyTorch-default-style uniform(-1/sqrt(fan_in)))
# ----------------------------------------------------------------------------
def init_params(key):
    def layer(key, w_shape, fan_in):
        kw_, kb_ = jax.random.split(key)
        bound = 1.0 / np.sqrt(fan_in)
        w = jax.random.uniform(kw_, w_shape, jnp.float32, -bound, bound)
        b = jax.random.uniform(kb_, (w_shape[0],), jnp.float32, -bound, bound)
        return w, b

    k1, k2, k3, k4 = jax.random.split(key, 4)
    w1, b1 = layer(k1, (32, 4, 8, 8), 4 * 8 * 8)
    w2, b2 = layer(k2, (64, 32, 4, 4), 32 * 4 * 4)
    w3, b3 = layer(k3, (64, 64, 3, 3), 64 * 3 * 3)
    w4, b4 = layer(k4, (1, 64 * 12 * 12), 64 * 12 * 12)
    return dict(w1=w1, b1=b1, w2=w2, b2=b2, w3=w3, b3=b3, w4=w4, b4=b4)


if __name__ == "__main__":
    key = jax.random.PRNGKey(0)
    k_params, k_x = jax.random.split(key)
    params = init_params(k_params)

    # Input implied by the forward pass: unbatched (4, 128, 128) image
    # (128 -> 31 -> 14 -> 12, so Flatten(start_dim=0) gives exactly 9216 feats).
    x = jax.random.normal(k_x, (4, 128, 128), jnp.float32)

    out = jax.block_until_ready(jax.jit(critic_forward)(x, params))
    ref = jax.block_until_ready(critic_forward_ref(x, params))

    assert out.shape == (1,), out.shape
    assert np.allclose(np.asarray(out), np.asarray(ref), rtol=2e-2, atol=2e-2), (out, ref)

    print("KERNEL_OK")
</pallas_src>

<mosaic_0001>
module attributes {stable_mosaic.version = 11 : i64} {
  func.func @_critic_kernel(%arg0: memref<1024x256xbf16, #tpu.memory_space<vmem>>, %arg1: memref<256x128xbf16, #tpu.memory_space<vmem>>, %arg2: memref<1x128xf32, #tpu.memory_space<vmem>>, %arg3: memref<16x128x128xbf16, #tpu.memory_space<vmem>>, %arg4: memref<1x128xf32, #tpu.memory_space<vmem>>, %arg5: memref<9x128x128xbf16, #tpu.memory_space<vmem>>, %arg6: memref<1x128xf32, #tpu.memory_space<vmem>>, %arg7: memref<192x128xf32, #tpu.memory_space<vmem>>, %arg8: memref<1x1xf32, #tpu.memory_space<vmem>>, %arg9: memref<1x1xf32, #tpu.memory_space<vmem>>, %arg10: memref<1024x128xf32, #tpu.memory_space<vmem>>, %arg11: memref<240x128xf32, #tpu.memory_space<vmem>>) attributes {dimension_semantics = [], scalar_prefetch = 0 : i64, scratch_operands = 2 : i64, tpu.core_type = #tpu.core_type<tc>} {
    %c0 = arith.constant 0 : index
    %c0_0 = arith.constant 0 : index
    %0 = vector.load %arg1[%c0, %c0_0] : memref<256x128xbf16, #tpu.memory_space<vmem>>, vector<256x128xbf16>
    %c0_1 = arith.constant 0 : index
    %c0_2 = arith.constant 0 : index
    %1 = vector.load %arg2[%c0_1, %c0_2] : memref<1x128xf32, #tpu.memory_space<vmem>>, vector<1x128xf32>
    %c0_3 = arith.constant 0 : index
    %c0_4 = arith.constant 0 : index
    %2 = vector.load %arg0[%c0_3, %c0_4] : memref<1024x256xbf16, #tpu.memory_space<vmem>>, vector<128x256xbf16>
    %cst = arith.constant dense<0.000000e+00> : vector<128x128xf32>
    %3 = tpu.matmul %2, %0, %cst {dimension_numbers = #tpu.dot_dimension_numbers<[1], [0], [0], [1], [0, 0, 1, 1], [], []>} : vector<128x256xbf16>, vector<256x128xbf16>, vector<128x128xf32> -> vector<128x128xf32>
    %4 = vector.broadcast %1 : vector<1x128xf32> to vector<128x128xf32>
    %5 = arith.addf %3, %4 : vector<128x128xf32>
    %cst_5 = arith.constant 0.000000e+00 : f32
    %6 = vector.broadcast %cst_5 : f32 to vector<128x128xf32>
    %7 = arith.maximumf %5, %6 : vector<128x128xf32>
    %c0_6 = arith.constant 0 : index
    %c0_7 = arith.constant 0 : index
    %8 = vector.load %arg10[%c0_6, %c0_7] : memref<1024x128xf32, #tpu.memory_space<vmem>>, vector<128x128xf32>
    tpu.vector_store %arg10[%c0_6, %c0_7], %7 {strides = array<i32>} : memref<1024x128xf32, #tpu.memory_space<vmem>>, vector<128x128xf32>,
    %c128 = arith.constant 128 : index
    %c0_8 = arith.constant 0 : index
    %9 = vector.load %arg0[%c128, %c0_8] : memref<1024x256xbf16, #tpu.memory_space<vmem>>, vector<128x256xbf16>
    %cst_9 = arith.constant dense<0.000000e+00> : vector<128x128xf32>
    %10 = tpu.matmul %9, %0, %cst_9 {dimension_numbers = #tpu.dot_dimension_numbers<[1], [0], [0], [1], [0, 0, 1, 1], [], []>} : vector<128x256xbf16>, vector<256x128xbf16>, vector<128x128xf32> -> vector<128x128xf32>
    %11 = vector.broadcast %1 : vector<1x128xf32> to vector<128x128xf32>
    %12 = arith.addf %10, %11 : vector<128x128xf32>
    %cst_10 = arith.constant 0.000000e+00 : f32
    %13 = vector.broadcast %cst_10 : f32 to vector<128x128xf32>
    %14 = arith.maximumf %12, %13 : vector<128x128xf32>
    %c128_11 = arith.constant 128 : index
    %c0_12 = arith.constant 0 : index
    %15 = vector.load %arg10[%c128_11, %c0_12] : memref<1024x128xf32, #tpu.memory_space<vmem>>, vector<128x128xf32>
    tpu.vector_store %arg10[%c128_11, %c0_12], %14 {strides = array<i32>} : memref<1024x128xf32, #tpu.memory_space<vmem>>, vector<128x128xf32>,
    %c256 = arith.constant 256 : index
    %c0_13 = arith.constant 0 : index
    %16 = vector.load %arg0[%c256, %c0_13] : memref<1024x256xbf16, #tpu.memory_space<vmem>>, vector<128x256xbf16>
    %cst_14 = arith.constant dense<0.000000e+00> : vector<128x128xf32>
    %17 = tpu.matmul %16, %0, %cst_14 {dimension_numbers = #tpu.dot_dimension_numbers<[1], [0], [0], [1], [0, 0, 1, 1], [], []>} : vector<128x256xbf16>, vector<256x128xbf16>, vector<128x128xf32> -> vector<128x128xf32>
    %18 = vector.broadcast %1 : vector<1x128xf32> to vector<128x128xf32>
    %19 = arith.addf %17, %18 : vector<128x128xf32>
    %cst_15 = arith.constant 0.000000e+00 : f32
    %20 = vector.broadcast %cst_15 : f32 to vector<128x128xf32>
    %21 = arith.maximumf %19, %20 : vector<128x128xf32>
    %c256_16 = arith.constant 256 : index
    %c0_17 = arith.constant 0 : index
    %22 = vector.load %arg10[%c256_16, %c0_17] : memref<1024x128xf32, #tpu.memory_space<vmem>>, vector<128x128xf32>
    tpu.vector_store %arg10[%c256_16, %c0_17], %21 {strides = array<i32>} : memref<1024x128xf32, #tpu.memory_space<vmem>>, vector<128x128xf32>,
    %c384 = arith.constant 384 : index
    %c0_18 = arith.constant 0 : index
    %23 = vector.load %arg0[%c384, %c0_18] : memref<1024x256xbf16, #tpu.memory_space<vmem>>, vector<128x256xbf16>
    %cst_19 = arith.constant dense<0.000000e+00> : vector<128x128xf32>
    %24 = tpu.matmul %23, %0, %cst_19 {dimension_numbers = #tpu.dot_dimension_numbers<[1], [0], [0], [1], [0, 0, 1, 1], [], []>} : vector<128x256xbf16>, vector<256x128xbf16>, vector<128x128xf32> -> vector<128x128xf32>
    %25 = vector.broadcast %1 : vector<1x128xf32> to vector<128x128xf32>
    %26 = arith.addf %24, %25 : vector<128x128xf32>
    %cst_20 = arith.constant 0.000000e+00 : f32
    %27 = vector.broadcast %cst_20 : f32 to vector<128x128xf32>
    %28 = arith.maximumf %26, %27 : vector<128x128xf32>
    %c384_21 = arith.constant 384 : index
    %c0_22 = arith.constant 0 : index
    %29 = vector.load %arg10[%c384_21, %c0_22] : memref<1024x128xf32, #tpu.memory_space<vmem>>, vector<128x128xf32>
    tpu.vector_store %arg10[%c384_21, %c0_22], %28 {strides = array<i32>} : memref<1024x128xf32, #tpu.memory_space<vmem>>, vector<128x128xf32>,
    %c512 = arith.constant 512 : index
    %c0_23 = arith.constant 0 : index
    %30 = vector.load %arg0[%c512, %c0_23] : memref<1024x256xbf16, #tpu.memory_space<vmem>>, vector<128x256xbf16>
    %cst_24 = arith.constant dense<0.000000e+00> : vector<128x128xf32>
    %31 = tpu.matmul %30, %0, %cst_24 {dimension_numbers = #tpu.dot_dimension_numbers<[1], [0], [0], [1], [0, 0, 1, 1], [], []>} : vector<128x256xbf16>, vector<256x128xbf16>, vector<128x128xf32> -> vector<128x128xf32>
    %32 = vector.broadcast %1 : vector<1x128xf32> to vector<128x128xf32>
    %33 = arith.addf %31, %32 : vector<128x128xf32>
    %cst_25 = arith.constant 0.000000e+00 : f32
    %34 = vector.broadcast %cst_25 : f32 to vector<128x128xf32>
    %35 = arith.maximumf %33, %34 : vector<128x128xf32>
    %c512_26 = arith.constant 512 : index
    %c0_27 = arith.constant 0 : index
    %36 = vector.load %arg10[%c512_26, %c0_27] : memref<1024x128xf32, #tpu.memory_space<vmem>>, vector<128x128xf32>
    tpu.vector_store %arg10[%c512_26, %c0_27], %35 {strides = array<i32>} : memref<1024x128xf32, #tpu.memory_space<vmem>>, vector<128x128xf32>,
    %c640 = arith.constant 640 : index
    %c0_28 = arith.constant 0 : index
    %37 = vector.load %arg0[%c640, %c0_28] : memref<1024x256xbf16, #tpu.memory_space<vmem>>, vector<128x256xbf16>
    %cst_29 = arith.constant dense<0.000000e+00> : vector<128x128xf32>
    %38 = tpu.matmul %37, %0, %cst_29 {dimension_numbers = #tpu.dot_dimension_numbers<[1], [0], [0], [1], [0, 0, 1, 1], [], []>} : vector<128x256xbf16>, vector<256x128xbf16>, vector<128x128xf32> -> vector<128x128xf32>
    %39 = vector.broadcast %1 : vector<1x128xf32> to vector<128x128xf32>
    %40 = arith.addf %38, %39 : vector<128x128xf32>
    %cst_30 = arith.constant 0.000000e+00 : f32
    %41 = vector.broadcast %cst_30 : f32 to vector<128x128xf32>
    %42 = arith.maximumf %40, %41 : vector<128x128xf32>
    %c640_31 = arith.constant 640 : index
    %c0_32 = arith.constant 0 : index
    %43 = vector.load %arg10[%c640_31, %c0_32] : memref<1024x128xf32, #tpu.memory_space<vmem>>, vector<128x128xf32>
    tpu.vector_store %arg10[%c640_31, %c0_32], %42 {strides = array<i32>} : memref<1024x128xf32, #tpu.memory_space<vmem>>, vector<128x128xf32>,
    %c768 = arith.constant 768 : index
    %c0_33 = arith.constant 0 : index
    %44 = vector.load %arg0[%c768, %c0_33] : memref<1024x256xbf16, #tpu.memory_space<vmem>>, vector<128x256xbf16>
    %cst_34 = arith.constant dense<0.000000e+00> : vector<128x128xf32>
    %45 = tpu.matmul %44, %0, %cst_34 {dimension_numbers = #tpu.dot_dimension_numbers<[1], [0], [0], [1], [0, 0, 1, 1], [], []>} : vector<128x256xbf16>, vector<256x128xbf16>, vector<128x128xf32> -> vector<128x128xf32>
    %46 = vector.broadcast %1 : vector<1x128xf32> to vector<128x128xf32>
    %47 = arith.addf %45, %46 : vector<128x128xf32>
    %cst_35 = arith.constant 0.000000e+00 : f32
    %48 = vector.broadcast %cst_35 : f32 to vector<128x128xf32>
    %49 = arith.maximumf %47, %48 : vector<128x128xf32>
    %c768_36 = arith.constant 768 : index
    %c0_37 = arith.constant 0 : index
    %50 = vector.load %arg10[%c768_36, %c0_37] : memref<1024x128xf32, #tpu.memory_space<vmem>>, vector<128x128xf32>
    tpu.vector_store %arg10[%c768_36, %c0_37], %49 {strides = array<i32>} : memref<1024x128xf32, #tpu.memory_space<vmem>>, vector<128x128xf32>,
    %c896 = arith.constant 896 : index
    %c0_38 = arith.constant 0 : index
    %51 = vector.load %arg0[%c896, %c0_38] : memref<1024x256xbf16, #tpu.memory_space<vmem>>, vector<128x256xbf16>
    %cst_39 = arith.constant dense<0.000000e+00> : vector<128x128xf32>
    %52 = tpu.matmul %51, %0, %cst_39 {dimension_numbers = #tpu.dot_dimension_numbers<[1], [0], [0], [1], [0, 0, 1, 1], [], []>} : vector<128x256xbf16>, vector<256x128xbf16>, vector<128x128xf32> -> vector<128x128xf32>
    %53 = vector.broadcast %1 : vector<1x128xf32> to vector<128x128xf32>
    %54 = arith.addf %52, %53 : vector<128x128xf32>
    %cst_40 = arith.constant 0.000000e+00 : f32
    %55 = vector.broadcast %cst_40 : f32 to vector<128x128xf32>
    %56 = arith.maximumf %54, %55 : vector<128x128xf32>
    %c896_41 = arith.constant 896 : index
    %c0_42 = arith.constant 0 : index
    %57 = vector.load %arg10[%c896_41, %c0_42] : memref<1024x128xf32, #tpu.memory_space<vmem>>, vector<128x128xf32>
    tpu.vector_store %arg10[%c896_41, %c0_42], %56 {strides = array<i32>} : memref<1024x128xf32, #tpu.memory_space<vmem>>, vector<128x128xf32>,
    %cst_43 = arith.constant 0.000000e+00 : f32
    %58 = vector.broadcast %cst_43 : f32 to vector<224x128xf32>
    %c0_44 = arith.constant 0 : index
    %c0_45 = arith.constant 0 : index
    %59 = vector.load %arg10[%c0_44, %c0_45] : memref<1024x128xf32, #tpu.memory_space<vmem>>, vector<224x128xf32>
    %60 = arith.truncf %59 : vector<224x128xf32> to vector<224x128xbf16>
    %c0_46 = arith.constant 0 : index
    %c0_47 = arith.constant 0 : index
    %c0_48 = arith.constant 0 : index
    %61 = vector.load %arg3[%c0_46, %c0_47, %c0_48] : memref<16x128x128xbf16, #tpu.memory_space<vmem>>, vector<1x128x128xbf16>
    %62 = vector.shape_cast %61 : vector<1x128x128xbf16> to vector<128x128xbf16>
    %cst_49 = arith.constant dense<0.000000e+00> : vector<224x128xf32>
    %63 = tpu.matmul %60, %62, %cst_49 {dimension_numbers = #tpu.dot_dimension_numbers<[1], [0], [0], [1], [0, 0, 1, 1], [], []>} : vector<224x128xbf16>, vector<128x128xbf16>, vector<224x128xf32> -> vector<224x128xf32>
    %64 = arith.addf %58, %63 : vector<224x128xf32>
    %c256_50 = arith.constant 256 : index
    %c0_51 = arith.constant 0 : index
    %65 = vector.load %arg10[%c256_50, %c0_51] : memref<1024x128xf32, #tpu.memory_space<vmem>>, vector<224x128xf32>
    %66 = arith.truncf %65 : vector<224x128xf32> to vector<224x128xbf16>
    %c1 = arith.constant 1 : index
    %c0_52 = arith.constant 0 : index
    %c0_53 = arith.constant 0 : index
    %67 = vector.load %arg3[%c1, %c0_52, %c0_53] : memref<16x128x128xbf16, #tpu.memory_space<vmem>>, vector<1x128x128xbf16>
    %68 = vector.shape_cast %67 : vector<1x128x128xbf16> to vector<128x128xbf16>
    %cst_54 = arith.constant dense<0.000000e+00> : vector<224x128xf32>
    %69 = tpu.matmul %66, %68, %cst_54 {dimension_numbers = #tpu.dot_dimension_numbers<[1], [0], [0], [1], [0, 0, 1, 1], [], []>} : vector<224x128xbf16>, vector<128x128xbf16>, vector<224x128xf32> -> vector<224x128xf32>
    %70 = arith.addf %64, %69 : vector<224x128xf32>
    %c1_55 = arith.constant 1 : index
    %c0_56 = arith.constant 0 : index
    %71 = vector.load %arg10[%c1_55, %c0_56] : memref<1024x128xf32, #tpu.memory_space<vmem>>, vector<224x128xf32>
    %72 = arith.truncf %71 : vector<224x128xf32> to vector<224x128xbf16>
    %c2 = arith.constant 2 : index
    %c0_57 = arith.constant 0 : index
    %c0_58 = arith.constant 0 : index
    %73 = vector.load %arg3[%c2, %c0_57, %c0_58] : memref<16x128x128xbf16, #tpu.memory_space<vmem>>, vector<1x128x128xbf16>
    %74 = vector.shape_cast %73 : vector<1x128x128xbf16> to vector<128x128xbf16>
    %cst_59 = arith.constant dense<0.000000e+00> : vector<224x128xf32>
    %75 = tpu.matmul %72, %74, %cst_59 {dimension_numbers = #tpu.dot_dimension_numbers<[1], [0], [0], [1], [0, 0, 1, 1], [], []>} : vector<224x128xbf16>, vector<128x128xbf16>, vector<224x128xf32> -> vector<224x128xf32>
    %76 = arith.addf %70, %75 : vector<224x128xf32>
    %c257 = arith.constant 257 : index
    %c0_60 = arith.constant 0 : index
    %77 = vector.load %arg10[%c257, %c0_60] : memref<1024x128xf32, #tpu.memory_space<vmem>>, vector<224x128xf32>
    %78 = arith.truncf %77 : vector<224x128xf32> to vector<224x128xbf16>
    %c3 = arith.constant 3 : index
    %c0_61 = arith.constant 0 : index
    %c0_62 = arith.constant 0 : index
    %79 = vector.load %arg3[%c3, %c0_61, %c0_62] : memref<16x128x128xbf16, #tpu.memory_space<vmem>>, vector<1x128x128xbf16>
    %80 = vector.shape_cast %79 : vector<1x128x128xbf16> to vector<128x128xbf16>
    %cst_63 = arith.constant dense<0.000000e+00> : vector<224x128xf32>
    %81 = tpu.matmul %78, %80, %cst_63 {dimension_numbers = #tpu.dot_dimension_numbers<[1], [0], [0], [1], [0, 0, 1, 1], [], []>} : vector<224x128xbf16>, vector<128x128xbf16>, vector<224x128xf32> -> vector<224x128xf32>
    %82 = arith.addf %76, %81 : vector<224x128xf32>
    %c512_64 = arith.constant 512 : index
    %c0_65 = arith.constant 0 : index
    %83 = vector.load %arg10[%c512_64, %c0_65] : memref<1024x128xf32, #tpu.memory_space<vmem>>, vector<224x128xf32>
    %84 = arith.truncf %83 : vector<224x128xf32> to vector<224x128xbf16>
    %c4 = arith.constant 4 : index
    %c0_66 = arith.constant 0 : index
    %c0_67 = arith.constant 0 : index
    %85 = vector.load %arg3[%c4, %c0_66, %c0_67] : memref<16x128x128xbf16, #tpu.memory_space<vmem>>, vector<1x128x128xbf16>
    %86 = vector.shape_cast %85 : vector<1x128x128xbf16> to vector<128x128xbf16>
    %cst_68 = arith.constant dense<0.000000e+00> : vector<224x128xf32>
    %87 = tpu.matmul %84, %86, %cst_68 {dimension_numbers = #tpu.dot_dimension_numbers<[1], [0], [0], [1], [0, 0, 1, 1], [], []>} : vector<224x128xbf16>, vector<128x128xbf16>, vector<224x128xf32> -> vector<224x128xf32>
    %88 = arith.addf %82, %87 : vector<224x128xf32>
    %c768_69 = arith.constant 768 : index
    %c0_70 = arith.constant 0 : index
    %89 = vector.load %arg10[%c768_69, %c0_70] : memref<1024x128xf32, #tpu.memory_space<vmem>>, vector<224x128xf32>
    %90 = arith.truncf %89 : vector<224x128xf32> to vector<224x128xbf16>
    %c5 = arith.constant 5 : index
    %c0_71 = arith.constant 0 : index
    %c0_72 = arith.constant 0 : index
    %91 = vector.load %arg3[%c5, %c0_71, %c0_72] : memref<16x128x128xbf16, #tpu.memory_space<vmem>>, vector<1x128x128xbf16>
    %92 = vector.shape_cast %91 : vector<1x128x128xbf16> to vector<128x128xbf16>
    %cst_73 = arith.constant dense<0.000000e+00> : vector<224x128xf32>
    %93 = tpu.matmul %90, %92, %cst_73 {dimension_numbers = #tpu.dot_dimension_numbers<[1], [0], [0], [1], [0, 0, 1, 1], [], []>} : vector<224x128xbf16>, vector<128x128xbf16>, vector<224x128xf32> -> vector<224x128xf32>
    %94 = arith.addf %88, %93 : vector<224x128xf32>
    %c513 = arith.constant 513 : index
    %c0_74 = arith.constant 0 : index
    %95 = vector.load %arg10[%c513, %c0_74] : memref<1024x128xf32, #tpu.memory_space<vmem>>, vector<224x128xf32>
    %96 = arith.truncf %95 : vector<224x128xf32> to vector<224x128xbf16>
    %c6 = arith.constant 6 : index
    %c0_75 = arith.constant 0 : index
    %c0_76 = arith.constant 0 : index
    %97 = vector.load %arg3[%c6, %c0_75, %c0_76] : memref<16x128x128xbf16, #tpu.memory_space<vmem>>, vector<1x128x128xbf16>
    %98 = vector.shape_cast %97 : vector<1x128x128xbf16> to vector<128x128xbf16>
    %cst_77 = arith.constant dense<0.000000e+00> : vector<224x128xf32>
    %99 = tpu.matmul %96, %98, %cst_77 {dimension_numbers = #tpu.dot_dimension_numbers<[1], [0], [0], [1], [0, 0, 1, 1], [], []>} : vector<224x128xbf16>, vector<128x128xbf16>, vector<224x128xf32> -> vector<224x128xf32>
    %100 = arith.addf %94, %99 : vector<224x128xf32>
    %c769 = arith.constant 769 : index
    %c0_78 = arith.constant 0 : index
    %101 = vector.load %arg10[%c769, %c0_78] : memref<1024x128xf32, #tpu.memory_space<vmem>>, vector<224x128xf32>
    %102 = arith.truncf %101 : vector<224x128xf32> to vector<224x128xbf16>
    %c7 = arith.constant 7 : index
    %c0_79 = arith.constant 0 : index
    %c0_80 = arith.constant 0 : index
    %103 = vector.load %arg3[%c7, %c0_79, %c0_80] : memref<16x128x128xbf16, #tpu.memory_space<vmem>>, vector<1x128x128xbf16>
    %104 = vector.shape_cast %103 : vector<1x128x128xbf16> to vector<128x128xbf16>
    %cst_81 = arith.constant dense<0.000000e+00> : vector<224x128xf32>
    %105 = tpu.matmul %102, %104, %cst_81 {dimension_numbers = #tpu.dot_dimension_numbers<[1], [0], [0], [1], [0, 0, 1, 1], [], []>} : vector<224x128xbf16>, vector<128x128xbf16>, vector<224x128xf32> -> vector<224x128xf32>
    %106 = arith.addf %100, %105 : vector<224x128xf32>
    %c16 = arith.constant 16 : index
    %c0_82 = arith.constant 0 : index
    %107 = vector.load %arg10[%c16, %c0_82] : memref<1024x128xf32, #tpu.memory_space<vmem>>, vector<224x128xf32>
    %108 = arith.truncf %107 : vector<224x128xf32> to vector<224x128xbf16>
    %c8 = arith.constant 8 : index
    %c0_83 = arith.constant 0 : index
    %c0_84 = arith.constant 0 : index
    %109 = vector.load %arg3[%c8, %c0_83, %c0_84] : memref<16x128x128xbf16, #tpu.memory_space<vmem>>, vector<1x128x128xbf16>
    %110 = vector.shape_cast %109 : vector<1x128x128xbf16> to vector<128x128xbf16>
    %cst_85 = arith.constant dense<0.000000e+00> : vector<224x128xf32>
    %111 = tpu.matmul %108, %110, %cst_85 {dimension_numbers = #tpu.dot_dimension_numbers<[1], [0], [0], [1], [0, 0, 1, 1], [], []>} : vector<224x128xbf16>, vector<128x128xbf16>, vector<224x128xf32> -> vector<224x128xf32>
    %112 = arith.addf %106, %111 : vector<224x128xf32>
    %c272 = arith.constant 272 : index
    %c0_86 = arith.constant 0 : index
    %113 = vector.load %arg10[%c272, %c0_86] : memref<1024x128xf32, #tpu.memory_space<vmem>>, vector<224x128xf32>
    %114 = arith.truncf %113 : vector<224x128xf32> to vector<224x128xbf16>
    %c9 = arith.constant 9 : index
    %c0_87 = arith.constant 0 : index
    %c0_88 = arith.constant 0 : index
    %115 = vector.load %arg3[%c9, %c0_87, %c0_88] : memref<16x128x128xbf16, #tpu.memory_space<vmem>>, vector<1x128x128xbf16>
    %116 = vector.shape_cast %115 : vector<1x128x128xbf16> to vector<128x128xbf16>
    %cst_89 = arith.constant dense<0.000000e+00> : vector<224x128xf32>
    %117 = tpu.matmul %114, %116, %cst_89 {dimension_numbers = #tpu.dot_dimension_numbers<[1], [0], [0], [1], [0, 0, 1, 1], [], []>} : vector<224x128xbf16>, vector<128x128xbf16>, vector<224x128xf32> -> vector<224x128xf32>
    %118 = arith.addf %112, %117 : vector<224x128xf32>
    %c17 = arith.constant 17 : index
    %c0_90 = arith.constant 0 : index
    %119 = vector.load %arg10[%c17, %c0_90] : memref<1024x128xf32, #tpu.memory_space<vmem>>, vector<224x128xf32>
    %120 = arith.truncf %119 : vector<224x128xf32> to vector<224x128xbf16>
    %c10 = arith.constant 10 : index
    %c0_91 = arith.constant 0 : index
    %c0_92 = arith.constant 0 : index
    %121 = vector.load %arg3[%c10, %c0_91, %c0_92] : memref<16x128x128xbf16, #tpu.memory_space<vmem>>, vector<1x128x128xbf16>
    %122 = vector.shape_cast %121 : vector<1x128x128xbf16> to vector<128x128xbf16>
    %cst_93 = arith.constant dense<0.000000e+00> : vector<224x128xf32>
    %123 = tpu.matmul %120, %122, %cst_93 {dimension_numbers = #tpu.dot_dimension_numbers<[1], [0], [0], [1], [0, 0, 1, 1], [], []>} : vector<224x128xbf16>, vector<128x128xbf16>, vector<224x128xf32> -> vector<224x128xf32>
    %124 = arith.addf %118, %123 : vector<224x128xf32>
    %c273 = arith.constant 273 : index
    %c0_94 = arith.constant 0 : index
    %125 = vector.load %arg10[%c273, %c0_94] : memref<1024x128xf32, #tpu.memory_space<vmem>>, vector<224x128xf32>
    %126 = arith.truncf %125 : vector<224x128xf32> to vector<224x128xbf16>
    %c11 = arith.constant 11 : index
    %c0_95 = arith.constant 0 : index
    %c0_96 = arith.constant 0 : index
    %127 = vector.load %arg3[%c11, %c0_95, %c0_96] : memref<16x128x128xbf16, #tpu.memory_space<vmem>>, vector<1x128x128xbf16>
    %128 = vector.shape_cast %127 : vector<1x128x128xbf16> to vector<128x128xbf16>
    %cst_97 = arith.constant dense<0.000000e+00> : vector<224x128xf32>
    %129 = tpu.matmul %126, %128, %cst_97 {dimension_numbers = #tpu.dot_dimension_numbers<[1], [0], [0], [1], [0, 0, 1, 1], [], []>} : vector<224x128xbf16>, vector<128x128xbf16>, vector<224x128xf32> -> vector<224x128xf32>
    %130 = arith.addf %124, %129 : vector<224x128xf32>
    %c528 = arith.constant 528 : index
    %c0_98 = arith.constant 0 : index
    %131 = vector.load %arg10[%c528, %c0_98] : memref<1024x128xf32, #tpu.memory_space<vmem>>, vector<224x128xf32>
    %132 = arith.truncf %131 : vector<224x128xf32> to vector<224x128xbf16>
    %c12 = arith.constant 12 : index
    %c0_99 = arith.constant 0 : index
    %c0_100 = arith.constant 0 : index
    %133 = vector.load %arg3[%c12, %c0_99, %c0_100] : memref<16x128x128xbf16, #tpu.memory_space<vmem>>, vector<1x128x128xbf16>
    %134 = vector.shape_cast %133 : vector<1x128x128xbf16> to vector<128x128xbf16>
    %cst_101 = arith.constant dense<0.000000e+00> : vector<224x128xf32>
    %135 = tpu.matmul %132, %134, %cst_101 {dimension_numbers = #tpu.dot_dimension_numbers<[1], [0], [0], [1], [0, 0, 1, 1], [], []>} : vector<224x128xbf16>, vector<128x128xbf16>, vector<224x128xf32> -> vector<224x128xf32>
    %136 = arith.addf %130, %135 : vector<224x128xf32>
    %c784 = arith.constant 784 : index
    %c0_102 = arith.constant 0 : index
    %137 = vector.load %arg10[%c784, %c0_102] : memref<1024x128xf32, #tpu.memory_space<vmem>>, vector<224x128xf32>
    %138 = arith.truncf %137 : vector<224x128xf32> to vector<224x128xbf16>
    %c13 = arith.constant 13 : index
    %c0_103 = arith.constant 0 : index
    %c0_104 = arith.constant 0 : index
    %139 = vector.load %arg3[%c13, %c0_103, %c0_104] : memref<16x128x128xbf16, #tpu.memory_space<vmem>>, vector<1x128x128xbf16>
    %140 = vector.shape_cast %139 : vector<1x128x128xbf16> to vector<128x128xbf16>
    %cst_105 = arith.constant dense<0.000000e+00> : vector<224x128xf32>
    %141 = tpu.matmul %138, %140, %cst_105 {dimension_numbers = #tpu.dot_dimension_numbers<[1], [0], [0], [1], [0, 0, 1, 1], [], []>} : vector<224x128xbf16>, vector<128x128xbf16>, vector<224x128xf32> -> vector<224x128xf32>
    %142 = arith.addf %136, %141 : vector<224x128xf32>
    %c529 = arith.constant 529 : index
    %c0_106 = arith.constant 0 : index
    %143 = vector.load %arg10[%c529, %c0_106] : memref<1024x128xf32, #tpu.memory_space<vmem>>, vector<224x128xf32>
    %144 = arith.truncf %143 : vector<224x128xf32> to vector<224x128xbf16>
    %c14 = arith.constant 14 : index
    %c0_107 = arith.constant 0 : index
    %c0_108 = arith.constant 0 : index
    %145 = vector.load %arg3[%c14, %c0_107, %c0_108] : memref<16x128x128xbf16, #tpu.memory_space<vmem>>, vector<1x128x128xbf16>
    %146 = vector.shape_cast %145 : vector<1x128x128xbf16> to vector<128x128xbf16>
    %cst_109 = arith.constant dense<0.000000e+00> : vector<224x128xf32>
    %147 = tpu.matmul %144, %146, %cst_109 {dimension_numbers = #tpu.dot_dimension_numbers<[1], [0], [0], [1], [0, 0, 1, 1], [], []>} : vector<224x128xbf16>, vector<128x128xbf16>, vector<224x128xf32> -> vector<224x128xf32>
    %148 = arith.addf %142, %147 : vector<224x128xf32>
    %c785 = arith.constant 785 : index
    %c0_110 = arith.constant 0 : index
    %149 = vector.load %arg10[%c785, %c0_110] : memref<1024x128xf32, #tpu.memory_space<vmem>>, vector<224x128xf32>
    %150 = arith.truncf %149 : vector<224x128xf32> to vector<224x128xbf16>
    %c15 = arith.constant 15 : index
    %c0_111 = arith.constant 0 : index
    %c0_112 = arith.constant 0 : index
    %151 = vector.load %arg3[%c15, %c0_111, %c0_112] : memref<16x128x128xbf16, #tpu.memory_space<vmem>>, vector<1x128x128xbf16>
    %152 = vector.shape_cast %151 : vector<1x128x128xbf16> to vector<128x128xbf16>
    %cst_113 = arith.constant dense<0.000000e+00> : vector<224x128xf32>
    %153 = tpu.matmul %150, %152, %cst_113 {dimension_numbers = #tpu.dot_dimension_numbers<[1], [0], [0], [1], [0, 0, 1, 1], [], []>} : vector<224x128xbf16>, vector<128x128xbf16>, vector<224x128xf32> -> vector<224x128xf32>
    %154 = arith.addf %148, %153 : vector<224x128xf32>
    %c0_114 = arith.constant 0 : index
    %c0_115 = arith.constant 0 : index
    %155 = vector.load %arg4[%c0_114, %c0_115] : memref<1x128xf32, #tpu.memory_space<vmem>>, vector<1x128xf32>
    %156 = vector.broadcast %155 : vector<1x128xf32> to vector<224x128xf32>
    %157 = arith.addf %154, %156 : vector<224x128xf32>
    %cst_116 = arith.constant 0.000000e+00 : f32
    %158 = vector.broadcast %cst_116 : f32 to vector<224x128xf32>
    %159 = arith.maximumf %157, %158 : vector<224x128xf32>
    %c0_117 = arith.constant 0 : index
    %c0_118 = arith.constant 0 : index
    %160 = vector.load %arg11[%c0_117, %c0_118] : memref<240x128xf32, #tpu.memory_space<vmem>>, vector<224x128xf32>
    tpu.vector_store %arg11[%c0_117, %c0_118], %159 {strides = array<i32>} : memref<240x128xf32, #tpu.memory_space<vmem>>, vector<224x128xf32>,
    %cst_119 = arith.constant 0.000000e+00 : f32
    %161 = vector.broadcast %cst_119 : f32 to vector<16x128xf32>
    %c224 = arith.constant 224 : index
    %c0_120 = arith.constant 0 : index
    %162 = vector.load %arg11[%c224, %c0_120] : memref<240x128xf32, #tpu.memory_space<vmem>>, vector<16x128xf32>
    tpu.vector_store %arg11[%c224, %c0_120], %161 {strides = array<i32>} : memref<240x128xf32, #tpu.memory_space<vmem>>, vector<16x128xf32>,
    %cst_121 = arith.constant 0.000000e+00 : f32
    %163 = vector.broadcast %cst_121 : f32 to vector<192x128xf32>
    %c0_122 = arith.constant 0 : index
    %c0_123 = arith.constant 0 : index
    %164 = vector.load %arg11[%c0_122, %c0_123] : memref<240x128xf32, #tpu.memory_space<vmem>>, vector<192x128xf32>
    %165 = arith.truncf %164 : vector<192x128xf32> to vector<192x128xbf16>
    %c0_124 = arith.constant 0 : index
    %c0_125 = arith.constant 0 : index
    %c0_126 = arith.constant 0 : index
    %166 = vector.load %arg5[%c0_124, %c0_125, %c0_126] : memref<9x128x128xbf16, #tpu.memory_space<vmem>>, vector<1x128x128xbf16>
    %167 = vector.shape_cast %166 : vector<1x128x128xbf16> to vector<128x128xbf16>
    %cst_127 = arith.constant dense<0.000000e+00> : vector<192x128xf32>
    %168 = tpu.matmul %165, %167, %cst_127 {dimension_numbers = #tpu.dot_dimension_numbers<[1], [0], [0], [1], [0, 0, 1, 1], [], []>} : vector<192x128xbf16>, vector<128x128xbf16>, vector<192x128xf32> -> vector<192x128xf32>
    %169 = arith.addf %163, %168 : vector<192x128xf32>
    %c1_128 = arith.constant 1 : index
    %c0_129 = arith.constant 0 : index
    %170 = vector.load %arg11[%c1_128, %c0_129] : memref<240x128xf32, #tpu.memory_space<vmem>>, vector<192x128xf32>
    %171 = arith.truncf %170 : vector<192x128xf32> to vector<192x128xbf16>
    %c1_130 = arith.constant 1 : index
    %c0_131 = arith.constant 0 : index
    %c0_132 = arith.constant 0 : index
    %172 = vector.load %arg5[%c1_130, %c0_131, %c0_132] : memref<9x128x128xbf16, #tpu.memory_space<vmem>>, vector<1x128x128xbf16>
    %173 = vector.shape_cast %172 : vector<1x128x128xbf16> to vector<128x128xbf16>
    %cst_133 = arith.constant dense<0.000000e+00> : vector<192x128xf32>
    %174 = tpu.matmul %171, %173, %cst_133 {dimension_numbers = #tpu.dot_dimension_numbers<[1], [0], [0], [1], [0, 0, 1, 1], [], []>} : vector<192x128xbf16>, vector<128x128xbf16>, vector<192x128xf32> -> vector<192x128xf32>
    %175 = arith.addf %169, %174 : vector<192x128xf32>
    %c2_134 = arith.constant 2 : index
    %c0_135 = arith.constant 0 : index
    %176 = vector.load %arg11[%c2_134, %c0_135] : memref<240x128xf32, #tpu.memory_space<vmem>>, vector<192x128xf32>
    %177 = arith.truncf %176 : vector<192x128xf32> to vector<192x128xbf16>
    %c2_136 = arith.constant 2 : index
    %c0_137 = arith.constant 0 : index
    %c0_138 = arith.constant 0 : index
    %178 = vector.load %arg5[%c2_136, %c0_137, %c0_138] : memref<9x128x128xbf16, #tpu.memory_space<vmem>>, vector<1x128x128xbf16>
    %179 = vector.shape_cast %178 : vector<1x128x128xbf16> to vector<128x128xbf16>
    %cst_139 = arith.constant dense<0.000000e+00> : vector<192x128xf32>
    %180 = tpu.matmul %177, %179, %cst_139 {dimension_numbers = #tpu.dot_dimension_numbers<[1], [0], [0], [1], [0, 0, 1, 1], [], []>} : vector<192x128xbf16>, vector<128x128xbf16>, vector<192x128xf32> -> vector<192x128xf32>
    %181 = arith.addf %175, %180 : vector<192x128xf32>
    %c16_140 = arith.constant 16 : index
    %c0_141 = arith.constant 0 : index
    %182 = vector.load %arg11[%c16_140, %c0_141] : memref<240x128xf32, #tpu.memory_space<vmem>>, vector<192x128xf32>
    %183 = arith.truncf %182 : vector<192x128xf32> to vector<192x128xbf16>
    %c3_142 = arith.constant 3 : index
    %c0_143 = arith.constant 0 : index
    %c0_144 = arith.constant 0 : index
    %184 = vector.load %arg5[%c3_142, %c0_143, %c0_144] : memref<9x128x128xbf16, #tpu.memory_space<vmem>>, vector<1x128x128xbf16>
    %185 = vector.shape_cast %184 : vector<1x128x128xbf16> to vector<128x128xbf16>
    %cst_145 = arith.constant dense<0.000000e+00> : vector<192x128xf32>
    %186 = tpu.matmul %183, %185, %cst_145 {dimension_numbers = #tpu.dot_dimension_numbers<[1], [0], [0], [1], [0, 0, 1, 1], [], []>} : vector<192x128xbf16>, vector<128x128xbf16>, vector<192x128xf32> -> vector<192x128xf32>
    %187 = arith.addf %181, %186 : vector<192x128xf32>
    %c17_146 = arith.constant 17 : index
    %c0_147 = arith.constant 0 : index
    %188 = vector.load %arg11[%c17_146, %c0_147] : memref<240x128xf32, #tpu.memory_space<vmem>>, vector<192x128xf32>
    %189 = arith.truncf %188 : vector<192x128xf32> to vector<192x128xbf16>
    %c4_148 = arith.constant 4 : index
    %c0_149 = arith.constant 0 : index
    %c0_150 = arith.constant 0 : index
    %190 = vector.load %arg5[%c4_148, %c0_149, %c0_150] : memref<9x128x128xbf16, #tpu.memory_space<vmem>>, vector<1x128x128xbf16>
    %191 = vector.shape_cast %190 : vector<1x128x128xbf16> to vector<128x128xbf16>
    %cst_151 = arith.constant dense<0.000000e+00> : vector<192x128xf32>
    %192 = tpu.matmul %189, %191, %cst_151 {dimension_numbers = #tpu.dot_dimension_numbers<[1], [0], [0], [1], [0, 0, 1, 1], [], []>} : vector<192x128xbf16>, vector<128x128xbf16>, vector<192x128xf32> -> vector<192x128xf32>
    %193 = arith.addf %187, %192 : vector<192x128xf32>
    %c18 = arith.constant 18 : index
    %c0_152 = arith.constant 0 : index
    %194 = vector.load %arg11[%c18, %c0_152] : memref<240x128xf32, #tpu.memory_space<vmem>>, vector<192x128xf32>
    %195 = arith.truncf %194 : vector<192x128xf32> to vector<192x128xbf16>
    %c5_153 = arith.constant 5 : index
    %c0_154 = arith.constant 0 : index
    %c0_155 = arith.constant 0 : index
    %196 = vector.load %arg5[%c5_153, %c0_154, %c0_155] : memref<9x128x128xbf16, #tpu.memory_space<vmem>>, vector<1x128x128xbf16>
    %197 = vector.shape_cast %196 : vector<1x128x128xbf16> to vector<128x128xbf16>
    %cst_156 = arith.constant dense<0.000000e+00> : vector<192x128xf32>
    %198 = tpu.matmul %195, %197, %cst_156 {dimension_numbers = #tpu.dot_dimension_numbers<[1], [0], [0], [1], [0, 0, 1, 1], [], []>} : vector<192x128xbf16>, vector<128x128xbf16>, vector<192x128xf32> -> vector<192x128xf32>
    %199 = arith.addf %193, %198 : vector<192x128xf32>
    %c32 = arith.constant 32 : index
    %c0_157 = arith.constant 0 : index
    %200 = vector.load %arg11[%c32, %c0_157] : memref<240x128xf32, #tpu.memory_space<vmem>>, vector<192x128xf32>
    %201 = arith.truncf %200 : vector<192x128xf32> to vector<192x128xbf16>
    %c6_158 = arith.constant 6 : index
    %c0_159 = arith.constant 0 : index
    %c0_160 = arith.constant 0 : index
    %202 = vector.load %arg5[%c6_158, %c0_159, %c0_160] : memref<9x128x128xbf16, #tpu.memory_space<vmem>>, vector<1x128x128xbf16>
    %203 = vector.shape_cast %202 : vector<1x128x128xbf16> to vector<128x128xbf16>
    %cst_161 = arith.constant dense<0.000000e+00> : vector<192x128xf32>
    %204 = tpu.matmul %201, %203, %cst_161 {dimension_numbers = #tpu.dot_dimension_numbers<[1], [0], [0], [1], [0, 0, 1, 1], [], []>} : vector<192x128xbf16>, vector<128x128xbf16>, vector<192x128xf32> -> vector<192x128xf32>
    %205 = arith.addf %199, %204 : vector<192x128xf32>
    %c33 = arith.constant 33 : index
    %c0_162 = arith.constant 0 : index
    %206 = vector.load %arg11[%c33, %c0_162] : memref<240x128xf32, #tpu.memory_space<vmem>>, vector<192x128xf32>
    %207 = arith.truncf %206 : vector<192x128xf32> to vector<192x128xbf16>
    %c7_163 = arith.constant 7 : index
    %c0_164 = arith.constant 0 : index
    %c0_165 = arith.constant 0 : index
    %208 = vector.load %arg5[%c7_163, %c0_164, %c0_165] : memref<9x128x128xbf16, #tpu.memory_space<vmem>>, vector<1x128x128xbf16>
    %209 = vector.shape_cast %208 : vector<1x128x128xbf16> to vector<128x128xbf16>
    %cst_166 = arith.constant dense<0.000000e+00> : vector<192x128xf32>
    %210 = tpu.matmul %207, %209, %cst_166 {dimension_numbers = #tpu.dot_dimension_numbers<[1], [0], [0], [1], [0, 0, 1, 1], [], []>} : vector<192x128xbf16>, vector<128x128xbf16>, vector<192x128xf32> -> vector<192x128xf32>
    %211 = arith.addf %205, %210 : vector<192x128xf32>
    %c34 = arith.constant 34 : index
    %c0_167 = arith.constant 0 : index
    %212 = vector.load %arg11[%c34, %c0_167] : memref<240x128xf32, #tpu.memory_space<vmem>>, vector<192x128xf32>
    %213 = arith.truncf %212 : vector<192x128xf32> to vector<192x128xbf16>
    %c8_168 = arith.constant 8 : index
    %c0_169 = arith.constant 0 : index
    %c0_170 = arith.constant 0 : index
    %214 = vector.load %arg5[%c8_168, %c0_169, %c0_170] : memref<9x128x128xbf16, #tpu.memory_space<vmem>>, vector<1x128x128xbf16>
    %215 = vector.shape_cast %214 : vector<1x128x128xbf16> to vector<128x128xbf16>
    %cst_171 = arith.constant dense<0.000000e+00> : vector<192x128xf32>
    %216 = tpu.matmul %213, %215, %cst_171 {dimension_numbers = #tpu.dot_dimension_numbers<[1], [0], [0], [1], [0, 0, 1, 1], [], []>} : vector<192x128xbf16>, vector<128x128xbf16>, vector<192x128xf32> -> vector<192x128xf32>
    %217 = arith.addf %211, %216 : vector<192x128xf32>
    %c0_172 = arith.constant 0 : index
    %c0_173 = arith.constant 0 : index
    %218 = vector.load %arg6[%c0_172, %c0_173] : memref<1x128xf32, #tpu.memory_space<vmem>>, vector<1x128xf32>
    %219 = vector.broadcast %218 : vector<1x128xf32> to vector<192x128xf32>
    %220 = arith.addf %217, %219 : vector<192x128xf32>
    %cst_174 = arith.constant 0.000000e+00 : f32
    %221 = vector.broadcast %cst_174 : f32 to vector<192x128xf32>
    %222 = arith.maximumf %220, %221 : vector<192x128xf32>
    %c0_175 = arith.constant 0 : index
    %c0_176 = arith.constant 0 : index
    %223 = vector.load %arg7[%c0_175, %c0_176] : memref<192x128xf32, #tpu.memory_space<vmem>>, vector<192x128xf32>
    %224 = arith.mulf %222, %223 : vector<192x128xf32>
    %cst_177 = arith.constant dense<0.000000e+00> : vector<128xf32>
    %225 = vector.multi_reduction <add>, %224, %cst_177 [0] : vector<192x128xf32> to vector<128xf32>
    %226 = vector.shape_cast %225 : vector<128xf32> to vector<1x128xf32>
    %cst_178 = arith.constant dense<0.000000e+00> : vector<1xf32>
    %227 = vector.multi_reduction <add>, %226, %cst_178 [1] : vector<1x128xf32> to vector<1xf32>
    %228 = vector.shape_cast %227 : vector<1xf32> to vector<1x1xf32>
    %c0_179 = arith.constant 0 : index
    %c0_180 = arith.constant 0 : index
    %229 = vector.load %arg8[%c0_179, %c0_180] : memref<1x1xf32, #tpu.memory_space<vmem>>, vector<1x1xf32>
    %230 = arith.addf %228, %229 : vector<1x1xf32>
    %c0_181 = arith.constant 0 : index
    %c0_182 = arith.constant 0 : index
    %231 = vector.load %arg9[%c0_181, %c0_182] : memref<1x1xf32, #tpu.memory_space<vmem>>, vector<1x1xf32>
    tpu.vector_store %arg9[%c0_181, %c0_182], %230 {strides = array<i32>} : memref<1x1xf32, #tpu.memory_space<vmem>>, vector<1x1xf32>,
    return
  }
}

</mosaic_0001>

<llo_original>
// kernel: critic_forward.1
$region0: #{critic_forward.1}
  #allocation0 [shape = 'u32[]', space=smem, size = 0x4, offset = 0x4, fixed_abs, tag = 'smem constant byte address 0x4 - core index']
  #allocation1 [shape = 'u32[144,128]{1,0:T(1,128)}', space=vmem, size = 0x12000, scoped, tag = 'internal scratch']
  #allocation2 [shape = 'f32[1024,128]{1,0:T(8,128)}', space=vmem, size = 0x80000, scoped, tag = 'scratch operand']
  #allocation3 [shape = 'f32[240,128]{1,0:T(8,128)}', space=vmem, size = 0x1e000, scoped, tag = 'scratch operand']
  #allocation4 [shape = 'f32[1,1]{1,0:T(1,128)S(1)}', space=vmem, size = 0x200, scoped, tag = 'scoped memory for critic_forward.1']
  %s0 = inlined_call_operand.vmem [shape: bf16[1024,256], index: 0, kind: input, shape index: {}]
  %s1 = inlined_call_operand.vmem [shape: bf16[256,128], index: 1, kind: input, shape index: {}]
  %s2 = inlined_call_operand.vmem [shape: f32[1,128], index: 2, kind: input, shape index: {}]
  %s3 = inlined_call_operand.vmem [shape: bf16[16,128,128], index: 3, kind: input, shape index: {}]
  %s4 = inlined_call_operand.vmem [shape: f32[1,128], index: 4, kind: input, shape index: {}]
  %s5 = inlined_call_operand.vmem [shape: bf16[9,128,128], index: 5, kind: input, shape index: {}]
  %s6 = inlined_call_operand.vmem [shape: f32[1,128], index: 6, kind: input, shape index: {}]
  %s7 = inlined_call_operand.vmem [shape: f32[192,128], index: 7, kind: input, shape index: {}]
  %s8 = inlined_call_operand.<no memory space> [shape: f32[1,1], index: 8, kind: input, shape index: {}]
  %s9 = inlined_call_operand.hbm [shape: f32[1,1], index: 9, kind: output, shape index: {}]
  %s10 = sld [smem:[#allocation0]]
  $region46: #{critic_forward.1} parent=0
    _
  %s12 = ssub.s32 1, %s10
  %s13 = scalar_select 0, %s12, %s10
  %v14 = vstv %s8
  %15 = vst [vmem:[#allocation4] sm:$0x1] %v14
  $region1: #{critic_forward.1} parent=0
    #allocation5 [shape = 'u8[512]{0}', space=vmem, size = 0x400, scoped, tag = 'output window, operand 0, single buffered']
    #allocation6 [shape = 's32[1]{0}', space=sflag, size = 0x4, scoped, tag = 'scoped memory for critic_forward.1']
    %16 = vsyncpa [#allocation6], 0
    // Predicated region
    $region2: #{critic_forward.1} parent=1 // pred_check
      _
    $region3: #{critic_forward.1} parent=1 // pred_check_branch
      %18 = sbr.rel (0) target = $region5
    $region4: #{critic_forward.1} parent=1 // pred_region
      _
    $region5: #{critic_forward.1} parent=1 // pred_fallthru
      _
    // Predicated region
    $region6: #{critic_forward.1} parent=1 // pred_check
      _
    $region7: #{critic_forward.1} parent=1 // pred_check_branch
      %20 = sbr.rel (0) target = $region9
    $region8: #{critic_forward.1} parent=1 // pred_region
      _
    $region9: #{critic_forward.1} parent=1 // pred_fallthru
      _
    // Predicated region
    $region10: #{critic_forward.1} parent=1 // pred_check
      _
    $region11: #{critic_forward.1} parent=1 // pred_check_branch
      %22 = sbr.rel (0) target = $region13
    $region12: #{critic_forward.1} parent=1 // pred_region
      _
    $region13: #{critic_forward.1} parent=1 // pred_fallthru
      _
    // Predicated region
    $region14: #{critic_forward.1} parent=1 // pred_check
      _
    $region15: #{critic_forward.1} parent=1 // pred_check_branch
      %24 = sbr.rel (0) target = $region17
    $region16: #{critic_forward.1} parent=1 // pred_region
      _
    $region17: #{critic_forward.1} parent=1 // pred_fallthru
      _
    // Predicated region
    $region18: #{critic_forward.1} parent=1 // pred_check
      _
    $region19: #{critic_forward.1} parent=1 // pred_check_branch
      %26 = sbr.rel (0) target = $region21
    $region20: #{critic_forward.1} parent=1 // pred_region
      _
    $region21: #{critic_forward.1} parent=1 // pred_fallthru
      _
    // Predicated region
    $region22: #{critic_forward.1} parent=1 // pred_check
      _
    $region23: #{critic_forward.1} parent=1 // pred_check_branch
      %28 = sbr.rel (0) target = $region25
    $region24: #{critic_forward.1} parent=1 // pred_region
      _
    $region25: #{critic_forward.1} parent=1 // pred_fallthru
      _
    // Predicated region
    $region26: #{critic_forward.1} parent=1 // pred_check
      _
    $region27: #{critic_forward.1} parent=1 // pred_check_branch
      %30 = sbr.rel (0) target = $region29
    $region28: #{critic_forward.1} parent=1 // pred_region
      _
    $region29: #{critic_forward.1} parent=1 // pred_fallthru
      _
    // Predicated region
    $region30: #{critic_forward.1} parent=1 // pred_check
      _
    $region31: #{critic_forward.1} parent=1 // pred_check_branch
      %32 = sbr.rel (0) target = $region33
    $region32: #{critic_forward.1} parent=1 // pred_region
      _
    $region33: #{critic_forward.1} parent=1 // pred_fallthru
      _
    // Predicated region
    $region34: #{critic_forward.1} parent=1 // pred_check
      _
    $region35: #{critic_forward.1} parent=1 // pred_check_branch
      %34 = sbr.rel (0) target = $region37
    $region36: #{critic_forward.1} parent=1 // pred_region
      _
    $region37: #{critic_forward.1} parent=1 // pred_fallthru
      _
    %v36 = vld [vmem:[%s1] sm:$0xf]
    %v37 = vld [vmem:[%s1 + $0x4] sm:$0xf]
    %v38 = vld [vmem:[%s1 + $0x8] sm:$0xf]
    %v39 = vld [vmem:[%s1 + $0xc] sm:$0xf]
    %v40 = vld [vmem:[%s1 + $0x10] sm:$0xf]
    %v41 = vld [vmem:[%s1 + $0x14] sm:$0xf]
    %v42 = vld [vmem:[%s1 + $0x18] sm:$0xf]
    %v43 = vld [vmem:[%s1 + $0x1c] sm:$0xf]
    %v44 = vld [vmem:[%s1 + $0x20] sm:$0xf]
    %v45 = vld [vmem:[%s1 + $0x24] sm:$0xf]
    %v46 = vld [vmem:[%s1 + $0x28] sm:$0xf]
    %v47 = vld [vmem:[%s1 + $0x2c] sm:$0xf]
    %v48 = vld [vmem:[%s1 + $0x30] sm:$0xf]
    %v49 = vld [vmem:[%s1 + $0x34] sm:$0xf]
    %v50 = vld [vmem:[%s1 + $0x38] sm:$0xf]
    %v51 = vld [vmem:[%s1 + $0x3c] sm:$0xf]
    %v52 = vld [vmem:[%s1 + $0x40] sm:$0xf]
    %v53 = vld [vmem:[%s1 + $0x44] sm:$0xf]
    %v54 = vld [vmem:[%s1 + $0x48] sm:$0xf]
    %v55 = vld [vmem:[%s1 + $0x4c] sm:$0xf]
    %v56 = vld [vmem:[%s1 + $0x50] sm:$0xf]
    %v57 = vld [vmem:[%s1 + $0x54] sm:$0xf]
    %v58 = vld [vmem:[%s1 + $0x58] sm:$0xf]
    %v59 = vld [vmem:[%s1 + $0x5c] sm:$0xf]
    %v60 = vld [vmem:[%s1 + $0x60] sm:$0xf]
    %v61 = vld [vmem:[%s1 + $0x64] sm:$0xf]
    %v62 = vld [vmem:[%s1 + $0x68] sm:$0xf]
    %v63 = vld [vmem:[%s1 + $0x6c] sm:$0xf]
    %v64 = vld [vmem:[%s1 + $0x70] sm:$0xf]
    %v65 = vld [vmem:[%s1 + $0x74] sm:$0xf]
    %v66 = vld [vmem:[%s1 + $0x78] sm:$0xf]
    %v67 = vld [vmem:[%s1 + $0x7c] sm:$0xf]
    %v68 = vld [vmem:[%s2] sm:$0x1]
    %v69 = vld [vmem:[%s0] sm:$0xff]
    %v70 = vld [vmem:[%s0 + $0x8] sm:$0xff]
    %v71 = vld [vmem:[%s0 + $0x10] sm:$0xff]
    %v72 = vld [vmem:[%s0 + $0x18] sm:$0xff]
    %v73 = vld [vmem:[%s0 + $0x20] sm:$0xff]
    %v74 = vld [vmem:[%s0 + $0x28] sm:$0xff]
    %v75 = vld [vmem:[%s0 + $0x30] sm:$0xff]
    %v76 = vld [vmem:[%s0 + $0x38] sm:$0xff]
    %v77 = vld [vmem:[%s0 + $0x40] sm:$0xff]
    %v78 = vld [vmem:[%s0 + $0x48] sm:$0xff]
    %v79 = vld [vmem:[%s0 + $0x50] sm:$0xff]
    %v80 = vld [vmem:[%s0 + $0x58] sm:$0xff]
    %v81 = vld [vmem:[%s0 + $0x60] sm:$0xff]
    %v82 = vld [vmem:[%s0 + $0x68] sm:$0xff]
    %v83 = vld [vmem:[%s0 + $0x70] sm:$0xff]
    %v84 = vld [vmem:[%s0 + $0x78] sm:$0xff]
    %v86 = vlaneseq
    %v87 = vshrl.u32 %v86, 7
    %v88 = vsub.s32 0, %v87
    %v89 = vrot.slane %v68, %v88
    %v107 = vunpack.c.l.b16 %v69
    %v108 = vunpack.c.h.b16 %v69
    %v109 = vunpack.c.l.b16 %v70
    %v110 = vunpack.c.h.b16 %v70
    %v111 = vunpack.c.l.b16 %v71
    %v112 = vunpack.c.h.b16 %v71
    %v113 = vunpack.c.l.b16 %v72
    %v114 = vunpack.c.h.b16 %v72
    %v115 = vunpack.c.l.b16 %v73
    %v116 = vunpack.c.h.b16 %v73
    %v117 = vunpack.c.l.b16 %v74
    %v118 = vunpack.c.h.b16 %v74
    %v119 = vunpack.c.l.b16 %v75
    %v120 = vunpack.c.h.b16 %v75
    %v121 = vunpack.c.l.b16 %v76
    %v122 = vunpack.c.h.b16 %v76
    %v123 = vunpack.c.l.b16 %v77
    %v124 = vunpack.c.h.b16 %v77
    %v125 = vunpack.c.l.b16 %v78
    %v126 = vunpack.c.h.b16 %v78
    %v127 = vunpack.c.l.b16 %v79
    %v128 = vunpack.c.h.b16 %v79
    %v129 = vunpack.c.l.b16 %v80
    %v130 = vunpack.c.h.b16 %v80
    %v131 = vunpack.c.l.b16 %v81
    %v132 = vunpack.c.h.b16 %v81
    %v133 = vunpack.c.l.b16 %v82
    %v134 = vunpack.c.h.b16 %v82
    %v135 = vunpack.c.l.b16 %v83
    %v136 = vunpack.c.h.b16 %v83
    %v137 = vunpack.c.l.b16 %v84
    %v138 = vunpack.c.h.b16 %v84
    %v139 = vpack.c.b16 %v109, %v107
    %v140 = vpack.c.b16 %v110, %v108
    %v141 = vpack.c.b16 %v113, %v111
    %v142 = vpack.c.b16 %v114, %v112
    %v143 = vpack.c.b16 %v117, %v115
    %v144 = vpack.c.b16 %v118, %v116
    %v145 = vpack.c.b16 %v121, %v119
    %v146 = vpack.c.b16 %v122, %v120
    %v147 = vpack.c.b16 %v125, %v123
    %v148 = vpack.c.b16 %v126, %v124
    %v149 = vpack.c.b16 %v129, %v127
    %v150 = vpack.c.b16 %v130, %v128
    %v151 = vpack.c.b16 %v133, %v131
    %v152 = vpack.c.b16 %v134, %v132
    %v153 = vpack.c.b16 %v137, %v135
    %v154 = vpack.c.b16 %v138, %v136
    %v203 = vunpack.c.l.b16 %v36
    %v204 = vunpack.c.l.b16 %v37
    %v205 = vunpack.c.l.b16 %v38
    %v206 = vunpack.c.l.b16 %v39
    %v207 = vunpack.c.l.b16 %v40
    %v208 = vunpack.c.l.b16 %v41
    %v209 = vunpack.c.l.b16 %v42
    %v210 = vunpack.c.l.b16 %v43
    %v211 = vunpack.c.l.b16 %v44
    %v212 = vunpack.c.l.b16 %v45
    %v213 = vunpack.c.l.b16 %v46
    %v214 = vunpack.c.l.b16 %v47
    %v215 = vunpack.c.l.b16 %v48
    %v216 = vunpack.c.l.b16 %v49
    %v217 = vunpack.c.l.b16 %v50
    %v218 = vunpack.c.l.b16 %v51
    %v219 = vunpack.c.l.b16 %v52
    %v220 = vunpack.c.l.b16 %v53
    %v221 = vunpack.c.l.b16 %v54
    %v222 = vunpack.c.l.b16 %v55
    %v223 = vunpack.c.l.b16 %v56
    %v224 = vunpack.c.l.b16 %v57
    %v225 = vunpack.c.l.b16 %v58
    %v226 = vunpack.c.l.b16 %v59
    %v227 = vunpack.c.l.b16 %v60
    %v228 = vunpack.c.l.b16 %v61
    %v229 = vunpack.c.l.b16 %v62
    %v230 = vunpack.c.l.b16 %v63
    %v231 = vunpack.c.l.b16 %v64
    %v232 = vunpack.c.l.b16 %v65
    %v233 = vunpack.c.l.b16 %v66
    %v234 = vunpack.c.l.b16 %v67
    %v235 = vpack.c.b16 %v204, %v203
    %v236 = vpack.c.b16 %v206, %v205
    %v237 = vpack.c.b16 %v208, %v207
    %v238 = vpack.c.b16 %v210, %v209
    %v239 = vpack.c.b16 %v212, %v211
    %v240 = vpack.c.b16 %v214, %v213
    %v241 = vpack.c.b16 %v216, %v215
    %v242 = vpack.c.b16 %v218, %v217
    %v243 = vpack.c.b16 %v220, %v219
    %v244 = vpack.c.b16 %v222, %v221
    %v245 = vpack.c.b16 %v224, %v223
    %v246 = vpack.c.b16 %v226, %v225
    %v247 = vpack.c.b16 %v228, %v227
    %v248 = vpack.c.b16 %v230, %v229
    %v249 = vpack.c.b16 %v232, %v231
    %v250 = vpack.c.b16 %v234, %v233
    %267 = vmatprep.subr.bf16.mxu0 0
    %268 = vmatpush1.bf16.msra.mxu0 %v235
    %269 = vmatprep.subr.bf16.mxu0 0
    %270 = vmatpush1.bf16.msra.mxu0 %v236
    %271 = vmatprep.subr.bf16.mxu0 0
    %272 = vmatpush1.bf16.msra.mxu0 %v237
    %273 = vmatprep.subr.bf16.mxu0 0
    %274 = vmatpush1.bf16.msra.mxu0 %v238
    %275 = vmatprep.subr.bf16.mxu0 0
    %276 = vmatpush1.bf16.msra.mxu0 %v239
    %277 = vmatprep.subr.bf16.mxu0 0
    %278 = vmatpush1.bf16.msra.mxu0 %v240
    %279 = vmatprep.subr.bf16.mxu0 0
    %280 = vmatpush1.bf16.msra.mxu0 %v241
    %281 = vmatprep.subr.bf16.mxu0 0
    %282 = vmatpush1.bf16.msra.mxu0 %v242
    %283 = vmatprep.subr.bf16.mxu0 0
    %284 = vmatpush1.bf16.msra.mxu0 %v243
    %285 = vmatprep.subr.bf16.mxu0 0
    %286 = vmatpush1.bf16.msra.mxu0 %v244
    %287 = vmatprep.subr.bf16.mxu0 0
    %288 = vmatpush1.bf16.msra.mxu0 %v245
    %289 = vmatprep.subr.bf16.mxu0 0
    %290 = vmatpush1.bf16.msra.mxu0 %v246
    %291 = vmatprep.subr.bf16.mxu0 0
    %292 = vmatpush1.bf16.msra.mxu0 %v247
    %293 = vmatprep.subr.bf16.mxu0 0
    %294 = vmatpush1.bf16.msra.mxu0 %v248
    %295 = vmatprep.subr.bf16.mxu0 0
    %296 = vmatpush1.bf16.msra.mxu0 %v249
    %297 = vmatprep.subr.bf16.mxu0 0
    %298 = vmatpush1.bf16.msra.mxu0 %v250
    %299 = vmatprep.mubr.bf16.mxu0 %v140
    %300 = vmatmul.mubr.bf16.gmra.mrb[0].mxu0 %v139
    %v301 = vpop.f32.mrb[0].mxu0
    %v302 = vadd.f32 %v89, %v301
    %v303 = vpop.f32.mrb[0].mxu0
    %v304 = vpop.f32.mrb[0].mxu0
    %v305 = vadd.f32 %v89, %v304
    %v306 = vpop.f32.mrb[0].mxu0
    %307 = vmatprep.mubr.bf16.mxu0 %v142
    %308 = vmatmul.mubr.bf16.gmra.mrb[0].mxu0 %v141
    %v309 = vpop.f32.mrb[0].mxu0
    %v310 = vadd.f32 %v89, %v309
    %v311 = vpop.f32.mrb[0].mxu0
    %v312 = vpop.f32.mrb[0].mxu0
    %v313 = vadd.f32 %v89, %v312
    %v314 = vpop.f32.mrb[0].mxu0
    %315 = vmatprep.mubr.bf16.mxu0 %v144
    %316 = vmatmul.mubr.bf16.gmra.mrb[0].mxu0 %v143
    %v317 = vpop.f32.mrb[0].mxu0
    %v318 = vadd.f32 %v89, %v317
    %v319 = vpop.f32.mrb[0].mxu0
    %v320 = vpop.f32.mrb[0].mxu0
    %v321 = vadd.f32 %v89, %v320
    %v322 = vpop.f32.mrb[0].mxu0
    %323 = vmatprep.mubr.bf16.mxu0 %v146
    %324 = vmatmul.mubr.bf16.gmra.mrb[0].mxu0 %v145
    %v325 = vpop.f32.mrb[0].mxu0
    %v326 = vadd.f32 %v89, %v325
    %v327 = vpop.f32.mrb[0].mxu0
    %v328 = vpop.f32.mrb[0].mxu0
    %v329 = vadd.f32 %v89, %v328
    %v330 = vpop.f32.mrb[0].mxu0
    %331 = vmatprep.mubr.bf16.mxu0 %v148
    %332 = vmatmul.mubr.bf16.gmra.mrb[0].mxu0 %v147
    %v333 = vpop.f32.mrb[0].mxu0
    %v334 = vadd.f32 %v89, %v333
    %v335 = vpop.f32.mrb[0].mxu0
    %v336 = vpop.f32.mrb[0].mxu0
    %v337 = vadd.f32 %v89, %v336
    %v338 = vpop.f32.mrb[0].mxu0
    %339 = vmatprep.mubr.bf16.mxu0 %v150
    %340 = vmatmul.mubr.bf16.gmra.mrb[0].mxu0 %v149
    %v341 = vpop.f32.mrb[0].mxu0
    %v342 = vadd.f32 %v89, %v341
    %v343 = vpop.f32.mrb[0].mxu0
    %v344 = vpop.f32.mrb[0].mxu0
    %v345 = vadd.f32 %v89, %v344
    %v346 = vpop.f32.mrb[0].mxu0
    %347 = vmatprep.mubr.bf16.mxu0 %v152
    %348 = vmatmul.mubr.bf16.gmra.mrb[0].mxu0 %v151
    %v349 = vpop.f32.mrb[0].mxu0
    %v350 = vadd.f32 %v89, %v349
    %v351 = vpop.f32.mrb[0].mxu0
    %v352 = vpop.f32.mrb[0].mxu0
    %v353 = vadd.f32 %v89, %v352
    %v354 = vpop.f32.mrb[0].mxu0
    %355 = vmatprep.mubr.bf16.mxu0 %v154
    %356 = vmatmul.mubr.bf16.gmra.mrb[0].mxu0 %v153
    %v357 = vpop.f32.mrb[0].mxu0
    %v358 = vadd.f32 %v89, %v357
    %v359 = vpop.f32.mrb[0].mxu0
    %v360 = vpop.f32.mrb[0].mxu0
    %v361 = vadd.f32 %v89, %v360
    %v362 = vpop.f32.mrb[0].mxu0
    %363 = vdwg.mxu0
    %v364 = vmax.f32 %v302, 0.0
    %v365 = vmax.f32 %v305, 0.0
    %v366 = vmax.f32 %v310, 0.0
    %v367 = vmax.f32 %v313, 0.0
    %v368 = vmax.f32 %v318, 0.0
    %v369 = vmax.f32 %v321, 0.0
    %v370 = vmax.f32 %v326, 0.0
    %v371 = vmax.f32 %v329, 0.0
    %v372 = vmax.f32 %v334, 0.0
    %v373 = vmax.f32 %v337, 0.0
    %v374 = vmax.f32 %v342, 0.0
    %v375 = vmax.f32 %v345, 0.0
    %v376 = vmax.f32 %v350, 0.0
    %v377 = vmax.f32 %v353, 0.0
    %v378 = vmax.f32 %v358, 0.0
    %v379 = vmax.f32 %v361, 0.0
    %380 = vst [vmem:[#allocation2] sm:$0xff] %v364
    %381 = vst [vmem:[#allocation2 + $0x8] sm:$0xff] %v365
    %382 = vst [vmem:[#allocation2 + $0x10] sm:$0xff] %v366
    %383 = vst [vmem:[#allocation2 + $0x18] sm:$0xff] %v367
    %384 = vst [vmem:[#allocation2 + $0x20] sm:$0xff] %v368
    %385 = vst [vmem:[#allocation2 + $0x28] sm:$0xff] %v369
    %386 = vst [vmem:[#allocation2 + $0x30] sm:$0xff] %v370
    %387 = vst [vmem:[#allocation2 + $0x38] sm:$0xff] %v371
    %388 = vst [vmem:[#allocation2 + $0x40] sm:$0xff] %v372
    %389 = vst [vmem:[#allocation2 + $0x48] sm:$0xff] %v373
    %390 = vst [vmem:[#allocation2 + $0x50] sm:$0xff] %v374
    %391 = vst [vmem:[#allocation2 + $0x58] sm:$0xff] %v375
    %392 = vst [vmem:[#allocation2 + $0x60] sm:$0xff] %v376
    %393 = vst [vmem:[#allocation2 + $0x68] sm:$0xff] %v377
    %394 = vst [vmem:[#allocation2 + $0x70] sm:$0xff] %v378
    %395 = vst [vmem:[#allocation2 + $0x78] sm:$0xff] %v379
    %v396 = vld [vmem:[%s0 + $0x80] sm:$0xff]
    %v397 = vld [vmem:[%s0 + $0x88] sm:$0xff]
    %v398 = vld [vmem:[%s0 + $0x90] sm:$0xff]
    %v399 = vld [vmem:[%s0 + $0x98] sm:$0xff]
    %v400 = vld [vmem:[%s0 + $0xa0] sm:$0xff]
    %v401 = vld [vmem:[%s0 + $0xa8] sm:$0xff]
    %v402 = vld [vmem:[%s0 + $0xb0] sm:$0xff]
    %v403 = vld [vmem:[%s0 + $0xb8] sm:$0xff]
    %v404 = vld [vmem:[%s0 + $0xc0] sm:$0xff]
    %v405 = vld [vmem:[%s0 + $0xc8] sm:$0xff]
    %v406 = vld [vmem:[%s0 + $0xd0] sm:$0xff]
    %v407 = vld [vmem:[%s0 + $0xd8] sm:$0xff]
    %v408 = vld [vmem:[%s0 + $0xe0] sm:$0xff]
    %v409 = vld [vmem:[%s0 + $0xe8] sm:$0xff]
    %v410 = vld [vmem:[%s0 + $0xf0] sm:$0xff]
    %v411 = vld [vmem:[%s0 + $0xf8] sm:$0xff]
    %v428 = vunpack.c.l.b16 %v396
    %v429 = vunpack.c.h.b16 %v396
    %v430 = vunpack.c.l.b16 %v397
    %v431 = vunpack.c.h.b16 %v397
    %v432 = vunpack.c.l.b16 %v398
    %v433 = vunpack.c.h.b16 %v398
    %v434 = vunpack.c.l.b16 %v399
    %v435 = vunpack.c.h.b16 %v399
    %v436 = vunpack.c.l.b16 %v400
    %v437 = vunpack.c.h.b16 %v400
    %v438 = vunpack.c.l.b16 %v401
    %v439 = vunpack.c.h.b16 %v401
    %v440 = vunpack.c.l.b16 %v402
    %v441 = vunpack.c.h.b16 %v402
    %v442 = vunpack.c.l.b16 %v403
    %v443 = vunpack.c.h.b16 %v403
    %v444 = vunpack.c.l.b16 %v404
    %v445 = vunpack.c.h.b16 %v404
    %v446 = vunpack.c.l.b16 %v405
    %v447 = vunpack.c.h.b16 %v405
    %v448 = vunpack.c.l.b16 %v406
    %v449 = vunpack.c.h.b16 %v406
    %v450 = vunpack.c.l.b16 %v407
    %v451 = vunpack.c.h.b16 %v407
    %v452 = vunpack.c.l.b16 %v408
    %v453 = vunpack.c.h.b16 %v408
    %v454 = vunpack.c.l.b16 %v409
    %v455 = vunpack.c.h.b16 %v409
    %v456 = vunpack.c.l.b16 %v410
    %v457 = vunpack.c.h.b16 %v410
    %v458 = vunpack.c.l.b16 %v411
    %v459 = vunpack.c.h.b16 %v411
    %v460 = vpack.c.b16 %v430, %v428
    %v461 = vpack.c.b16 %v431, %v429
    %v462 = vpack.c.b16 %v434, %v432
    %v463 = vpack.c.b16 %v435, %v433
    %v464 = vpack.c.b16 %v438, %v436
    %v465 = vpack.c.b16 %v439, %v437
    %v466 = vpack.c.b16 %v442, %v440
    %v467 = vpack.c.b16 %v443, %v441
    %v468 = vpack.c.b16 %v446, %v444
    %v469 = vpack.c.b16 %v447, %v445
    %v470 = vpack.c.b16 %v450, %v448
    %v471 = vpack.c.b16 %v451, %v449
    %v472 = vpack.c.b16 %v454, %v452
    %v473 = vpack.c.b16 %v455, %v453
    %v474 = vpack.c.b16 %v458, %v456
    %v475 = vpack.c.b16 %v459, %v457
    %492 = vmatprep.subr.bf16.mxu0 0
    %493 = vmatpush1.bf16.msra.mxu0 %v235
    %494 = vmatprep.subr.bf16.mxu0 0
    %495 = vmatpush1.bf16.msra.mxu0 %v236
    %496 = vmatprep.subr.bf16.mxu0 0
    %497 = vmatpush1.bf16.msra.mxu0 %v237
    %498 = vmatprep.subr.bf16.mxu0 0
    %499 = vmatpush1.bf16.msra.mxu0 %v238
    %500 = vmatprep.subr.bf16.mxu0 0
    %501 = vmatpush1.bf16.msra.mxu0 %v239
    %502 = vmatprep.subr.bf16.mxu0 0
    %503 = vmatpush1.bf16.msra.mxu0 %v240
    %504 = vmatprep.subr.bf16.mxu0 0
    %505 = vmatpush1.bf16.msra.mxu0 %v241
    %506 = vmatprep.subr.bf16.mxu0 0
    %507 = vmatpush1.bf16.msra.mxu0 %v242
    %508 = vmatprep.subr.bf16.mxu0 0
    %509 = vmatpush1.bf16.msra.mxu0 %v243
    %510 = vmatprep.subr.bf16.mxu0 0
    %511 = vmatpush1.bf16.msra.mxu0 %v244
    %512 = vmatprep.subr.bf16.mxu0 0
    %513 = vmatpush1.bf16.msra.mxu0 %v245
    %514 = vmatprep.subr.bf16.mxu0 0
    %515 = vmatpush1.bf16.msra.mxu0 %v246
    %516 = vmatprep.subr.bf16.mxu0 0
    %517 = vmatpush1.bf16.msra.mxu0 %v247
    %518 = vmatprep.subr.bf16.mxu0 0
    %519 = vmatpush1.bf16.msra.mxu0 %v248
    %520 = vmatprep.subr.bf16.mxu0 0
    %521 = vmatpush1.bf16.msra.mxu0 %v249
    %522 = vmatprep.subr.bf16.mxu0 0
    %523 = vmatpush1.bf16.msra.mxu0 %v250
    %524 = vmatprep.mubr.bf16.mxu0 %v461
    %525 = vmatmul.mubr.bf16.gmra.mrb[0].mxu0 %v460
    %v526 = vpop.f32.mrb[0].mxu0
    %v527 = vadd.f32 %v89, %v526
    %v528 = vpop.f32.mrb[0].mxu0
    %v529 = vpop.f32.mrb[0].mxu0
    %v530 = vadd.f32 %v89, %v529
    %v531 = vpop.f32.mrb[0].mxu0
    %532 = vmatprep.mubr.bf16.mxu0 %v463
    %533 = vmatmul.mubr.bf16.gmra.mrb[0].mxu0 %v462
    %v534 = vpop.f32.mrb[0].mxu0
    %v535 = vadd.f32 %v89, %v534
    %v536 = vpop.f32.mrb[0].mxu0
    %v537 = vpop.f32.mrb[0].mxu0
    %v538 = vadd.f32 %v89, %v537
    %v539 = vpop.f32.mrb[0].mxu0
    %540 = vmatprep.mubr.bf16.mxu0 %v465
    %541 = vmatmul.mubr.bf16.gmra.mrb[0].mxu0 %v464
    %v542 = vpop.f32.mrb[0].mxu0
    %v543 = vadd.f32 %v89, %v542
    %v544 = vpop.f32.mrb[0].mxu0
    %v545 = vpop.f32.mrb[0].mxu0
    %v546 = vadd.f32 %v89, %v545
    %v547 = vpop.f32.mrb[0].mxu0
    %548 = vmatprep.mubr.bf16.mxu0 %v467
    %549 = vmatmul.mubr.bf16.gmra.mrb[0].mxu0 %v466
    %v550 = vpop.f32.mrb[0].mxu0
    %v551 = vadd.f32 %v89, %v550
    %v552 = vpop.f32.mrb[0].mxu0
    %v553 = vpop.f32.mrb[0].mxu0
    %v554 = vadd.f32 %v89, %v553
    %v555 = vpop.f32.mrb[0].mxu0
    %556 = vmatprep.mubr.bf16.mxu0 %v469
    %557 = vmatmul.mubr.bf16.gmra.mrb[0].mxu0 %v468
    %v558 = vpop.f32.mrb[0].mxu0
    %v559 = vadd.f32 %v89, %v558
    %v560 = vpop.f32.mrb[0].mxu0
    %v561 = vpop.f32.mrb[0].mxu0
    %v562 = vadd.f32 %v89, %v561
    %v563 = vpop.f32.mrb[0].mxu0
    %564 = vmatprep.mubr.bf16.mxu0 %v471
    %565 = vmatmul.mubr.bf16.gmra.mrb[0].mxu0 %v470
    %v566 = vpop.f32.mrb[0].mxu0
    %v567 = vadd.f32 %v89, %v566
    %v568 = vpop.f32.mrb[0].mxu0
    %v569 = vpop.f32.mrb[0].mxu0
    %v570 = vadd.f32 %v89, %v569
    %v571 = vpop.f32.mrb[0].mxu0
    %572 = vmatprep.mubr.bf16.mxu0 %v473
    %573 = vmatmul.mubr.bf16.gmra.mrb[0].mxu0 %v472
    %v574 = vpop.f32.mrb[0].mxu0
    %v575 = vadd.f32 %v89, %v574
    %v576 = vpop.f32.mrb[0].mxu0
    %v577 = vpop.f32.mrb[0].mxu0
    %v578 = vadd.f32 %v89, %v577
    %v579 = vpop.f32.mrb[0].mxu0
    %580 = vmatprep.mubr.bf16.mxu0 %v475
    %581 = vmatmul.mubr.bf16.gmra.mrb[0].mxu0 %v474
    %v582 = vpop.f32.mrb[0].mxu0
    %v583 = vadd.f32 %v89, %v582
    %v584 = vpop.f32.mrb[0].mxu0
    %v585 = vpop.f32.mrb[0].mxu0
    %v586 = vadd.f32 %v89, %v585
    %v587 = vpop.f32.mrb[0].mxu0
    %588 = vdwg.mxu0
    %v589 = vmax.f32 %v527, 0.0
    %v590 = vmax.f32 %v530, 0.0
    %v591 = vmax.f32 %v535, 0.0
    %v592 = vmax.f32 %v538, 0.0
    %v593 = vmax.f32 %v543, 0.0
    %v594 = vmax.f32 %v546, 0.0
    %v595 = vmax.f32 %v551, 0.0
    %v596 = vmax.f32 %v554, 0.0
    %v597 = vmax.f32 %v559, 0.0
    %v598 = vmax.f32 %v562, 0.0
    %v599 = vmax.f32 %v567, 0.0
    %v600 = vmax.f32 %v570, 0.0
    %v601 = vmax.f32 %v575, 0.0
    %v602 = vmax.f32 %v578, 0.0
    %v603 = vmax.f32 %v583, 0.0
    %v604 = vmax.f32 %v586, 0.0
    %605 = vst [vmem:[#allocation2 + $0x80] sm:$0xff] %v589
    %606 = vst [vmem:[#allocation2 + $0x88] sm:$0xff] %v590
    %607 = vst [vmem:[#allocation2 + $0x90] sm:$0xff] %v591
    %608 = vst [vmem:[#allocation2 + $0x98] sm:$0xff] %v592
    %609 = vst [vmem:[#allocation2 + $0xa0] sm:$0xff] %v593
    %610 = vst [vmem:[#allocation2 + $0xa8] sm:$0xff] %v594
    %611 = vst [vmem:[#allocation2 + $0xb0] sm:$0xff] %v595
    %612 = vst [vmem:[#allocation2 + $0xb8] sm:$0xff] %v596
    %613 = vst [vmem:[#allocation2 + $0xc0] sm:$0xff] %v597
    %614 = vst [vmem:[#allocation2 + $0xc8] sm:$0xff] %v598
    %615 = vst [vmem:[#allocation2 + $0xd0] sm:$0xff] %v599
    %616 = vst [vmem:[#allocation2 + $0xd8] sm:$0xff] %v600
    %617 = vst [vmem:[#allocation2 + $0xe0] sm:$0xff] %v601
    %618 = vst [vmem:[#allocation2 + $0xe8] sm:$0xff] %v602
    %619 = vst [vmem:[#allocation2 + $0xf0] sm:$0xff] %v603
    %620 = vst [vmem:[#allocation2 + $0xf8] sm:$0xff] %v604
    %v621 = vld [vmem:[%s0 + $0x100] sm:$0xff]
    %v622 = vld [vmem:[%s0 + $0x108] sm:$0xff]
    %v623 = vld [vmem:[%s0 + $0x110] sm:$0xff]
    %v624 = vld [vmem:[%s0 + $0x118] sm:$0xff]
    %v625 = vld [vmem:[%s0 + $0x120] sm:$0xff]
    %v626 = vld [vmem:[%s0 + $0x128] sm:$0xff]
    %v627 = vld [vmem:[%s0 + $0x130] sm:$0xff]
    %v628 = vld [vmem:[%s0 + $0x138] sm:$0xff]
    %v629 = vld [vmem:[%s0 + $0x140] sm:$0xff]
    %v630 = vld [vmem:[%s0 + $0x148] sm:$0xff]
    %v631 = vld [vmem:[%s0 + $0x150] sm:$0xff]
    %v632 = vld [vmem:[%s0 + $0x158] sm:$0xff]
    %v633 = vld [vmem:[%s0 + $0x160] sm:$0xff]
    %v634 = vld [vmem:[%s0 + $0x168] sm:$0xff]
    %v635 = vld [vmem:[%s0 + $0x170] sm:$0xff]
    %v636 = vld [vmem:[%s0 + $0x178] sm:$0xff]
    %v653 = vunpack.c.l.b16 %v621
    %v654 = vunpack.c.h.b16 %v621
    %v655 = vunpack.c.l.b16 %v622
    %v656 = vunpack.c.h.b16 %v622
    %v657 = vunpack.c.l.b16 %v623
    %v658 = vunpack.c.h.b16 %v623
    %v659 = vunpack.c.l.b16 %v624
    %v660 = vunpack.c.h.b16 %v624
    %v661 = vunpack.c.l.b16 %v625
    %v662 = vunpack.c.h.b16 %v625
    %v663 = vunpack.c.l.b16 %v626
    %v664 = vunpack.c.h.b16 %v626
    %v665 = vunpack.c.l.b16 %v627
    %v666 = vunpack.c.h.b16 %v627
    %v667 = vunpack.c.l.b16 %v628
    %v668 = vunpack.c.h.b16 %v628
    %v669 = vunpack.c.l.b16 %v629
    %v670 = vunpack.c.h.b16 %v629
    %v671 = vunpack.c.l.b16 %v630
    %v672 = vunpack.c.h.b16 %v630
    %v673 = vunpack.c.l.b16 %v631
    %v674 = vunpack.c.h.b16 %v631
    %v675 = vunpack.c.l.b16 %v632
    %v676 = vunpack.c.h.b16 %v632
    %v677 = vunpack.c.l.b16 %v633
    %v678 = vunpack.c.h.b16 %v633
    %v679 = vunpack.c.l.b16 %v634
    %v680 = vunpack.c.h.b16 %v634
    %v681 = vunpack.c.l.b16 %v635
    %v682 = vunpack.c.h.b16 %v635
    %v683 = vunpack.c.l.b16 %v636
    %v684 = vunpack.c.h.b16 %v636
    %v685 = vpack.c.b16 %v655, %v653
    %v686 = vpack.c.b16 %v656, %v654
    %v687 = vpack.c.b16 %v659, %v657
    %v688 = vpack.c.b16 %v660, %v658
    %v689 = vpack.c.b16 %v663, %v661
    %v690 = vpack.c.b16 %v664, %v662
    %v691 = vpack.c.b16 %v667, %v665
    %v692 = vpack.c.b16 %v668, %v666
    %v693 = vpack.c.b16 %v671, %v669
    %v694 = vpack.c.b16 %v672, %v670
    %v695 = vpack.c.b16 %v675, %v673
    %v696 = vpack.c.b16 %v676, %v674
    %v697 = vpack.c.b16 %v679, %v677
    %v698 = vpack.c.b16 %v680, %v678
    %v699 = vpack.c.b16 %v683, %v681
    %v700 = vpack.c.b16 %v684, %v682
    %717 = vmatprep.subr.bf16.mxu0 0
    %718 = vmatpush1.bf16.msra.mxu0 %v235
    %719 = vmatprep.subr.bf16.mxu0 0
    %720 = vmatpush1.bf16.msra.mxu0 %v236
    %721 = vmatprep.subr.bf16.mxu0 0
    %722 = vmatpush1.bf16.msra.mxu0 %v237
    %723 = vmatprep.subr.bf16.mxu0 0
    %724 = vmatpush1.bf16.msra.mxu0 %v238
    %725 = vmatprep.subr.bf16.mxu0 0
    %726 = vmatpush1.bf16.msra.mxu0 %v239
    %727 = vmatprep.subr.bf16.mxu0 0
    %728 = vmatpush1.bf16.msra.mxu0 %v240
    %729 = vmatprep.subr.bf16.mxu0 0
    %730 = vmatpush1.bf16.msra.mxu0 %v241
    %731 = vmatprep.subr.bf16.mxu0 0
    %732 = vmatpush1.bf16.msra.mxu0 %v242
    %733 = vmatprep.subr.bf16.mxu0 0
    %734 = vmatpush1.bf16.msra.mxu0 %v243
    %735 = vmatprep.subr.bf16.mxu0 0
    %736 = vmatpush1.bf16.msra.mxu0 %v244
    %737 = vmatprep.subr.bf16.mxu0 0
    %738 = vmatpush1.bf16.msra.mxu0 %v245
    %739 = vmatprep.subr.bf16.mxu0 0
    %740 = vmatpush1.bf16.msra.mxu0 %v246
    %741 = vmatprep.subr.bf16.mxu0 0
    %742 = vmatpush1.bf16.msra.mxu0 %v247
    %743 = vmatprep.subr.bf16.mxu0 0
    %744 = vmatpush1.bf16.msra.mxu0 %v248
    %745 = vmatprep.subr.bf16.mxu0 0
    %746 = vmatpush1.bf16.msra.mxu0 %v249
    %747 = vmatprep.subr.bf16.mxu0 0
    %748 = vmatpush1.bf16.msra.mxu0 %v250
    %749 = vmatprep.mubr.bf16.mxu0 %v686
    %750 = vmatmul.mubr.bf16.gmra.mrb[0].mxu0 %v685
    %v751 = vpop.f32.mrb[0].mxu0
    %v752 = vadd.f32 %v89, %v751
    %v753 = vpop.f32.mrb[0].mxu0
    %v754 = vpop.f32.mrb[0].mxu0
    %v755 = vadd.f32 %v89, %v754
    %v756 = vpop.f32.mrb[0].mxu0
    %757 = vmatprep.mubr.bf16.mxu0 %v688
    %758 = vmatmul.mubr.bf16.gmra.mrb[0].mxu0 %v687
    %v759 = vpop.f32.mrb[0].mxu0
    %v760 = vadd.f32 %v89, %v759
    %v761 = vpop.f32.mrb[0].mxu0
    %v762 = vpop.f32.mrb[0].mxu0
    %v763 = vadd.f32 %v89, %v762
    %v764 = vpop.f32.mrb[0].mxu0
    %765 = vmatprep.mubr.bf16.mxu0 %v690
    %766 = vmatmul.mubr.bf16.gmra.mrb[0].mxu0 %v689
    %v767 = vpop.f32.mrb[0].mxu0
    %v768 = vadd.f32 %v89, %v767
    %v769 = vpop.f32.mrb[0].mxu0
    %v770 = vpop.f32.mrb[0].mxu0
    %v771 = vadd.f32 %v89, %v770
    %v772 = vpop.f32.mrb[0].mxu0
    %773 = vmatprep.mubr.bf16.mxu0 %v692
    %774 = vmatmul.mubr.bf16.gmra.mrb[0].mxu0 %v691
    %v775 = vpop.f32.mrb[0].mxu0
    %v776 = vadd.f32 %v89, %v775
    %v777 = vpop.f32.mrb[0].mxu0
    %v778 = vpop.f32.mrb[0].mxu0
    %v779 = vadd.f32 %v89, %v778
    %v780 = vpop.f32.mrb[0].mxu0
    %781 = vmatprep.mubr.bf16.mxu0 %v694
    %782 = vmatmul.mubr.bf16.gmra.mrb[0].mxu0 %v693
    %v783 = vpop.f32.mrb[0].mxu0
    %v784 = vadd.f32 %v89, %v783
    %v785 = vpop.f32.mrb[0].mxu0
    %v786 = vpop.f32.mrb[0].mxu0
    %v787 = vadd.f32 %v89, %v786
    %v788 = vpop.f32.mrb[0].mxu0
    %789 = vmatprep.mubr.bf16.mxu0 %v696
    %790 = vmatmul.mubr.bf16.gmra.mrb[0].mxu0 %v695
    %v791 = vpop.f32.mrb[0].mxu0
    %v792 = vadd.f32 %v89, %v791
    %v793 = vpop.f32.mrb[0].mxu0
    %v794 = vpop.f32.mrb[0].mxu0
    %v795 = vadd.f32 %v89, %v794
    %v796 = vpop.f32.mrb[0].mxu0
    %797 = vmatprep.mubr.bf16.mxu0 %v698
    %798 = vmatmul.mubr.bf16.gmra.mrb[0].mxu0 %v697
    %v799 = vpop.f32.mrb[0].mxu0
    %v800 = vadd.f32 %v89, %v799
    %v801 = vpop.f32.mrb[0].mxu0
    %v802 = vpop.f32.mrb[0].mxu0
    %v803 = vadd.f32 %v89, %v802
    %v804 = vpop.f32.mrb[0].mxu0
    %805 = vmatprep.mubr.bf16.mxu0 %v700
    %806 = vmatmul.mubr.bf16.gmra.mrb[0].mxu0 %v699
    %v807 = vpop.f32.mrb[0].mxu0
    %v808 = vadd.f32 %v89, %v807
    %v809 = vpop.f32.mrb[0].mxu0
    %v810 = vpop.f32.mrb[0].mxu0
    %v811 = vadd.f32 %v89, %v810
    %v812 = vpop.f32.mrb[0].mxu0
    %813 = vdwg.mxu0
    %v814 = vmax.f32 %v752, 0.0
    %v815 = vmax.f32 %v755, 0.0
    %v816 = vmax.f32 %v760, 0.0
    %v817 = vmax.f32 %v763, 0.0
    %v818 = vmax.f32 %v768, 0.0
    %v819 = vmax.f32 %v771, 0.0
    %v820 = vmax.f32 %v776, 0.0
    %v821 = vmax.f32 %v779, 0.0
    %v822 = vmax.f32 %v784, 0.0
    %v823 = vmax.f32 %v787, 0.0
    %v824 = vmax.f32 %v792, 0.0
    %v825 = vmax.f32 %v795, 0.0
    %v826 = vmax.f32 %v800, 0.0
    %v827 = vmax.f32 %v803, 0.0
    %v828 = vmax.f32 %v808, 0.0
    %v829 = vmax.f32 %v811, 0.0
    %830 = vst [vmem:[#allocation2 + $0x100] sm:$0xff] %v814
    %831 = vst [vmem:[#allocation2 + $0x108] sm:$0xff] %v815
    %832 = vst [vmem:[#allocation2 + $0x110] sm:$0xff] %v816
    %833 = vst [vmem:[#allocation2 + $0x118] sm:$0xff] %v817
    %834 = vst [vmem:[#allocation2 + $0x120] sm:$0xff] %v818
    %835 = vst [vmem:[#allocation2 + $0x128] sm:$0xff] %v819
    %836 = vst [vmem:[#allocation2 + $0x130] sm:$0xff] %v820
    %837 = vst [vmem:[#allocation2 + $0x138] sm:$0xff] %v821
    %838 = vst [vmem:[#allocation2 + $0x140] sm:$0xff] %v822
    %839 = vst [vmem:[#allocation2 + $0x148] sm:$0xff] %v823
    %840 = vst [vmem:[#allocation2 + $0x150] sm:$0xff] %v824
    %841 = vst [vmem:[#allocation2 + $0x158] sm:$0xff] %v825
    %842 = vst [vmem:[#allocation2 + $0x160] sm:$0xff] %v826
    %843 = vst [vmem:[#allocation2 + $0x168] sm:$0xff] %v827
    %844 = vst [vmem:[#allocation2 + $0x170] sm:$0xff] %v828
    %845 = vst [vmem:[#allocation2 + $0x178] sm:$0xff] %v829
    %v846 = vld [vmem:[%s0 + $0x180] sm:$0xff]
    %v847 = vld [vmem:[%s0 + $0x188] sm:$0xff]
    %v848 = vld [vmem:[%s0 + $0x190] sm:$0xff]
    %v849 = vld [vmem:[%s0 + $0x198] sm:$0xff]
    %v850 = vld [vmem:[%s0 + $0x1a0] sm:$0xff]
    %v851 = vld [vmem:[%s0 + $0x1a8] sm:$0xff]
    %v852 = vld [vmem:[%s0 + $0x1b0] sm:$0xff]
    %v853 = vld [vmem:[%s0 + $0x1b8] sm:$0xff]
    %v854 = vld [vmem:[%s0 + $0x1c0] sm:$0xff]
    %v855 = vld [vmem:[%s0 + $0x1c8] sm:$0xff]
    %v856 = vld [vmem:[%s0 + $0x1d0] sm:$0xff]
    %v857 = vld [vmem:[%s0 + $0x1d8] sm:$0xff]
    %v858 = vld [vmem:[%s0 + $0x1e0] sm:$0xff]
    %v859 = vld [vmem:[%s0 + $0x1e8] sm:$0xff]
    %v860 = vld [vmem:[%s0 + $0x1f0] sm:$0xff]
    %v861 = vld [vmem:[%s0 + $0x1f8] sm:$0xff]
    %v878 = vunpack.c.l.b16 %v846
    %v879 = vunpack.c.h.b16 %v846
    %v880 = vunpack.c.l.b16 %v847
    %v881 = vunpack.c.h.b16 %v847
    %v882 = vunpack.c.l.b16 %v848
    %v883 = vunpack.c.h.b16 %v848
    %v884 = vunpack.c.l.b16 %v849
    %v885 = vunpack.c.h.b16 %v849
    %v886 = vunpack.c.l.b16 %v850
    %v887 = vunpack.c.h.b16 %v850
    %v888 = vunpack.c.l.b16 %v851
    %v889 = vunpack.c.h.b16 %v851
    %v890 = vunpack.c.l.b16 %v852
    %v891 = vunpack.c.h.b16 %v852
    %v892 = vunpack.c.l.b16 %v853
    %v893 = vunpack.c.h.b16 %v853
    %v894 = vunpack.c.l.b16 %v854
    %v895 = vunpack.c.h.b16 %v854
    %v896 = vunpack.c.l.b16 %v855
    %v897 = vunpack.c.h.b16 %v855
    %v898 = vunpack.c.l.b16 %v856
    %v899 = vunpack.c.h.b16 %v856
    %v900 = vunpack.c.l.b16 %v857
    %v901 = vunpack.c.h.b16 %v857
    %v902 = vunpack.c.l.b16 %v858
    %v903 = vunpack.c.h.b16 %v858
    %v904 = vunpack.c.l.b16 %v859
    %v905 = vunpack.c.h.b16 %v859
    %v906 = vunpack.c.l.b16 %v860
    %v907 = vunpack.c.h.b16 %v860
    %v908 = vunpack.c.l.b16 %v861
    %v909 = vunpack.c.h.b16 %v861
    %v910 = vpack.c.b16 %v880, %v878
    %v911 = vpack.c.b16 %v881, %v879
    %v912 = vpack.c.b16 %v884, %v882
    %v913 = vpack.c.b16 %v885, %v883
    %v914 = vpack.c.b16 %v888, %v886
    %v915 = vpack.c.b16 %v889, %v887
    %v916 = vpack.c.b16 %v892, %v890
    %v917 = vpack.c.b16 %v893, %v891
    %v918 = vpack.c.b16 %v896, %v894
    %v919 = vpack.c.b16 %v897, %v895
    %v920 = vpack.c.b16 %v900, %v898
    %v921 = vpack.c.b16 %v901, %v899
    %v922 = vpack.c.b16 %v904, %v902
    %v923 = vpack.c.b16 %v905, %v903
    %v924 = vpack.c.b16 %v908, %v906
    %v925 = vpack.c.b16 %v909, %v907
    %942 = vmatprep.subr.bf16.mxu0 0
    %943 = vmatpush1.bf16.msra.mxu0 %v235
    %944 = vmatprep.subr.bf16.mxu0 0
    %945 = vmatpush1.bf16.msra.mxu0 %v236
    %946 = vmatprep.subr.bf16.mxu0 0
    %947 = vmatpush1.bf16.msra.mxu0 %v237
    %948 = vmatprep.subr.bf16.mxu0 0
    %949 = vmatpush1.bf16.msra.mxu0 %v238
    %950 = vmatprep.subr.bf16.mxu0 0
    %951 = vmatpush1.bf16.msra.mxu0 %v239
    %952 = vmatprep.subr.bf16.mxu0 0
    %953 = vmatpush1.bf16.msra.mxu0 %v240
    %954 = vmatprep.subr.bf16.mxu0 0
    %955 = vmatpush1.bf16.msra.mxu0 %v241
    %956 = vmatprep.subr.bf16.mxu0 0
    %957 = vmatpush1.bf16.msra.mxu0 %v242
    %958 = vmatprep.subr.bf16.mxu0 0
    %959 = vmatpush1.bf16.msra.mxu0 %v243
    %960 = vmatprep.subr.bf16.mxu0 0
    %961 = vmatpush1.bf16.msra.mxu0 %v244
    %962 = vmatprep.subr.bf16.mxu0 0
    %963 = vmatpush1.bf16.msra.mxu0 %v245
    %964 = vmatprep.subr.bf16.mxu0 0
    %965 = vmatpush1.bf16.msra.mxu0 %v246
    %966 = vmatprep.subr.bf16.mxu0 0
    %967 = vmatpush1.bf16.msra.mxu0 %v247
    %968 = vmatprep.subr.bf16.mxu0 0
    %969 = vmatpush1.bf16.msra.mxu0 %v248
    %970 = vmatprep.subr.bf16.mxu0 0
    %971 = vmatpush1.bf16.msra.mxu0 %v249
    %972 = vmatprep.subr.bf16.mxu0 0
    %973 = vmatpush1.bf16.msra.mxu0 %v250
    %974 = vmatprep.mubr.bf16.mxu0 %v911
    %975 = vmatmul.mubr.bf16.gmra.mrb[0].mxu0 %v910
    %v976 = vpop.f32.mrb[0].mxu0
    %v977 = vadd.f32 %v89, %v976
    %v978 = vpop.f32.mrb[0].mxu0
    %v979 = vpop.f32.mrb[0].mxu0
    %v980 = vadd.f32 %v89, %v979
    %v981 = vpop.f32.mrb[0].mxu0
    %982 = vmatprep.mubr.bf16.mxu0 %v913
    %983 = vmatmul.mubr.bf16.gmra.mrb[0].mxu0 %v912
    %v984 = vpop.f32.mrb[0].mxu0
    %v985 = vadd.f32 %v89, %v984
    %v986 = vpop.f32.mrb[0].mxu0
    %v987 = vpop.f32.mrb[0].mxu0
    %v988 = vadd.f32 %v89, %v987
    %v989 = vpop.f32.mrb[0].mxu0
    %990 = vmatprep.mubr.bf16.mxu0 %v915
    %991 = vmatmul.mubr.bf16.gmra.mrb[0].mxu0 %v914
    %v992 = vpop.f32.mrb[0].mxu0
    %v993 = vadd.f32 %v89, %v992
    %v994 = vpop.f32.mrb[0].mxu0
    %v995 = vpop.f32.mrb[0].mxu0
    %v996 = vadd.f32 %v89, %v995
    %v997 = vpop.f32.mrb[0].mxu0
    %998 = vmatprep.mubr.bf16.mxu0 %v917
    %999 = vmatmul.mubr.bf16.gmra.mrb[0].mxu0 %v916
    %v1000 = vpop.f32.mrb[0].mxu0
    %v1001 = vadd.f32 %v89, %v1000
    %v1002 = vpop.f32.mrb[0].mxu0
    %v1003 = vpop.f32.mrb[0].mxu0
    %v1004 = vadd.f32 %v89, %v1003
    %v1005 = vpop.f32.mrb[0].mxu0
    %1006 = vmatprep.mubr.bf16.mxu0 %v919
    %1007 = vmatmul.mubr.bf16.gmra.mrb[0].mxu0 %v918
    %v1008 = vpop.f32.mrb[0].mxu0
    %v1009 = vadd.f32 %v89, %v1008
    %v1010 = vpop.f32.mrb[0].mxu0
    %v1011 = vpop.f32.mrb[0].mxu0
    %v1012 = vadd.f32 %v89, %v1011
    %v1013 = vpop.f32.mrb[0].mxu0
    %1014 = vmatprep.mubr.bf16.mxu0 %v921
    %1015 = vmatmul.mubr.bf16.gmra.mrb[0].mxu0 %v920
    %v1016 = vpop.f32.mrb[0].mxu0
    %v1017 = vadd.f32 %v89, %v1016
    %v1018 = vpop.f32.mrb[0].mxu0
    %v1019 = vpop.f32.mrb[0].mxu0
    %v1020 = vadd.f32 %v89, %v1019
    %v1021 = vpop.f32.mrb[0].mxu0
    %1022 = vmatprep.mubr.bf16.mxu0 %v923
    %1023 = vmatmul.mubr.bf16.gmra.mrb[0].mxu0 %v922
    %v1024 = vpop.f32.mrb[0].mxu0
    %v1025 = vadd.f32 %v89, %v1024
    %v1026 = vpop.f32.mrb[0].mxu0
    %v1027 = vpop.f32.mrb[0].mxu0
    %v1028 = vadd.f32 %v89, %v1027
    %v1029 = vpop.f32.mrb[0].mxu0
    %1030 = vmatprep.mubr.bf16.mxu0 %v925
    %1031 = vmatmul.mubr.bf16.gmra.mrb[0].mxu0 %v924
    %v1032 = vpop.f32.mrb[0].mxu0
    %v1033 = vadd.f32 %v89, %v1032
    %v1034 = vpop.f32.mrb[0].mxu0
    %v1035 = vpop.f32.mrb[0].mxu0
    %v1036 = vadd.f32 %v89, %v1035
    %v1037 = vpop.f32.mrb[0].mxu0
    %1038 = vdwg.mxu0
    %v1039 = vmax.f32 %v977, 0.0
    %v1040 = vmax.f32 %v980, 0.0
    %v1041 = vmax.f32 %v985, 0.0
    %v1042 = vmax.f32 %v988, 0.0
    %v1043 = vmax.f32 %v993, 0.0
    %v1044 = vmax.f32 %v996, 0.0
    %v1045 = vmax.f32 %v1001, 0.0
    %v1046 = vmax.f32 %v1004, 0.0
    %v1047 = vmax.f32 %v1009, 0.0
    %v1048 = vmax.f32 %v1012, 0.0
    %v1049 = vmax.f32 %v1017, 0.0
    %v1050 = vmax.f32 %v1020, 0.0
    %v1051 = vmax.f32 %v1025, 0.0
    %v1052 = vmax.f32 %v1028, 0.0
    %v1053 = vmax.f32 %v1033, 0.0
    %v1054 = vmax.f32 %v1036, 0.0
    %1055 = vst [vmem:[#allocation2 + $0x180] sm:$0xff] %v1039
    %1056 = vst [vmem:[#allocation2 + $0x188] sm:$0xff] %v1040
    %1057 = vst [vmem:[#allocation2 + $0x190] sm:$0xff] %v1041
    %1058 = vst [vmem:[#allocation2 + $0x198] sm:$0xff] %v1042
    %1059 = vst [vmem:[#allocation2 + $0x1a0] sm:$0xff] %v1043
    %1060 = vst [vmem:[#allocation2 + $0x1a8] sm:$0xff] %v1044
    %1061 = vst [vmem:[#allocation2 + $0x1b0] sm:$0xff] %v1045
    %1062 = vst [vmem:[#allocation2 + $0x1b8] sm:$0xff] %v1046
    %1063 = vst [vmem:[#allocation2 + $0x1c0] sm:$0xff] %v1047
    %1064 = vst [vmem:[#allocation2 + $0x1c8] sm:$0xff] %v1048
    %1065 = vst [vmem:[#allocation2 + $0x1d0] sm:$0xff] %v1049
    %1066 = vst [vmem:[#allocation2 + $0x1d8] sm:$0xff] %v1050
    %1067 = vst [vmem:[#allocation2 + $0x1e0] sm:$0xff] %v1051
    %1068 = vst [vmem:[#allocation2 + $0x1e8] sm:$0xff] %v1052
    %1069 = vst [vmem:[#allocation2 + $0x1f0] sm:$0xff] %v1053
    %1070 = vst [vmem:[#allocation2 + $0x1f8] sm:$0xff] %v1054
    %v1071 = vld [vmem:[%s0 + $0x200] sm:$0xff]
    %v1072 = vld [vmem:[%s0 + $0x208] sm:$0xff]
    %v1073 = vld [vmem:[%s0 + $0x210] sm:$0xff]
    %v1074 = vld [vmem:[%s0 + $0x218] sm:$0xff]
    %v1075 = vld [vmem:[%s0 + $0x220] sm:$0xff]
    %v1076 = vld [vmem:[%s0 + $0x228] sm:$0xff]
    %v1077 = vld [vmem:[%s0 + $0x230] sm:$0xff]
    %v1078 = vld [vmem:[%s0 + $0x238] sm:$0xff]
    %v1079 = vld [vmem:[%s0 + $0x240] sm:$0xff]
    %v1080 = vld [vmem:[%s0 + $0x248] sm:$0xff]
    %v1081 = vld [vmem:[%s0 + $0x250] sm:$0xff]
    %v1082 = vld [vmem:[%s0 + $0x258] sm:$0xff]
    %v1083 = vld [vmem:[%s0 + $0x260] sm:$0xff]
    %v1084 = vld [vmem:[%s0 + $0x268] sm:$0xff]
    %v1085 = vld [vmem:[%s0 + $0x270] sm:$0xff]
    %v1086 = vld [vmem:[%s0 + $0x278] sm:$0xff]
    %v1103 = vunpack.c.l.b16 %v1071
    %v1104 = vunpack.c.h.b16 %v1071
    %v1105 = vunpack.c.l.b16 %v1072
    %v1106 = vunpack.c.h.b16 %v1072
    %v1107 = vunpack.c.l.b16 %v1073
    %v1108 = vunpack.c.h.b16 %v1073
    %v1109 = vunpack.c.l.b16 %v1074
    %v1110 = vunpack.c.h.b16 %v1074
    %v1111 = vunpack.c.l.b16 %v1075
    %v1112 = vunpack.c.h.b16 %v1075
    %v1113 = vunpack.c.l.b16 %v1076
    %v1114 = vunpack.c.h.b16 %v1076
    %v1115 = vunpack.c.l.b16 %v1077
    %v1116 = vunpack.c.h.b16 %v1077
    %v1117 = vunpack.c.l.b16 %v1078
    %v1118 = vunpack.c.h.b16 %v1078
    %v1119 = vunpack.c.l.b16 %v1079
    %v1120 = vunpack.c.h.b16 %v1079
    %v1121 = vunpack.c.l.b16 %v1080
    %v1122 = vunpack.c.h.b16 %v1080
    %v1123 = vunpack.c.l.b16 %v1081
    %v1124 = vunpack.c.h.b16 %v1081
    %v1125 = vunpack.c.l.b16 %v1082
    %v1126 = vunpack.c.h.b16 %v1082
    %v1127 = vunpack.c.l.b16 %v1083
    %v1128 = vunpack.c.h.b16 %v1083
    %v1129 = vunpack.c.l.b16 %v1084
    %v1130 = vunpack.c.h.b16 %v1084
    %v1131 = vunpack.c.l.b16 %v1085
    %v1132 = vunpack.c.h.b16 %v1085
    %v1133 = vunpack.c.l.b16 %v1086
    %v1134 = vunpack.c.h.b16 %v1086
    %v1135 = vpack.c.b16 %v1105, %v1103
    %v1136 = vpack.c.b16 %v1106, %v1104
    %v1137 = vpack.c.b16 %v1109, %v1107
    %v1138 = vpack.c.b16 %v1110, %v1108
    %v1139 = vpack.c.b16 %v1113, %v1111
    %v1140 = vpack.c.b16 %v1114, %v1112
    %v1141 = vpack.c.b16 %v1117, %v1115
    %v1142 = vpack.c.b16 %v1118, %v1116
    %v1143 = vpack.c.b16 %v1121, %v1119
    %v1144 = vpack.c.b16 %v1122, %v1120
    %v1145 = vpack.c.b16 %v1125, %v1123
    %v1146 = vpack.c.b16 %v1126, %v1124
    %v1147 = vpack.c.b16 %v1129, %v1127
    %v1148 = vpack.c.b16 %v1130, %v1128
    %v1149 = vpack.c.b16 %v1133, %v1131
    %v1150 = vpack.c.b16 %v1134, %v1132
    %1167 = vmatprep.subr.bf16.mxu0 0
    %1168 = vmatpush1.bf16.msra.mxu0 %v235
    %1169 = vmatprep.subr.bf16.mxu0 0
    %1170 = vmatpush1.bf16.msra.mxu0 %v236
    %1171 = vmatprep.subr.bf16.mxu0 0
    %1172 = vmatpush1.bf16.msra.mxu0 %v237
    %1173 = vmatprep.subr.bf16.mxu0 0
    %1174 = vmatpush1.bf16.msra.mxu0 %v238
    %1175 = vmatprep.subr.bf16.mxu0 0
    %1176 = vmatpush1.bf16.msra.mxu0 %v239
    %1177 = vmatprep.subr.bf16.mxu0 0
    %1178 = vmatpush1.bf16.msra.mxu0 %v240
    %1179 = vmatprep.subr.bf16.mxu0 0
    %1180 = vmatpush1.bf16.msra.mxu0 %v241
    %1181 = vmatprep.subr.bf16.mxu0 0
    %1182 = vmatpush1.bf16.msra.mxu0 %v242
    %1183 = vmatprep.subr.bf16.mxu0 0
    %1184 = vmatpush1.bf16.msra.mxu0 %v243
    %1185 = vmatprep.subr.bf16.mxu0 0
    %1186 = vmatpush1.bf16.msra.mxu0 %v244
    %1187 = vmatprep.subr.bf16.mxu0 0
    %1188 = vmatpush1.bf16.msra.mxu0 %v245
    %1189 = vmatprep.subr.bf16.mxu0 0
    %1190 = vmatpush1.bf16.msra.mxu0 %v246
    %1191 = vmatprep.subr.bf16.mxu0 0
    %1192 = vmatpush1.bf16.msra.mxu0 %v247
    %1193 = vmatprep.subr.bf16.mxu0 0
    %1194 = vmatpush1.bf16.msra.mxu0 %v248
    %1195 = vmatprep.subr.bf16.mxu0 0
    %1196 = vmatpush1.bf16.msra.mxu0 %v249
    %1197 = vmatprep.subr.bf16.mxu0 0
    %1198 = vmatpush1.bf16.msra.mxu0 %v250
    %1199 = vmatprep.mubr.bf16.mxu0 %v1136
    %1200 = vmatmul.mubr.bf16.gmra.mrb[0].mxu0 %v1135
    %v1201 = vpop.f32.mrb[0].mxu0
    %v1202 = vadd.f32 %v89, %v1201
    %v1203 = vpop.f32.mrb[0].mxu0
    %v1204 = vpop.f32.mrb[0].mxu0
    %v1205 = vadd.f32 %v89, %v1204
    %v1206 = vpop.f32.mrb[0].mxu0
    %1207 = vmatprep.mubr.bf16.mxu0 %v1138
    %1208 = vmatmul.mubr.bf16.gmra.mrb[0].mxu0 %v1137
    %v1209 = vpop.f32.mrb[0].mxu0
    %v1210 = vadd.f32 %v89, %v1209
    %v1211 = vpop.f32.mrb[0].mxu0
    %v1212 = vpop.f32.mrb[0].mxu0
    %v1213 = vadd.f32 %v89, %v1212
    %v1214 = vpop.f32.mrb[0].mxu0
    %1215 = vmatprep.mubr.bf16.mxu0 %v1140
    %1216 = vmatmul.mubr.bf16.gmra.mrb[0].mxu0 %v1139
    %v1217 = vpop.f32.mrb[0].mxu0
    %v1218 = vadd.f32 %v89, %v1217
    %v1219 = vpop.f32.mrb[0].mxu0
    %v1220 = vpop.f32.mrb[0].mxu0
    %v1221 = vadd.f32 %v89, %v1220
    %v1222 = vpop.f32.mrb[0].mxu0
    %1223 = vmatprep.mubr.bf16.mxu0 %v1142
    %1224 = vmatmul.mubr.bf16.gmra.mrb[0].mxu0 %v1141
    %v1225 = vpop.f32.mrb[0].mxu0
    %v1226 = vadd.f32 %v89, %v1225
    %v1227 = vpop.f32.mrb[0].mxu0
    %v1228 = vpop.f32.mrb[0].mxu0
    %v1229 = vadd.f32 %v89, %v1228
    %v1230 = vpop.f32.mrb[0].mxu0
    %1231 = vmatprep.mubr.bf16.mxu0 %v1144
    %1232 = vmatmul.mubr.bf16.gmra.mrb[0].mxu0 %v1143
    %v1233 = vpop.f32.mrb[0].mxu0
    %v1234 = vadd.f32 %v89, %v1233
    %v1235 = vpop.f32.mrb[0].mxu0
    %v1236 = vpop.f32.mrb[0].mxu0
    %v1237 = vadd.f32 %v89, %v1236
    %v1238 = vpop.f32.mrb[0].mxu0
    %1239 = vmatprep.mubr.bf16.mxu0 %v1146
    %1240 = vmatmul.mubr.bf16.gmra.mrb[0].mxu0 %v1145
    %v1241 = vpop.f32.mrb[0].mxu0
    %v1242 = vadd.f32 %v89, %v1241
    %v1243 = vpop.f32.mrb[0].mxu0
    %v1244 = vpop.f32.mrb[0].mxu0
    %v1245 = vadd.f32 %v89, %v1244
    %v1246 = vpop.f32.mrb[0].mxu0
    %1247 = vmatprep.mubr.bf16.mxu0 %v1148
    %1248 = vmatmul.mubr.bf16.gmra.mrb[0].mxu0 %v1147
    %v1249 = vpop.f32.mrb[0].mxu0
    %v1250 = vadd.f32 %v89, %v1249
    %v1251 = vpop.f32.mrb[0].mxu0
    %v1252 = vpop.f32.mrb[0].mxu0
    %v1253 = vadd.f32 %v89, %v1252
    %v1254 = vpop.f32.mrb[0].mxu0
    %1255 = vmatprep.mubr.bf16.mxu0 %v1150
    %1256 = vmatmul.mubr.bf16.gmra.mrb[0].mxu0 %v1149
    %v1257 = vpop.f32.mrb[0].mxu0
    %v1258 = vadd.f32 %v89, %v1257
    %v1259 = vpop.f32.mrb[0].mxu0
    %v1260 = vpop.f32.mrb[0].mxu0
    %v1261 = vadd.f32 %v89, %v1260
    %v1262 = vpop.f32.mrb[0].mxu0
    %1263 = vdwg.mxu0
    %v1264 = vmax.f32 %v1202, 0.0
    %v1265 = vmax.f32 %v1205, 0.0
    %v1266 = vmax.f32 %v1210, 0.0
    %v1267 = vmax.f32 %v1213, 0.0
    %v1268 = vmax.f32 %v1218, 0.0
    %v1269 = vmax.f32 %v1221, 0.0
    %v1270 = vmax.f32 %v1226, 0.0
    %v1271 = vmax.f32 %v1229, 0.0
    %v1272 = vmax.f32 %v1234, 0.0
    %v1273 = vmax.f32 %v1237, 0.0
    %v1274 = vmax.f32 %v1242, 0.0
    %v1275 = vmax.f32 %v1245, 0.0
    %v1276 = vmax.f32 %v1250, 0.0
    %v1277 = vmax.f32 %v1253, 0.0
    %v1278 = vmax.f32 %v1258, 0.0
    %v1279 = vmax.f32 %v1261, 0.0
    %1280 = vst [vmem:[#allocation2 + $0x200] sm:$0xff] %v1264
    %1281 = vst [vmem:[#allocation2 + $0x208] sm:$0xff] %v1265
    %1282 = vst [vmem:[#allocation2 + $0x210] sm:$0xff] %v1266
    %1283 = vst [vmem:[#allocation2 + $0x218] sm:$0xff] %v1267
    %1284 = vst [vmem:[#allocation2 + $0x220] sm:$0xff] %v1268
    %1285 = vst [vmem:[#allocation2 + $0x228] sm:$0xff] %v1269
    %1286 = vst [vmem:[#allocation2 + $0x230] sm:$0xff] %v1270
    %1287 = vst [vmem:[#allocation2 + $0x238] sm:$0xff] %v1271
    %1288 = vst [vmem:[#allocation2 + $0x240] sm:$0xff] %v1272
    %1289 = vst [vmem:[#allocation2 + $0x248] sm:$0xff] %v1273
    %1290 = vst [vmem:[#allocation2 + $0x250] sm:$0xff] %v1274
    %1291 = vst [vmem:[#allocation2 + $0x258] sm:$0xff] %v1275
    %1292 = vst [vmem:[#allocation2 + $0x260] sm:$0xff] %v1276
    %1293 = vst [vmem:[#allocation2 + $0x268] sm:$0xff] %v1277
    %1294 = vst [vmem:[#allocation2 + $0x270] sm:$0xff] %v1278
    %1295 = vst [vmem:[#allocation2 + $0x278] sm:$0xff] %v1279
    %v1296 = vld [vmem:[%s0 + $0x280] sm:$0xff]
    %v1297 = vld [vmem:[%s0 + $0x288] sm:$0xff]
    %v1298 = vld [vmem:[%s0 + $0x290] sm:$0xff]
    %v1299 = vld [vmem:[%s0 + $0x298] sm:$0xff]
    %v1300 = vld [vmem:[%s0 + $0x2a0] sm:$0xff]
    %v1301 = vld [vmem:[%s0 + $0x2a8] sm:$0xff]
    %v1302 = vld [vmem:[%s0 + $0x2b0] sm:$0xff]
    %v1303 = vld [vmem:[%s0 + $0x2b8] sm:$0xff]
    %v1304 = vld [vmem:[%s0 + $0x2c0] sm:$0xff]
    %v1305 = vld [vmem:[%s0 + $0x2c8] sm:$0xff]
    %v1306 = vld [vmem:[%s0 + $0x2d0] sm:$0xff]
    %v1307 = vld [vmem:[%s0 + $0x2d8] sm:$0xff]
    %v1308 = vld [vmem:[%s0 + $0x2e0] sm:$0xff]
    %v1309 = vld [vmem:[%s0 + $0x2e8] sm:$0xff]
    %v1310 = vld [vmem:[%s0 + $0x2f0] sm:$0xff]
    %v1311 = vld [vmem:[%s0 + $0x2f8] sm:$0xff]
    %v1328 = vunpack.c.l.b16 %v1296
    %v1329 = vunpack.c.h.b16 %v1296
    %v1330 = vunpack.c.l.b16 %v1297
    %v1331 = vunpack.c.h.b16 %v1297
    %v1332 = vunpack.c.l.b16 %v1298
    %v1333 = vunpack.c.h.b16 %v1298
    %v1334 = vunpack.c.l.b16 %v1299
    %v1335 = vunpack.c.h.b16 %v1299
    %v1336 = vunpack.c.l.b16 %v1300
    %v1337 = vunpack.c.h.b16 %v1300
    %v1338 = vunpack.c.l.b16 %v1301
    %v1339 = vunpack.c.h.b16 %v1301
    %v1340 = vunpack.c.l.b16 %v1302
    %v1341 = vunpack.c.h.b16 %v1302
    %v1342 = vunpack.c.l.b16 %v1303
    %v1343 = vunpack.c.h.b16 %v1303
    %v1344 = vunpack.c.l.b16 %v1304
    %v1345 = vunpack.c.h.b16 %v1304
    %v1346 = vunpack.c.l.b16 %v1305
    %v1347 = vunpack.c.h.b16 %v1305
    %v1348 = vunpack.c.l.b16 %v1306
    %v1349 = vunpack.c.h.b16 %v1306
    %v1350 = vunpack.c.l.b16 %v1307
    %v1351 = vunpack.c.h.b16 %v1307
    %v1352 = vunpack.c.l.b16 %v1308
    %v1353 = vunpack.c.h.b16 %v1308
    %v1354 = vunpack.c.l.b16 %v1309
    %v1355 = vunpack.c.h.b16 %v1309
    %v1356 = vunpack.c.l.b16 %v1310
    %v1357 = vunpack.c.h.b16 %v1310
    %v1358 = vunpack.c.l.b16 %v1311
    %v1359 = vunpack.c.h.b16 %v1311
    %v1360 = vpack.c.b16 %v1330, %v1328
    %v1361 = vpack.c.b16 %v1331, %v1329
    %v1362 = vpack.c.b16 %v1334, %v1332
    %v1363 = vpack.c.b16 %v1335, %v1333
    %v1364 = vpack.c.b16 %v1338, %v1336
    %v1365 = vpack.c.b16 %v1339, %v1337
    %v1366 = vpack.c.b16 %v1342, %v1340
    %v1367 = vpack.c.b16 %v1343, %v1341
    %v1368 = vpack.c.b16 %v1346, %v1344
    %v1369 = vpack.c.b16 %v1347, %v1345
    %v1370 = vpack.c.b16 %v1350, %v1348
    %v1371 = vpack.c.b16 %v1351, %v1349
    %v1372 = vpack.c.b16 %v1354, %v1352
    %v1373 = vpack.c.b16 %v1355, %v1353
    %v1374 = vpack.c.b16 %v1358, %v1356
    %v1375 = vpack.c.b16 %v1359, %v1357
    %1392 = vmatprep.subr.bf16.mxu0 0
    %1393 = vmatpush1.bf16.msra.mxu0 %v235
    %1394 = vmatprep.subr.bf16.mxu0 0
    %1395 = vmatpush1.bf16.msra.mxu0 %v236
    %1396 = vmatprep.subr.bf16.mxu0 0
    %1397 = vmatpush1.bf16.msra.mxu0 %v237
    %1398 = vmatprep.subr.bf16.mxu0 0
    %1399 = vmatpush1.bf16.msra.mxu0 %v238
    %1400 = vmatprep.subr.bf16.mxu0 0
    %1401 = vmatpush1.bf16.msra.mxu0 %v239
    %1402 = vmatprep.subr.bf16.mxu0 0
    %1403 = vmatpush1.bf16.msra.mxu0 %v240
    %1404 = vmatprep.subr.bf16.mxu0 0
    %1405 = vmatpush1.bf16.msra.mxu0 %v241
    %1406 = vmatprep.subr.bf16.mxu0 0
    %1407 = vmatpush1.bf16.msra.mxu0 %v242
    %1408 = vmatprep.subr.bf16.mxu0 0
    %1409 = vmatpush1.bf16.msra.mxu0 %v243
    %1410 = vmatprep.subr.bf16.mxu0 0
    %1411 = vmatpush1.bf16.msra.mxu0 %v244
    %1412 = vmatprep.subr.bf16.mxu0 0
    %1413 = vmatpush1.bf16.msra.mxu0 %v245
    %1414 = vmatprep.subr.bf16.mxu0 0
    %1415 = vmatpush1.bf16.msra.mxu0 %v246
    %1416 = vmatprep.subr.bf16.mxu0 0
    %1417 = vmatpush1.bf16.msra.mxu0 %v247
    %1418 = vmatprep.subr.bf16.mxu0 0
    %1419 = vmatpush1.bf16.msra.mxu0 %v248
    %1420 = vmatprep.subr.bf16.mxu0 0
    %1421 = vmatpush1.bf16.msra.mxu0 %v249
    %1422 = vmatprep.subr.bf16.mxu0 0
    %1423 = vmatpush1.bf16.msra.mxu0 %v250
    %1424 = vmatprep.mubr.bf16.mxu0 %v1361
    %1425 = vmatmul.mubr.bf16.gmra.mrb[0].mxu0 %v1360
    %v1426 = vpop.f32.mrb[0].mxu0
    %v1427 = vadd.f32 %v89, %v1426
    %v1428 = vpop.f32.mrb[0].mxu0
    %v1429 = vpop.f32.mrb[0].mxu0
    %v1430 = vadd.f32 %v89, %v1429
    %v1431 = vpop.f32.mrb[0].mxu0
    %1432 = vmatprep.mubr.bf16.mxu0 %v1363
    %1433 = vmatmul.mubr.bf16.gmra.mrb[0].mxu0 %v1362
    %v1434 = vpop.f32.mrb[0].mxu0
    %v1435 = vadd.f32 %v89, %v1434
    %v1436 = vpop.f32.mrb[0].mxu0
    %v1437 = vpop.f32.mrb[0].mxu0
    %v1438 = vadd.f32 %v89, %v1437
    %v1439 = vpop.f32.mrb[0].mxu0
    %1440 = vmatprep.mubr.bf16.mxu0 %v1365
    %1441 = vmatmul.mubr.bf16.gmra.mrb[0].mxu0 %v1364
    %v1442 = vpop.f32.mrb[0].mxu0
    %v1443 = vadd.f32 %v89, %v1442
    %v1444 = vpop.f32.mrb[0].mxu0
    %v1445 = vpop.f32.mrb[0].mxu0
    %v1446 = vadd.f32 %v89, %v1445
    %v1447 = vpop.f32.mrb[0].mxu0
    %1448 = vmatprep.mubr.bf16.mxu0 %v1367
    %1449 = vmatmul.mubr.bf16.gmra.mrb[0].mxu0 %v1366
    %v1450 = vpop.f32.mrb[0].mxu0
    %v1451 = vadd.f32 %v89, %v1450
    %v1452 = vpop.f32.mrb[0].mxu0
    %v1453 = vpop.f32.mrb[0].mxu0
    %v1454 = vadd.f32 %v89, %v1453
    %v1455 = vpop.f32.mrb[0].mxu0
    %1456 = vmatprep.mubr.bf16.mxu0 %v1369
    %1457 = vmatmul.mubr.bf16.gmra.mrb[0].mxu0 %v1368
    %v1458 = vpop.f32.mrb[0].mxu0
    %v1459 = vadd.f32 %v89, %v1458
    %v1460 = vpop.f32.mrb[0].mxu0
    %v1461 = vpop.f32.mrb[0].mxu0
    %v1462 = vadd.f32 %v89, %v1461
    %v1463 = vpop.f32.mrb[0].mxu0
    %1464 = vmatprep.mubr.bf16.mxu0 %v1371
    %1465 = vmatmul.mubr.bf16.gmra.mrb[0].mxu0 %v1370
    %v1466 = vpop.f32.mrb[0].mxu0
    %v1467 = vadd.f32 %v89, %v1466
    %v1468 = vpop.f32.mrb[0].mxu0
    %v1469 = vpop.f32.mrb[0].mxu0
    %v1470 = vadd.f32 %v89, %v1469
    %v1471 = vpop.f32.mrb[0].mxu0
    %1472 = vmatprep.mubr.bf16.mxu0 %v1373
    %1473 = vmatmul.mubr.bf16.gmra.mrb[0].mxu0 %v1372
    %v1474 = vpop.f32.mrb[0].mxu0
    %v1475 = vadd.f32 %v89, %v1474
    %v1476 = vpop.f32.mrb[0].mxu0
    %v1477 = vpop.f32.mrb[0].mxu0
    %v1478 = vadd.f32 %v89, %v1477
    %v1479 = vpop.f32.mrb[0].mxu0
    %1480 = vmatprep.mubr.bf16.mxu0 %v1375
    %1481 = vmatmul.mubr.bf16.gmra.mrb[0].mxu0 %v1374
    %v1482 = vpop.f32.mrb[0].mxu0
    %v1483 = vadd.f32 %v89, %v1482
    %v1484 = vpop.f32.mrb[0].mxu0
    %v1485 = vpop.f32.mrb[0].mxu0
    %v1486 = vadd.f32 %v89, %v1485
    %v1487 = vpop.f32.mrb[0].mxu0
    %1488 = vdwg.mxu0
    %v1489 = vmax.f32 %v1427, 0.0
    %v1490 = vmax.f32 %v1430, 0.0
    %v1491 = vmax.f32 %v1435, 0.0
    %v1492 = vmax.f32 %v1438, 0.0
    %v1493 = vmax.f32 %v1443, 0.0
    %v1494 = vmax.f32 %v1446, 0.0
    %v1495 = vmax.f32 %v1451, 0.0
    %v1496 = vmax.f32 %v1454, 0.0
    %v1497 = vmax.f32 %v1459, 0.0
    %v1498 = vmax.f32 %v1462, 0.0
    %v1499 = vmax.f32 %v1467, 0.0
    %v1500 = vmax.f32 %v1470, 0.0
    %v1501 = vmax.f32 %v1475, 0.0
    %v1502 = vmax.f32 %v1478, 0.0
    %v1503 = vmax.f32 %v1483, 0.0
    %v1504 = vmax.f32 %v1486, 0.0
    %1505 = vst [vmem:[#allocation2 + $0x280] sm:$0xff] %v1489
    %1506 = vst [vmem:[#allocation2 + $0x288] sm:$0xff] %v1490
    %1507 = vst [vmem:[#allocation2 + $0x290] sm:$0xff] %v1491
    %1508 = vst [vmem:[#allocation2 + $0x298] sm:$0xff] %v1492
    %1509 = vst [vmem:[#allocation2 + $0x2a0] sm:$0xff] %v1493
    %1510 = vst [vmem:[#allocation2 + $0x2a8] sm:$0xff] %v1494
    %1511 = vst [vmem:[#allocation2 + $0x2b0] sm:$0xff] %v1495
    %1512 = vst [vmem:[#allocation2 + $0x2b8] sm:$0xff] %v1496
    %1513 = vst [vmem:[#allocation2 + $0x2c0] sm:$0xff] %v1497
    %1514 = vst [vmem:[#allocation2 + $0x2c8] sm:$0xff] %v1498
    %1515 = vst [vmem:[#allocation2 + $0x2d0] sm:$0xff] %v1499
    %1516 = vst [vmem:[#allocation2 + $0x2d8] sm:$0xff] %v1500
    %1517 = vst [vmem:[#allocation2 + $0x2e0] sm:$0xff] %v1501
    %1518 = vst [vmem:[#allocation2 + $0x2e8] sm:$0xff] %v1502
    %1519 = vst [vmem:[#allocation2 + $0x2f0] sm:$0xff] %v1503
    %1520 = vst [vmem:[#allocation2 + $0x2f8] sm:$0xff] %v1504
    %v1521 = vld [vmem:[%s0 + $0x300] sm:$0xff]
    %v1522 = vld [vmem:[%s0 + $0x308] sm:$0xff]
    %v1523 = vld [vmem:[%s0 + $0x310] sm:$0xff]
    %v1524 = vld [vmem:[%s0 + $0x318] sm:$0xff]
    %v1525 = vld [vmem:[%s0 + $0x320] sm:$0xff]
    %v1526 = vld [vmem:[%s0 + $0x328] sm:$0xff]
    %v1527 = vld [vmem:[%s0 + $0x330] sm:$0xff]
    %v1528 = vld [vmem:[%s0 + $0x338] sm:$0xff]
    %v1529 = vld [vmem:[%s0 + $0x340] sm:$0xff]
    %v1530 = vld [vmem:[%s0 + $0x348] sm:$0xff]
    %v1531 = vld [vmem:[%s0 + $0x350] sm:$0xff]
    %v1532 = vld [vmem:[%s0 + $0x358] sm:$0xff]
    %v1533 = vld [vmem:[%s0 + $0x360] sm:$0xff]
    %v1534 = vld [vmem:[%s0 + $0x368] sm:$0xff]
    %v1535 = vld [vmem:[%s0 + $0x370] sm:$0xff]
    %v1536 = vld [vmem:[%s0 + $0x378] sm:$0xff]
    %v1553 = vunpack.c.l.b16 %v1521
    %v1554 = vunpack.c.h.b16 %v1521
    %v1555 = vunpack.c.l.b16 %v1522
    %v1556 = vunpack.c.h.b16 %v1522
    %v1557 = vunpack.c.l.b16 %v1523
    %v1558 = vunpack.c.h.b16 %v1523
    %v1559 = vunpack.c.l.b16 %v1524
    %v1560 = vunpack.c.h.b16 %v1524
    %v1561 = vunpack.c.l.b16 %v1525
    %v1562 = vunpack.c.h.b16 %v1525
    %v1563 = vunpack.c.l.b16 %v1526
    %v1564 = vunpack.c.h.b16 %v1526
    %v1565 = vunpack.c.l.b16 %v1527
    %v1566 = vunpack.c.h.b16 %v1527
    %v1567 = vunpack.c.l.b16 %v1528
    %v1568 = vunpack.c.h.b16 %v1528
    %v1569 = vunpack.c.l.b16 %v1529
    %v1570 = vunpack.c.h.b16 %v1529
    %v1571 = vunpack.c.l.b16 %v1530
    %v1572 = vunpack.c.h.b16 %v1530
    %v1573 = vunpack.c.l.b16 %v1531
    %v1574 = vunpack.c.h.b16 %v1531
    %v1575 = vunpack.c.l.b16 %v1532
    %v1576 = vunpack.c.h.b16 %v1532
    %v1577 = vunpack.c.l.b16 %v1533
    %v1578 = vunpack.c.h.b16 %v1533
    %v1579 = vunpack.c.l.b16 %v1534
    %v1580 = vunpack.c.h.b16 %v1534
    %v1581 = vunpack.c.l.b16 %v1535
    %v1582 = vunpack.c.h.b16 %v1535
    %v1583 = vunpack.c.l.b16 %v1536
    %v1584 = vunpack.c.h.b16 %v1536
    %v1585 = vpack.c.b16 %v1555, %v1553
    %v1586 = vpack.c.b16 %v1556, %v1554
    %v1587 = vpack.c.b16 %v1559, %v1557
    %v1588 = vpack.c.b16 %v1560, %v1558
    %v1589 = vpack.c.b16 %v1563, %v1561
    %v1590 = vpack.c.b16 %v1564, %v1562
    %v1591 = vpack.c.b16 %v1567, %v1565
    %v1592 = vpack.c.b16 %v1568, %v1566
    %v1593 = vpack.c.b16 %v1571, %v1569
    %v1594 = vpack.c.b16 %v1572, %v1570
    %v1595 = vpack.c.b16 %v1575, %v1573
    %v1596 = vpack.c.b16 %v1576, %v1574
    %v1597 = vpack.c.b16 %v1579, %v1577
    %v1598 = vpack.c.b16 %v1580, %v1578
    %v1599 = vpack.c.b16 %v1583, %v1581
    %v1600 = vpack.c.b16 %v1584, %v1582
    %1617 = vmatprep.subr.bf16.mxu0 0
    %1618 = vmatpush1.bf16.msra.mxu0 %v235
    %1619 = vmatprep.subr.bf16.mxu0 0
    %1620 = vmatpush1.bf16.msra.mxu0 %v236
    %1621 = vmatprep.subr.bf16.mxu0 0
    %1622 = vmatpush1.bf16.msra.mxu0 %v237
    %1623 = vmatprep.subr.bf16.mxu0 0
    %1624 = vmatpush1.bf16.msra.mxu0 %v238
    %1625 = vmatprep.subr.bf16.mxu0 0
    %1626 = vmatpush1.bf16.msra.mxu0 %v239
    %1627 = vmatprep.subr.bf16.mxu0 0
    %1628 = vmatpush1.bf16.msra.mxu0 %v240
    %1629 = vmatprep.subr.bf16.mxu0 0
    %1630 = vmatpush1.bf16.msra.mxu0 %v241
    %1631 = vmatprep.subr.bf16.mxu0 0
    %1632 = vmatpush1.bf16.msra.mxu0 %v242
    %1633 = vmatprep.subr.bf16.mxu0 0
    %1634 = vmatpush1.bf16.msra.mxu0 %v243
    %1635 = vmatprep.subr.bf16.mxu0 0
    %1636 = vmatpush1.bf16.msra.mxu0 %v244
    %1637 = vmatprep.subr.bf16.mxu0 0
    %1638 = vmatpush1.bf16.msra.mxu0 %v245
    %1639 = vmatprep.subr.bf16.mxu0 0
    %1640 = vmatpush1.bf16.msra.mxu0 %v246
    %1641 = vmatprep.subr.bf16.mxu0 0
    %1642 = vmatpush1.bf16.msra.mxu0 %v247
    %1643 = vmatprep.subr.bf16.mxu0 0
    %1644 = vmatpush1.bf16.msra.mxu0 %v248
    %1645 = vmatprep.subr.bf16.mxu0 0
    %1646 = vmatpush1.bf16.msra.mxu0 %v249
    %1647 = vmatprep.subr.bf16.mxu0 0
    %1648 = vmatpush1.bf16.msra.mxu0 %v250
    %1649 = vmatprep.mubr.bf16.mxu0 %v1586
    %1650 = vmatmul.mubr.bf16.gmra.mrb[0].mxu0 %v1585
    %v1651 = vpop.f32.mrb[0].mxu0
    %v1652 = vadd.f32 %v89, %v1651
    %v1653 = vpop.f32.mrb[0].mxu0
    %v1654 = vpop.f32.mrb[0].mxu0
    %v1655 = vadd.f32 %v89, %v1654
    %v1656 = vpop.f32.mrb[0].mxu0
    %1657 = vmatprep.mubr.bf16.mxu0 %v1588
    %1658 = vmatmul.mubr.bf16.gmra.mrb[0].mxu0 %v1587
    %v1659 = vpop.f32.mrb[0].mxu0
    %v1660 = vadd.f32 %v89, %v1659
    %v1661 = vpop.f32.mrb[0].mxu0
    %v1662 = vpop.f32.mrb[0].mxu0
    %v1663 = vadd.f32 %v89, %v1662
    %v1664 = vpop.f32.mrb[0].mxu0
    %1665 = vmatprep.mubr.bf16.mxu0 %v1590
    %1666 = vmatmul.mubr.bf16.gmra.mrb[0].mxu0 %v1589
    %v1667 = vpop.f32.mrb[0].mxu0
    %v1668 = vadd.f32 %v89, %v1667
    %v1669 = vpop.f32.mrb[0].mxu0
    %v1670 = vpop.f32.mrb[0].mxu0
    %v1671 = vadd.f32 %v89, %v1670
    %v1672 = vpop.f32.mrb[0].mxu0
    %1673 = vmatprep.mubr.bf16.mxu0 %v1592
    %1674 = vmatmul.mubr.bf16.gmra.mrb[0].mxu0 %v1591
    %v1675 = vpop.f32.mrb[0].mxu0
    %v1676 = vadd.f32 %v89, %v1675
    %v1677 = vpop.f32.mrb[0].mxu0
    %v1678 = vpop.f32.mrb[0].mxu0
    %v1679 = vadd.f32 %v89, %v1678
    %v1680 = vpop.f32.mrb[0].mxu0
    %1681 = vmatprep.mubr.bf16.mxu0 %v1594
    %1682 = vmatmul.mubr.bf16.gmra.mrb[0].mxu0 %v1593
    %v1683 = vpop.f32.mrb[0].mxu0
    %v1684 = vadd.f32 %v89, %v1683
    %v1685 = vpop.f32.mrb[0].mxu0
    %v1686 = vpop.f32.mrb[0].mxu0
    %v1687 = vadd.f32 %v89, %v1686
    %v1688 = vpop.f32.mrb[0].mxu0
    %1689 = vmatprep.mubr.bf16.mxu0 %v1596
    %1690 = vmatmul.mubr.bf16.gmra.mrb[0].mxu0 %v1595
    %v1691 = vpop.f32.mrb[0].mxu0
    %v1692 = vadd.f32 %v89, %v1691
    %v1693 = vpop.f32.mrb[0].mxu0
    %v1694 = vpop.f32.mrb[0].mxu0
    %v1695 = vadd.f32 %v89, %v1694
    %v1696 = vpop.f32.mrb[0].mxu0
    %1697 = vmatprep.mubr.bf16.mxu0 %v1598
    %1698 = vmatmul.mubr.bf16.gmra.mrb[0].mxu0 %v1597
    %v1699 = vpop.f32.mrb[0].mxu0
    %v1700 = vadd.f32 %v89, %v1699
    %v1701 = vpop.f32.mrb[0].mxu0
    %v1702 = vpop.f32.mrb[0].mxu0
    %v1703 = vadd.f32 %v89, %v1702
    %v1704 = vpop.f32.mrb[0].mxu0
    %1705 = vmatprep.mubr.bf16.mxu0 %v1600
    %1706 = vmatmul.mubr.bf16.gmra.mrb[0].mxu0 %v1599
    %v1707 = vpop.f32.mrb[0].mxu0
    %v1708 = vadd.f32 %v89, %v1707
    %v1709 = vpop.f32.mrb[0].mxu0
    %v1710 = vpop.f32.mrb[0].mxu0
    %v1711 = vadd.f32 %v89, %v1710
    %v1712 = vpop.f32.mrb[0].mxu0
    %1713 = vdwg.mxu0
    %v1714 = vmax.f32 %v1652, 0.0
    %v1715 = vmax.f32 %v1655, 0.0
    %v1716 = vmax.f32 %v1660, 0.0
    %v1717 = vmax.f32 %v1663, 0.0
    %v1718 = vmax.f32 %v1668, 0.0
    %v1719 = vmax.f32 %v1671, 0.0
    %v1720 = vmax.f32 %v1676, 0.0
    %v1721 = vmax.f32 %v1679, 0.0
    %v1722 = vmax.f32 %v1684, 0.0
    %v1723 = vmax.f32 %v1687, 0.0
    %v1724 = vmax.f32 %v1692, 0.0
    %v1725 = vmax.f32 %v1695, 0.0
    %v1726 = vmax.f32 %v1700, 0.0
    %v1727 = vmax.f32 %v1703, 0.0
    %v1728 = vmax.f32 %v1708, 0.0
    %v1729 = vmax.f32 %v1711, 0.0
    %1730 = vst [vmem:[#allocation2 + $0x300] sm:$0xff] %v1714
    %1731 = vst [vmem:[#allocation2 + $0x308] sm:$0xff] %v1715
    %1732 = vst [vmem:[#allocation2 + $0x310] sm:$0xff] %v1716
    %1733 = vst [vmem:[#allocation2 + $0x318] sm:$0xff] %v1717
    %1734 = vst [vmem:[#allocation2 + $0x320] sm:$0xff] %v1718
    %1735 = vst [vmem:[#allocation2 + $0x328] sm:$0xff] %v1719
    %1736 = vst [vmem:[#allocation2 + $0x330] sm:$0xff] %v1720
    %1737 = vst [vmem:[#allocation2 + $0x338] sm:$0xff] %v1721
    %1738 = vst [vmem:[#allocation2 + $0x340] sm:$0xff] %v1722
    %1739 = vst [vmem:[#allocation2 + $0x348] sm:$0xff] %v1723
    %1740 = vst [vmem:[#allocation2 + $0x350] sm:$0xff] %v1724
    %1741 = vst [vmem:[#allocation2 + $0x358] sm:$0xff] %v1725
    %1742 = vst [vmem:[#allocation2 + $0x360] sm:$0xff] %v1726
    %1743 = vst [vmem:[#allocation2 + $0x368] sm:$0xff] %v1727
    %1744 = vst [vmem:[#allocation2 + $0x370] sm:$0xff] %v1728
    %1745 = vst [vmem:[#allocation2 + $0x378] sm:$0xff] %v1729
    %v1746 = vld [vmem:[%s0 + $0x380] sm:$0xff]
    %v1747 = vld [vmem:[%s0 + $0x388] sm:$0xff]
    %v1748 = vld [vmem:[%s0 + $0x390] sm:$0xff]
    %v1749 = vld [vmem:[%s0 + $0x398] sm:$0xff]
    %v1750 = vld [vmem:[%s0 + $0x3a0] sm:$0xff]
    %v1751 = vld [vmem:[%s0 + $0x3a8] sm:$0xff]
    %v1752 = vld [vmem:[%s0 + $0x3b0] sm:$0xff]
    %v1753 = vld [vmem:[%s0 + $0x3b8] sm:$0xff]
    %v1754 = vld [vmem:[%s0 + $0x3c0] sm:$0xff]
    %v1755 = vld [vmem:[%s0 + $0x3c8] sm:$0xff]
    %v1756 = vld [vmem:[%s0 + $0x3d0] sm:$0xff]
    %v1757 = vld [vmem:[%s0 + $0x3d8] sm:$0xff]
    %v1758 = vld [vmem:[%s0 + $0x3e0] sm:$0xff]
    %v1759 = vld [vmem:[%s0 + $0x3e8] sm:$0xff]
    %v1760 = vld [vmem:[%s0 + $0x3f0] sm:$0xff]
    %v1761 = vld [vmem:[%s0 + $0x3f8] sm:$0xff]
    %v1778 = vunpack.c.l.b16 %v1746
    %v1779 = vunpack.c.h.b16 %v1746
    %v1780 = vunpack.c.l.b16 %v1747
    %v1781 = vunpack.c.h.b16 %v1747
    %v1782 = vunpack.c.l.b16 %v1748
    %v1783 = vunpack.c.h.b16 %v1748
    %v1784 = vunpack.c.l.b16 %v1749
    %v1785 = vunpack.c.h.b16 %v1749
    %v1786 = vunpack.c.l.b16 %v1750
    %v1787 = vunpack.c.h.b16 %v1750
    %v1788 = vunpack.c.l.b16 %v1751
    %v1789 = vunpack.c.h.b16 %v1751
    %v1790 = vunpack.c.l.b16 %v1752
    %v1791 = vunpack.c.h.b16 %v1752
    %v1792 = vunpack.c.l.b16 %v1753
    %v1793 = vunpack.c.h.b16 %v1753
    %v1794 = vunpack.c.l.b16 %v1754
    %v1795 = vunpack.c.h.b16 %v1754
    %v1796 = vunpack.c.l.b16 %v1755
    %v1797 = vunpack.c.h.b16 %v1755
    %v1798 = vunpack.c.l.b16 %v1756
    %v1799 = vunpack.c.h.b16 %v1756
    %v1800 = vunpack.c.l.b16 %v1757
    %v1801 = vunpack.c.h.b16 %v1757
    %v1802 = vunpack.c.l.b16 %v1758
    %v1803 = vunpack.c.h.b16 %v1758
    %v1804 = vunpack.c.l.b16 %v1759
    %v1805 = vunpack.c.h.b16 %v1759
    %v1806 = vunpack.c.l.b16 %v1760
    %v1807 = vunpack.c.h.b16 %v1760
    %v1808 = vunpack.c.l.b16 %v1761
    %v1809 = vunpack.c.h.b16 %v1761
    %v1810 = vpack.c.b16 %v1780, %v1778
    %v1811 = vpack.c.b16 %v1781, %v1779
    %v1812 = vpack.c.b16 %v1784, %v1782
    %v1813 = vpack.c.b16 %v1785, %v1783
    %v1814 = vpack.c.b16 %v1788, %v1786
    %v1815 = vpack.c.b16 %v1789, %v1787
    %v1816 = vpack.c.b16 %v1792, %v1790
    %v1817 = vpack.c.b16 %v1793, %v1791
    %v1818 = vpack.c.b16 %v1796, %v1794
    %v1819 = vpack.c.b16 %v1797, %v1795
    %v1820 = vpack.c.b16 %v1800, %v1798
    %v1821 = vpack.c.b16 %v1801, %v1799
    %v1822 = vpack.c.b16 %v1804, %v1802
    %v1823 = vpack.c.b16 %v1805, %v1803
    %v1824 = vpack.c.b16 %v1808, %v1806
    %v1825 = vpack.c.b16 %v1809, %v1807
    %1842 = vmatprep.subr.bf16.mxu0 0
    %1843 = vmatpush1.bf16.msra.mxu0 %v235
    %1844 = vmatprep.subr.bf16.mxu0 0
    %1845 = vmatpush1.bf16.msra.mxu0 %v236
    %1846 = vmatprep.subr.bf16.mxu0 0
    %1847 = vmatpush1.bf16.msra.mxu0 %v237
    %1848 = vmatprep.subr.bf16.mxu0 0
    %1849 = vmatpush1.bf16.msra.mxu0 %v238
    %1850 = vmatprep.subr.bf16.mxu0 0
    %1851 = vmatpush1.bf16.msra.mxu0 %v239
    %1852 = vmatprep.subr.bf16.mxu0 0
    %1853 = vmatpush1.bf16.msra.mxu0 %v240
    %1854 = vmatprep.subr.bf16.mxu0 0
    %1855 = vmatpush1.bf16.msra.mxu0 %v241
    %1856 = vmatprep.subr.bf16.mxu0 0
    %1857 = vmatpush1.bf16.msra.mxu0 %v242
    %1858 = vmatprep.subr.bf16.mxu0 0
    %1859 = vmatpush1.bf16.msra.mxu0 %v243
    %1860 = vmatprep.subr.bf16.mxu0 0
    %1861 = vmatpush1.bf16.msra.mxu0 %v244
    %1862 = vmatprep.subr.bf16.mxu0 0
    %1863 = vmatpush1.bf16.msra.mxu0 %v245
    %1864 = vmatprep.subr.bf16.mxu0 0
    %1865 = vmatpush1.bf16.msra.mxu0 %v246
    %1866 = vmatprep.subr.bf16.mxu0 0
    %1867 = vmatpush1.bf16.msra.mxu0 %v247
    %1868 = vmatprep.subr.bf16.mxu0 0
    %1869 = vmatpush1.bf16.msra.mxu0 %v248
    %1870 = vmatprep.subr.bf16.mxu0 0
    %1871 = vmatpush1.bf16.msra.mxu0 %v249
    %1872 = vmatprep.subr.bf16.mxu0 0
    %1873 = vmatpush1.bf16.msra.mxu0 %v250
    %1874 = vmatprep.mubr.bf16.mxu0 %v1811
    %1875 = vmatmul.mubr.bf16.gmra.mrb[0].mxu0 %v1810
    %v1876 = vpop.f32.mrb[0].mxu0
    %v1877 = vadd.f32 %v89, %v1876
    %v1878 = vpop.f32.mrb[0].mxu0
    %v1879 = vpop.f32.mrb[0].mxu0
    %v1880 = vadd.f32 %v89, %v1879
    %v1881 = vpop.f32.mrb[0].mxu0
    %1882 = vmatprep.mubr.bf16.mxu0 %v1813
    %1883 = vmatmul.mubr.bf16.gmra.mrb[0].mxu0 %v1812
    %v1884 = vpop.f32.mrb[0].mxu0
    %v1885 = vadd.f32 %v89, %v1884
    %v1886 = vpop.f32.mrb[0].mxu0
    %v1887 = vpop.f32.mrb[0].mxu0
    %v1888 = vadd.f32 %v89, %v1887
    %v1889 = vpop.f32.mrb[0].mxu0
    %1890 = vmatprep.mubr.bf16.mxu0 %v1815
    %1891 = vmatmul.mubr.bf16.gmra.mrb[0].mxu0 %v1814
    %v1892 = vpop.f32.mrb[0].mxu0
    %v1893 = vadd.f32 %v89, %v1892
    %v1894 = vpop.f32.mrb[0].mxu0
    %v1895 = vpop.f32.mrb[0].mxu0
    %v1896 = vadd.f32 %v89, %v1895
    %v1897 = vpop.f32.mrb[0].mxu0
    %1898 = vmatprep.mubr.bf16.mxu0 %v1817
    %1899 = vmatmul.mubr.bf16.gmra.mrb[0].mxu0 %v1816
    %v1900 = vpop.f32.mrb[0].mxu0
    %v1901 = vadd.f32 %v89, %v1900
    %v1902 = vpop.f32.mrb[0].mxu0
    %v1903 = vpop.f32.mrb[0].mxu0
    %v1904 = vadd.f32 %v89, %v1903
    %v1905 = vpop.f32.mrb[0].mxu0
    %1906 = vmatprep.mubr.bf16.mxu0 %v1819
    %1907 = vmatmul.mubr.bf16.gmra.mrb[0].mxu0 %v1818
    %v1908 = vpop.f32.mrb[0].mxu0
    %v1909 = vadd.f32 %v89, %v1908
    %v1910 = vpop.f32.mrb[0].mxu0
    %v1911 = vpop.f32.mrb[0].mxu0
    %v1912 = vadd.f32 %v89, %v1911
    %v1913 = vpop.f32.mrb[0].mxu0
    %1914 = vmatprep.mubr.bf16.mxu0 %v1821
    %1915 = vmatmul.mubr.bf16.gmra.mrb[0].mxu0 %v1820
    %v1916 = vpop.f32.mrb[0].mxu0
    %v1917 = vadd.f32 %v89, %v1916
    %v1918 = vpop.f32.mrb[0].mxu0
    %v1919 = vpop.f32.mrb[0].mxu0
    %v1920 = vadd.f32 %v89, %v1919
    %v1921 = vpop.f32.mrb[0].mxu0
    %1922 = vmatprep.mubr.bf16.mxu0 %v1823
    %1923 = vmatmul.mubr.bf16.gmra.mrb[0].mxu0 %v1822
    %v1924 = vpop.f32.mrb[0].mxu0
    %v1925 = vadd.f32 %v89, %v1924
    %v1926 = vpop.f32.mrb[0].mxu0
    %v1927 = vpop.f32.mrb[0].mxu0
    %v1928 = vadd.f32 %v89, %v1927
    %v1929 = vpop.f32.mrb[0].mxu0
    %1930 = vmatprep.mubr.bf16.mxu0 %v1825
    %1931 = vmatmul.mubr.bf16.gmra.mrb[0].mxu0 %v1824
    %v1932 = vpop.f32.mrb[0].mxu0
    %v1933 = vadd.f32 %v89, %v1932
    %v1934 = vpop.f32.mrb[0].mxu0
    %v1935 = vpop.f32.mrb[0].mxu0
    %v1936 = vadd.f32 %v89, %v1935
    %v1937 = vpop.f32.mrb[0].mxu0
    %1938 = vdwg.mxu0
    %v1939 = vmax.f32 %v1877, 0.0
    %v1940 = vmax.f32 %v1880, 0.0
    %v1941 = vmax.f32 %v1885, 0.0
    %v1942 = vmax.f32 %v1888, 0.0
    %v1943 = vmax.f32 %v1893, 0.0
    %v1944 = vmax.f32 %v1896, 0.0
    %v1945 = vmax.f32 %v1901, 0.0
    %v1946 = vmax.f32 %v1904, 0.0
    %v1947 = vmax.f32 %v1909, 0.0
    %v1948 = vmax.f32 %v1912, 0.0
    %v1949 = vmax.f32 %v1917, 0.0
    %v1950 = vmax.f32 %v1920, 0.0
    %v1951 = vmax.f32 %v1925, 0.0
    %v1952 = vmax.f32 %v1928, 0.0
    %v1953 = vmax.f32 %v1933, 0.0
    %v1954 = vmax.f32 %v1936, 0.0
    %1955 = vst [vmem:[#allocation2 + $0x380] sm:$0xff] %v1939
    %1956 = vst [vmem:[#allocation2 + $0x388] sm:$0xff] %v1940
    %1957 = vst [vmem:[#allocation2 + $0x390] sm:$0xff] %v1941
    %1958 = vst [vmem:[#allocation2 + $0x398] sm:$0xff] %v1942
    %1959 = vst [vmem:[#allocation2 + $0x3a0] sm:$0xff] %v1943
    %1960 = vst [vmem:[#allocation2 + $0x3a8] sm:$0xff] %v1944
    %1961 = vst [vmem:[#allocation2 + $0x3b0] sm:$0xff] %v1945
    %1962 = vst [vmem:[#allocation2 + $0x3b8] sm:$0xff] %v1946
    %1963 = vst [vmem:[#allocation2 + $0x3c0] sm:$0xff] %v1947
    %1964 = vst [vmem:[#allocation2 + $0x3c8] sm:$0xff] %v1948
    %1965 = vst [vmem:[#allocation2 + $0x3d0] sm:$0xff] %v1949
    %1966 = vst [vmem:[#allocation2 + $0x3d8] sm:$0xff] %v1950
    %1967 = vst [vmem:[#allocation2 + $0x3e0] sm:$0xff] %v1951
    %1968 = vst [vmem:[#allocation2 + $0x3e8] sm:$0xff] %v1952
    %1969 = vst [vmem:[#allocation2 + $0x3f0] sm:$0xff] %v1953
    %1970 = vst [vmem:[#allocation2 + $0x3f8] sm:$0xff] %v1954
    %v1971 = vld [vmem:[#allocation2] sm:$0xff]
    %v1972 = vld [vmem:[#allocation2 + $0x8] sm:$0xff]
    %v1973 = vld [vmem:[#allocation2 + $0x10] sm:$0xff]
    %v1974 = vld [vmem:[#allocation2 + $0x18] sm:$0xff]
    %v1975 = vld [vmem:[#allocation2 + $0x20] sm:$0xff]
    %v1976 = vld [vmem:[#allocation2 + $0x28] sm:$0xff]
    %v1977 = vld [vmem:[#allocation2 + $0x30] sm:$0xff]
    %v1978 = vld [vmem:[#allocation2 + $0x38] sm:$0xff]
    %v1979 = vld [vmem:[#allocation2 + $0x40] sm:$0xff]
    %v1980 = vld [vmem:[#allocation2 + $0x48] sm:$0xff]
    %v1981 = vld [vmem:[#allocation2 + $0x50] sm:$0xff]
    %v1982 = vld [vmem:[#allocation2 + $0x58] sm:$0xff]
    %v1983 = vld [vmem:[#allocation2 + $0x60] sm:$0xff]
    %v1984 = vld [vmem:[#allocation2 + $0x68] sm:$0xff]
    %v1985 = vld [vmem:[#allocation2 + $0x70] sm:$0xff]
    %v1986 = vld [vmem:[#allocation2 + $0x78] sm:$0xff]
    %v1987 = vld [vmem:[#allocation2 + $0x80] sm:$0xff]
    %v1988 = vld [vmem:[#allocation2 + $0x88] sm:$0xff]
    %v1989 = vld [vmem:[#allocation2 + $0x90] sm:$0xff]
    %v1990 = vld [vmem:[#allocation2 + $0x98] sm:$0xff]
    %v1991 = vld [vmem:[#allocation2 + $0xa0] sm:$0xff]
    %v1992 = vld [vmem:[#allocation2 + $0xa8] sm:$0xff]
    %v1993 = vld [vmem:[#allocation2 + $0xb0] sm:$0xff]
    %v1994 = vld [vmem:[#allocation2 + $0xb8] sm:$0xff]
    %v1995 = vld [vmem:[#allocation2 + $0xc0] sm:$0xff]
    %v1996 = vld [vmem:[#allocation2 + $0xc8] sm:$0xff]
    %v1997 = vld [vmem:[#allocation2 + $0xd0] sm:$0xff]
    %v1998 = vld [vmem:[#allocation2 + $0xd8] sm:$0xff]
    %v1999 = vpack.c.bf16 %v1972, %v1971
    %v2000 = vpack.c.bf16 %v1974, %v1973
    %v2001 = vpack.c.bf16 %v1976, %v1975
    %v2002 = vpack.c.bf16 %v1978, %v1977
    %v2003 = vpack.c.bf16 %v1980, %v1979
    %v2004 = vpack.c.bf16 %v1982, %v1981
    %v2005 = vpack.c.bf16 %v1984, %v1983
    %v2006 = vpack.c.bf16 %v1986, %v1985
    %v2007 = vpack.c.bf16 %v1988, %v1987
    %v2008 = vpack.c.bf16 %v1990, %v1989
    %v2009 = vpack.c.bf16 %v1992, %v1991
    %v2010 = vpack.c.bf16 %v1994, %v1993
    %v2011 = vpack.c.bf16 %v1996, %v1995
    %v2012 = vpack.c.bf16 %v1998, %v1997
    %v2013 = vld [vmem:[%s3] sm:$0xf]
    %v2014 = vld [vmem:[%s3 + $0x4] sm:$0xf]
    %v2015 = vld [vmem:[%s3 + $0x8] sm:$0xf]
    %v2016 = vld [vmem:[%s3 + $0xc] sm:$0xf]
    %v2017 = vld [vmem:[%s3 + $0x10] sm:$0xf]
    %v2018 = vld [vmem:[%s3 + $0x14] sm:$0xf]
    %v2019 = vld [vmem:[%s3 + $0x18] sm:$0xf]
    %v2020 = vld [vmem:[%s3 + $0x1c] sm:$0xf]
    %v2021 = vld [vmem:[%s3 + $0x20] sm:$0xf]
    %v2022 = vld [vmem:[%s3 + $0x24] sm:$0xf]
    %v2023 = vld [vmem:[%s3 + $0x28] sm:$0xf]
    %v2024 = vld [vmem:[%s3 + $0x2c] sm:$0xf]
    %v2025 = vld [vmem:[%s3 + $0x30] sm:$0xf]
    %v2026 = vld [vmem:[%s3 + $0x34] sm:$0xf]
    %v2027 = vld [vmem:[%s3 + $0x38] sm:$0xf]
    %v2028 = vld [vmem:[%s3 + $0x3c] sm:$0xf]
    %v2029 = vld [vmem:[#allocation2 + $0x100] sm:$0xff]
    %v2030 = vld [vmem:[#allocation2 + $0x108] sm:$0xff]
    %v2031 = vld [vmem:[#allocation2 + $0x110] sm:$0xff]
    %v2032 = vld [vmem:[#allocation2 + $0x118] sm:$0xff]
    %v2033 = vld [vmem:[#allocation2 + $0x120] sm:$0xff]
    %v2034 = vld [vmem:[#allocation2 + $0x128] sm:$0xff]
    %v2035 = vld [vmem:[#allocation2 + $0x130] sm:$0xff]
    %v2036 = vld [vmem:[#allocation2 + $0x138] sm:$0xff]
    %v2037 = vld [vmem:[#allocation2 + $0x140] sm:$0xff]
    %v2038 = vld [vmem:[#allocation2 + $0x148] sm:$0xff]
    %v2039 = vld [vmem:[#allocation2 + $0x150] sm:$0xff]
    %v2040 = vld [vmem:[#allocation2 + $0x158] sm:$0xff]
    %v2041 = vld [vmem:[#allocation2 + $0x160] sm:$0xff]
    %v2042 = vld [vmem:[#allocation2 + $0x168] sm:$0xff]
    %v2043 = vld [vmem:[#allocation2 + $0x170] sm:$0xff]
    %v2044 = vld [vmem:[#allocation2 + $0x178] sm:$0xff]
    %v2045 = vld [vmem:[#allocation2 + $0x180] sm:$0xff]
    %v2046 = vld [vmem:[#allocation2 + $0x188] sm:$0xff]
    %v2047 = vld [vmem:[#allocation2 + $0x190] sm:$0xff]
    %v2048 = vld [vmem:[#allocation2 + $0x198] sm:$0xff]
    %v2049 = vld [vmem:[#allocation2 + $0x1a0] sm:$0xff]
    %v2050 = vld [vmem:[#allocation2 + $0x1a8] sm:$0xff]
    %v2051 = vld [vmem:[#allocation2 + $0x1b0] sm:$0xff]
    %v2052 = vld [vmem:[#allocation2 + $0x1b8] sm:$0xff]
    %v2053 = vld [vmem:[#allocation2 + $0x1c0] sm:$0xff]
    %v2054 = vld [vmem:[#allocation2 + $0x1c8] sm:$0xff]
    %v2055 = vld [vmem:[#allocation2 + $0x1d0] sm:$0xff]
    %v2056 = vld [vmem:[#allocation2 + $0x1d8] sm:$0xff]
    %v2057 = vpack.c.bf16 %v2030, %v2029
    %v2058 = vpack.c.bf16 %v2032, %v2031
    %v2059 = vpack.c.bf16 %v2034, %v2033
    %v2060 = vpack.c.bf16 %v2036, %v2035
    %v2061 = vpack.c.bf16 %v2038, %v2037
    %v2062 = vpack.c.bf16 %v2040, %v2039
    %v2063 = vpack.c.bf16 %v2042, %v2041
    %v2064 = vpack.c.bf16 %v2044, %v2043
    %v2065 = vpack.c.bf16 %v2046, %v2045
    %v2066 = vpack.c.bf16 %v2048, %v2047
    %v2067 = vpack.c.bf16 %v2050, %v2049
    %v2068 = vpack.c.bf16 %v2052, %v2051
    %v2069 = vpack.c.bf16 %v2054, %v2053
    %v2070 = vpack.c.bf16 %v2056, %v2055
    %s2071 = scalar_lea.vmem %s3, 64
    %v2072 = vld [vmem:[%s2071] sm:$0xf]
    %v2073 = vld [vmem:[%s2071 + $0x4] sm:$0xf]
    %v2074 = vld [vmem:[%s2071 + $0x8] sm:$0xf]
    %v2075 = vld [vmem:[%s2071 + $0xc] sm:$0xf]
    %v2076 = vld [vmem:[%s2071 + $0x10] sm:$0xf]
    %v2077 = vld [vmem:[%s2071 + $0x14] sm:$0xf]
    %v2078 = vld [vmem:[%s2071 + $0x18] sm:$0xf]
    %v2079 = vld [vmem:[%s2071 + $0x1c] sm:$0xf]
    %v2080 = vld [vmem:[%s2071 + $0x20] sm:$0xf]
    %v2081 = vld [vmem:[%s2071 + $0x24] sm:$0xf]
    %v2082 = vld [vmem:[%s2071 + $0x28] sm:$0xf]
    %v2083 = vld [vmem:[%s2071 + $0x2c] sm:$0xf]
    %v2084 = vld [vmem:[%s2071 + $0x30] sm:$0xf]
    %v2085 = vld [vmem:[%s2071 + $0x34] sm:$0xf]
    %v2086 = vld [vmem:[%s2071 + $0x38] sm:$0xf]
    %v2087 = vld [vmem:[%s2071 + $0x3c] sm:$0xf]
    %v2104 = vunpack.c.l.b16 %v2072
    %v2105 = vunpack.c.l.b16 %v2073
    %v2106 = vunpack.c.l.b16 %v2074
    %v2107 = vunpack.c.l.b16 %v2075
    %v2108 = vunpack.c.l.b16 %v2076
    %v2109 = vunpack.c.l.b16 %v2077
    %v2110 = vunpack.c.l.b16 %v2078
    %v2111 = vunpack.c.l.b16 %v2079
    %v2112 = vunpack.c.l.b16 %v2080
    %v2113 = vunpack.c.l.b16 %v2081
    %v2114 = vunpack.c.l.b16 %v2082
    %v2115 = vunpack.c.l.b16 %v2083
    %v2116 = vunpack.c.l.b16 %v2084
    %v2117 = vunpack.c.l.b16 %v2085
    %v2118 = vunpack.c.l.b16 %v2086
    %v2119 = vunpack.c.l.b16 %v2087
    %v2120 = vpack.c.b16 %v2105, %v2104
    %v2121 = vpack.c.b16 %v2107, %v2106
    %v2122 = vpack.c.b16 %v2109, %v2108
    %v2123 = vpack.c.b16 %v2111, %v2110
    %v2124 = vpack.c.b16 %v2113, %v2112
    %v2125 = vpack.c.b16 %v2115, %v2114
    %v2126 = vpack.c.b16 %v2117, %v2116
    %v2127 = vpack.c.b16 %v2119, %v2118
    %2136 = vmatprep.subr.bf16.mxu0 0
    %2137 = vmatpush1.bf16.msra.mxu0 %v2120
    %2138 = vmatprep.subr.bf16.mxu0 0
    %2139 = vmatpush1.bf16.msra.mxu0 %v2121
    %2140 = vmatprep.subr.bf16.mxu0 0
    %2141 = vmatpush1.bf16.msra.mxu0 %v2122
    %2142 = vmatprep.subr.bf16.mxu0 0
    %2143 = vmatpush1.bf16.msra.mxu0 %v2123
    %2144 = vmatprep.subr.bf16.mxu0 0
    %2145 = vmatpush1.bf16.msra.mxu0 %v2124
    %2146 = vmatprep.subr.bf16.mxu0 0
    %2147 = vmatpush1.bf16.msra.mxu0 %v2125
    %2148 = vmatprep.subr.bf16.mxu0 0
    %2149 = vmatpush1.bf16.msra.mxu0 %v2126
    %2150 = vmatprep.subr.bf16.mxu0 0
    %2151 = vmatpush1.bf16.msra.mxu0 %v2127
    %2152 = vmatprep.subr.bf16.mxu0 0
    %2153 = vmatpush1.bf16.msra.mxu0 0
    %2154 = vmatprep.subr.bf16.mxu0 0
    %2155 = vmatpush1.bf16.msra.mxu0 0
    %2156 = vmatprep.subr.bf16.mxu0 0
    %2157 = vmatpush1.bf16.msra.mxu0 0
    %2158 = vmatprep.subr.bf16.mxu0 0
    %2159 = vmatpush1.bf16.msra.mxu0 0
    %2160 = vmatprep.subr.bf16.mxu0 0
    %2161 = vmatpush1.bf16.msra.mxu0 0
    %2162 = vmatprep.subr.bf16.mxu0 0
    %2163 = vmatpush1.bf16.msra.mxu0 0
    %2164 = vmatprep.subr.bf16.mxu0 0
    %2165 = vmatpush1.bf16.msra.mxu0 0
    %2166 = vmatprep.subr.bf16.mxu0 0
    %2167 = vmatpush1.bf16.msra.mxu0 0
    %2168 = vmatprep.mubr.bf16.mxu0 0
    %2169 = vmatmul.mubr.bf16.gmra.mrb[0].mxu0 %v2057
    %v2170 = vpop.f32.mrb[0].mxu0
    %v2171 = vadd.f32 0.0, %v2170
    %v2172 = vpop.f32.mrb[0].mxu0
    %v2173 = vpop.f32.mrb[0].mxu0
    %v2174 = vadd.f32 0.0, %v2173
    %v2175 = vpop.f32.mrb[0].mxu0
    %2176 = vmatprep.mubr.bf16.mxu0 0
    %2177 = vmatmul.mubr.bf16.gmra.mrb[0].mxu0 %v2058
    %v2178 = vpop.f32.mrb[0].mxu0
    %v2179 = vadd.f32 0.0, %v2178
    %v2180 = vpop.f32.mrb[0].mxu0
    %v2181 = vpop.f32.mrb[0].mxu0
    %v2182 = vadd.f32 0.0, %v2181
    %v2183 = vpop.f32.mrb[0].mxu0
    %2184 = vmatprep.mubr.bf16.mxu0 0
    %2185 = vmatmul.mubr.bf16.gmra.mrb[0].mxu0 %v2059
    %v2186 = vpop.f32.mrb[0].mxu0
    %v2187 = vadd.f32 0.0, %v2186
    %v2188 = vpop.f32.mrb[0].mxu0
    %v2189 = vpop.f32.mrb[0].mxu0
    %v2190 = vadd.f32 0.0, %v2189
    %v2191 = vpop.f32.mrb[0].mxu0
    %2192 = vmatprep.mubr.bf16.mxu0 0
    %2193 = vmatmul.mubr.bf16.gmra.mrb[0].mxu0 %v2060
    %v2194 = vpop.f32.mrb[0].mxu0
    %v2195 = vadd.f32 0.0, %v2194
    %v2196 = vpop.f32.mrb[0].mxu0
    %v2197 = vpop.f32.mrb[0].mxu0
    %v2198 = vadd.f32 0.0, %v2197
    %v2199 = vpop.f32.mrb[0].mxu0
    %2200 = vmatprep.mubr.bf16.mxu0 0
    %2201 = vmatmul.mubr.bf16.gmra.mrb[0].mxu0 %v2061
    %v2202 = vpop.f32.mrb[0].mxu0
    %v2203 = vadd.f32 0.0, %v2202
    %v2204 = vpop.f32.mrb[0].mxu0
    %v2205 = vpop.f32.mrb[0].mxu0
    %v2206 = vadd.f32 0.0, %v2205
    %v2207 = vpop.f32.mrb[0].mxu0
    %2208 = vmatprep.mubr.bf16.mxu0 0
    %2209 = vmatmul.mubr.bf16.gmra.mrb[0].mxu0 %v2062
    %v2210 = vpop.f32.mrb[0].mxu0
    %v2211 = vadd.f32 0.0, %v2210
    %v2212 = vpop.f32.mrb[0].mxu0
    %v2213 = vpop.f32.mrb[0].mxu0
    %v2214 = vadd.f32 0.0, %v2213
    %v2215 = vpop.f32.mrb[0].mxu0
    %2216 = vmatprep.mubr.bf16.mxu0 0
    %2217 = vmatmul.mubr.bf16.gmra.mrb[0].mxu0 %v2063
    %v2218 = vpop.f32.mrb[0].mxu0
    %v2219 = vadd.f32 0.0, %v2218
    %v2220 = vpop.f32.mrb[0].mxu0
    %v2221 = vpop.f32.mrb[0].mxu0
    %v2222 = vadd.f32 0.0, %v2221
    %v2223 = vpop.f32.mrb[0].mxu0
    %2224 = vmatprep.mubr.bf16.mxu0 0
    %2225 = vmatmul.mubr.bf16.gmra.mrb[0].mxu0 %v2064
    %v2226 = vpop.f32.mrb[0].mxu0
    %v2227 = vadd.f32 0.0, %v2226
    %v2228 = vpop.f32.mrb[0].mxu0
    %v2229 = vpop.f32.mrb[0].mxu0
    %v2230 = vadd.f32 0.0, %v2229
    %v2231 = vpop.f32.mrb[0].mxu0
    %2232 = vmatprep.mubr.bf16.mxu0 0
    %2233 = vmatmul.mubr.bf16.gmra.mrb[0].mxu0 %v2065
    %v2234 = vpop.f32.mrb[0].mxu0
    %v2235 = vadd.f32 0.0, %v2234
    %v2236 = vpop.f32.mrb[0].mxu0
    %v2237 = vpop.f32.mrb[0].mxu0
    %v2238 = vadd.f32 0.0, %v2237
    %v2239 = vpop.f32.mrb[0].mxu0
    %2240 = vmatprep.mubr.bf16.mxu0 0
    %2241 = vmatmul.mubr.bf16.gmra.mrb[0].mxu0 %v2066
    %v2242 = vpop.f32.mrb[0].mxu0
    %v2243 = vadd.f32 0.0, %v2242
    %v2244 = vpop.f32.mrb[0].mxu0
    %v2245 = vpop.f32.mrb[0].mxu0
    %v2246 = vadd.f32 0.0, %v2245
    %v2247 = vpop.f32.mrb[0].mxu0
    %2248 = vmatprep.mubr.bf16.mxu0 0
    %2249 = vmatmul.mubr.bf16.gmra.mrb[0].mxu0 %v2067
    %v2250 = vpop.f32.mrb[0].mxu0
    %v2251 = vadd.f32 0.0, %v2250
    %v2252 = vpop.f32.mrb[0].mxu0
    %v2253 = vpop.f32.mrb[0].mxu0
    %v2254 = vadd.f32 0.0, %v2253
    %v2255 = vpop.f32.mrb[0].mxu0
    %2256 = vmatprep.mubr.bf16.mxu0 0
    %2257 = vmatmul.mubr.bf16.gmra.mrb[0].mxu0 %v2068
    %v2258 = vpop.f32.mrb[0].mxu0
    %v2259 = vadd.f32 0.0, %v2258
    %v2260 = vpop.f32.mrb[0].mxu0
    %v2261 = vpop.f32.mrb[0].mxu0
    %v2262 = vadd.f32 0.0, %v2261
    %v2263 = vpop.f32.mrb[0].mxu0
    %2264 = vmatprep.mubr.bf16.mxu0 0
    %2265 = vmatmul.mubr.bf16.gmra.mrb[0].mxu0 %v2069
    %v2266 = vpop.f32.mrb[0].mxu0
    %v2267 = vadd.f32 0.0, %v2266
    %v2268 = vpop.f32.mrb[0].mxu0
    %v2269 = vpop.f32.mrb[0].mxu0
    %v2270 = vadd.f32 0.0, %v2269
    %v2271 = vpop.f32.mrb[0].mxu0
    %2272 = vmatprep.mubr.bf16.mxu0 0
    %2273 = vmatmul.mubr.bf16.gmra.mrb[0].mxu0 %v2070
    %v2274 = vpop.f32.mrb[0].mxu0
    %v2275 = vadd.f32 0.0, %v2274
    %v2276 = vpop.f32.mrb[0].mxu0
    %v2277 = vpop.f32.mrb[0].mxu0
    %v2278 = vadd.f32 0.0, %v2277
    %v2279 = vpop.f32.mrb[0].mxu0
    %2280 = vdwg.mxu0
    %v2297 = vunpack.c.l.b16 %v2013
    %v2298 = vunpack.c.l.b16 %v2014
    %v2299 = vunpack.c.l.b16 %v2015
    %v2300 = vunpack.c.l.b16 %v2016
    %v2301 = vunpack.c.l.b16 %v2017
    %v2302 = vunpack.c.l.b16 %v2018
    %v2303 = vunpack.c.l.b16 %v2019
    %v2304 = vunpack.c.l.b16 %v2020
    %v2305 = vunpack.c.l.b16 %v2021
    %v2306 = vunpack.c.l.b16 %v2022
    %v2307 = vunpack.c.l.b16 %v2023
    %v2308 = vunpack.c.l.b16 %v2024
    %v2309 = vunpack.c.l.b16 %v2025
    %v2310 = vunpack.c.l.b16 %v2026
    %v2311 = vunpack.c.l.b16 %v2027
    %v2312 = vunpack.c.l.b16 %v2028
    %v2313 = vpack.c.b16 %v2298, %v2297
    %v2314 = vpack.c.b16 %v2300, %v2299
    %v2315 = vpack.c.b16 %v2302, %v2301
    %v2316 = vpack.c.b16 %v2304, %v2303
    %v2317 = vpack.c.b16 %v2306, %v2305
    %v2318 = vpack.c.b16 %v2308, %v2307
    %v2319 = vpack.c.b16 %v2310, %v2309
    %v2320 = vpack.c.b16 %v2312, %v2311
    %2329 = vmatprep.subr.bf16.mxu0 0
    %2330 = vmatpush1.bf16.msra.mxu0 %v2313
    %2331 = vmatprep.subr.bf16.mxu0 0
    %2332 = vmatpush1.bf16.msra.mxu0 %v2314
    %2333 = vmatprep.subr.bf16.mxu0 0
    %2334 = vmatpush1.bf16.msra.mxu0 %v2315
    %2335 = vmatprep.subr.bf16.mxu0 0
    %2336 = vmatpush1.bf16.msra.mxu0 %v2316
    %2337 = vmatprep.subr.bf16.mxu0 0
    %2338 = vmatpush1.bf16.msra.mxu0 %v2317
    %2339 = vmatprep.subr.bf16.mxu0 0
    %2340 = vmatpush1.bf16.msra.mxu0 %v2318
    %2341 = vmatprep.subr.bf16.mxu0 0
    %2342 = vmatpush1.bf16.msra.mxu0 %v2319
    %2343 = vmatprep.subr.bf16.mxu0 0
    %2344 = vmatpush1.bf16.msra.mxu0 %v2320
    %2345 = vmatprep.subr.bf16.mxu0 0
    %2346 = vmatpush1.bf16.msra.mxu0 0
    %2347 = vmatprep.subr.bf16.mxu0 0
    %2348 = vmatpush1.bf16.msra.mxu0 0
    %2349 = vmatprep.subr.bf16.mxu0 0
    %2350 = vmatpush1.bf16.msra.mxu0 0
    %2351 = vmatprep.subr.bf16.mxu0 0
    %2352 = vmatpush1.bf16.msra.mxu0 0
    %2353 = vmatprep.subr.bf16.mxu0 0
    %2354 = vmatpush1.bf16.msra.mxu0 0
    %2355 = vmatprep.subr.bf16.mxu0 0
    %2356 = vmatpush1.bf16.msra.mxu0 0
    %2357 = vmatprep.subr.bf16.mxu0 0
    %2358 = vmatpush1.bf16.msra.mxu0 0
    %2359 = vmatprep.subr.bf16.mxu0 0
    %2360 = vmatpush1.bf16.msra.mxu0 0
    %2361 = vmatprep.mubr.bf16.mxu0 0
    %2362 = vmatmul.mubr.bf16.gmra.mrb[0].mxu0 %v1999
    %v2363 = vpop.f32.mrb[0].mxu0
    %v2364 = vadd.f32 %v2171, %v2363
    %v2365 = vpop.f32.mrb[0].mxu0
    %v2366 = vpop.f32.mrb[0].mxu0
    %v2367 = vadd.f32 %v2174, %v2366
    %v2368 = vpop.f32.mrb[0].mxu0
    %2369 = vmatprep.mubr.bf16.mxu0 0
    %2370 = vmatmul.mubr.bf16.gmra.mrb[0].mxu0 %v2000
    %v2371 = vpop.f32.mrb[0].mxu0
    %v2372 = vadd.f32 %v2179, %v2371
    %v2373 = vpop.f32.mrb[0].mxu0
    %v2374 = vpop.f32.mrb[0].mxu0
    %v2375 = vadd.f32 %v2182, %v2374
    %v2376 = vpop.f32.mrb[0].mxu0
    %2377 = vmatprep.mubr.bf16.mxu0 0
    %2378 = vmatmul.mubr.bf16.gmra.mrb[0].mxu0 %v2001
    %v2379 = vpop.f32.mrb[0].mxu0
    %v2380 = vadd.f32 %v2187, %v2379
    %v2381 = vpop.f32.mrb[0].mxu0
    %v2382 = vpop.f32.mrb[0].mxu0
    %v2383 = vadd.f32 %v2190, %v2382
    %v2384 = vpop.f32.mrb[0].mxu0
    %2385 = vmatprep.mubr.bf16.mxu0 0
    %2386 = vmatmul.mubr.bf16.gmra.mrb[0].mxu0 %v2002
    %v2387 = vpop.f32.mrb[0].mxu0
    %v2388 = vadd.f32 %v2195, %v2387
    %v2389 = vpop.f32.mrb[0].mxu0
    %v2390 = vpop.f32.mrb[0].mxu0
    %v2391 = vadd.f32 %v2198, %v2390
    %v2392 = vpop.f32.mrb[0].mxu0
    %2393 = vmatprep.mubr.bf16.mxu0 0
    %2394 = vmatmul.mubr.bf16.gmra.mrb[0].mxu0 %v2003
    %v2395 = vpop.f32.mrb[0].mxu0
    %v2396 = vadd.f32 %v2203, %v2395
    %v2397 = vpop.f32.mrb[0].mxu0
    %v2398 = vpop.f32.mrb[0].mxu0
    %v2399 = vadd.f32 %v2206, %v2398
    %v2400 = vpop.f32.mrb[0].mxu0
    %2401 = vmatprep.mubr.bf16.mxu0 0
    %2402 = vmatmul.mubr.bf16.gmra.mrb[0].mxu0 %v2004
    %v2403 = vpop.f32.mrb[0].mxu0
    %v2404 = vadd.f32 %v2211, %v2403
    %v2405 = vpop.f32.mrb[0].mxu0
    %v2406 = vpop.f32.mrb[0].mxu0
    %v2407 = vadd.f32 %v2214, %v2406
    %v2408 = vpop.f32.mrb[0].mxu0
    %2409 = vmatprep.mubr.bf16.mxu0 0
    %2410 = vmatmul.mubr.bf16.gmra.mrb[0].mxu0 %v2005
    %v2411 = vpop.f32.mrb[0].mxu0
    %v2412 = vadd.f32 %v2219, %v2411
    %v2413 = vpop.f32.mrb[0].mxu0
    %v2414 = vpop.f32.mrb[0].mxu0
    %v2415 = vadd.f32 %v2222, %v2414
    %v2416 = vpop.f32.mrb[0].mxu0
    %2417 = vmatprep.mubr.bf16.mxu0 0
    %2418 = vmatmul.mubr.bf16.gmra.mrb[0].mxu0 %v2006
    %v2419 = vpop.f32.mrb[0].mxu0
    %v2420 = vadd.f32 %v2227, %v2419
    %v2421 = vpop.f32.mrb[0].mxu0
    %v2422 = vpop.f32.mrb[0].mxu0
    %v2423 = vadd.f32 %v2230, %v2422
    %v2424 = vpop.f32.mrb[0].mxu0
    %2425 = vmatprep.mubr.bf16.mxu0 0
    %2426 = vmatmul.mubr.bf16.gmra.mrb[0].mxu0 %v2007
    %v2427 = vpop.f32.mrb[0].mxu0
    %v2428 = vadd.f32 %v2235, %v2427
    %v2429 = vpop.f32.mrb[0].mxu0
    %v2430 = vpop.f32.mrb[0].mxu0
    %v2431 = vadd.f32 %v2238, %v2430
    %v2432 = vpop.f32.mrb[0].mxu0
    %2433 = vmatprep.mubr.bf16.mxu0 0
    %2434 = vmatmul.mubr.bf16.gmra.mrb[0].mxu0 %v2008
    %v2435 = vpop.f32.mrb[0].mxu0
    %v2436 = vadd.f32 %v2243, %v2435
    %v2437 = vpop.f32.mrb[0].mxu0
    %v2438 = vpop.f32.mrb[0].mxu0
    %v2439 = vadd.f32 %v2246, %v2438
    %v2440 = vpop.f32.mrb[0].mxu0
    %2441 = vmatprep.mubr.bf16.mxu0 0
    %2442 = vmatmul.mubr.bf16.gmra.mrb[0].mxu0 %v2009
    %v2443 = vpop.f32.mrb[0].mxu0
    %v2444 = vadd.f32 %v2251, %v2443
    %v2445 = vpop.f32.mrb[0].mxu0
    %v2446 = vpop.f32.mrb[0].mxu0
    %v2447 = vadd.f32 %v2254, %v2446
    %v2448 = vpop.f32.mrb[0].mxu0
    %2449 = vmatprep.mubr.bf16.mxu0 0
    %2450 = vmatmul.mubr.bf16.gmra.mrb[0].mxu0 %v2010
    %v2451 = vpop.f32.mrb[0].mxu0
    %v2452 = vadd.f32 %v2259, %v2451
    %v2453 = vpop.f32.mrb[0].mxu0
    %v2454 = vpop.f32.mrb[0].mxu0
    %v2455 = vadd.f32 %v2262, %v2454
    %v2456 = vpop.f32.mrb[0].mxu0
    %2457 = vmatprep.mubr.bf16.mxu0 0
    %2458 = vmatmul.mubr.bf16.gmra.mrb[0].mxu0 %v2011
    %v2459 = vpop.f32.mrb[0].mxu0
    %v2460 = vadd.f32 %v2267, %v2459
    %v2461 = vpop.f32.mrb[0].mxu0
    %v2462 = vpop.f32.mrb[0].mxu0
    %v2463 = vadd.f32 %v2270, %v2462
    %v2464 = vpop.f32.mrb[0].mxu0
    %2465 = vmatprep.mubr.bf16.mxu0 0
    %2466 = vmatmul.mubr.bf16.gmra.mrb[0].mxu0 %v2012
    %v2467 = vpop.f32.mrb[0].mxu0
    %v2468 = vadd.f32 %v2275, %v2467
    %v2469 = vpop.f32.mrb[0].mxu0
    %v2470 = vpop.f32.mrb[0].mxu0
    %v2471 = vadd.f32 %v2278, %v2470
    %v2472 = vpop.f32.mrb[0].mxu0
    %2473 = vdwg.mxu0
    %v2474 = vld [vmem:[#allocation2 + $0x1] sm:$0xff]
    %v2475 = vld [vmem:[#allocation2 + $0x9] sm:$0xff]
    %v2476 = vld [vmem:[#allocation2 + $0x11] sm:$0xff]
    %v2477 = vld [vmem:[#allocation2 + $0x19] sm:$0xff]
    %v2478 = vld [vmem:[#allocation2 + $0x21] sm:$0xff]
    %v2479 = vld [vmem:[#allocation2 + $0x29] sm:$0xff]
    %v2480 = vld [vmem:[#allocation2 + $0x31] sm:$0xff]
    %v2481 = vld [vmem:[#allocation2 + $0x39] sm:$0xff]
    %v2482 = vld [vmem:[#allocation2 + $0x41] sm:$0xff]
    %v2483 = vld [vmem:[#allocation2 + $0x49] sm:$0xff]
    %v2484 = vld [vmem:[#allocation2 + $0x51] sm:$0xff]
    %v2485 = vld [vmem:[#allocation2 + $0x59] sm:$0xff]
    %v2486 = vld [vmem:[#allocation2 + $0x61] sm:$0xff]
    %v2487 = vld [vmem:[#allocation2 + $0x69] sm:$0xff]
    %v2488 = vld [vmem:[#allocation2 + $0x71] sm:$0xff]
    %v2489 = vld [vmem:[#allocation2 + $0x79] sm:$0xff]
    %v2490 = vld [vmem:[#allocation2 + $0x81] sm:$0xff]
    %v2491 = vld [vmem:[#allocation2 + $0x89] sm:$0xff]
    %v2492 = vld [vmem:[#allocation2 + $0x91] sm:$0xff]
    %v2493 = vld [vmem:[#allocation2 + $0x99] sm:$0xff]
    %v2494 = vld [vmem:[#allocation2 + $0xa1] sm:$0xff]
    %v2495 = vld [vmem:[#allocation2 + $0xa9] sm:$0xff]
    %v2496 = vld [vmem:[#allocation2 + $0xb1] sm:$0xff]
    %v2497 = vld [vmem:[#allocation2 + $0xb9] sm:$0xff]
    %v2498 = vld [vmem:[#allocation2 + $0xc1] sm:$0xff]
    %v2499 = vld [vmem:[#allocation2 + $0xc9] sm:$0xff]
    %v2500 = vld [vmem:[#allocation2 + $0xd1] sm:$0xff]
    %v2501 = vld [vmem:[#allocation2 + $0xd9] sm:$0xff]
    %v2502 = vpack.c.bf16 %v2475, %v2474
    %v2503 = vpack.c.bf16 %v2477, %v2476
    %v2504 = vpack.c.bf16 %v2479, %v2478
    %v2505 = vpack.c.bf16 %v2481, %v2480
    %v2506 = vpack.c.bf16 %v2483, %v2482
    %v2507 = vpack.c.bf16 %v2485, %v2484
    %v2508 = vpack.c.bf16 %v2487, %v2486
    %v2509 = vpack.c.bf16 %v2489, %v2488
    %v2510 = vpack.c.bf16 %v2491, %v2490
    %v2511 = vpack.c.bf16 %v2493, %v2492
    %v2512 = vpack.c.bf16 %v2495, %v2494
    %v2513 = vpack.c.bf16 %v2497, %v2496
    %v2514 = vpack.c.bf16 %v2499, %v2498
    %v2515 = vpack.c.bf16 %v2501, %v2500
    %s2516 = scalar_lea.vmem %s3, 128
    %v2517 = vld [vmem:[%s2516] sm:$0xf]
    %v2518 = vld [vmem:[%s2516 + $0x4] sm:$0xf]
    %v2519 = vld [vmem:[%s2516 + $0x8] sm:$0xf]
    %v2520 = vld [vmem:[%s2516 + $0xc] sm:$0xf]
    %v2521 = vld [vmem:[%s2516 + $0x10] sm:$0xf]
    %v2522 = vld [vmem:[%s2516 + $0x14] sm:$0xf]
    %v2523 = vld [vmem:[%s2516 + $0x18] sm:$0xf]
    %v2524 = vld [vmem:[%s2516 + $0x1c] sm:$0xf]
    %v2525 = vld [vmem:[%s2516 + $0x20] sm:$0xf]
    %v2526 = vld [vmem:[%s2516 + $0x24] sm:$0xf]
    %v2527 = vld [vmem:[%s2516 + $0x28] sm:$0xf]
    %v2528 = vld [vmem:[%s2516 + $0x2c] sm:$0xf]
    %v2529 = vld [vmem:[%s2516 + $0x30] sm:$0xf]
    %v2530 = vld [vmem:[%s2516 + $0x34] sm:$0xf]
    %v2531 = vld [vmem:[%s2516 + $0x38] sm:$0xf]
    %v2532 = vld [vmem:[%s2516 + $0x3c] sm:$0xf]
    %v2549 = vunpack.c.l.b16 %v2517
    %v2550 = vunpack.c.l.b16 %v2518
    %v2551 = vunpack.c.l.b16 %v2519
    %v2552 = vunpack.c.l.b16 %v2520
    %v2553 = vunpack.c.l.b16 %v2521
    %v2554 = vunpack.c.l.b16 %v2522
    %v2555 = vunpack.c.l.b16 %v2523
    %v2556 = vunpack.c.l.b16 %v2524
    %v2557 = vunpack.c.l.b16 %v2525
    %v2558 = vunpack.c.l.b16 %v2526
    %v2559 = vunpack.c.l.b16 %v2527
    %v2560 = vunpack.c.l.b16 %v2528
    %v2561 = vunpack.c.l.b16 %v2529
    %v2562 = vunpack.c.l.b16 %v2530
    %v2563 = vunpack.c.l.b16 %v2531
    %v2564 = vunpack.c.l.b16 %v2532
    %v2565 = vpack.c.b16 %v2550, %v2549
    %v2566 = vpack.c.b16 %v2552, %v2551
    %v2567 = vpack.c.b16 %v2554, %v2553
    %v2568 = vpack.c.b16 %v2556, %v2555
    %v2569 = vpack.c.b16 %v2558, %v2557
    %v2570 = vpack.c.b16 %v2560, %v2559
    %v2571 = vpack.c.b16 %v2562, %v2561
    %v2572 = vpack.c.b16 %v2564, %v2563
    %2581 = vmatprep.subr.bf16.mxu0 0
    %2582 = vmatpush1.bf16.msra.mxu0 %v2565
    %2583 = vmatprep.subr.bf16.mxu0 0
    %2584 = vmatpush1.bf16.msra.mxu0 %v2566
    %2585 = vmatprep.subr.bf16.mxu0 0
    %2586 = vmatpush1.bf16.msra.mxu0 %v2567
    %2587 = vmatprep.subr.bf16.mxu0 0
    %2588 = vmatpush1.bf16.msra.mxu0 %v2568
    %2589 = vmatprep.subr.bf16.mxu0 0
    %2590 = vmatpush1.bf16.msra.mxu0 %v2569
    %2591 = vmatprep.subr.bf16.mxu0 0
    %2592 = vmatpush1.bf16.msra.mxu0 %v2570
    %2593 = vmatprep.subr.bf16.mxu0 0
    %2594 = vmatpush1.bf16.msra.mxu0 %v2571
    %2595 = vmatprep.subr.bf16.mxu0 0
    %2596 = vmatpush1.bf16.msra.mxu0 %v2572
    %2597 = vmatprep.subr.bf16.mxu0 0
    %2598 = vmatpush1.bf16.msra.mxu0 0
    %2599 = vmatprep.subr.bf16.mxu0 0
    %2600 = vmatpush1.bf16.msra.mxu0 0
    %2601 = vmatprep.subr.bf16.mxu0 0
    %2602 = vmatpush1.bf16.msra.mxu0 0
    %2603 = vmatprep.subr.bf16.mxu0 0
    %2604 = vmatpush1.bf16.msra.mxu0 0
    %2605 = vmatprep.subr.bf16.mxu0 0
    %2606 = vmatpush1.bf16.msra.mxu0 0
    %2607 = vmatprep.subr.bf16.mxu0 0
    %2608 = vmatpush1.bf16.msra.mxu0 0
    %2609 = vmatprep.subr.bf16.mxu0 0
    %2610 = vmatpush1.bf16.msra.mxu0 0
    %2611 = vmatprep.subr.bf16.mxu0 0
    %2612 = vmatpush1.bf16.msra.mxu0 0
    %2613 = vmatprep.mubr.bf16.mxu0 0
    %2614 = vmatmul.mubr.bf16.gmra.mrb[0].mxu0 %v2502
    %v2615 = vpop.f32.mrb[0].mxu0
    %v2616 = vadd.f32 0.0, %v2615
    %v2617 = vpop.f32.mrb[0].mxu0
    %v2618 = vpop.f32.mrb[0].mxu0
    %v2619 = vadd.f32 0.0, %v2618
    %v2620 = vpop.f32.mrb[0].mxu0
    %2621 = vmatprep.mubr.bf16.mxu0 0
    %2622 = vmatmul.mubr.bf16.gmra.mrb[0].mxu0 %v2503
    %v2623 = vpop.f32.mrb[0].mxu0
    %v2624 = vadd.f32 0.0, %v2623
    %v2625 = vpop.f32.mrb[0].mxu0
    %v2626 = vpop.f32.mrb[0].mxu0
    %v2627 = vadd.f32 0.0, %v2626
    %v2628 = vpop.f32.mrb[0].mxu0
    %2629 = vmatprep.mubr.bf16.mxu0 0
    %2630 = vmatmul.mubr.bf16.gmra.mrb[0].mxu0 %v2504
    %v2631 = vpop.f32.mrb[0].mxu0
    %v2632 = vadd.f32 0.0, %v2631
    %v2633 = vpop.f32.mrb[0].mxu0
    %v2634 = vpop.f32.mrb[0].mxu0
    %v2635 = vadd.f32 0.0, %v2634
    %v2636 = vpop.f32.mrb[0].mxu0
    %2637 = vmatprep.mubr.bf16.mxu0 0
    %2638 = vmatmul.mubr.bf16.gmra.mrb[0].mxu0 %v2505
    %v2639 = vpop.f32.mrb[0].mxu0
    %v2640 = vadd.f32 0.0, %v2639
    %v2641 = vpop.f32.mrb[0].mxu0
    %v2642 = vpop.f32.mrb[0].mxu0
    %v2643 = vadd.f32 0.0, %v2642
    %v2644 = vpop.f32.mrb[0].mxu0
    %2645 = vmatprep.mubr.bf16.mxu0 0
    %2646 = vmatmul.mubr.bf16.gmra.mrb[0].mxu0 %v2506
    %v2647 = vpop.f32.mrb[0].mxu0
    %v2648 = vadd.f32 0.0, %v2647
    %v2649 = vpop.f32.mrb[0].mxu0
    %v2650 = vpop.f32.mrb[0].mxu0
    %v2651 = vadd.f32 0.0, %v2650
    %v2652 = vpop.f32.mrb[0].mxu0
    %2653 = vmatprep.mubr.bf16.mxu0 0
    %2654 = vmatmul.mubr.bf16.gmra.mrb[0].mxu0 %v2507
    %v2655 = vpop.f32.mrb[0].mxu0
    %v2656 = vadd.f32 0.0, %v2655
    %v2657 = vpop.f32.mrb[0].mxu0
    %v2658 = vpop.f32.mrb[0].mxu0
    %v2659 = vadd.f32 0.0, %v2658
    %v2660 = vpop.f32.mrb[0].mxu0
    %2661 = vmatprep.mubr.bf16.mxu0 0
    %2662 = vmatmul.mubr.bf16.gmra.mrb[0].mxu0 %v2508
    %v2663 = vpop.f32.mrb[0].mxu0
    %v2664 = vadd.f32 0.0, %v2663
    %v2665 = vpop.f32.mrb[0].mxu0
    %v2666 = vpop.f32.mrb[0].mxu0
    %v2667 = vadd.f32 0.0, %v2666
    %v2668 = vpop.f32.mrb[0].mxu0
    %2669 = vmatprep.mubr.bf16.mxu0 0
    %2670 = vmatmul.mubr.bf16.gmra.mrb[0].mxu0 %v2509
    %v2671 = vpop.f32.mrb[0].mxu0
    %v2672 = vadd.f32 0.0, %v2671
    %v2673 = vpop.f32.mrb[0].mxu0
    %v2674 = vpop.f32.mrb[0].mxu0
    %v2675 = vadd.f32 0.0, %v2674
    %v2676 = vpop.f32.mrb[0].mxu0
    %2677 = vmatprep.mubr.bf16.mxu0 0
    %2678 = vmatmul.mubr.bf16.gmra.mrb[0].mxu0 %v2510
    %v2679 = vpop.f32.mrb[0].mxu0
    %v2680 = vadd.f32 0.0, %v2679
    %v2681 = vpop.f32.mrb[0].mxu0
    %v2682 = vpop.f32.mrb[0].mxu0
    %v2683 = vadd.f32 0.0, %v2682
    %v2684 = vpop.f32.mrb[0].mxu0
    %2685 = vmatprep.mubr.bf16.mxu0 0
    %2686 = vmatmul.mubr.bf16.gmra.mrb[0].mxu0 %v2511
    %v2687 = vpop.f32.mrb[0].mxu0
    %v2688 = vadd.f32 0.0, %v2687
    %v2689 = vpop.f32.mrb[0].mxu0
    %v2690 = vpop.f32.mrb[0].mxu0
    %v2691 = vadd.f32 0.0, %v2690
    %v2692 = vpop.f32.mrb[0].mxu0
    %2693 = vmatprep.mubr.bf16.mxu0 0
    %2694 = vmatmul.mubr.bf16.gmra.mrb[0].mxu0 %v2512
    %v2695 = vpop.f32.mrb[0].mxu0
    %v2696 = vadd.f32 0.0, %v2695
    %v2697 = vpop.f32.mrb[0].mxu0
    %v2698 = vpop.f32.mrb[0].mxu0
    %v2699 = vadd.f32 0.0, %v2698
    %v2700 = vpop.f32.mrb[0].mxu0
    %2701 = vmatprep.mubr.bf16.mxu0 0
    %2702 = vmatmul.mubr.bf16.gmra.mrb[0].mxu0 %v2513
    %v2703 = vpop.f32.mrb[0].mxu0
    %v2704 = vadd.f32 0.0, %v2703
    %v2705 = vpop.f32.mrb[0].mxu0
    %v2706 = vpop.f32.mrb[0].mxu0
    %v2707 = vadd.f32 0.0, %v2706
    %v2708 = vpop.f32.mrb[0].mxu0
    %2709 = vmatprep.mubr.bf16.mxu0 0
    %2710 = vmatmul.mubr.bf16.gmra.mrb[0].mxu0 %v2514
    %v2711 = vpop.f32.mrb[0].mxu0
    %v2712 = vadd.f32 0.0, %v2711
    %v2713 = vpop.f32.mrb[0].mxu0
    %v2714 = vpop.f32.mrb[0].mxu0
    %v2715 = vadd.f32 0.0, %v2714
    %v2716 = vpop.f32.mrb[0].mxu0
    %2717 = vmatprep.mubr.bf16.mxu0 0
    %2718 = vmatmul.mubr.bf16.gmra.mrb[0].mxu0 %v2515
    %v2719 = vpop.f32.mrb[0].mxu0
    %v2720 = vadd.f32 0.0, %v2719
    %v2721 = vpop.f32.mrb[0].mxu0
    %v2722 = vpop.f32.mrb[0].mxu0
    %v2723 = vadd.f32 0.0, %v2722
    %v2724 = vpop.f32.mrb[0].mxu0
    %2725 = vdwg.mxu0
    %v2726 = vadd.f32 %v2364, %v2616
    %v2727 = vadd.f32 %v2367, %v2619
    %v2728 = vadd.f32 %v2372, %v2624
    %v2729 = vadd.f32 %v2375, %v2627
    %v2730 = vadd.f32 %v2380, %v2632
    %v2731 = vadd.f32 %v2383, %v2635
    %v2732 = vadd.f32 %v2388, %v2640
    %v2733 = vadd.f32 %v2391, %v2643
    %v2734 = vadd.f32 %v2396, %v2648
    %v2735 = vadd.f32 %v2399, %v2651
    %v2736 = vadd.f32 %v2404, %v2656
    %v2737 = vadd.f32 %v2407, %v2659
    %v2738 = vadd.f32 %v2412, %v2664
    %v2739 = vadd.f32 %v2415, %v2667
    %v2740 = vadd.f32 %v2420, %v2672
    %v2741 = vadd.f32 %v2423, %v2675
    %v2742 = vadd.f32 %v2428, %v2680
    %v2743 = vadd.f32 %v2431, %v2683
    %v2744 = vadd.f32 %v2436, %v2688
    %v2745 = vadd.f32 %v2439, %v2691
    %v2746 = vadd.f32 %v2444, %v2696
    %v2747 = vadd.f32 %v2447, %v2699
    %v2748 = vadd.f32 %v2452, %v2704
    %v2749 = vadd.f32 %v2455, %v2707
    %v2750 = vadd.f32 %v2460, %v2712
    %v2751 = vadd.f32 %v2463, %v2715
    %v2752 = vadd.f32 %v2468, %v2720
    %v2753 = vadd.f32 %v2471, %v2723
    %v2754 = vld [vmem:[#allocation2 + $0x101] sm:$0xff]
    %v2755 = vld [vmem:[#allocation2 + $0x109] sm:$0xff]
    %v2756 = vld [vmem:[#allocation2 + $0x111] sm:$0xff]
    %v2757 = vld [vmem:[#allocation2 + $0x119] sm:$0xff]
    %v2758 = vld [vmem:[#allocation2 + $0x121] sm:$0xff]
    %v2759 = vld [vmem:[#allocation2 + $0x129] sm:$0xff]
    %v2760 = vld [vmem:[#allocation2 + $0x131] sm:$0xff]
    %v2761 = vld [vmem:[#allocation2 + $0x139] sm:$0xff]
    %v2762 = vld [vmem:[#allocation2 + $0x141] sm:$0xff]
    %v2763 = vld [vmem:[#allocation2 + $0x149] sm:$0xff]
    %v2764 = vld [vmem:[#allocation2 + $0x151] sm:$0xff]
    %v2765 = vld [vmem:[#allocation2 + $0x159] sm:$0xff]
    %v2766 = vld [vmem:[#allocation2 + $0x161] sm:$0xff]
    %v2767 = vld [vmem:[#allocation2 + $0x169] sm:$0xff]
    %v2768 = vld [vmem:[#allocation2 + $0x171] sm:$0xff]
    %v2769 = vld [vmem:[#allocation2 + $0x179] sm:$0xff]
    %v2770 = vld [vmem:[#allocation2 + $0x181] sm:$0xff]
    %v2771 = vld [vmem:[#allocation2 + $0x189] sm:$0xff]
    %v2772 = vld [vmem:[#allocation2 + $0x191] sm:$0xff]
    %v2773 = vld [vmem:[#allocation2 + $0x199] sm:$0xff]
    %v2774 = vld [vmem:[#allocation2 + $0x1a1] sm:$0xff]
    %v2775 = vld [vmem:[#allocation2 + $0x1a9] sm:$0xff]
    %v2776 = vld [vmem:[#allocation2 + $0x1b1] sm:$0xff]
    %v2777 = vld [vmem:[#allocation2 + $0x1b9] sm:$0xff]
    %v2778 = vld [vmem:[#allocation2 + $0x1c1] sm:$0xff]
    %v2779 = vld [vmem:[#allocation2 + $0x1c9] sm:$0xff]
    %v2780 = vld [vmem:[#allocation2 + $0x1d1] sm:$0xff]
    %v2781 = vld [vmem:[#allocation2 + $0x1d9] sm:$0xff]
    %v2782 = vpack.c.bf16 %v2755, %v2754
    %v2783 = vpack.c.bf16 %v2757, %v2756
    %v2784 = vpack.c.bf16 %v2759, %v2758
    %v2785 = vpack.c.bf16 %v2761, %v2760
    %v2786 = vpack.c.bf16 %v2763, %v2762
    %v2787 = vpack.c.bf16 %v2765, %v2764
    %v2788 = vpack.c.bf16 %v2767, %v2766
    %v2789 = vpack.c.bf16 %v2769, %v2768
    %v2790 = vpack.c.bf16 %v2771, %v2770
    %v2791 = vpack.c.bf16 %v2773, %v2772
    %v2792 = vpack.c.bf16 %v2775, %v2774
    %v2793 = vpack.c.bf16 %v2777, %v2776
    %v2794 = vpack.c.bf16 %v2779, %v2778
    %v2795 = vpack.c.bf16 %v2781, %v2780
    %s2796 = scalar_lea.vmem %s3, 192
    %v2797 = vld [vmem:[%s2796] sm:$0xf]
    %v2798 = vld [vmem:[%s2796 + $0x4] sm:$0xf]
    %v2799 = vld [vmem:[%s2796 + $0x8] sm:$0xf]
    %v2800 = vld [vmem:[%s2796 + $0xc] sm:$0xf]
    %v2801 = vld [vmem:[%s2796 + $0x10] sm:$0xf]
    %v2802 = vld [vmem:[%s2796 + $0x14] sm:$0xf]
    %v2803 = vld [vmem:[%s2796 + $0x18] sm:$0xf]
    %v2804 = vld [vmem:[%s2796 + $0x1c] sm:$0xf]
    %v2805 = vld [vmem:[%s2796 + $0x20] sm:$0xf]
    %v2806 = vld [vmem:[%s2796 + $0x24] sm:$0xf]
    %v2807 = vld [vmem:[%s2796 + $0x28] sm:$0xf]
    %v2808 = vld [vmem:[%s2796 + $0x2c] sm:$0xf]
    %v2809 = vld [vmem:[%s2796 + $0x30] sm:$0xf]
    %v2810 = vld [vmem:[%s2796 + $0x34] sm:$0xf]
    %v2811 = vld [vmem:[%s2796 + $0x38] sm:$0xf]
    %v2812 = vld [vmem:[%s2796 + $0x3c] sm:$0xf]
    %v2829 = vunpack.c.l.b16 %v2797
    %v2830 = vunpack.c.l.b16 %v2798
    %v2831 = vunpack.c.l.b16 %v2799
    %v2832 = vunpack.c.l.b16 %v2800
    %v2833 = vunpack.c.l.b16 %v2801
    %v2834 = vunpack.c.l.b16 %v2802
    %v2835 = vunpack.c.l.b16 %v2803
    %v2836 = vunpack.c.l.b16 %v2804
    %v2837 = vunpack.c.l.b16 %v2805
    %v2838 = vunpack.c.l.b16 %v2806
    %v2839 = vunpack.c.l.b16 %v2807
    %v2840 = vunpack.c.l.b16 %v2808
    %v2841 = vunpack.c.l.b16 %v2809
    %v2842 = vunpack.c.l.b16 %v2810
    %v2843 = vunpack.c.l.b16 %v2811
    %v2844 = vunpack.c.l.b16 %v2812
    %v2845 = vpack.c.b16 %v2830, %v2829
    %v2846 = vpack.c.b16 %v2832, %v2831
    %v2847 = vpack.c.b16 %v2834, %v2833
    %v2848 = vpack.c.b16 %v2836, %v2835
    %v2849 = vpack.c.b16 %v2838, %v2837
    %v2850 = vpack.c.b16 %v2840, %v2839
    %v2851 = vpack.c.b16 %v2842, %v2841
    %v2852 = vpack.c.b16 %v2844, %v2843
    %2861 = vmatprep.subr.bf16.mxu0 0
    %2862 = vmatpush1.bf16.msra.mxu0 %v2845
    %2863 = vmatprep.subr.bf16.mxu0 0
    %2864 = vmatpush1.bf16.msra.mxu0 %v2846
    %2865 = vmatprep.subr.bf16.mxu0 0
    %2866 = vmatpush1.bf16.msra.mxu0 %v2847
    %2867 = vmatprep.subr.bf16.mxu0 0
    %2868 = vmatpush1.bf16.msra.mxu0 %v2848
    %2869 = vmatprep.subr.bf16.mxu0 0
    %2870 = vmatpush1.bf16.msra.mxu0 %v2849
    %2871 = vmatprep.subr.bf16.mxu0 0
    %2872 = vmatpush1.bf16.msra.mxu0 %v2850
    %2873 = vmatprep.subr.bf16.mxu0 0
    %2874 = vmatpush1.bf16.msra.mxu0 %v2851
    %2875 = vmatprep.subr.bf16.mxu0 0
    %2876 = vmatpush1.bf16.msra.mxu0 %v2852
    %2877 = vmatprep.subr.bf16.mxu0 0
    %2878 = vmatpush1.bf16.msra.mxu0 0
    %2879 = vmatprep.subr.bf16.mxu0 0
    %2880 = vmatpush1.bf16.msra.mxu0 0
    %2881 = vmatprep.subr.bf16.mxu0 0
    %2882 = vmatpush1.bf16.msra.mxu0 0
    %2883 = vmatprep.subr.bf16.mxu0 0
    %2884 = vmatpush1.bf16.msra.mxu0 0
    %2885 = vmatprep.subr.bf16.mxu0 0
    %2886 = vmatpush1.bf16.msra.mxu0 0
    %2887 = vmatprep.subr.bf16.mxu0 0
    %2888 = vmatpush1.bf16.msra.mxu0 0
    %2889 = vmatprep.subr.bf16.mxu0 0
    %2890 = vmatpush1.bf16.msra.mxu0 0
    %2891 = vmatprep.subr.bf16.mxu0 0
    %2892 = vmatpush1.bf16.msra.mxu0 0
    %2893 = vmatprep.mubr.bf16.mxu0 0
    %2894 = vmatmul.mubr.bf16.gmra.mrb[0].mxu0 %v2782
    %v2895 = vpop.f32.mrb[0].mxu0
    %v2896 = vadd.f32 0.0, %v2895
    %v2897 = vpop.f32.mrb[0].mxu0
    %v2898 = vpop.f32.mrb[0].mxu0
    %v2899 = vadd.f32 0.0, %v2898
    %v2900 = vpop.f32.mrb[0].mxu0
    %2901 = vmatprep.mubr.bf16.mxu0 0
    %2902 = vmatmul.mubr.bf16.gmra.mrb[0].mxu0 %v2783
    %v2903 = vpop.f32.mrb[0].mxu0
    %v2904 = vadd.f32 0.0, %v2903
    %v2905 = vpop.f32.mrb[0].mxu0
    %v2906 = vpop.f32.mrb[0].mxu0
    %v2907 = vadd.f32 0.0, %v2906
    %v2908 = vpop.f32.mrb[0].mxu0
    %2909 = vmatprep.mubr.bf16.mxu0 0
    %2910 = vmatmul.mubr.bf16.gmra.mrb[0].mxu0 %v2784
    %v2911 = vpop.f32.mrb[0].mxu0
    %v2912 = vadd.f32 0.0, %v2911
    %v2913 = vpop.f32.mrb[0].mxu0
    %v2914 = vpop.f32.mrb[0].mxu0
    %v2915 = vadd.f32 0.0, %v2914
    %v2916 = vpop.f32.mrb[0].mxu0
    %2917 = vmatprep.mubr.bf16.mxu0 0
    %2918 = vmatmul.mubr.bf16.gmra.mrb[0].mxu0 %v2785
    %v2919 = vpop.f32.mrb[0].mxu0
    %v2920 = vadd.f32 0.0, %v2919
    %v2921 = vpop.f32.mrb[0].mxu0
    %v2922 = vpop.f32.mrb[0].mxu0
    %v2923 = vadd.f32 0.0, %v2922
    %v2924 = vpop.f32.mrb[0].mxu0
    %2925 = vmatprep.mubr.bf16.mxu0 0
    %2926 = vmatmul.mubr.bf16.gmra.mrb[0].mxu0 %v2786
    %v2927 = vpop.f32.mrb[0].mxu0
    %v2928 = vadd.f32 0.0, %v2927
    %v2929 = vpop.f32.mrb[0].mxu0
    %v2930 = vpop.f32.mrb[0].mxu0
    %v2931 = vadd.f32 0.0, %v2930
    %v2932 = vpop.f32.mrb[0].mxu0
    %2933 = vmatprep.mubr.bf16.mxu0 0
    %2934 = vmatmul.mubr.bf16.gmra.mrb[0].mxu0 %v2787
    %v2935 = vpop.f32.mrb[0].mxu0
    %v2936 = vadd.f32 0.0, %v2935
    %v2937 = vpop.f32.mrb[0].mxu0
    %v2938 = vpop.f32.mrb[0].mxu0
    %v2939 = vadd.f32 0.0, %v2938
    %v2940 = vpop.f32.mrb[0].mxu0
    %2941 = vmatprep.mubr.bf16.mxu0 0
    %2942 = vmatmul.mubr.bf16.gmra.mrb[0].mxu0 %v2788
    %v2943 = vpop.f32.mrb[0].mxu0
    %v2944 = vadd.f32 0.0, %v2943
    %v2945 = vpop.f32.mrb[0].mxu0
    %v2946 = vpop.f32.mrb[0].mxu0
    %v2947 = vadd.f32 0.0, %v2946
    %v2948 = vpop.f32.mrb[0].mxu0
    %2949 = vmatprep.mubr.bf16.mxu0 0
    %2950 = vmatmul.mubr.bf16.gmra.mrb[0].mxu0 %v2789
    %v2951 = vpop.f32.mrb[0].mxu0
    %v2952 = vadd.f32 0.0, %v2951
    %v2953 = vpop.f32.mrb[0].mxu0
    %v2954 = vpop.f32.mrb[0].mxu0
    %v2955 = vadd.f32 0.0, %v2954
    %v2956 = vpop.f32.mrb[0].mxu0
    %2957 = vmatprep.mubr.bf16.mxu0 0
    %2958 = vmatmul.mubr.bf16.gmra.mrb[0].mxu0 %v2790
    %v2959 = vpop.f32.mrb[0].mxu0
    %v2960 = vadd.f32 0.0, %v2959
    %v2961 = vpop.f32.mrb[0].mxu0
    %v2962 = vpop.f32.mrb[0].mxu0
    %v2963 = vadd.f32 0.0, %v2962
    %v2964 = vpop.f32.mrb[0].mxu0
    %2965 = vmatprep.mubr.bf16.mxu0 0
    %2966 = vmatmul.mubr.bf16.gmra.mrb[0].mxu0 %v2791
    %v2967 = vpop.f32.mrb[0].mxu0
    %v2968 = vadd.f32 0.0, %v2967
    %v2969 = vpop.f32.mrb[0].mxu0
    %v2970 = vpop.f32.mrb[0].mxu0
    %v2971 = vadd.f32 0.0, %v2970
    %v2972 = vpop.f32.mrb[0].mxu0
    %2973 = vmatprep.mubr.bf16.mxu0 0
    %2974 = vmatmul.mubr.bf16.gmra.mrb[0].mxu0 %v2792
    %v2975 = vpop.f32.mrb[0].mxu0
    %v2976 = vadd.f32 0.0, %v2975
    %v2977 = vpop.f32.mrb[0].mxu0
    %v2978 = vpop.f32.mrb[0].mxu0
    %v2979 = vadd.f32 0.0, %v2978
    %v2980 = vpop.f32.mrb[0].mxu0
    %2981 = vmatprep.mubr.bf16.mxu0 0
    %2982 = vmatmul.mubr.bf16.gmra.mrb[0].mxu0 %v2793
    %v2983 = vpop.f32.mrb[0].mxu0
    %v2984 = vadd.f32 0.0, %v2983
    %v2985 = vpop.f32.mrb[0].mxu0
    %v2986 = vpop.f32.mrb[0].mxu0
    %v2987 = vadd.f32 0.0, %v2986
    %v2988 = vpop.f32.mrb[0].mxu0
    %2989 = vmatprep.mubr.bf16.mxu0 0
    %2990 = vmatmul.mubr.bf16.gmra.mrb[0].mxu0 %v2794
    %v2991 = vpop.f32.mrb[0].mxu0
    %v2992 = vadd.f32 0.0, %v2991
    %v2993 = vpop.f32.mrb[0].mxu0
    %v2994 = vpop.f32.mrb[0].mxu0
    %v2995 = vadd.f32 0.0, %v2994
    %v2996 = vpop.f32.mrb[0].mxu0
    %2997 = vmatprep.mubr.bf16.mxu0 0
    %2998 = vmatmul.mubr.bf16.gmra.mrb[0].mxu0 %v2795
    %v2999 = vpop.f32.mrb[0].mxu0
    %v3000 = vadd.f32 0.0, %v2999
    %v3001 = vpop.f32.mrb[0].mxu0
    %v3002 = vpop.f32.mrb[0].mxu0
    %v3003 = vadd.f32 0.0, %v3002
    %v3004 = vpop.f32.mrb[0].mxu0
    %3005 = vdwg.mxu0
    %v3006 = vadd.f32 %v2726, %v2896
    %v3007 = vadd.f32 %v2727, %v2899
    %v3008 = vadd.f32 %v2728, %v2904
    %v3009 = vadd.f32 %v2729, %v2907
    %v3010 = vadd.f32 %v2730, %v2912
    %v3011 = vadd.f32 %v2731, %v2915
    %v3012 = vadd.f32 %v2732, %v2920
    %v3013 = vadd.f32 %v2733, %v2923
    %v3014 = vadd.f32 %v2734, %v2928
    %v3015 = vadd.f32 %v2735, %v2931
    %v3016 = vadd.f32 %v2736, %v2936
    %v3017 = vadd.f32 %v2737, %v2939
    %v3018 = vadd.f32 %v2738, %v2944
    %v3019 = vadd.f32 %v2739, %v2947
    %v3020 = vadd.f32 %v2740, %v2952
    %v3021 = vadd.f32 %v2741, %v2955
    %v3022 = vadd.f32 %v2742, %v2960
    %v3023 = vadd.f32 %v2743, %v2963
    %v3024 = vadd.f32 %v2744, %v2968
    %v3025 = vadd.f32 %v2745, %v2971
    %v3026 = vadd.f32 %v2746, %v2976
    %v3027 = vadd.f32 %v2747, %v2979
    %v3028 = vadd.f32 %v2748, %v2984
    %v3029 = vadd.f32 %v2749, %v2987
    %v3030 = vadd.f32 %v2750, %v2992
    %v3031 = vadd.f32 %v2751, %v2995
    %v3032 = vadd.f32 %v2752, %v3000
    %v3033 = vadd.f32 %v2753, %v3003
    %v3034 = vld [vmem:[#allocation2 + $0x200] sm:$0xff]
    %v3035 = vld [vmem:[#allocation2 + $0x208] sm:$0xff]
    %v3036 = vld [vmem:[#allocation2 + $0x210] sm:$0xff]
    %v3037 = vld [vmem:[#allocation2 + $0x218] sm:$0xff]
    %v3038 = vld [vmem:[#allocation2 + $0x220] sm:$0xff]
    %v3039 = vld [vmem:[#allocation2 + $0x228] sm:$0xff]
    %v3040 = vld [vmem:[#allocation2 + $0x230] sm:$0xff]
    %v3041 = vld [vmem:[#allocation2 + $0x238] sm:$0xff]
    %v3042 = vld [vmem:[#allocation2 + $0x240] sm:$0xff]
    %v3043 = vld [vmem:[#allocation2 + $0x248] sm:$0xff]
    %v3044 = vld [vmem:[#allocation2 + $0x250] sm:$0xff]
    %v3045 = vld [vmem:[#allocation2 + $0x258] sm:$0xff]
    %v3046 = vld [vmem:[#allocation2 + $0x260] sm:$0xff]
    %v3047 = vld [vmem:[#allocation2 + $0x268] sm:$0xff]
    %v3048 = vld [vmem:[#allocation2 + $0x270] sm:$0xff]
    %v3049 = vld [vmem:[#allocation2 + $0x278] sm:$0xff]
    %v3050 = vld [vmem:[#allocation2 + $0x280] sm:$0xff]
    %v3051 = vld [vmem:[#allocation2 + $0x288] sm:$0xff]
    %v3052 = vld [vmem:[#allocation2 + $0x290] sm:$0xff]
    %v3053 = vld [vmem:[#allocation2 + $0x298] sm:$0xff]
    %v3054 = vld [vmem:[#allocation2 + $0x2a0] sm:$0xff]
    %v3055 = vld [vmem:[#allocation2 + $0x2a8] sm:$0xff]
    %v3056 = vld [vmem:[#allocation2 + $0x2b0] sm:$0xff]
    %v3057 = vld [vmem:[#allocation2 + $0x2b8] sm:$0xff]
    %v3058 = vld [vmem:[#allocation2 + $0x2c0] sm:$0xff]
    %v3059 = vld [vmem:[#allocation2 + $0x2c8] sm:$0xff]
    %v3060 = vld [vmem:[#allocation2 + $0x2d0] sm:$0xff]
    %v3061 = vld [vmem:[#allocation2 + $0x2d8] sm:$0xff]
    %v3062 = vpack.c.bf16 %v3035, %v3034
    %v3063 = vpack.c.bf16 %v3037, %v3036
    %v3064 = vpack.c.bf16 %v3039, %v3038
    %v3065 = vpack.c.bf16 %v3041, %v3040
    %v3066 = vpack.c.bf16 %v3043, %v3042
    %v3067 = vpack.c.bf16 %v3045, %v3044
    %v3068 = vpack.c.bf16 %v3047, %v3046
    %v3069 = vpack.c.bf16 %v3049, %v3048
    %v3070 = vpack.c.bf16 %v3051, %v3050
    %v3071 = vpack.c.bf16 %v3053, %v3052
    %v3072 = vpack.c.bf16 %v3055, %v3054
    %v3073 = vpack.c.bf16 %v3057, %v3056
    %v3074 = vpack.c.bf16 %v3059, %v3058
    %v3075 = vpack.c.bf16 %v3061, %v3060
    %s3076 = scalar_lea.vmem %s3, 256
    %v3077 = vld [vmem:[%s3076] sm:$0xf]
    %v3078 = vld [vmem:[%s3076 + $0x4] sm:$0xf]
    %v3079 = vld [vmem:[%s3076 + $0x8] sm:$0xf]
    %v3080 = vld [vmem:[%s3076 + $0xc] sm:$0xf]
    %v3081 = vld [vmem:[%s3076 + $0x10] sm:$0xf]
    %v3082 = vld [vmem:[%s3076 + $0x14] sm:$0xf]
    %v3083 = vld [vmem:[%s3076 + $0x18] sm:$0xf]
    %v3084 = vld [vmem:[%s3076 + $0x1c] sm:$0xf]
    %v3085 = vld [vmem:[%s3076 + $0x20] sm:$0xf]
    %v3086 = vld [vmem:[%s3076 + $0x24] sm:$0xf]
    %v3087 = vld [vmem:[%s3076 + $0x28] sm:$0xf]
    %v3088 = vld [vmem:[%s3076 + $0x2c] sm:$0xf]
    %v3089 = vld [vmem:[%s3076 + $0x30] sm:$0xf]
    %v3090 = vld [vmem:[%s3076 + $0x34] sm:$0xf]
    %v3091 = vld [vmem:[%s3076 + $0x38] sm:$0xf]
    %v3092 = vld [vmem:[%s3076 + $0x3c] sm:$0xf]
    %v3109 = vunpack.c.l.b16 %v3077
    %v3110 = vunpack.c.l.b16 %v3078
    %v3111 = vunpack.c.l.b16 %v3079
    %v3112 = vunpack.c.l.b16 %v3080
    %v3113 = vunpack.c.l.b16 %v3081
    %v3114 = vunpack.c.l.b16 %v3082
    %v3115 = vunpack.c.l.b16 %v3083
    %v3116 = vunpack.c.l.b16 %v3084
    %v3117 = vunpack.c.l.b16 %v3085
    %v3118 = vunpack.c.l.b16 %v3086
    %v3119 = vunpack.c.l.b16 %v3087
    %v3120 = vunpack.c.l.b16 %v3088
    %v3121 = vunpack.c.l.b16 %v3089
    %v3122 = vunpack.c.l.b16 %v3090
    %v3123 = vunpack.c.l.b16 %v3091
    %v3124 = vunpack.c.l.b16 %v3092
    %v3125 = vpack.c.b16 %v3110, %v3109
    %v3126 = vpack.c.b16 %v3112, %v3111
    %v3127 = vpack.c.b16 %v3114, %v3113
    %v3128 = vpack.c.b16 %v3116, %v3115
    %v3129 = vpack.c.b16 %v3118, %v3117
    %v3130 = vpack.c.b16 %v3120, %v3119
    %v3131 = vpack.c.b16 %v3122, %v3121
    %v3132 = vpack.c.b16 %v3124, %v3123
    %3141 = vmatprep.subr.bf16.mxu0 0
    %3142 = vmatpush1.bf16.msra.mxu0 %v3125
    %3143 = vmatprep.subr.bf16.mxu0 0
    %3144 = vmatpush1.bf16.msra.mxu0 %v3126
    %3145 = vmatprep.subr.bf16.mxu0 0
    %3146 = vmatpush1.bf16.msra.mxu0 %v3127
    %3147 = vmatprep.subr.bf16.mxu0 0
    %3148 = vmatpush1.bf16.msra.mxu0 %v3128
    %3149 = vmatprep.subr.bf16.mxu0 0
    %3150 = vmatpush1.bf16.msra.mxu0 %v3129
    %3151 = vmatprep.subr.bf16.mxu0 0
    %3152 = vmatpush1.bf16.msra.mxu0 %v3130
    %3153 = vmatprep.subr.bf16.mxu0 0
    %3154 = vmatpush1.bf16.msra.mxu0 %v3131
    %3155 = vmatprep.subr.bf16.mxu0 0
    %3156 = vmatpush1.bf16.msra.mxu0 %v3132
    %3157 = vmatprep.subr.bf16.mxu0 0
    %3158 = vmatpush1.bf16.msra.mxu0 0
    %3159 = vmatprep.subr.bf16.mxu0 0
    %3160 = vmatpush1.bf16.msra.mxu0 0
    %3161 = vmatprep.subr.bf16.mxu0 0
    %3162 = vmatpush1.bf16.msra.mxu0 0
    %3163 = vmatprep.subr.bf16.mxu0 0
    %3164 = vmatpush1.bf16.msra.mxu0 0
    %3165 = vmatprep.subr.bf16.mxu0 0
    %3166 = vmatpush1.bf16.msra.mxu0 0
    %3167 = vmatprep.subr.bf16.mxu0 0
    %3168 = vmatpush1.bf16.msra.mxu0 0
    %3169 = vmatprep.subr.bf16.mxu0 0
    %3170 = vmatpush1.bf16.msra.mxu0 0
    %3171 = vmatprep.subr.bf16.mxu0 0
    %3172 = vmatpush1.bf16.msra.mxu0 0
    %3173 = vmatprep.mubr.bf16.mxu0 0
    %3174 = vmatmul.mubr.bf16.gmra.mrb[0].mxu0 %v3062
    %v3175 = vpop.f32.mrb[0].mxu0
    %v3176 = vadd.f32 0.0, %v3175
    %v3177 = vpop.f32.mrb[0].mxu0
    %v3178 = vpop.f32.mrb[0].mxu0
    %v3179 = vadd.f32 0.0, %v3178
    %v3180 = vpop.f32.mrb[0].mxu0
    %3181 = vmatprep.mubr.bf16.mxu0 0
    %3182 = vmatmul.mubr.bf16.gmra.mrb[0].mxu0 %v3063
    %v3183 = vpop.f32.mrb[0].mxu0
    %v3184 = vadd.f32 0.0, %v3183
    %v3185 = vpop.f32.mrb[0].mxu0
    %v3186 = vpop.f32.mrb[0].mxu0
    %v3187 = vadd.f32 0.0, %v3186
    %v3188 = vpop.f32.mrb[0].mxu0
    %3189 = vmatprep.mubr.bf16.mxu0 0
    %3190 = vmatmul.mubr.bf16.gmra.mrb[0].mxu0 %v3064
    %v3191 = vpop.f32.mrb[0].mxu0
    %v3192 = vadd.f32 0.0, %v3191
    %v3193 = vpop.f32.mrb[0].mxu0
    %v3194 = vpop.f32.mrb[0].mxu0
    %v3195 = vadd.f32 0.0, %v3194
    %v3196 = vpop.f32.mrb[0].mxu0
    %3197 = vmatprep.mubr.bf16.mxu0 0
    %3198 = vmatmul.mubr.bf16.gmra.mrb[0].mxu0 %v3065
    %v3199 = vpop.f32.mrb[0].mxu0
    %v3200 = vadd.f32 0.0, %v3199
    %v3201 = vpop.f32.mrb[0].mxu0
    %v3202 = vpop.f32.mrb[0].mxu0
    %v3203 = vadd.f32 0.0, %v3202
    %v3204 = vpop.f32.mrb[0].mxu0
    %3205 = vmatprep.mubr.bf16.mxu0 0
    %3206 = vmatmul.mubr.bf16.gmra.mrb[0].mxu0 %v3066
    %v3207 = vpop.f32.mrb[0].mxu0
    %v3208 = vadd.f32 0.0, %v3207
    %v3209 = vpop.f32.mrb[0].mxu0
    %v3210 = vpop.f32.mrb[0].mxu0
    %v3211 = vadd.f32 0.0, %v3210
    %v3212 = vpop.f32.mrb[0].mxu0
    %3213 = vmatprep.mubr.bf16.mxu0 0
    %3214 = vmatmul.mubr.bf16.gmra.mrb[0].mxu0 %v3067
    %v3215 = vpop.f32.mrb[0].mxu0
    %v3216 = vadd.f32 0.0, %v3215
    %v3217 = vpop.f32.mrb[0].mxu0
    %v3218 = vpop.f32.mrb[0].mxu0
    %v3219 = vadd.f32 0.0, %v3218
    %v3220 = vpop.f32.mrb[0].mxu0
    %3221 = vmatprep.mubr.bf16.mxu0 0
    %3222 = vmatmul.mubr.bf16.gmra.mrb[0].mxu0 %v3068
    %v3223 = vpop.f32.mrb[0].mxu0
    %v3224 = vadd.f32 0.0, %v3223
    %v3225 = vpop.f32.mrb[0].mxu0
    %v3226 = vpop.f32.mrb[0].mxu0
    %v3227 = vadd.f32 0.0, %v3226
    %v3228 = vpop.f32.mrb[0].mxu0
    %3229 = vmatprep.mubr.bf16.mxu0 0
    %3230 = vmatmul.mubr.bf16.gmra.mrb[0].mxu0 %v3069
    %v3231 = vpop.f32.mrb[0].mxu0
    %v3232 = vadd.f32 0.0, %v3231
    %v3233 = vpop.f32.mrb[0].mxu0
    %v3234 = vpop.f32.mrb[0].mxu0
    %v3235 = vadd.f32 0.0, %v3234
    %v3236 = vpop.f32.mrb[0].mxu0
    %3237 = vmatprep.mubr.bf16.mxu0 0
    %3238 = vmatmul.mubr.bf16.gmra.mrb[0].mxu0 %v3070
    %v3239 = vpop.f32.mrb[0].mxu0
    %v3240 = vadd.f32 0.0, %v3239
    %v3241 = vpop.f32.mrb[0].mxu0
    %v3242 = vpop.f32.mrb[0].mxu0
    %v3243 = vadd.f32 0.0, %v3242
    %v3244 = vpop.f32.mrb[0].mxu0
    %3245 = vmatprep.mubr.bf16.mxu0 0
    %3246 = vmatmul.mubr.bf16.gmra.mrb[0].mxu0 %v3071
    %v3247 = vpop.f32.mrb[0].mxu0
    %v3248 = vadd.f32 0.0, %v3247
    %v3249 = vpop.f32.mrb[0].mxu0
    %v3250 = vpop.f32.mrb[0].mxu0
    %v3251 = vadd.f32 0.0, %v3250
    %v3252 = vpop.f32.mrb[0].mxu0
    %3253 = vmatprep.mubr.bf16.mxu0 0
    %3254 = vmatmul.mubr.bf16.gmra.mrb[0].mxu0 %v3072
    %v3255 = vpop.f32.mrb[0].mxu0
    %v3256 = vadd.f32 0.0, %v3255
    %v3257 = vpop.f32.mrb[0].mxu0
    %v3258 = vpop.f32.mrb[0].mxu0
    %v3259 = vadd.f32 0.0, %v3258
    %v3260 = vpop.f32.mrb[0].mxu0
    %3261 = vmatprep.mubr.bf16.mxu0 0
    %3262 = vmatmul.mubr.bf16.gmra.mrb[0].mxu0 %v3073
    %v3263 = vpop.f32.mrb[0].mxu0
    %v3264 = vadd.f32 0.0, %v3263
    %v3265 = vpop.f32.mrb[0].mxu0
    %v3266 = vpop.f32.mrb[0].mxu0
    %v3267 = vadd.f32 0.0, %v3266
    %v3268 = vpop.f32.mrb[0].mxu0
    %3269 = vmatprep.mubr.bf16.mxu0 0
    %3270 = vmatmul.mubr.bf16.gmra.mrb[0].mxu0 %v3074
    %v3271 = vpop.f32.mrb[0].mxu0
    %v3272 = vadd.f32 0.0, %v3271
    %v3273 = vpop.f32.mrb[0].mxu0
    %v3274 = vpop.f32.mrb[0].mxu0
    %v3275 = vadd.f32 0.0, %v3274
    %v3276 = vpop.f32.mrb[0].mxu0
    %3277 = vmatprep.mubr.bf16.mxu0 0
    %3278 = vmatmul.mubr.bf16.gmra.mrb[0].mxu0 %v3075
    %v3279 = vpop.f32.mrb[0].mxu0
    %v3280 = vadd.f32 0.0, %v3279
    %v3281 = vpop.f32.mrb[0].mxu0
    %v3282 = vpop.f32.mrb[0].mxu0
    %v3283 = vadd.f32 0.0, %v3282
    %v3284 = vpop.f32.mrb[0].mxu0
    %3285 = vdwg.mxu0
    %v3286 = vadd.f32 %v3006, %v3176
    %v3287 = vadd.f32 %v3007, %v3179
    %v3288 = vadd.f32 %v3008, %v3184
    %v3289 = vadd.f32 %v3009, %v3187
    %v3290 = vadd.f32 %v3010, %v3192
    %v3291 = vadd.f32 %v3011, %v3195
    %v3292 = vadd.f32 %v3012, %v3200
    %v3293 = vadd.f32 %v3013, %v3203
    %v3294 = vadd.f32 %v3014, %v3208
    %v3295 = vadd.f32 %v3015, %v3211
    %v3296 = vadd.f32 %v3016, %v3216
    %v3297 = vadd.f32 %v3017, %v3219
    %v3298 = vadd.f32 %v3018, %v3224
    %v3299 = vadd.f32 %v3019, %v3227
    %v3300 = vadd.f32 %v3020, %v3232
    %v3301 = vadd.f32 %v3021, %v3235
    %v3302 = vadd.f32 %v3022, %v3240
    %v3303 = vadd.f32 %v3023, %v3243
    %v3304 = vadd.f32 %v3024, %v3248
    %v3305 = vadd.f32 %v3025, %v3251
    %v3306 = vadd.f32 %v3026, %v3256
    %v3307 = vadd.f32 %v3027, %v3259
    %v3308 = vadd.f32 %v3028, %v3264
    %v3309 = vadd.f32 %v3029, %v3267
    %v3310 = vadd.f32 %v3030, %v3272
    %v3311 = vadd.f32 %v3031, %v3275
    %v3312 = vadd.f32 %v3032, %v3280
    %v3313 = vadd.f32 %v3033, %v3283
    %v3314 = vld [vmem:[#allocation2 + $0x300] sm:$0xff]
    %v3315 = vld [vmem:[#allocation2 + $0x308] sm:$0xff]
    %v3316 = vld [vmem:[#allocation2 + $0x310] sm:$0xff]
    %v3317 = vld [vmem:[#allocation2 + $0x318] sm:$0xff]
    %v3318 = vld [vmem:[#allocation2 + $0x320] sm:$0xff]
    %v3319 = vld [vmem:[#allocation2 + $0x328] sm:$0xff]
    %v3320 = vld [vmem:[#allocation2 + $0x330] sm:$0xff]
    %v3321 = vld [vmem:[#allocation2 + $0x338] sm:$0xff]
    %v3322 = vld [vmem:[#allocation2 + $0x340] sm:$0xff]
    %v3323 = vld [vmem:[#allocation2 + $0x348] sm:$0xff]
    %v3324 = vld [vmem:[#allocation2 + $0x350] sm:$0xff]
    %v3325 = vld [vmem:[#allocation2 + $0x358] sm:$0xff]
    %v3326 = vld [vmem:[#allocation2 + $0x360] sm:$0xff]
    %v3327 = vld [vmem:[#allocation2 + $0x368] sm:$0xff]
    %v3328 = vld [vmem:[#allocation2 + $0x370] sm:$0xff]
    %v3329 = vld [vmem:[#allocation2 + $0x378] sm:$0xff]
    %v3330 = vld [vmem:[#allocation2 + $0x380] sm:$0xff]
    %v3331 = vld [vmem:[#allocation2 + $0x388] sm:$0xff]
    %v3332 = vld [vmem:[#allocation2 + $0x390] sm:$0xff]
    %v3333 = vld [vmem:[#allocation2 + $0x398] sm:$0xff]
    %v3334 = vld [vmem:[#allocation2 + $0x3a0] sm:$0xff]
    %v3335 = vld [vmem:[#allocation2 + $0x3a8] sm:$0xff]
    %v3336 = vld [vmem:[#allocation2 + $0x3b0] sm:$0xff]
    %v3337 = vld [vmem:[#allocation2 + $0x3b8] sm:$0xff]
    %v3338 = vld [vmem:[#allocation2 + $0x3c0] sm:$0xff]
    %v3339 = vld [vmem:[#allocation2 + $0x3c8] sm:$0xff]
    %v3340 = vld [vmem:[#allocation2 + $0x3d0] sm:$0xff]
    %v3341 = vld [vmem:[#allocation2 + $0x3d8] sm:$0xff]
    %v3342 = vpack.c.bf16 %v3315, %v3314
    %v3343 = vpack.c.bf16 %v3317, %v3316
    %v3344 = vpack.c.bf16 %v3319, %v3318
    %v3345 = vpack.c.bf16 %v3321, %v3320
    %v3346 = vpack.c.bf16 %v3323, %v3322
    %v3347 = vpack.c.bf16 %v3325, %v3324
    %v3348 = vpack.c.bf16 %v3327, %v3326
    %v3349 = vpack.c.bf16 %v3329, %v3328
    %v3350 = vpack.c.bf16 %v3331, %v3330
    %v3351 = vpack.c.bf16 %v3333, %v3332
    %v3352 = vpack.c.bf16 %v3335, %v3334
    %v3353 = vpack.c.bf16 %v3337, %v3336
    %v3354 = vpack.c.bf16 %v3339, %v3338
    %v3355 = vpack.c.bf16 %v3341, %v3340
    %s3356 = scalar_lea.vmem %s3, 320
    %v3357 = vld [vmem:[%s3356] sm:$0xf]
    %v3358 = vld [vmem:[%s3356 + $0x4] sm:$0xf]
    %v3359 = vld [vmem:[%s3356 + $0x8] sm:$0xf]
    %v3360 = vld [vmem:[%s3356 + $0xc] sm:$0xf]
    %v3361 = vld [vmem:[%s3356 + $0x10] sm:$0xf]
    %v3362 = vld [vmem:[%s3356 + $0x14] sm:$0xf]
    %v3363 = vld [vmem:[%s3356 + $0x18] sm:$0xf]
    %v3364 = vld [vmem:[%s3356 + $0x1c] sm:$0xf]
    %v3365 = vld [vmem:[%s3356 + $0x20] sm:$0xf]
    %v3366 = vld [vmem:[%s3356 + $0x24] sm:$0xf]
    %v3367 = vld [vmem:[%s3356 + $0x28] sm:$0xf]
    %v3368 = vld [vmem:[%s3356 + $0x2c] sm:$0xf]
    %v3369 = vld [vmem:[%s3356 + $0x30] sm:$0xf]
    %v3370 = vld [vmem:[%s3356 + $0x34] sm:$0xf]
    %v3371 = vld [vmem:[%s3356 + $0x38] sm:$0xf]
    %v3372 = vld [vmem:[%s3356 + $0x3c] sm:$0xf]
    %v3389 = vunpack.c.l.b16 %v3357
    %v3390 = vunpack.c.l.b16 %v3358
    %v3391 = vunpack.c.l.b16 %v3359
    %v3392 = vunpack.c.l.b16 %v3360
    %v3393 = vunpack.c.l.b16 %v3361
    %v3394 = vunpack.c.l.b16 %v3362
    %v3395 = vunpack.c.l.b16 %v3363
    %v3396 = vunpack.c.l.b16 %v3364
    %v3397 = vunpack.c.l.b16 %v3365
    %v3398 = vunpack.c.l.b16 %v3366
    %v3399 = vunpack.c.l.b16 %v3367
    %v3400 = vunpack.c.l.b16 %v3368
    %v3401 = vunpack.c.l.b16 %v3369
    %v3402 = vunpack.c.l.b16 %v3370
    %v3403 = vunpack.c.l.b16 %v3371
    %v3404 = vunpack.c.l.b16 %v3372
    %v3405 = vpack.c.b16 %v3390, %v3389
    %v3406 = vpack.c.b16 %v3392, %v3391
    %v3407 = vpack.c.b16 %v3394, %v3393
    %v3408 = vpack.c.b16 %v3396, %v3395
    %v3409 = vpack.c.b16 %v3398, %v3397
    %v3410 = vpack.c.b16 %v3400, %v3399
    %v3411 = vpack.c.b16 %v3402, %v3401
    %v3412 = vpack.c.b16 %v3404, %v3403
    %3421 = vmatprep.subr.bf16.mxu0 0
    %3422 = vmatpush1.bf16.msra.mxu0 %v3405
    %3423 = vmatprep.subr.bf16.mxu0 0
    %3424 = vmatpush1.bf16.msra.mxu0 %v3406
    %3425 = vmatprep.subr.bf16.mxu0 0
    %3426 = vmatpush1.bf16.msra.mxu0 %v3407
    %3427 = vmatprep.subr.bf16.mxu0 0
    %3428 = vmatpush1.bf16.msra.mxu0 %v3408
    %3429 = vmatprep.subr.bf16.mxu0 0
    %3430 = vmatpush1.bf16.msra.mxu0 %v3409
    %3431 = vmatprep.subr.bf16.mxu0 0
    %3432 = vmatpush1.bf16.msra.mxu0 %v3410
    %3433 = vmatprep.subr.bf16.mxu0 0
    %3434 = vmatpush1.bf16.msra.mxu0 %v3411
    %3435 = vmatprep.subr.bf16.mxu0 0
    %3436 = vmatpush1.bf16.msra.mxu0 %v3412
    %3437 = vmatprep.subr.bf16.mxu0 0
    %3438 = vmatpush1.bf16.msra.mxu0 0
    %3439 = vmatprep.subr.bf16.mxu0 0
    %3440 = vmatpush1.bf16.msra.mxu0 0
    %3441 = vmatprep.subr.bf16.mxu0 0
    %3442 = vmatpush1.bf16.msra.mxu0 0
    %3443 = vmatprep.subr.bf16.mxu0 0
    %3444 = vmatpush1.bf16.msra.mxu0 0
    %3445 = vmatprep.subr.bf16.mxu0 0
    %3446 = vmatpush1.bf16.msra.mxu0 0
    %3447 = vmatprep.subr.bf16.mxu0 0
    %3448 = vmatpush1.bf16.msra.mxu0 0
    %3449 = vmatprep.subr.bf16.mxu0 0
    %3450 = vmatpush1.bf16.msra.mxu0 0
    %3451 = vmatprep.subr.bf16.mxu0 0
    %3452 = vmatpush1.bf16.msra.mxu0 0
    %3453 = vmatprep.mubr.bf16.mxu0 0
    %3454 = vmatmul.mubr.bf16.gmra.mrb[0].mxu0 %v3342
    %v3455 = vpop.f32.mrb[0].mxu0
    %v3456 = vadd.f32 0.0, %v3455
    %v3457 = vpop.f32.mrb[0].mxu0
    %v3458 = vpop.f32.mrb[0].mxu0
    %v3459 = vadd.f32 0.0, %v3458
    %v3460 = vpop.f32.mrb[0].mxu0
    %3461 = vmatprep.mubr.bf16.mxu0 0
    %3462 = vmatmul.mubr.bf16.gmra.mrb[0].mxu0 %v3343
    %v3463 = vpop.f32.mrb[0].mxu0
    %v3464 = vadd.f32 0.0, %v3463
    %v3465 = vpop.f32.mrb[0].mxu0
    %v3466 = vpop.f32.mrb[0].mxu0
    %v3467 = vadd.f32 0.0, %v3466
    %v3468 = vpop.f32.mrb[0].mxu0
    %3469 = vmatprep.mubr.bf16.mxu0 0
    %3470 = vmatmul.mubr.bf16.gmra.mrb[0].mxu0 %v3344
    %v3471 = vpop.f32.mrb[0].mxu0
    %v3472 = vadd.f32 0.0, %v3471
    %v3473 = vpop.f32.mrb[0].mxu0
    %v3474 = vpop.f32.mrb[0].mxu0
    %v3475 = vadd.f32 0.0, %v3474
    %v3476 = vpop.f32.mrb[0].mxu0
    %3477 = vmatprep.mubr.bf16.mxu0 0
    %3478 = vmatmul.mubr.bf16.gmra.mrb[0].mxu0 %v3345
    %v3479 = vpop.f32.mrb[0].mxu0
    %v3480 = vadd.f32 0.0, %v3479
    %v3481 = vpop.f32.mrb[0].mxu0
    %v3482 = vpop.f32.mrb[0].mxu0
    %v3483 = vadd.f32 0.0, %v3482
    %v3484 = vpop.f32.mrb[0].mxu0
    %3485 = vmatprep.mubr.bf16.mxu0 0
    %3486 = vmatmul.mubr.bf16.gmra.mrb[0].mxu0 %v3346
    %v3487 = vpop.f32.mrb[0].mxu0
    %v3488 = vadd.f32 0.0, %v3487
    %v3489 = vpop.f32.mrb[0].mxu0
    %v3490 = vpop.f32.mrb[0].mxu0
    %v3491 = vadd.f32 0.0, %v3490
    %v3492 = vpop.f32.mrb[0].mxu0
    %3493 = vmatprep.mubr.bf16.mxu0 0
    %3494 = vmatmul.mubr.bf16.gmra.mrb[0].mxu0 %v3347
    %v3495 = vpop.f32.mrb[0].mxu0
    %v3496 = vadd.f32 0.0, %v3495
    %v3497 = vpop.f32.mrb[0].mxu0
    %v3498 = vpop.f32.mrb[0].mxu0
    %v3499 = vadd.f32 0.0, %v3498
    %v3500 = vpop.f32.mrb[0].mxu0
    %3501 = vmatprep.mubr.bf16.mxu0 0
    %3502 = vmatmul.mubr.bf16.gmra.mrb[0].mxu0 %v3348
    %v3503 = vpop.f32.mrb[0].mxu0
    %v3504 = vadd.f32 0.0, %v3503
    %v3505 = vpop.f32.mrb[0].mxu0
    %v3506 = vpop.f32.mrb[0].mxu0
    %v3507 = vadd.f32 0.0, %v3506
    %v3508 = vpop.f32.mrb[0].mxu0
    %3509 = vmatprep.mubr.bf16.mxu0 0
    %3510 = vmatmul.mubr.bf16.gmra.mrb[0].mxu0 %v3349
    %v3511 = vpop.f32.mrb[0].mxu0
    %v3512 = vadd.f32 0.0, %v3511
    %v3513 = vpop.f32.mrb[0].mxu0
    %v3514 = vpop.f32.mrb[0].mxu0
    %v3515 = vadd.f32 0.0, %v3514
    %v3516 = vpop.f32.mrb[0].mxu0
    %3517 = vmatprep.mubr.bf16.mxu0 0
    %3518 = vmatmul.mubr.bf16.gmra.mrb[0].mxu0 %v3350
    %v3519 = vpop.f32.mrb[0].mxu0
    %v3520 = vadd.f32 0.0, %v3519
    %v3521 = vpop.f32.mrb[0].mxu0
    %v3522 = vpop.f32.mrb[0].mxu0
    %v3523 = vadd.f32 0.0, %v3522
    %v3524 = vpop.f32.mrb[0].mxu0
    %3525 = vmatprep.mubr.bf16.mxu0 0
    %3526 = vmatmul.mubr.bf16.gmra.mrb[0].mxu0 %v3351
    %v3527 = vpop.f32.mrb[0].mxu0
    %v3528 = vadd.f32 0.0, %v3527
    %v3529 = vpop.f32.mrb[0].mxu0
    %v3530 = vpop.f32.mrb[0].mxu0
    %v3531 = vadd.f32 0.0, %v3530
    %v3532 = vpop.f32.mrb[0].mxu0
    %3533 = vmatprep.mubr.bf16.mxu0 0
    %3534 = vmatmul.mubr.bf16.gmra.mrb[0].mxu0 %v3352
    %v3535 = vpop.f32.mrb[0].mxu0
    %v3536 = vadd.f32 0.0, %v3535
    %v3537 = vpop.f32.mrb[0].mxu0
    %v3538 = vpop.f32.mrb[0].mxu0
    %v3539 = vadd.f32 0.0, %v3538
    %v3540 = vpop.f32.mrb[0].mxu0
    %3541 = vmatprep.mubr.bf16.mxu0 0
    %3542 = vmatmul.mubr.bf16.gmra.mrb[0].mxu0 %v3353
    %v3543 = vpop.f32.mrb[0].mxu0
    %v3544 = vadd.f32 0.0, %v3543
    %v3545 = vpop.f32.mrb[0].mxu0
    %v3546 = vpop.f32.mrb[0].mxu0
    %v3547 = vadd.f32 0.0, %v3546
    %v3548 = vpop.f32.mrb[0].mxu0
    %3549 = vmatprep.mubr.bf16.mxu0 0
    %3550 = vmatmul.mubr.bf16.gmra.mrb[0].mxu0 %v3354
    %v3551 = vpop.f32.mrb[0].mxu0
    %v3552 = vadd.f32 0.0, %v3551
    %v3553 = vpop.f32.mrb[0].mxu0
    %v3554 = vpop.f32.mrb[0].mxu0
    %v3555 = vadd.f32 0.0, %v3554
    %v3556 = vpop.f32.mrb[0].mxu0
    %3557 = vmatprep.mubr.bf16.mxu0 0
    %3558 = vmatmul.mubr.bf16.gmra.mrb[0].mxu0 %v3355
    %v3559 = vpop.f32.mrb[0].mxu0
    %v3560 = vadd.f32 0.0, %v3559
    %v3561 = vpop.f32.mrb[0].mxu0
    %v3562 = vpop.f32.mrb[0].mxu0
    %v3563 = vadd.f32 0.0, %v3562
    %v3564 = vpop.f32.mrb[0].mxu0
    %3565 = vdwg.mxu0
    %v3566 = vadd.f32 %v3286, %v3456
    %v3567 = vadd.f32 %v3287, %v3459
    %v3568 = vadd.f32 %v3288, %v3464
    %v3569 = vadd.f32 %v3289, %v3467
    %v3570 = vadd.f32 %v3290, %v3472
    %v3571 = vadd.f32 %v3291, %v3475
    %v3572 = vadd.f32 %v3292, %v3480
    %v3573 = vadd.f32 %v3293, %v3483
    %v3574 = vadd.f32 %v3294, %v3488
    %v3575 = vadd.f32 %v3295, %v3491
    %v3576 = vadd.f32 %v3296, %v3496
    %v3577 = vadd.f32 %v3297, %v3499
    %v3578 = vadd.f32 %v3298, %v3504
    %v3579 = vadd.f32 %v3299, %v3507
    %v3580 = vadd.f32 %v3300, %v3512
    %v3581 = vadd.f32 %v3301, %v3515
    %v3582 = vadd.f32 %v3302, %v3520
    %v3583 = vadd.f32 %v3303, %v3523
    %v3584 = vadd.f32 %v3304, %v3528
    %v3585 = vadd.f32 %v3305, %v3531
    %v3586 = vadd.f32 %v3306, %v3536
    %v3587 = vadd.f32 %v3307, %v3539
    %v3588 = vadd.f32 %v3308, %v3544
    %v3589 = vadd.f32 %v3309, %v3547
    %v3590 = vadd.f32 %v3310, %v3552
    %v3591 = vadd.f32 %v3311, %v3555
    %v3592 = vadd.f32 %v3312, %v3560
    %v3593 = vadd.f32 %v3313, %v3563
    %v3594 = vld [vmem:[#allocation2 + $0x201] sm:$0xff]
    %v3595 = vld [vmem:[#allocation2 + $0x209] sm:$0xff]
    %v3596 = vld [vmem:[#allocation2 + $0x211] sm:$0xff]
    %v3597 = vld [vmem:[#allocation2 + $0x219] sm:$0xff]
    %v3598 = vld [vmem:[#allocation2 + $0x221] sm:$0xff]
    %v3599 = vld [vmem:[#allocation2 + $0x229] sm:$0xff]
    %v3600 = vld [vmem:[#allocation2 + $0x231] sm:$0xff]
    %v3601 = vld [vmem:[#allocation2 + $0x239] sm:$0xff]
    %v3602 = vld [vmem:[#allocation2 + $0x241] sm:$0xff]
    %v3603 = vld [vmem:[#allocation2 + $0x249] sm:$0xff]
    %v3604 = vld [vmem:[#allocation2 + $0x251] sm:$0xff]
    %v3605 = vld [vmem:[#allocation2 + $0x259] sm:$0xff]
    %v3606 = vld [vmem:[#allocation2 + $0x261] sm:$0xff]
    %v3607 = vld [vmem:[#allocation2 + $0x269] sm:$0xff]
    %v3608 = vld [vmem:[#allocation2 + $0x271] sm:$0xff]
    %v3609 = vld [vmem:[#allocation2 + $0x279] sm:$0xff]
    %v3610 = vld [vmem:[#allocation2 + $0x281] sm:$0xff]
    %v3611 = vld [vmem:[#allocation2 + $0x289] sm:$0xff]
    %v3612 = vld [vmem:[#allocation2 + $0x291] sm:$0xff]
    %v3613 = vld [vmem:[#allocation2 + $0x299] sm:$0xff]
    %v3614 = vld [vmem:[#allocation2 + $0x2a1] sm:$0xff]
    %v3615 = vld [vmem:[#allocation2 + $0x2a9] sm:$0xff]
    %v3616 = vld [vmem:[#allocation2 + $0x2b1] sm:$0xff]
    %v3617 = vld [vmem:[#allocation2 + $0x2b9] sm:$0xff]
    %v3618 = vld [vmem:[#allocation2 + $0x2c1] sm:$0xff]
    %v3619 = vld [vmem:[#allocation2 + $0x2c9] sm:$0xff]
    %v3620 = vld [vmem:[#allocation2 + $0x2d1] sm:$0xff]
    %v3621 = vld [vmem:[#allocation2 + $0x2d9] sm:$0xff]
    %v3622 = vpack.c.bf16 %v3595, %v3594
    %v3623 = vpack.c.bf16 %v3597, %v3596
    %v3624 = vpack.c.bf16 %v3599, %v3598
    %v3625 = vpack.c.bf16 %v3601, %v3600
    %v3626 = vpack.c.bf16 %v3603, %v3602
    %v3627 = vpack.c.bf16 %v3605, %v3604
    %v3628 = vpack.c.bf16 %v3607, %v3606
    %v3629 = vpack.c.bf16 %v3609, %v3608
    %v3630 = vpack.c.bf16 %v3611, %v3610
    %v3631 = vpack.c.bf16 %v3613, %v3612
    %v3632 = vpack.c.bf16 %v3615, %v3614
    %v3633 = vpack.c.bf16 %v3617, %v3616
    %v3634 = vpack.c.bf16 %v3619, %v3618
    %v3635 = vpack.c.bf16 %v3621, %v3620
    %s3636 = scalar_lea.vmem %s3, 384
    %v3637 = vld [vmem:[%s3636] sm:$0xf]
    %v3638 = vld [vmem:[%s3636 + $0x4] sm:$0xf]
    %v3639 = vld [vmem:[%s3636 + $0x8] sm:$0xf]
    %v3640 = vld [vmem:[%s3636 + $0xc] sm:$0xf]
    %v3641 = vld [vmem:[%s3636 + $0x10] sm:$0xf]
    %v3642 = vld [vmem:[%s3636 + $0x14] sm:$0xf]
    %v3643 = vld [vmem:[%s3636 + $0x18] sm:$0xf]
    %v3644 = vld [vmem:[%s3636 + $0x1c] sm:$0xf]
    %v3645 = vld [vmem:[%s3636 + $0x20] sm:$0xf]
    %v3646 = vld [vmem:[%s3636 + $0x24] sm:$0xf]
    %v3647 = vld [vmem:[%s3636 + $0x28] sm:$0xf]
    %v3648 = vld [vmem:[%s3636 + $0x2c] sm:$0xf]
    %v3649 = vld [vmem:[%s3636 + $0x30] sm:$0xf]
    %v3650 = vld [vmem:[%s3636 + $0x34] sm:$0xf]
    %v3651 = vld [vmem:[%s3636 + $0x38] sm:$0xf]
    %v3652 = vld [vmem:[%s3636 + $0x3c] sm:$0xf]
    %v3669 = vunpack.c.l.b16 %v3637
    %v3670 = vunpack.c.l.b16 %v3638
    %v3671 = vunpack.c.l.b16 %v3639
    %v3672 = vunpack.c.l.b16 %v3640
    %v3673 = vunpack.c.l.b16 %v3641
    %v3674 = vunpack.c.l.b16 %v3642
    %v3675 = vunpack.c.l.b16 %v3643
    %v3676 = vunpack.c.l.b16 %v3644
    %v3677 = vunpack.c.l.b16 %v3645
    %v3678 = vunpack.c.l.b16 %v3646
    %v3679 = vunpack.c.l.b16 %v3647
    %v3680 = vunpack.c.l.b16 %v3648
    %v3681 = vunpack.c.l.b16 %v3649
    %v3682 = vunpack.c.l.b16 %v3650
    %v3683 = vunpack.c.l.b16 %v3651
    %v3684 = vunpack.c.l.b16 %v3652
    %v3685 = vpack.c.b16 %v3670, %v3669
    %v3686 = vpack.c.b16 %v3672, %v3671
    %v3687 = vpack.c.b16 %v3674, %v3673
    %v3688 = vpack.c.b16 %v3676, %v3675
    %v3689 = vpack.c.b16 %v3678, %v3677
    %v3690 = vpack.c.b16 %v3680, %v3679
    %v3691 = vpack.c.b16 %v3682, %v3681
    %v3692 = vpack.c.b16 %v3684, %v3683
    %3701 = vmatprep.subr.bf16.mxu0 0
    %3702 = vmatpush1.bf16.msra.mxu0 %v3685
    %3703 = vmatprep.subr.bf16.mxu0 0
    %3704 = vmatpush1.bf16.msra.mxu0 %v3686
    %3705 = vmatprep.subr.bf16.mxu0 0
    %3706 = vmatpush1.bf16.msra.mxu0 %v3687
    %3707 = vmatprep.subr.bf16.mxu0 0
    %3708 = vmatpush1.bf16.msra.mxu0 %v3688
    %3709 = vmatprep.subr.bf16.mxu0 0
    %3710 = vmatpush1.bf16.msra.mxu0 %v3689
    %3711 = vmatprep.subr.bf16.mxu0 0
    %3712 = vmatpush1.bf16.msra.mxu0 %v3690
    %3713 = vmatprep.subr.bf16.mxu0 0
    %3714 = vmatpush1.bf16.msra.mxu0 %v3691
    %3715 = vmatprep.subr.bf16.mxu0 0
    %3716 = vmatpush1.bf16.msra.mxu0 %v3692
    %3717 = vmatprep.subr.bf16.mxu0 0
    %3718 = vmatpush1.bf16.msra.mxu0 0
    %3719 = vmatprep.subr.bf16.mxu0 0
    %3720 = vmatpush1.bf16.msra.mxu0 0
    %3721 = vmatprep.subr.bf16.mxu0 0
    %3722 = vmatpush1.bf16.msra.mxu0 0
    %3723 = vmatprep.subr.bf16.mxu0 0
    %3724 = vmatpush1.bf16.msra.mxu0 0
    %3725 = vmatprep.subr.bf16.mxu0 0
    %3726 = vmatpush1.bf16.msra.mxu0 0
    %3727 = vmatprep.subr.bf16.mxu0 0
    %3728 = vmatpush1.bf16.msra.mxu0 0
    %3729 = vmatprep.subr.bf16.mxu0 0
    %3730 = vmatpush1.bf16.msra.mxu0 0
    %3731 = vmatprep.subr.bf16.mxu0 0
    %3732 = vmatpush1.bf16.msra.mxu0 0
    %3733 = vmatprep.mubr.bf16.mxu0 0
    %3734 = vmatmul.mubr.bf16.gmra.mrb[0].mxu0 %v3622
    %v3735 = vpop.f32.mrb[0].mxu0
    %v3736 = vadd.f32 0.0, %v3735
    %v3737 = vpop.f32.mrb[0].mxu0
    %v3738 = vpop.f32.mrb[0].mxu0
    %v3739 = vadd.f32 0.0, %v3738
    %v3740 = vpop.f32.mrb[0].mxu0
    %3741 = vmatprep.mubr.bf16.mxu0 0
    %3742 = vmatmul.mubr.bf16.gmra.mrb[0].mxu0 %v3623
    %v3743 = vpop.f32.mrb[0].mxu0
    %v3744 = vadd.f32 0.0, %v3743
    %v3745 = vpop.f32.mrb[0].mxu0
    %v3746 = vpop.f32.mrb[0].mxu0
    %v3747 = vadd.f32 0.0, %v3746
    %v3748 = vpop.f32.mrb[0].mxu0
    %3749 = vmatprep.mubr.bf16.mxu0 0
    %3750 = vmatmul.mubr.bf16.gmra.mrb[0].mxu0 %v3624
    %v3751 = vpop.f32.mrb[0].mxu0
    %v3752 = vadd.f32 0.0, %v3751
    %v3753 = vpop.f32.mrb[0].mxu0
    %v3754 = vpop.f32.mrb[0].mxu0
    %v3755 = vadd.f32 0.0, %v3754
    %v3756 = vpop.f32.mrb[0].mxu0
    %3757 = vmatprep.mubr.bf16.mxu0 0
    %3758 = vmatmul.mubr.bf16.gmra.mrb[0].mxu0 %v3625
    %v3759 = vpop.f32.mrb[0].mxu0
    %v3760 = vadd.f32 0.0, %v3759
    %v3761 = vpop.f32.mrb[0].mxu0
    %v3762 = vpop.f32.mrb[0].mxu0
    %v3763 = vadd.f32 0.0, %v3762
    %v3764 = vpop.f32.mrb[0].mxu0
    %3765 = vmatprep.mubr.bf16.mxu0 0
    %3766 = vmatmul.mubr.bf16.gmra.mrb[0].mxu0 %v3626
    %v3767 = vpop.f32.mrb[0].mxu0
    %v3768 = vadd.f32 0.0, %v3767
    %v3769 = vpop.f32.mrb[0].mxu0
    %v3770 = vpop.f32.mrb[0].mxu0
    %v3771 = vadd.f32 0.0, %v3770
    %v3772 = vpop.f32.mrb[0].mxu0
    %3773 = vmatprep.mubr.bf16.mxu0 0
    %3774 = vmatmul.mubr.bf16.gmra.mrb[0].mxu0 %v3627
    %v3775 = vpop.f32.mrb[0].mxu0
    %v3776 = vadd.f32 0.0, %v3775
    %v3777 = vpop.f32.mrb[0].mxu0
    %v3778 = vpop.f32.mrb[0].mxu0
    %v3779 = vadd.f32 0.0, %v3778
    %v3780 = vpop.f32.mrb[0].mxu0
    %3781 = vmatprep.mubr.bf16.mxu0 0
    %3782 = vmatmul.mubr.bf16.gmra.mrb[0].mxu0 %v3628
    %v3783 = vpop.f32.mrb[0].mxu0
    %v3784 = vadd.f32 0.0, %v3783
    %v3785 = vpop.f32.mrb[0].mxu0
    %v3786 = vpop.f32.mrb[0].mxu0
    %v3787 = vadd.f32 0.0, %v3786
    %v3788 = vpop.f32.mrb[0].mxu0
    %3789 = vmatprep.mubr.bf16.mxu0 0
    %3790 = vmatmul.mubr.bf16.gmra.mrb[0].mxu0 %v3629
    %v3791 = vpop.f32.mrb[0].mxu0
    %v3792 = vadd.f32 0.0, %v3791
    %v3793 = vpop.f32.mrb[0].mxu0
    %v3794 = vpop.f32.mrb[0].mxu0
    %v3795 = vadd.f32 0.0, %v3794
    %v3796 = vpop.f32.mrb[0].mxu0
    %3797 = vmatprep.mubr.bf16.mxu0 0
    %3798 = vmatmul.mubr.bf16.gmra.mrb[0].mxu0 %v3630
    %v3799 = vpop.f32.mrb[0].mxu0
    %v3800 = vadd.f32 0.0, %v3799
    %v3801 = vpop.f32.mrb[0].mxu0
    %v3802 = vpop.f32.mrb[0].mxu0
    %v3803 = vadd.f32 0.0, %v3802
    %v3804 = vpop.f32.mrb[0].mxu0
    %3805 = vmatprep.mubr.bf16.mxu0 0
    %3806 = vmatmul.mubr.bf16.gmra.mrb[0].mxu0 %v3631
    %v3807 = vpop.f32.mrb[0].mxu0
    %v3808 = vadd.f32 0.0, %v3807
    %v3809 = vpop.f32.mrb[0].mxu0
    %v3810 = vpop.f32.mrb[0].mxu0
    %v3811 = vadd.f32 0.0, %v3810
    %v3812 = vpop.f32.mrb[0].mxu0
    %3813 = vmatprep.mubr.bf16.mxu0 0
    %3814 = vmatmul.mubr.bf16.gmra.mrb[0].mxu0 %v3632
    %v3815 = vpop.f32.mrb[0].mxu0
    %v3816 = vadd.f32 0.0, %v3815
    %v3817 = vpop.f32.mrb[0].mxu0
    %v3818 = vpop.f32.mrb[0].mxu0
    %v3819 = vadd.f32 0.0, %v3818
    %v3820 = vpop.f32.mrb[0].mxu0
    %3821 = vmatprep.mubr.bf16.mxu0 0
    %3822 = vmatmul.mubr.bf16.gmra.mrb[0].mxu0 %v3633
    %v3823 = vpop.f32.mrb[0].mxu0
    %v3824 = vadd.f32 0.0, %v3823
    %v3825 = vpop.f32.mrb[0].mxu0
    %v3826 = vpop.f32.mrb[0].mxu0
    %v3827 = vadd.f32 0.0, %v3826
    %v3828 = vpop.f32.mrb[0].mxu0
    %3829 = vmatprep.mubr.bf16.mxu0 0
    %3830 = vmatmul.mubr.bf16.gmra.mrb[0].mxu0 %v3634
    %v3831 = vpop.f32.mrb[0].mxu0
    %v3832 = vadd.f32 0.0, %v3831
    %v3833 = vpop.f32.mrb[0].mxu0
    %v3834 = vpop.f32.mrb[0].mxu0
    %v3835 = vadd.f32 0.0, %v3834
    %v3836 = vpop.f32.mrb[0].mxu0
    %3837 = vmatprep.mubr.bf16.mxu0 0
    %3838 = vmatmul.mubr.bf16.gmra.mrb[0].mxu0 %v3635
    %v3839 = vpop.f32.mrb[0].mxu0
    %v3840 = vadd.f32 0.0, %v3839
    %v3841 = vpop.f32.mrb[0].mxu0
    %v3842 = vpop.f32.mrb[0].mxu0
    %v3843 = vadd.f32 0.0, %v3842
    %v3844 = vpop.f32.mrb[0].mxu0
    %3845 = vdwg.mxu0
    %v3846 = vadd.f32 %v3566, %v3736
    %v3847 = vadd.f32 %v3567, %v3739
    %v3848 = vadd.f32 %v3568, %v3744
    %v3849 = vadd.f32 %v3569, %v3747
    %v3850 = vadd.f32 %v3570, %v3752
    %v3851 = vadd.f32 %v3571, %v3755
    %v3852 = vadd.f32 %v3572, %v3760
    %v3853 = vadd.f32 %v3573, %v3763
    %v3854 = vadd.f32 %v3574, %v3768
    %v3855 = vadd.f32 %v3575, %v3771
    %v3856 = vadd.f32 %v3576, %v3776
    %v3857 = vadd.f32 %v3577, %v3779
    %v3858 = vadd.f32 %v3578, %v3784
    %v3859 = vadd.f32 %v3579, %v3787
    %v3860 = vadd.f32 %v3580, %v3792
    %v3861 = vadd.f32 %v3581, %v3795
    %v3862 = vadd.f32 %v3582, %v3800
    %v3863 = vadd.f32 %v3583, %v3803
    %v3864 = vadd.f32 %v3584, %v3808
    %v3865 = vadd.f32 %v3585, %v3811
    %v3866 = vadd.f32 %v3586, %v3816
    %v3867 = vadd.f32 %v3587, %v3819
    %v3868 = vadd.f32 %v3588, %v3824
    %v3869 = vadd.f32 %v3589, %v3827
    %v3870 = vadd.f32 %v3590, %v3832
    %v3871 = vadd.f32 %v3591, %v3835
    %v3872 = vadd.f32 %v3592, %v3840
    %v3873 = vadd.f32 %v3593, %v3843
    %v3874 = vld [vmem:[#allocation2 + $0x301] sm:$0xff]
    %v3875 = vld [vmem:[#allocation2 + $0x309] sm:$0xff]
    %v3876 = vld [vmem:[#allocation2 + $0x311] sm:$0xff]
    %v3877 = vld [vmem:[#allocation2 + $0x319] sm:$0xff]
    %v3878 = vld [vmem:[#allocation2 + $0x321] sm:$0xff]
    %v3879 = vld [vmem:[#allocation2 + $0x329] sm:$0xff]
    %v3880 = vld [vmem:[#allocation2 + $0x331] sm:$0xff]
    %v3881 = vld [vmem:[#allocation2 + $0x339] sm:$0xff]
    %v3882 = vld [vmem:[#allocation2 + $0x341] sm:$0xff]
    %v3883 = vld [vmem:[#allocation2 + $0x349] sm:$0xff]
    %v3884 = vld [vmem:[#allocation2 + $0x351] sm:$0xff]
    %v3885 = vld [vmem:[#allocation2 + $0x359] sm:$0xff]
    %v3886 = vld [vmem:[#allocation2 + $0x361] sm:$0xff]
    %v3887 = vld [vmem:[#allocation2 + $0x369] sm:$0xff]
    %v3888 = vld [vmem:[#allocation2 + $0x371] sm:$0xff]
    %v3889 = vld [vmem:[#allocation2 + $0x379] sm:$0xff]
    %v3890 = vld [vmem:[#allocation2 + $0x381] sm:$0xff]
    %v3891 = vld [vmem:[#allocation2 + $0x389] sm:$0xff]
    %v3892 = vld [vmem:[#allocation2 + $0x391] sm:$0xff]
    %v3893 = vld [vmem:[#allocation2 + $0x399] sm:$0xff]
    %v3894 = vld [vmem:[#allocation2 + $0x3a1] sm:$0xff]
    %v3895 = vld [vmem:[#allocation2 + $0x3a9] sm:$0xff]
    %v3896 = vld [vmem:[#allocation2 + $0x3b1] sm:$0xff]
    %v3897 = vld [vmem:[#allocation2 + $0x3b9] sm:$0xff]
    %v3898 = vld [vmem:[#allocation2 + $0x3c1] sm:$0xff]
    %v3899 = vld [vmem:[#allocation2 + $0x3c9] sm:$0xff]
    %v3900 = vld [vmem:[#allocation2 + $0x3d1] sm:$0xff]
    %v3901 = vld [vmem:[#allocation2 + $0x3d9] sm:$0xff]
    %v3902 = vpack.c.bf16 %v3875, %v3874
    %v3903 = vpack.c.bf16 %v3877, %v3876
    %v3904 = vpack.c.bf16 %v3879, %v3878
    %v3905 = vpack.c.bf16 %v3881, %v3880
    %v3906 = vpack.c.bf16 %v3883, %v3882
    %v3907 = vpack.c.bf16 %v3885, %v3884
    %v3908 = vpack.c.bf16 %v3887, %v3886
    %v3909 = vpack.c.bf16 %v3889, %v3888
    %v3910 = vpack.c.bf16 %v3891, %v3890
    %v3911 = vpack.c.bf16 %v3893, %v3892
    %v3912 = vpack.c.bf16 %v3895, %v3894
    %v3913 = vpack.c.bf16 %v3897, %v3896
    %v3914 = vpack.c.bf16 %v3899, %v3898
    %v3915 = vpack.c.bf16 %v3901, %v3900
    %s3916 = scalar_lea.vmem %s3, 448
    %v3917 = vld [vmem:[%s3916] sm:$0xf]
    %v3918 = vld [vmem:[%s3916 + $0x4] sm:$0xf]
    %v3919 = vld [vmem:[%s3916 + $0x8] sm:$0xf]
    %v3920 = vld [vmem:[%s3916 + $0xc] sm:$0xf]
    %v3921 = vld [vmem:[%s3916 + $0x10] sm:$0xf]
    %v3922 = vld [vmem:[%s3916 + $0x14] sm:$0xf]
    %v3923 = vld [vmem:[%s3916 + $0x18] sm:$0xf]
    %v3924 = vld [vmem:[%s3916 + $0x1c] sm:$0xf]
    %v3925 = vld [vmem:[%s3916 + $0x20] sm:$0xf]
    %v3926 = vld [vmem:[%s3916 + $0x24] sm:$0xf]
    %v3927 = vld [vmem:[%s3916 + $0x28] sm:$0xf]
    %v3928 = vld [vmem:[%s3916 + $0x2c] sm:$0xf]
    %v3929 = vld [vmem:[%s3916 + $0x30] sm:$0xf]
    %v3930 = vld [vmem:[%s3916 + $0x34] sm:$0xf]
    %v3931 = vld [vmem:[%s3916 + $0x38] sm:$0xf]
    %v3932 = vld [vmem:[%s3916 + $0x3c] sm:$0xf]
    %v3949 = vunpack.c.l.b16 %v3917
    %v3950 = vunpack.c.l.b16 %v3918
    %v3951 = vunpack.c.l.b16 %v3919
    %v3952 = vunpack.c.l.b16 %v3920
    %v3953 = vunpack.c.l.b16 %v3921
    %v3954 = vunpack.c.l.b16 %v3922
    %v3955 = vunpack.c.l.b16 %v3923
    %v3956 = vunpack.c.l.b16 %v3924
    %v3957 = vunpack.c.l.b16 %v3925
    %v3958 = vunpack.c.l.b16 %v3926
    %v3959 = vunpack.c.l.b16 %v3927
    %v3960 = vunpack.c.l.b16 %v3928
    %v3961 = vunpack.c.l.b16 %v3929
    %v3962 = vunpack.c.l.b16 %v3930
    %v3963 = vunpack.c.l.b16 %v3931
    %v3964 = vunpack.c.l.b16 %v3932
    %v3965 = vpack.c.b16 %v3950, %v3949
    %v3966 = vpack.c.b16 %v3952, %v3951
    %v3967 = vpack.c.b16 %v3954, %v3953
    %v3968 = vpack.c.b16 %v3956, %v3955
    %v3969 = vpack.c.b16 %v3958, %v3957
    %v3970 = vpack.c.b16 %v3960, %v3959
    %v3971 = vpack.c.b16 %v3962, %v3961
    %v3972 = vpack.c.b16 %v3964, %v3963
    %3981 = vmatprep.subr.bf16.mxu0 0
    %3982 = vmatpush1.bf16.msra.mxu0 %v3965
    %3983 = vmatprep.subr.bf16.mxu0 0
    %3984 = vmatpush1.bf16.msra.mxu0 %v3966
    %3985 = vmatprep.subr.bf16.mxu0 0
    %3986 = vmatpush1.bf16.msra.mxu0 %v3967
    %3987 = vmatprep.subr.bf16.mxu0 0
    %3988 = vmatpush1.bf16.msra.mxu0 %v3968
    %3989 = vmatprep.subr.bf16.mxu0 0
    %3990 = vmatpush1.bf16.msra.mxu0 %v3969
    %3991 = vmatprep.subr.bf16.mxu0 0
    %3992 = vmatpush1.bf16.msra.mxu0 %v3970
    %3993 = vmatprep.subr.bf16.mxu0 0
    %3994 = vmatpush1.bf16.msra.mxu0 %v3971
    %3995 = vmatprep.subr.bf16.mxu0 0
    %3996 = vmatpush1.bf16.msra.mxu0 %v3972
    %3997 = vmatprep.subr.bf16.mxu0 0
    %3998 = vmatpush1.bf16.msra.mxu0 0
    %3999 = vmatprep.subr.bf16.mxu0 0
    %4000 = vmatpush1.bf16.msra.mxu0 0
    %4001 = vmatprep.subr.bf16.mxu0 0
    %4002 = vmatpush1.bf16.msra.mxu0 0
    %4003 = vmatprep.subr.bf16.mxu0 0
    %4004 = vmatpush1.bf16.msra.mxu0 0
    %4005 = vmatprep.subr.bf16.mxu0 0
    %4006 = vmatpush1.bf16.msra.mxu0 0
    %4007 = vmatprep.subr.bf16.mxu0 0
    %4008 = vmatpush1.bf16.msra.mxu0 0
    %4009 = vmatprep.subr.bf16.mxu0 0
    %4010 = vmatpush1.bf16.msra.mxu0 0
    %4011 = vmatprep.subr.bf16.mxu0 0
    %4012 = vmatpush1.bf16.msra.mxu0 0
    %4013 = vmatprep.mubr.bf16.mxu0 0
    %4014 = vmatmul.mubr.bf16.gmra.mrb[0].mxu0 %v3902
    %v4015 = vpop.f32.mrb[0].mxu0
    %v4016 = vadd.f32 0.0, %v4015
    %v4017 = vpop.f32.mrb[0].mxu0
    %v4018 = vpop.f32.mrb[0].mxu0
    %v4019 = vadd.f32 0.0, %v4018
    %v4020 = vpop.f32.mrb[0].mxu0
    %4021 = vmatprep.mubr.bf16.mxu0 0
    %4022 = vmatmul.mubr.bf16.gmra.mrb[0].mxu0 %v3903
    %v4023 = vpop.f32.mrb[0].mxu0
    %v4024 = vadd.f32 0.0, %v4023
    %v4025 = vpop.f32.mrb[0].mxu0
    %v4026 = vpop.f32.mrb[0].mxu0
    %v4027 = vadd.f32 0.0, %v4026
    %v4028 = vpop.f32.mrb[0].mxu0
    %4029 = vmatprep.mubr.bf16.mxu0 0
    %4030 = vmatmul.mubr.bf16.gmra.mrb[0].mxu0 %v3904
    %v4031 = vpop.f32.mrb[0].mxu0
    %v4032 = vadd.f32 0.0, %v4031
    %v4033 = vpop.f32.mrb[0].mxu0
    %v4034 = vpop.f32.mrb[0].mxu0
    %v4035 = vadd.f32 0.0, %v4034
    %v4036 = vpop.f32.mrb[0].mxu0
    %4037 = vmatprep.mubr.bf16.mxu0 0
    %4038 = vmatmul.mubr.bf16.gmra.mrb[0].mxu0 %v3905
    %v4039 = vpop.f32.mrb[0].mxu0
    %v4040 = vadd.f32 0.0, %v4039
    %v4041 = vpop.f32.mrb[0].mxu0
    %v4042 = vpop.f32.mrb[0].mxu0
    %v4043 = vadd.f32 0.0, %v4042
    %v4044 = vpop.f32.mrb[0].mxu0
    %4045 = vmatprep.mubr.bf16.mxu0 0
    %4046 = vmatmul.mubr.bf16.gmra.mrb[0].mxu0 %v3906
    %v4047 = vpop.f32.mrb[0].mxu0
    %v4048 = vadd.f32 0.0, %v4047
    %v4049 = vpop.f32.mrb[0].mxu0
    %v4050 = vpop.f32.mrb[0].mxu0
    %v4051 = vadd.f32 0.0, %v4050
    %v4052 = vpop.f32.mrb[0].mxu0
    %4053 = vmatprep.mubr.bf16.mxu0 0
    %4054 = vmatmul.mubr.bf16.gmra.mrb[0].mxu0 %v3907
    %v4055 = vpop.f32.mrb[0].mxu0
    %v4056 = vadd.f32 0.0, %v4055
    %v4057 = vpop.f32.mrb[0].mxu0
    %v4058 = vpop.f32.mrb[0].mxu0
    %v4059 = vadd.f32 0.0, %v4058
    %v4060 = vpop.f32.mrb[0].mxu0
    %4061 = vmatprep.mubr.bf16.mxu0 0
    %4062 = vmatmul.mubr.bf16.gmra.mrb[0].mxu0 %v3908
    %v4063 = vpop.f32.mrb[0].mxu0
    %v4064 = vadd.f32 0.0, %v4063
    %v4065 = vpop.f32.mrb[0].mxu0
    %v4066 = vpop.f32.mrb[0].mxu0
    %v4067 = vadd.f32 0.0, %v4066
    %v4068 = vpop.f32.mrb[0].mxu0
    %4069 = vmatprep.mubr.bf16.mxu0 0
    %4070 = vmatmul.mubr.bf16.gmra.mrb[0].mxu0 %v3909
    %v4071 = vpop.f32.mrb[0].mxu0
    %v4072 = vadd.f32 0.0, %v4071
    %v4073 = vpop.f32.mrb[0].mxu0
    %v4074 = vpop.f32.mrb[0].mxu0
    %v4075 = vadd.f32 0.0, %v4074
    %v4076 = vpop.f32.mrb[0].mxu0
    %4077 = vmatprep.mubr.bf16.mxu0 0
    %4078 = vmatmul.mubr.bf16.gmra.mrb[0].mxu0 %v3910
    %v4079 = vpop.f32.mrb[0].mxu0
    %v4080 = vadd.f32 0.0, %v4079
    %v4081 = vpop.f32.mrb[0].mxu0
    %v4082 = vpop.f32.mrb[0].mxu0
    %v4083 = vadd.f32 0.0, %v4082
    %v4084 = vpop.f32.mrb[0].mxu0
    %4085 = vmatprep.mubr.bf16.mxu0 0
    %4086 = vmatmul.mubr.bf16.gmra.mrb[0].mxu0 %v3911
    %v4087 = vpop.f32.mrb[0].mxu0
    %v4088 = vadd.f32 0.0, %v4087
    %v4089 = vpop.f32.mrb[0].mxu0
    %v4090 = vpop.f32.mrb[0].mxu0
    %v4091 = vadd.f32 0.0, %v4090
    %v4092 = vpop.f32.mrb[0].mxu0
    %4093 = vmatprep.mubr.bf16.mxu0 0
    %4094 = vmatmul.mubr.bf16.gmra.mrb[0].mxu0 %v3912
    %v4095 = vpop.f32.mrb[0].mxu0
    %v4096 = vadd.f32 0.0, %v4095
    %v4097 = vpop.f32.mrb[0].mxu0
    %v4098 = vpop.f32.mrb[0].mxu0
    %v4099 = vadd.f32 0.0, %v4098
    %v4100 = vpop.f32.mrb[0].mxu0
    %4101 = vmatprep.mubr.bf16.mxu0 0
    %4102 = vmatmul.mubr.bf16.gmra.mrb[0].mxu0 %v3913
    %v4103 = vpop.f32.mrb[0].mxu0
    %v4104 = vadd.f32 0.0, %v4103
    %v4105 = vpop.f32.mrb[0].mxu0
    %v4106 = vpop.f32.mrb[0].mxu0
    %v4107 = vadd.f32 0.0, %v4106
    %v4108 = vpop.f32.mrb[0].mxu0
    %4109 = vmatprep.mubr.bf16.mxu0 0
    %4110 = vmatmul.mubr.bf16.gmra.mrb[0].mxu0 %v3914
    %v4111 = vpop.f32.mrb[0].mxu0
    %v4112 = vadd.f32 0.0, %v4111
    %v4113 = vpop.f32.mrb[0].mxu0
    %v4114 = vpop.f32.mrb[0].mxu0
    %v4115 = vadd.f32 0.0, %v4114
    %v4116 = vpop.f32.mrb[0].mxu0
    %4117 = vmatprep.mubr.bf16.mxu0 0
    %4118 = vmatmul.mubr.bf16.gmra.mrb[0].mxu0 %v3915
    %v4119 = vpop.f32.mrb[0].mxu0
    %v4120 = vadd.f32 0.0, %v4119
    %v4121 = vpop.f32.mrb[0].mxu0
    %v4122 = vpop.f32.mrb[0].mxu0
    %v4123 = vadd.f32 0.0, %v4122
    %v4124 = vpop.f32.mrb[0].mxu0
    %4125 = vdwg.mxu0
    %v4126 = vadd.f32 %v3846, %v4016
    %v4127 = vadd.f32 %v3847, %v4019
    %v4128 = vadd.f32 %v3848, %v4024
    %v4129 = vadd.f32 %v3849, %v4027
    %v4130 = vadd.f32 %v3850, %v4032
    %v4131 = vadd.f32 %v3851, %v4035
    %v4132 = vadd.f32 %v3852, %v4040
    %v4133 = vadd.f32 %v3853, %v4043
    %v4134 = vadd.f32 %v3854, %v4048
    %v4135 = vadd.f32 %v3855, %v4051
    %v4136 = vadd.f32 %v3856, %v4056
    %v4137 = vadd.f32 %v3857, %v4059
    %v4138 = vadd.f32 %v3858, %v4064
    %v4139 = vadd.f32 %v3859, %v4067
    %v4140 = vadd.f32 %v3860, %v4072
    %v4141 = vadd.f32 %v3861, %v4075
    %v4142 = vadd.f32 %v3862, %v4080
    %v4143 = vadd.f32 %v3863, %v4083
    %v4144 = vadd.f32 %v3864, %v4088
    %v4145 = vadd.f32 %v3865, %v4091
    %v4146 = vadd.f32 %v3866, %v4096
    %v4147 = vadd.f32 %v3867, %v4099
    %v4148 = vadd.f32 %v3868, %v4104
    %v4149 = vadd.f32 %v3869, %v4107
    %v4150 = vadd.f32 %v3870, %v4112
    %v4151 = vadd.f32 %v3871, %v4115
    %v4152 = vadd.f32 %v3872, %v4120
    %v4153 = vadd.f32 %v3873, %v4123
    %v4154 = vld [vmem:[#allocation2 + $0x10] sm:$0xff]
    %v4155 = vld [vmem:[#allocation2 + $0x18] sm:$0xff]
    %v4156 = vld [vmem:[#allocation2 + $0x20] sm:$0xff]
    %v4157 = vld [vmem:[#allocation2 + $0x28] sm:$0xff]
    %v4158 = vld [vmem:[#allocation2 + $0x30] sm:$0xff]
    %v4159 = vld [vmem:[#allocation2 + $0x38] sm:$0xff]
    %v4160 = vld [vmem:[#allocation2 + $0x40] sm:$0xff]
    %v4161 = vld [vmem:[#allocation2 + $0x48] sm:$0xff]
    %v4162 = vld [vmem:[#allocation2 + $0x50] sm:$0xff]
    %v4163 = vld [vmem:[#allocation2 + $0x58] sm:$0xff]
    %v4164 = vld [vmem:[#allocation2 + $0x60] sm:$0xff]
    %v4165 = vld [vmem:[#allocation2 + $0x68] sm:$0xff]
    %v4166 = vld [vmem:[#allocation2 + $0x70] sm:$0xff]
    %v4167 = vld [vmem:[#allocation2 + $0x78] sm:$0xff]
    %v4168 = vld [vmem:[#allocation2 + $0x80] sm:$0xff]
    %v4169 = vld [vmem:[#allocation2 + $0x88] sm:$0xff]
    %v4170 = vld [vmem:[#allocation2 + $0x90] sm:$0xff]
    %v4171 = vld [vmem:[#allocation2 + $0x98] sm:$0xff]
    %v4172 = vld [vmem:[#allocation2 + $0xa0] sm:$0xff]
    %v4173 = vld [vmem:[#allocation2 + $0xa8] sm:$0xff]
    %v4174 = vld [vmem:[#allocation2 + $0xb0] sm:$0xff]
    %v4175 = vld [vmem:[#allocation2 + $0xb8] sm:$0xff]
    %v4176 = vld [vmem:[#allocation2 + $0xc0] sm:$0xff]
    %v4177 = vld [vmem:[#allocation2 + $0xc8] sm:$0xff]
    %v4178 = vld [vmem:[#allocation2 + $0xd0] sm:$0xff]
    %v4179 = vld [vmem:[#allocation2 + $0xd8] sm:$0xff]
    %v4180 = vld [vmem:[#allocation2 + $0xe0] sm:$0xff]
    %v4181 = vld [vmem:[#allocation2 + $0xe8] sm:$0xff]
    %v4182 = vpack.c.bf16 %v4155, %v4154
    %v4183 = vpack.c.bf16 %v4157, %v4156
    %v4184 = vpack.c.bf16 %v4159, %v4158
    %v4185 = vpack.c.bf16 %v4161, %v4160
    %v4186 = vpack.c.bf16 %v4163, %v4162
    %v4187 = vpack.c.bf16 %v4165, %v4164
    %v4188 = vpack.c.bf16 %v4167, %v4166
    %v4189 = vpack.c.bf16 %v4169, %v4168
    %v4190 = vpack.c.bf16 %v4171, %v4170
    %v4191 = vpack.c.bf16 %v4173, %v4172
    %v4192 = vpack.c.bf16 %v4175, %v4174
    %v4193 = vpack.c.bf16 %v4177, %v4176
    %v4194 = vpack.c.bf16 %v4179, %v4178
    %v4195 = vpack.c.bf16 %v4181, %v4180
    %s4196 = scalar_lea.vmem %s3, 512
    %v4197 = vld [vmem:[%s4196] sm:$0xf]
    %v4198 = vld [vmem:[%s4196 + $0x4] sm:$0xf]
    %v4199 = vld [vmem:[%s4196 + $0x8] sm:$0xf]
    %v4200 = vld [vmem:[%s4196 + $0xc] sm:$0xf]
    %v4201 = vld [vmem:[%s4196 + $0x10] sm:$0xf]
    %v4202 = vld [vmem:[%s4196 + $0x14] sm:$0xf]
    %v4203 = vld [vmem:[%s4196 + $0x18] sm:$0xf]
    %v4204 = vld [vmem:[%s4196 + $0x1c] sm:$0xf]
    %v4205 = vld [vmem:[%s4196 + $0x20] sm:$0xf]
    %v4206 = vld [vmem:[%s4196 + $0x24] sm:$0xf]
    %v4207 = vld [vmem:[%s4196 + $0x28] sm:$0xf]
    %v4208 = vld [vmem:[%s4196 + $0x2c] sm:$0xf]
    %v4209 = vld [vmem:[%s4196 + $0x30] sm:$0xf]
    %v4210 = vld [vmem:[%s4196 + $0x34] sm:$0xf]
    %v4211 = vld [vmem:[%s4196 + $0x38] sm:$0xf]
    %v4212 = vld [vmem:[%s4196 + $0x3c] sm:$0xf]
    %v4229 = vunpack.c.l.b16 %v4197
    %v4230 = vunpack.c.l.b16 %v4198
    %v4231 = vunpack.c.l.b16 %v4199
    %v4232 = vunpack.c.l.b16 %v4200
    %v4233 = vunpack.c.l.b16 %v4201
    %v4234 = vunpack.c.l.b16 %v4202
    %v4235 = vunpack.c.l.b16 %v4203
    %v4236 = vunpack.c.l.b16 %v4204
    %v4237 = vunpack.c.l.b16 %v4205
    %v4238 = vunpack.c.l.b16 %v4206
    %v4239 = vunpack.c.l.b16 %v4207
    %v4240 = vunpack.c.l.b16 %v4208
    %v4241 = vunpack.c.l.b16 %v4209
    %v4242 = vunpack.c.l.b16 %v4210
    %v4243 = vunpack.c.l.b16 %v4211
    %v4244 = vunpack.c.l.b16 %v4212
    %v4245 = vpack.c.b16 %v4230, %v4229
    %v4246 = vpack.c.b16 %v4232, %v4231
    %v4247 = vpack.c.b16 %v4234, %v4233
    %v4248 = vpack.c.b16 %v4236, %v4235
    %v4249 = vpack.c.b16 %v4238, %v4237
    %v4250 = vpack.c.b16 %v4240, %v4239
    %v4251 = vpack.c.b16 %v4242, %v4241
    %v4252 = vpack.c.b16 %v4244, %v4243
    %4261 = vmatprep.subr.bf16.mxu0 0
    %4262 = vmatpush1.bf16.msra.mxu0 %v4245
    %4263 = vmatprep.subr.bf16.mxu0 0
    %4264 = vmatpush1.bf16.msra.mxu0 %v4246
    %4265 = vmatprep.subr.bf16.mxu0 0
    %4266 = vmatpush1.bf16.msra.mxu0 %v4247
    %4267 = vmatprep.subr.bf16.mxu0 0
    %4268 = vmatpush1.bf16.msra.mxu0 %v4248
    %4269 = vmatprep.subr.bf16.mxu0 0
    %4270 = vmatpush1.bf16.msra.mxu0 %v4249
    %4271 = vmatprep.subr.bf16.mxu0 0
    %4272 = vmatpush1.bf16.msra.mxu0 %v4250
    %4273 = vmatprep.subr.bf16.mxu0 0
    %4274 = vmatpush1.bf16.msra.mxu0 %v4251
    %4275 = vmatprep.subr.bf16.mxu0 0
    %4276 = vmatpush1.bf16.msra.mxu0 %v4252
    %4277 = vmatprep.subr.bf16.mxu0 0
    %4278 = vmatpush1.bf16.msra.mxu0 0
    %4279 = vmatprep.subr.bf16.mxu0 0
    %4280 = vmatpush1.bf16.msra.mxu0 0
    %4281 = vmatprep.subr.bf16.mxu0 0
    %4282 = vmatpush1.bf16.msra.mxu0 0
    %4283 = vmatprep.subr.bf16.mxu0 0
    %4284 = vmatpush1.bf16.msra.mxu0 0
    %4285 = vmatprep.subr.bf16.mxu0 0
    %4286 = vmatpush1.bf16.msra.mxu0 0
    %4287 = vmatprep.subr.bf16.mxu0 0
    %4288 = vmatpush1.bf16.msra.mxu0 0
    %4289 = vmatprep.subr.bf16.mxu0 0
    %4290 = vmatpush1.bf16.msra.mxu0 0
    %4291 = vmatprep.subr.bf16.mxu0 0
    %4292 = vmatpush1.bf16.msra.mxu0 0
    %4293 = vmatprep.mubr.bf16.mxu0 0
    %4294 = vmatmul.mubr.bf16.gmra.mrb[0].mxu0 %v4182
    %v4295 = vpop.f32.mrb[0].mxu0
    %v4296 = vadd.f32 0.0, %v4295
    %v4297 = vpop.f32.mrb[0].mxu0
    %v4298 = vpop.f32.mrb[0].mxu0
    %v4299 = vadd.f32 0.0, %v4298
    %v4300 = vpop.f32.mrb[0].mxu0
    %4301 = vmatprep.mubr.bf16.mxu0 0
    %4302 = vmatmul.mubr.bf16.gmra.mrb[0].mxu0 %v4183
    %v4303 = vpop.f32.mrb[0].mxu0
    %v4304 = vadd.f32 0.0, %v4303
    %v4305 = vpop.f32.mrb[0].mxu0
    %v4306 = vpop.f32.mrb[0].mxu0
    %v4307 = vadd.f32 0.0, %v4306
    %v4308 = vpop.f32.mrb[0].mxu0
    %4309 = vmatprep.mubr.bf16.mxu0 0
    %4310 = vmatmul.mubr.bf16.gmra.mrb[0].mxu0 %v4184
    %v4311 = vpop.f32.mrb[0].mxu0
    %v4312 = vadd.f32 0.0, %v4311
    %v4313 = vpop.f32.mrb[0].mxu0
    %v4314 = vpop.f32.mrb[0].mxu0
    %v4315 = vadd.f32 0.0, %v4314
    %v4316 = vpop.f32.mrb[0].mxu0
    %4317 = vmatprep.mubr.bf16.mxu0 0
    %4318 = vmatmul.mubr.bf16.gmra.mrb[0].mxu0 %v4185
    %v4319 = vpop.f32.mrb[0].mxu0
    %v4320 = vadd.f32 0.0, %v4319
    %v4321 = vpop.f32.mrb[0].mxu0
    %v4322 = vpop.f32.mrb[0].mxu0
    %v4323 = vadd.f32 0.0, %v4322
    %v4324 = vpop.f32.mrb[0].mxu0
    %4325 = vmatprep.mubr.bf16.mxu0 0
    %4326 = vmatmul.mubr.bf16.gmra.mrb[0].mxu0 %v4186
    %v4327 = vpop.f32.mrb[0].mxu0
    %v4328 = vadd.f32 0.0, %v4327
    %v4329 = vpop.f32.mrb[0].mxu0
    %v4330 = vpop.f32.mrb[0].mxu0
    %v4331 = vadd.f32 0.0, %v4330
    %v4332 = vpop.f32.mrb[0].mxu0
    %4333 = vmatprep.mubr.bf16.mxu0 0
    %4334 = vmatmul.mubr.bf16.gmra.mrb[0].mxu0 %v4187
    %v4335 = vpop.f32.mrb[0].mxu0
    %v4336 = vadd.f32 0.0, %v4335
    %v4337 = vpop.f32.mrb[0].mxu0
    %v4338 = vpop.f32.mrb[0].mxu0
    %v4339 = vadd.f32 0.0, %v4338
    %v4340 = vpop.f32.mrb[0].mxu0
    %4341 = vmatprep.mubr.bf16.mxu0 0
    %4342 = vmatmul.mubr.bf16.gmra.mrb[0].mxu0 %v4188
    %v4343 = vpop.f32.mrb[0].mxu0
    %v4344 = vadd.f32 0.0, %v4343
    %v4345 = vpop.f32.mrb[0].mxu0
    %v4346 = vpop.f32.mrb[0].mxu0
    %v4347 = vadd.f32 0.0, %v4346
    %v4348 = vpop.f32.mrb[0].mxu0
    %4349 = vmatprep.mubr.bf16.mxu0 0
    %4350 = vmatmul.mubr.bf16.gmra.mrb[0].mxu0 %v4189
    %v4351 = vpop.f32.mrb[0].mxu0
    %v4352 = vadd.f32 0.0, %v4351
    %v4353 = vpop.f32.mrb[0].mxu0
    %v4354 = vpop.f32.mrb[0].mxu0
    %v4355 = vadd.f32 0.0, %v4354
    %v4356 = vpop.f32.mrb[0].mxu0
    %4357 = vmatprep.mubr.bf16.mxu0 0
    %4358 = vmatmul.mubr.bf16.gmra.mrb[0].mxu0 %v4190
    %v4359 = vpop.f32.mrb[0].mxu0
    %v4360 = vadd.f32 0.0, %v4359
    %v4361 = vpop.f32.mrb[0].mxu0
    %v4362 = vpop.f32.mrb[0].mxu0
    %v4363 = vadd.f32 0.0, %v4362
    %v4364 = vpop.f32.mrb[0].mxu0
    %4365 = vmatprep.mubr.bf16.mxu0 0
    %4366 = vmatmul.mubr.bf16.gmra.mrb[0].mxu0 %v4191
    %v4367 = vpop.f32.mrb[0].mxu0
    %v4368 = vadd.f32 0.0, %v4367
    %v4369 = vpop.f32.mrb[0].mxu0
    %v4370 = vpop.f32.mrb[0].mxu0
    %v4371 = vadd.f32 0.0, %v4370
    %v4372 = vpop.f32.mrb[0].mxu0
    %4373 = vmatprep.mubr.bf16.mxu0 0
    %4374 = vmatmul.mubr.bf16.gmra.mrb[0].mxu0 %v4192
    %v4375 = vpop.f32.mrb[0].mxu0
    %v4376 = vadd.f32 0.0, %v4375
    %v4377 = vpop.f32.mrb[0].mxu0
    %v4378 = vpop.f32.mrb[0].mxu0
    %v4379 = vadd.f32 0.0, %v4378
    %v4380 = vpop.f32.mrb[0].mxu0
    %4381 = vmatprep.mubr.bf16.mxu0 0
    %4382 = vmatmul.mubr.bf16.gmra.mrb[0].mxu0 %v4193
    %v4383 = vpop.f32.mrb[0].mxu0
    %v4384 = vadd.f32 0.0, %v4383
    %v4385 = vpop.f32.mrb[0].mxu0
    %v4386 = vpop.f32.mrb[0].mxu0
    %v4387 = vadd.f32 0.0, %v4386
    %v4388 = vpop.f32.mrb[0].mxu0
    %4389 = vmatprep.mubr.bf16.mxu0 0
    %4390 = vmatmul.mubr.bf16.gmra.mrb[0].mxu0 %v4194
    %v4391 = vpop.f32.mrb[0].mxu0
    %v4392 = vadd.f32 0.0, %v4391
    %v4393 = vpop.f32.mrb[0].mxu0
    %v4394 = vpop.f32.mrb[0].mxu0
    %v4395 = vadd.f32 0.0, %v4394
    %v4396 = vpop.f32.mrb[0].mxu0
    %4397 = vmatprep.mubr.bf16.mxu0 0
    %4398 = vmatmul.mubr.bf16.gmra.mrb[0].mxu0 %v4195
    %v4399 = vpop.f32.mrb[0].mxu0
    %v4400 = vadd.f32 0.0, %v4399
    %v4401 = vpop.f32.mrb[0].mxu0
    %v4402 = vpop.f32.mrb[0].mxu0
    %v4403 = vadd.f32 0.0, %v4402
    %v4404 = vpop.f32.mrb[0].mxu0
    %4405 = vdwg.mxu0
    %v4406 = vadd.f32 %v4126, %v4296
    %v4407 = vadd.f32 %v4127, %v4299
    %v4408 = vadd.f32 %v4128, %v4304
    %v4409 = vadd.f32 %v4129, %v4307
    %v4410 = vadd.f32 %v4130, %v4312
    %v4411 = vadd.f32 %v4131, %v4315
    %v4412 = vadd.f32 %v4132, %v4320
    %v4413 = vadd.f32 %v4133, %v4323
    %v4414 = vadd.f32 %v4134, %v4328
    %v4415 = vadd.f32 %v4135, %v4331
    %v4416 = vadd.f32 %v4136, %v4336
    %v4417 = vadd.f32 %v4137, %v4339
    %v4418 = vadd.f32 %v4138, %v4344
    %v4419 = vadd.f32 %v4139, %v4347
    %v4420 = vadd.f32 %v4140, %v4352
    %v4421 = vadd.f32 %v4141, %v4355
    %v4422 = vadd.f32 %v4142, %v4360
    %v4423 = vadd.f32 %v4143, %v4363
    %v4424 = vadd.f32 %v4144, %v4368
    %v4425 = vadd.f32 %v4145, %v4371
    %v4426 = vadd.f32 %v4146, %v4376
    %v4427 = vadd.f32 %v4147, %v4379
    %v4428 = vadd.f32 %v4148, %v4384
    %v4429 = vadd.f32 %v4149, %v4387
    %v4430 = vadd.f32 %v4150, %v4392
    %v4431 = vadd.f32 %v4151, %v4395
    %v4432 = vadd.f32 %v4152, %v4400
    %v4433 = vadd.f32 %v4153, %v4403
    %v4434 = vld [vmem:[#allocation2 + $0x110] sm:$0xff]
    %v4435 = vld [vmem:[#allocation2 + $0x118] sm:$0xff]
    %v4436 = vld [vmem:[#allocation2 + $0x120] sm:$0xff]
    %v4437 = vld [vmem:[#allocation2 + $0x128] sm:$0xff]
    %v4438 = vld [vmem:[#allocation2 + $0x130] sm:$0xff]
    %v4439 = vld [vmem:[#allocation2 + $0x138] sm:$0xff]
    %v4440 = vld [vmem:[#allocation2 + $0x140] sm:$0xff]
    %v4441 = vld [vmem:[#allocation2 + $0x148] sm:$0xff]
    %v4442 = vld [vmem:[#allocation2 + $0x150] sm:$0xff]
    %v4443 = vld [vmem:[#allocation2 + $0x158] sm:$0xff]
    %v4444 = vld [vmem:[#allocation2 + $0x160] sm:$0xff]
    %v4445 = vld [vmem:[#allocation2 + $0x168] sm:$0xff]
    %v4446 = vld [vmem:[#allocation2 + $0x170] sm:$0xff]
    %v4447 = vld [vmem:[#allocation2 + $0x178] sm:$0xff]
    %v4448 = vld [vmem:[#allocation2 + $0x180] sm:$0xff]
    %v4449 = vld [vmem:[#allocation2 + $0x188] sm:$0xff]
    %v4450 = vld [vmem:[#allocation2 + $0x190] sm:$0xff]
    %v4451 = vld [vmem:[#allocation2 + $0x198] sm:$0xff]
    %v4452 = vld [vmem:[#allocation2 + $0x1a0] sm:$0xff]
    %v4453 = vld [vmem:[#allocation2 + $0x1a8] sm:$0xff]
    %v4454 = vld [vmem:[#allocation2 + $0x1b0] sm:$0xff]
    %v4455 = vld [vmem:[#allocation2 + $0x1b8] sm:$0xff]
    %v4456 = vld [vmem:[#allocation2 + $0x1c0] sm:$0xff]
    %v4457 = vld [vmem:[#allocation2 + $0x1c8] sm:$0xff]
    %v4458 = vld [vmem:[#allocation2 + $0x1d0] sm:$0xff]
    %v4459 = vld [vmem:[#allocation2 + $0x1d8] sm:$0xff]
    %v4460 = vld [vmem:[#allocation2 + $0x1e0] sm:$0xff]
    %v4461 = vld [vmem:[#allocation2 + $0x1e8] sm:$0xff]
    %v4462 = vpack.c.bf16 %v4435, %v4434
    %v4463 = vpack.c.bf16 %v4437, %v4436
    %v4464 = vpack.c.bf16 %v4439, %v4438
    %v4465 = vpack.c.bf16 %v4441, %v4440
    %v4466 = vpack.c.bf16 %v4443, %v4442
    %v4467 = vpack.c.bf16 %v4445, %v4444
    %v4468 = vpack.c.bf16 %v4447, %v4446
    %v4469 = vpack.c.bf16 %v4449, %v4448
    %v4470 = vpack.c.bf16 %v4451, %v4450
    %v4471 = vpack.c.bf16 %v4453, %v4452
    %v4472 = vpack.c.bf16 %v4455, %v4454
    %v4473 = vpack.c.bf16 %v4457, %v4456
    %v4474 = vpack.c.bf16 %v4459, %v4458
    %v4475 = vpack.c.bf16 %v4461, %v4460
    %s4476 = scalar_lea.vmem %s3, 576
    %v4477 = vld [vmem:[%s4476] sm:$0xf]
    %v4478 = vld [vmem:[%s4476 + $0x4] sm:$0xf]
    %v4479 = vld [vmem:[%s4476 + $0x8] sm:$0xf]
    %v4480 = vld [vmem:[%s4476 + $0xc] sm:$0xf]
    %v4481 = vld [vmem:[%s4476 + $0x10] sm:$0xf]
    %v4482 = vld [vmem:[%s4476 + $0x14] sm:$0xf]
    %v4483 = vld [vmem:[%s4476 + $0x18] sm:$0xf]
    %v4484 = vld [vmem:[%s4476 + $0x1c] sm:$0xf]
    %v4485 = vld [vmem:[%s4476 + $0x20] sm:$0xf]
    %v4486 = vld [vmem:[%s4476 + $0x24] sm:$0xf]
    %v4487 = vld [vmem:[%s4476 + $0x28] sm:$0xf]
    %v4488 = vld [vmem:[%s4476 + $0x2c] sm:$0xf]
    %v4489 = vld [vmem:[%s4476 + $0x30] sm:$0xf]
    %v4490 = vld [vmem:[%s4476 + $0x34] sm:$0xf]
    %v4491 = vld [vmem:[%s4476 + $0x38] sm:$0xf]
    %v4492 = vld [vmem:[%s4476 + $0x3c] sm:$0xf]
    %v4509 = vunpack.c.l.b16 %v4477
    %v4510 = vunpack.c.l.b16 %v4478
    %v4511 = vunpack.c.l.b16 %v4479
    %v4512 = vunpack.c.l.b16 %v4480
    %v4513 = vunpack.c.l.b16 %v4481
    %v4514 = vunpack.c.l.b16 %v4482
    %v4515 = vunpack.c.l.b16 %v4483
    %v4516 = vunpack.c.l.b16 %v4484
    %v4517 = vunpack.c.l.b16 %v4485
    %v4518 = vunpack.c.l.b16 %v4486
    %v4519 = vunpack.c.l.b16 %v4487
    %v4520 = vunpack.c.l.b16 %v4488
    %v4521 = vunpack.c.l.b16 %v4489
    %v4522 = vunpack.c.l.b16 %v4490
    %v4523 = vunpack.c.l.b16 %v4491
    %v4524 = vunpack.c.l.b16 %v4492
    %v4525 = vpack.c.b16 %v4510, %v4509
    %v4526 = vpack.c.b16 %v4512, %v4511
    %v4527 = vpack.c.b16 %v4514, %v4513
    %v4528 = vpack.c.b16 %v4516, %v4515
    %v4529 = vpack.c.b16 %v4518, %v4517
    %v4530 = vpack.c.b16 %v4520, %v4519
    %v4531 = vpack.c.b16 %v4522, %v4521
    %v4532 = vpack.c.b16 %v4524, %v4523
    %4541 = vmatprep.subr.bf16.mxu0 0
    %4542 = vmatpush1.bf16.msra.mxu0 %v4525
    %4543 = vmatprep.subr.bf16.mxu0 0
    %4544 = vmatpush1.bf16.msra.mxu0 %v4526
    %4545 = vmatprep.subr.bf16.mxu0 0
    %4546 = vmatpush1.bf16.msra.mxu0 %v4527
    %4547 = vmatprep.subr.bf16.mxu0 0
    %4548 = vmatpush1.bf16.msra.mxu0 %v4528
    %4549 = vmatprep.subr.bf16.mxu0 0
    %4550 = vmatpush1.bf16.msra.mxu0 %v4529
    %4551 = vmatprep.subr.bf16.mxu0 0
    %4552 = vmatpush1.bf16.msra.mxu0 %v4530
    %4553 = vmatprep.subr.bf16.mxu0 0
    %4554 = vmatpush1.bf16.msra.mxu0 %v4531
    %4555 = vmatprep.subr.bf16.mxu0 0
    %4556 = vmatpush1.bf16.msra.mxu0 %v4532
    %4557 = vmatprep.subr.bf16.mxu0 0
    %4558 = vmatpush1.bf16.msra.mxu0 0
    %4559 = vmatprep.subr.bf16.mxu0 0
    %4560 = vmatpush1.bf16.msra.mxu0 0
    %4561 = vmatprep.subr.bf16.mxu0 0
    %4562 = vmatpush1.bf16.msra.mxu0 0
    %4563 = vmatprep.subr.bf16.mxu0 0
    %4564 = vmatpush1.bf16.msra.mxu0 0
    %4565 = vmatprep.subr.bf16.mxu0 0
    %4566 = vmatpush1.bf16.msra.mxu0 0
    %4567 = vmatprep.subr.bf16.mxu0 0
    %4568 = vmatpush1.bf16.msra.mxu0 0
    %4569 = vmatprep.subr.bf16.mxu0 0
    %4570 = vmatpush1.bf16.msra.mxu0 0
    %4571 = vmatprep.subr.bf16.mxu0 0
    %4572 = vmatpush1.bf16.msra.mxu0 0
    %4573 = vmatprep.mubr.bf16.mxu0 0
    %4574 = vmatmul.mubr.bf16.gmra.mrb[0].mxu0 %v4462
    %v4575 = vpop.f32.mrb[0].mxu0
    %v4576 = vadd.f32 0.0, %v4575
    %v4577 = vpop.f32.mrb[0].mxu0
    %v4578 = vpop.f32.mrb[0].mxu0
    %v4579 = vadd.f32 0.0, %v4578
    %v4580 = vpop.f32.mrb[0].mxu0
    %4581 = vmatprep.mubr.bf16.mxu0 0
    %4582 = vmatmul.mubr.bf16.gmra.mrb[0].mxu0 %v4463
    %v4583 = vpop.f32.mrb[0].mxu0
    %v4584 = vadd.f32 0.0, %v4583
    %v4585 = vpop.f32.mrb[0].mxu0
    %v4586 = vpop.f32.mrb[0].mxu0
    %v4587 = vadd.f32 0.0, %v4586
    %v4588 = vpop.f32.mrb[0].mxu0
    %4589 = vmatprep.mubr.bf16.mxu0 0
    %4590 = vmatmul.mubr.bf16.gmra.mrb[0].mxu0 %v4464
    %v4591 = vpop.f32.mrb[0].mxu0
    %v4592 = vadd.f32 0.0, %v4591
    %v4593 = vpop.f32.mrb[0].mxu0
    %v4594 = vpop.f32.mrb[0].mxu0
    %v4595 = vadd.f32 0.0, %v4594
    %v4596 = vpop.f32.mrb[0].mxu0
    %4597 = vmatprep.mubr.bf16.mxu0 0
    %4598 = vmatmul.mubr.bf16.gmra.mrb[0].mxu0 %v4465
    %v4599 = vpop.f32.mrb[0].mxu0
    %v4600 = vadd.f32 0.0, %v4599
    %v4601 = vpop.f32.mrb[0].mxu0
    %v4602 = vpop.f32.mrb[0].mxu0
    %v4603 = vadd.f32 0.0, %v4602
    %v4604 = vpop.f32.mrb[0].mxu0
    %4605 = vmatprep.mubr.bf16.mxu0 0
    %4606 = vmatmul.mubr.bf16.gmra.mrb[0].mxu0 %v4466
    %v4607 = vpop.f32.mrb[0].mxu0
    %v4608 = vadd.f32 0.0, %v4607
    %v4609 = vpop.f32.mrb[0].mxu0
    %v4610 = vpop.f32.mrb[0].mxu0
    %v4611 = vadd.f32 0.0, %v4610
    %v4612 = vpop.f32.mrb[0].mxu0
    %4613 = vmatprep.mubr.bf16.mxu0 0
    %4614 = vmatmul.mubr.bf16.gmra.mrb[0].mxu0 %v4467
    %v4615 = vpop.f32.mrb[0].mxu0
    %v4616 = vadd.f32 0.0, %v4615
    %v4617 = vpop.f32.mrb[0].mxu0
    %v4618 = vpop.f32.mrb[0].mxu0
    %v4619 = vadd.f32 0.0, %v4618
    %v4620 = vpop.f32.mrb[0].mxu0
    %4621 = vmatprep.mubr.bf16.mxu0 0
    %4622 = vmatmul.mubr.bf16.gmra.mrb[0].mxu0 %v4468
    %v4623 = vpop.f32.mrb[0].mxu0
    %v4624 = vadd.f32 0.0, %v4623
    %v4625 = vpop.f32.mrb[0].mxu0
    %v4626 = vpop.f32.mrb[0].mxu0
    %v4627 = vadd.f32 0.0, %v4626
    %v4628 = vpop.f32.mrb[0].mxu0
    %4629 = vmatprep.mubr.bf16.mxu0 0
    %4630 = vmatmul.mubr.bf16.gmra.mrb[0].mxu0 %v4469
    %v4631 = vpop.f32.mrb[0].mxu0
    %v4632 = vadd.f32 0.0, %v4631
    %v4633 = vpop.f32.mrb[0].mxu0
    %v4634 = vpop.f32.mrb[0].mxu0
    %v4635 = vadd.f32 0.0, %v4634
    %v4636 = vpop.f32.mrb[0].mxu0
    %4637 = vmatprep.mubr.bf16.mxu0 0
    %4638 = vmatmul.mubr.bf16.gmra.mrb[0].mxu0 %v4470
    %v4639 = vpop.f32.mrb[0].mxu0
    %v4640 = vadd.f32 0.0, %v4639
    %v4641 = vpop.f32.mrb[0].mxu0
    %v4642 = vpop.f32.mrb[0].mxu0
    %v4643 = vadd.f32 0.0, %v4642
    %v4644 = vpop.f32.mrb[0].mxu0
    %4645 = vmatprep.mubr.bf16.mxu0 0
    %4646 = vmatmul.mubr.bf16.gmra.mrb[0].mxu0 %v4471
    %v4647 = vpop.f32.mrb[0].mxu0
    %v4648 = vadd.f32 0.0, %v4647
    %v4649 = vpop.f32.mrb[0].mxu0
    %v4650 = vpop.f32.mrb[0].mxu0
    %v4651 = vadd.f32 0.0, %v4650
    %v4652 = vpop.f32.mrb[0].mxu0
    %4653 = vmatprep.mubr.bf16.mxu0 0
    %4654 = vmatmul.mubr.bf16.gmra.mrb[0].mxu0 %v4472
    %v4655 = vpop.f32.mrb[0].mxu0
    %v4656 = vadd.f32 0.0, %v4655
    %v4657 = vpop.f32.mrb[0].mxu0
    %v4658 = vpop.f32.mrb[0].mxu0
    %v4659 = vadd.f32 0.0, %v4658
    %v4660 = vpop.f32.mrb[0].mxu0
    %4661 = vmatprep.mubr.bf16.mxu0 0
    %4662 = vmatmul.mubr.bf16.gmra.mrb[0].mxu0 %v4473
    %v4663 = vpop.f32.mrb[0].mxu0
    %v4664 = vadd.f32 0.0, %v4663
    %v4665 = vpop.f32.mrb[0].mxu0
    %v4666 = vpop.f32.mrb[0].mxu0
    %v4667 = vadd.f32 0.0, %v4666
    %v4668 = vpop.f32.mrb[0].mxu0
    %4669 = vmatprep.mubr.bf16.mxu0 0
    %4670 = vmatmul.mubr.bf16.gmra.mrb[0].mxu0 %v4474
    %v4671 = vpop.f32.mrb[0].mxu0
    %v4672 = vadd.f32 0.0, %v4671
    %v4673 = vpop.f32.mrb[0].mxu0
    %v4674 = vpop.f32.mrb[0].mxu0
    %v4675 = vadd.f32 0.0, %v4674
    %v4676 = vpop.f32.mrb[0].mxu0
    %4677 = vmatprep.mubr.bf16.mxu0 0
    %4678 = vmatmul.mubr.bf16.gmra.mrb[0].mxu0 %v4475
    %v4679 = vpop.f32.mrb[0].mxu0
    %v4680 = vadd.f32 0.0, %v4679
    %v4681 = vpop.f32.mrb[0].mxu0
    %v4682 = vpop.f32.mrb[0].mxu0
    %v4683 = vadd.f32 0.0, %v4682
    %v4684 = vpop.f32.mrb[0].mxu0
    %4685 = vdwg.mxu0
    %v4686 = vadd.f32 %v4406, %v4576
    %v4687 = vadd.f32 %v4407, %v4579
    %v4688 = vadd.f32 %v4408, %v4584
    %v4689 = vadd.f32 %v4409, %v4587
    %v4690 = vadd.f32 %v4410, %v4592
    %v4691 = vadd.f32 %v4411, %v4595
    %v4692 = vadd.f32 %v4412, %v4600
    %v4693 = vadd.f32 %v4413, %v4603
    %v4694 = vadd.f32 %v4414, %v4608
    %v4695 = vadd.f32 %v4415, %v4611
    %v4696 = vadd.f32 %v4416, %v4616
    %v4697 = vadd.f32 %v4417, %v4619
    %v4698 = vadd.f32 %v4418, %v4624
    %v4699 = vadd.f32 %v4419, %v4627
    %v4700 = vadd.f32 %v4420, %v4632
    %v4701 = vadd.f32 %v4421, %v4635
    %v4702 = vadd.f32 %v4422, %v4640
    %v4703 = vadd.f32 %v4423, %v4643
    %v4704 = vadd.f32 %v4424, %v4648
    %v4705 = vadd.f32 %v4425, %v4651
    %v4706 = vadd.f32 %v4426, %v4656
    %v4707 = vadd.f32 %v4427, %v4659
    %v4708 = vadd.f32 %v4428, %v4664
    %v4709 = vadd.f32 %v4429, %v4667
    %v4710 = vadd.f32 %v4430, %v4672
    %v4711 = vadd.f32 %v4431, %v4675
    %v4712 = vadd.f32 %v4432, %v4680
    %v4713 = vadd.f32 %v4433, %v4683
    %v4714 = vld [vmem:[#allocation2 + $0x11] sm:$0xff]
    %v4715 = vld [vmem:[#allocation2 + $0x19] sm:$0xff]
    %v4716 = vld [vmem:[#allocation2 + $0x21] sm:$0xff]
    %v4717 = vld [vmem:[#allocation2 + $0x29] sm:$0xff]
    %v4718 = vld [vmem:[#allocation2 + $0x31] sm:$0xff]
    %v4719 = vld [vmem:[#allocation2 + $0x39] sm:$0xff]
    %v4720 = vld [vmem:[#allocation2 + $0x41] sm:$0xff]
    %v4721 = vld [vmem:[#allocation2 + $0x49] sm:$0xff]
    %v4722 = vld [vmem:[#allocation2 + $0x51] sm:$0xff]
    %v4723 = vld [vmem:[#allocation2 + $0x59] sm:$0xff]
    %v4724 = vld [vmem:[#allocation2 + $0x61] sm:$0xff]
    %v4725 = vld [vmem:[#allocation2 + $0x69] sm:$0xff]
    %v4726 = vld [vmem:[#allocation2 + $0x71] sm:$0xff]
    %v4727 = vld [vmem:[#allocation2 + $0x79] sm:$0xff]
    %v4728 = vld [vmem:[#allocation2 + $0x81] sm:$0xff]
    %v4729 = vld [vmem:[#allocation2 + $0x89] sm:$0xff]
    %v4730 = vld [vmem:[#allocation2 + $0x91] sm:$0xff]
    %v4731 = vld [vmem:[#allocation2 + $0x99] sm:$0xff]
    %v4732 = vld [vmem:[#allocation2 + $0xa1] sm:$0xff]
    %v4733 = vld [vmem:[#allocation2 + $0xa9] sm:$0xff]
    %v4734 = vld [vmem:[#allocation2 + $0xb1] sm:$0xff]
    %v4735 = vld [vmem:[#allocation2 + $0xb9] sm:$0xff]
    %v4736 = vld [vmem:[#allocation2 + $0xc1] sm:$0xff]
    %v4737 = vld [vmem:[#allocation2 + $0xc9] sm:$0xff]
    %v4738 = vld [vmem:[#allocation2 + $0xd1] sm:$0xff]
    %v4739 = vld [vmem:[#allocation2 + $0xd9] sm:$0xff]
    %v4740 = vld [vmem:[#allocation2 + $0xe1] sm:$0xff]
    %v4741 = vld [vmem:[#allocation2 + $0xe9] sm:$0xff]
    %v4742 = vpack.c.bf16 %v4715, %v4714
    %v4743 = vpack.c.bf16 %v4717, %v4716
    %v4744 = vpack.c.bf16 %v4719, %v4718
    %v4745 = vpack.c.bf16 %v4721, %v4720
    %v4746 = vpack.c.bf16 %v4723, %v4722
    %v4747 = vpack.c.bf16 %v4725, %v4724
    %v4748 = vpack.c.bf16 %v4727, %v4726
    %v4749 = vpack.c.bf16 %v4729, %v4728
    %v4750 = vpack.c.bf16 %v4731, %v4730
    %v4751 = vpack.c.bf16 %v4733, %v4732
    %v4752 = vpack.c.bf16 %v4735, %v4734
    %v4753 = vpack.c.bf16 %v4737, %v4736
    %v4754 = vpack.c.bf16 %v4739, %v4738
    %v4755 = vpack.c.bf16 %v4741, %v4740
    %s4756 = scalar_lea.vmem %s3, 640
    %v4757 = vld [vmem:[%s4756] sm:$0xf]
    %v4758 = vld [vmem:[%s4756 + $0x4] sm:$0xf]
    %v4759 = vld [vmem:[%s4756 + $0x8] sm:$0xf]
    %v4760 = vld [vmem:[%s4756 + $0xc] sm:$0xf]
    %v4761 = vld [vmem:[%s4756 + $0x10] sm:$0xf]
    %v4762 = vld [vmem:[%s4756 + $0x14] sm:$0xf]
    %v4763 = vld [vmem:[%s4756 + $0x18] sm:$0xf]
    %v4764 = vld [vmem:[%s4756 + $0x1c] sm:$0xf]
    %v4765 = vld [vmem:[%s4756 + $0x20] sm:$0xf]
    %v4766 = vld [vmem:[%s4756 + $0x24] sm:$0xf]
    %v4767 = vld [vmem:[%s4756 + $0x28] sm:$0xf]
    %v4768 = vld [vmem:[%s4756 + $0x2c] sm:$0xf]
    %v4769 = vld [vmem:[%s4756 + $0x30] sm:$0xf]
    %v4770 = vld [vmem:[%s4756 + $0x34] sm:$0xf]
    %v4771 = vld [vmem:[%s4756 + $0x38] sm:$0xf]
    %v4772 = vld [vmem:[%s4756 + $0x3c] sm:$0xf]
    %v4789 = vunpack.c.l.b16 %v4757
    %v4790 = vunpack.c.l.b16 %v4758
    %v4791 = vunpack.c.l.b16 %v4759
    %v4792 = vunpack.c.l.b16 %v4760
    %v4793 = vunpack.c.l.b16 %v4761
    %v4794 = vunpack.c.l.b16 %v4762
    %v4795 = vunpack.c.l.b16 %v4763
    %v4796 = vunpack.c.l.b16 %v4764
    %v4797 = vunpack.c.l.b16 %v4765
    %v4798 = vunpack.c.l.b16 %v4766
    %v4799 = vunpack.c.l.b16 %v4767
    %v4800 = vunpack.c.l.b16 %v4768
    %v4801 = vunpack.c.l.b16 %v4769
    %v4802 = vunpack.c.l.b16 %v4770
    %v4803 = vunpack.c.l.b16 %v4771
    %v4804 = vunpack.c.l.b16 %v4772
    %v4805 = vpack.c.b16 %v4790, %v4789
    %v4806 = vpack.c.b16 %v4792, %v4791
    %v4807 = vpack.c.b16 %v4794, %v4793
    %v4808 = vpack.c.b16 %v4796, %v4795
    %v4809 = vpack.c.b16 %v4798, %v4797
    %v4810 = vpack.c.b16 %v4800, %v4799
    %v4811 = vpack.c.b16 %v4802, %v4801
    %v4812 = vpack.c.b16 %v4804, %v4803
    %4821 = vmatprep.subr.bf16.mxu0 0
    %4822 = vmatpush1.bf16.msra.mxu0 %v4805
    %4823 = vmatprep.subr.bf16.mxu0 0
    %4824 = vmatpush1.bf16.msra.mxu0 %v4806
    %4825 = vmatprep.subr.bf16.mxu0 0
    %4826 = vmatpush1.bf16.msra.mxu0 %v4807
    %4827 = vmatprep.subr.bf16.mxu0 0
    %4828 = vmatpush1.bf16.msra.mxu0 %v4808
    %4829 = vmatprep.subr.bf16.mxu0 0
    %4830 = vmatpush1.bf16.msra.mxu0 %v4809
    %4831 = vmatprep.subr.bf16.mxu0 0
    %4832 = vmatpush1.bf16.msra.mxu0 %v4810
    %4833 = vmatprep.subr.bf16.mxu0 0
    %4834 = vmatpush1.bf16.msra.mxu0 %v4811
    %4835 = vmatprep.subr.bf16.mxu0 0
    %4836 = vmatpush1.bf16.msra.mxu0 %v4812
    %4837 = vmatprep.subr.bf16.mxu0 0
    %4838 = vmatpush1.bf16.msra.mxu0 0
    %4839 = vmatprep.subr.bf16.mxu0 0
    %4840 = vmatpush1.bf16.msra.mxu0 0
    %4841 = vmatprep.subr.bf16.mxu0 0
    %4842 = vmatpush1.bf16.msra.mxu0 0
    %4843 = vmatprep.subr.bf16.mxu0 0
    %4844 = vmatpush1.bf16.msra.mxu0 0
    %4845 = vmatprep.subr.bf16.mxu0 0
    %4846 = vmatpush1.bf16.msra.mxu0 0
    %4847 = vmatprep.subr.bf16.mxu0 0
    %4848 = vmatpush1.bf16.msra.mxu0 0
    %4849 = vmatprep.subr.bf16.mxu0 0
    %4850 = vmatpush1.bf16.msra.mxu0 0
    %4851 = vmatprep.subr.bf16.mxu0 0
    %4852 = vmatpush1.bf16.msra.mxu0 0
    %4853 = vmatprep.mubr.bf16.mxu0 0
    %4854 = vmatmul.mubr.bf16.gmra.mrb[0].mxu0 %v4742
    %v4855 = vpop.f32.mrb[0].mxu0
    %v4856 = vadd.f32 0.0, %v4855
    %v4857 = vpop.f32.mrb[0].mxu0
    %v4858 = vpop.f32.mrb[0].mxu0
    %v4859 = vadd.f32 0.0, %v4858
    %v4860 = vpop.f32.mrb[0].mxu0
    %4861 = vmatprep.mubr.bf16.mxu0 0
    %4862 = vmatmul.mubr.bf16.gmra.mrb[0].mxu0 %v4743
    %v4863 = vpop.f32.mrb[0].mxu0
    %v4864 = vadd.f32 0.0, %v4863
    %v4865 = vpop.f32.mrb[0].mxu0
    %v4866 = vpop.f32.mrb[0].mxu0
    %v4867 = vadd.f32 0.0, %v4866
    %v4868 = vpop.f32.mrb[0].mxu0
    %4869 = vmatprep.mubr.bf16.mxu0 0
    %4870 = vmatmul.mubr.bf16.gmra.mrb[0].mxu0 %v4744
    %v4871 = vpop.f32.mrb[0].mxu0
    %v4872 = vadd.f32 0.0, %v4871
    %v4873 = vpop.f32.mrb[0].mxu0
    %v4874 = vpop.f32.mrb[0].mxu0
    %v4875 = vadd.f32 0.0, %v4874
    %v4876 = vpop.f32.mrb[0].mxu0
    %4877 = vmatprep.mubr.bf16.mxu0 0
    %4878 = vmatmul.mubr.bf16.gmra.mrb[0].mxu0 %v4745
    %v4879 = vpop.f32.mrb[0].mxu0
    %v4880 = vadd.f32 0.0, %v4879
    %v4881 = vpop.f32.mrb[0].mxu0
    %v4882 = vpop.f32.mrb[0].mxu0
    %v4883 = vadd.f32 0.0, %v4882
    %v4884 = vpop.f32.mrb[0].mxu0
    %4885 = vmatprep.mubr.bf16.mxu0 0
    %4886 = vmatmul.mubr.bf16.gmra.mrb[0].mxu0 %v4746
    %v4887 = vpop.f32.mrb[0].mxu0
    %v4888 = vadd.f32 0.0, %v4887
    %v4889 = vpop.f32.mrb[0].mxu0
    %v4890 = vpop.f32.mrb[0].mxu0
    %v4891 = vadd.f32 0.0, %v4890
    %v4892 = vpop.f32.mrb[0].mxu0
    %4893 = vmatprep.mubr.bf16.mxu0 0
    %4894 = vmatmul.mubr.bf16.gmra.mrb[0].mxu0 %v4747
    %v4895 = vpop.f32.mrb[0].mxu0
    %v4896 = vadd.f32 0.0, %v4895
    %v4897 = vpop.f32.mrb[0].mxu0
    %v4898 = vpop.f32.mrb[0].mxu0
    %v4899 = vadd.f32 0.0, %v4898
    %v4900 = vpop.f32.mrb[0].mxu0
    %4901 = vmatprep.mubr.bf16.mxu0 0
    %4902 = vmatmul.mubr.bf16.gmra.mrb[0].mxu0 %v4748
    %v4903 = vpop.f32.mrb[0].mxu0
    %v4904 = vadd.f32 0.0, %v4903
    %v4905 = vpop.f32.mrb[0].mxu0
    %v4906 = vpop.f32.mrb[0].mxu0
    %v4907 = vadd.f32 0.0, %v4906
    %v4908 = vpop.f32.mrb[0].mxu0
    %4909 = vmatprep.mubr.bf16.mxu0 0
    %4910 = vmatmul.mubr.bf16.gmra.mrb[0].mxu0 %v4749
    %v4911 = vpop.f32.mrb[0].mxu0
    %v4912 = vadd.f32 0.0, %v4911
    %v4913 = vpop.f32.mrb[0].mxu0
    %v4914 = vpop.f32.mrb[0].mxu0
    %v4915 = vadd.f32 0.0, %v4914
    %v4916 = vpop.f32.mrb[0].mxu0
    %4917 = vmatprep.mubr.bf16.mxu0 0
    %4918 = vmatmul.mubr.bf16.gmra.mrb[0].mxu0 %v4750
    %v4919 = vpop.f32.mrb[0].mxu0
    %v4920 = vadd.f32 0.0, %v4919
    %v4921 = vpop.f32.mrb[0].mxu0
    %v4922 = vpop.f32.mrb[0].mxu0
    %v4923 = vadd.f32 0.0, %v4922
    %v4924 = vpop.f32.mrb[0].mxu0
    %4925 = vmatprep.mubr.bf16.mxu0 0
    %4926 = vmatmul.mubr.bf16.gmra.mrb[0].mxu0 %v4751
    %v4927 = vpop.f32.mrb[0].mxu0
    %v4928 = vadd.f32 0.0, %v4927
    %v4929 = vpop.f32.mrb[0].mxu0
    %v4930 = vpop.f32.mrb[0].mxu0
    %v4931 = vadd.f32 0.0, %v4930
    %v4932 = vpop.f32.mrb[0].mxu0
    %4933 = vmatprep.mubr.bf16.mxu0 0
    %4934 = vmatmul.mubr.bf16.gmra.mrb[0].mxu0 %v4752
    %v4935 = vpop.f32.mrb[0].mxu0
    %v4936 = vadd.f32 0.0, %v4935
    %v4937 = vpop.f32.mrb[0].mxu0
    %v4938 = vpop.f32.mrb[0].mxu0
    %v4939 = vadd.f32 0.0, %v4938
    %v4940 = vpop.f32.mrb[0].mxu0
    %4941 = vmatprep.mubr.bf16.mxu0 0
    %4942 = vmatmul.mubr.bf16.gmra.mrb[0].mxu0 %v4753
    %v4943 = vpop.f32.mrb[0].mxu0
    %v4944 = vadd.f32 0.0, %v4943
    %v4945 = vpop.f32.mrb[0].mxu0
    %v4946 = vpop.f32.mrb[0].mxu0
    %v4947 = vadd.f32 0.0, %v4946
    %v4948 = vpop.f32.mrb[0].mxu0
    %4949 = vmatprep.mubr.bf16.mxu0 0
    %4950 = vmatmul.mubr.bf16.gmra.mrb[0].mxu0 %v4754
    %v4951 = vpop.f32.mrb[0].mxu0
    %v4952 = vadd.f32 0.0, %v4951
    %v4953 = vpop.f32.mrb[0].mxu0
    %v4954 = vpop.f32.mrb[0].mxu0
    %v4955 = vadd.f32 0.0, %v4954
    %v4956 = vpop.f32.mrb[0].mxu0
    %4957 = vmatprep.mubr.bf16.mxu0 0
    %4958 = vmatmul.mubr.bf16.gmra.mrb[0].mxu0 %v4755
    %v4959 = vpop.f32.mrb[0].mxu0
    %v4960 = vadd.f32 0.0, %v4959
    %v4961 = vpop.f32.mrb[0].mxu0
    %v4962 = vpop.f32.mrb[0].mxu0
    %v4963 = vadd.f32 0.0, %v4962
    %v4964 = vpop.f32.mrb[0].mxu0
    %4965 = vdwg.mxu0
    %v4966 = vadd.f32 %v4686, %v4856
    %v4967 = vadd.f32 %v4687, %v4859
    %v4968 = vadd.f32 %v4688, %v4864
    %v4969 = vadd.f32 %v4689, %v4867
    %v4970 = vadd.f32 %v4690, %v4872
    %v4971 = vadd.f32 %v4691, %v4875
    %v4972 = vadd.f32 %v4692, %v4880
    %v4973 = vadd.f32 %v4693, %v4883
    %v4974 = vadd.f32 %v4694, %v4888
    %v4975 = vadd.f32 %v4695, %v4891
    %v4976 = vadd.f32 %v4696, %v4896
    %v4977 = vadd.f32 %v4697, %v4899
    %v4978 = vadd.f32 %v4698, %v4904
    %v4979 = vadd.f32 %v4699, %v4907
    %v4980 = vadd.f32 %v4700, %v4912
    %v4981 = vadd.f32 %v4701, %v4915
    %v4982 = vadd.f32 %v4702, %v4920
    %v4983 = vadd.f32 %v4703, %v4923
    %v4984 = vadd.f32 %v4704, %v4928
    %v4985 = vadd.f32 %v4705, %v4931
    %v4986 = vadd.f32 %v4706, %v4936
    %v4987 = vadd.f32 %v4707, %v4939
    %v4988 = vadd.f32 %v4708, %v4944
    %v4989 = vadd.f32 %v4709, %v4947
    %v4990 = vadd.f32 %v4710, %v4952
    %v4991 = vadd.f32 %v4711, %v4955
    %v4992 = vadd.f32 %v4712, %v4960
    %v4993 = vadd.f32 %v4713, %v4963
    %v4994 = vld [vmem:[#allocation2 + $0x111] sm:$0xff]
    %v4995 = vld [vmem:[#allocation2 + $0x119] sm:$0xff]
    %v4996 = vld [vmem:[#allocation2 + $0x121] sm:$0xff]
    %v4997 = vld [vmem:[#allocation2 + $0x129] sm:$0xff]
    %v4998 = vld [vmem:[#allocation2 + $0x131] sm:$0xff]
    %v4999 = vld [vmem:[#allocation2 + $0x139] sm:$0xff]
    %v5000 = vld [vmem:[#allocation2 + $0x141] sm:$0xff]
    %v5001 = vld [vmem:[#allocation2 + $0x149] sm:$0xff]
    %v5002 = vld [vmem:[#allocation2 + $0x151] sm:$0xff]
    %v5003 = vld [vmem:[#allocation2 + $0x159] sm:$0xff]
    %v5004 = vld [vmem:[#allocation2 + $0x161] sm:$0xff]
    %v5005 = vld [vmem:[#allocation2 + $0x169] sm:$0xff]
    %v5006 = vld [vmem:[#allocation2 + $0x171] sm:$0xff]
    %v5007 = vld [vmem:[#allocation2 + $0x179] sm:$0xff]
    %v5008 = vld [vmem:[#allocation2 + $0x181] sm:$0xff]
    %v5009 = vld [vmem:[#allocation2 + $0x189] sm:$0xff]
    %v5010 = vld [vmem:[#allocation2 + $0x191] sm:$0xff]
    %v5011 = vld [vmem:[#allocation2 + $0x199] sm:$0xff]
    %v5012 = vld [vmem:[#allocation2 + $0x1a1] sm:$0xff]
    %v5013 = vld [vmem:[#allocation2 + $0x1a9] sm:$0xff]
    %v5014 = vld [vmem:[#allocation2 + $0x1b1] sm:$0xff]
    %v5015 = vld [vmem:[#allocation2 + $0x1b9] sm:$0xff]
    %v5016 = vld [vmem:[#allocation2 + $0x1c1] sm:$0xff]
    %v5017 = vld [vmem:[#allocation2 + $0x1c9] sm:$0xff]
    %v5018 = vld [vmem:[#allocation2 + $0x1d1] sm:$0xff]
    %v5019 = vld [vmem:[#allocation2 + $0x1d9] sm:$0xff]
    %v5020 = vld [vmem:[#allocation2 + $0x1e1] sm:$0xff]
    %v5021 = vld [vmem:[#allocation2 + $0x1e9] sm:$0xff]
    %v5022 = vpack.c.bf16 %v4995, %v4994
    %v5023 = vpack.c.bf16 %v4997, %v4996
    %v5024 = vpack.c.bf16 %v4999, %v4998
    %v5025 = vpack.c.bf16 %v5001, %v5000
    %v5026 = vpack.c.bf16 %v5003, %v5002
    %v5027 = vpack.c.bf16 %v5005, %v5004
    %v5028 = vpack.c.bf16 %v5007, %v5006
    %v5029 = vpack.c.bf16 %v5009, %v5008
    %v5030 = vpack.c.bf16 %v5011, %v5010
    %v5031 = vpack.c.bf16 %v5013, %v5012
    %v5032 = vpack.c.bf16 %v5015, %v5014
    %v5033 = vpack.c.bf16 %v5017, %v5016
    %v5034 = vpack.c.bf16 %v5019, %v5018
    %v5035 = vpack.c.bf16 %v5021, %v5020
    %s5036 = scalar_lea.vmem %s3, 704
    %v5037 = vld [vmem:[%s5036] sm:$0xf]
    %v5038 = vld [vmem:[%s5036 + $0x4] sm:$0xf]
    %v5039 = vld [vmem:[%s5036 + $0x8] sm:$0xf]
    %v5040 = vld [vmem:[%s5036 + $0xc] sm:$0xf]
    %v5041 = vld [vmem:[%s5036 + $0x10] sm:$0xf]
    %v5042 = vld [vmem:[%s5036 + $0x14] sm:$0xf]
    %v5043 = vld [vmem:[%s5036 + $0x18] sm:$0xf]
    %v5044 = vld [vmem:[%s5036 + $0x1c] sm:$0xf]
    %v5045 = vld [vmem:[%s5036 + $0x20] sm:$0xf]
    %v5046 = vld [vmem:[%s5036 + $0x24] sm:$0xf]
    %v5047 = vld [vmem:[%s5036 + $0x28] sm:$0xf]
    %v5048 = vld [vmem:[%s5036 + $0x2c] sm:$0xf]
    %v5049 = vld [vmem:[%s5036 + $0x30] sm:$0xf]
    %v5050 = vld [vmem:[%s5036 + $0x34] sm:$0xf]
    %v5051 = vld [vmem:[%s5036 + $0x38] sm:$0xf]
    %v5052 = vld [vmem:[%s5036 + $0x3c] sm:$0xf]
    %v5069 = vunpack.c.l.b16 %v5037
    %v5070 = vunpack.c.l.b16 %v5038
    %v5071 = vunpack.c.l.b16 %v5039
    %v5072 = vunpack.c.l.b16 %v5040
    %v5073 = vunpack.c.l.b16 %v5041
    %v5074 = vunpack.c.l.b16 %v5042
    %v5075 = vunpack.c.l.b16 %v5043
    %v5076 = vunpack.c.l.b16 %v5044
    %v5077 = vunpack.c.l.b16 %v5045
    %v5078 = vunpack.c.l.b16 %v5046
    %v5079 = vunpack.c.l.b16 %v5047
    %v5080 = vunpack.c.l.b16 %v5048
    %v5081 = vunpack.c.l.b16 %v5049
    %v5082 = vunpack.c.l.b16 %v5050
    %v5083 = vunpack.c.l.b16 %v5051
    %v5084 = vunpack.c.l.b16 %v5052
    %v5085 = vpack.c.b16 %v5070, %v5069
    %v5086 = vpack.c.b16 %v5072, %v5071
    %v5087 = vpack.c.b16 %v5074, %v5073
    %v5088 = vpack.c.b16 %v5076, %v5075
    %v5089 = vpack.c.b16 %v5078, %v5077
    %v5090 = vpack.c.b16 %v5080, %v5079
    %v5091 = vpack.c.b16 %v5082, %v5081
    %v5092 = vpack.c.b16 %v5084, %v5083
    %5101 = vmatprep.subr.bf16.mxu0 0
    %5102 = vmatpush1.bf16.msra.mxu0 %v5085
    %5103 = vmatprep.subr.bf16.mxu0 0
    %5104 = vmatpush1.bf16.msra.mxu0 %v5086
    %5105 = vmatprep.subr.bf16.mxu0 0
    %5106 = vmatpush1.bf16.msra.mxu0 %v5087
    %5107 = vmatprep.subr.bf16.mxu0 0
    %5108 = vmatpush1.bf16.msra.mxu0 %v5088
    %5109 = vmatprep.subr.bf16.mxu0 0
    %5110 = vmatpush1.bf16.msra.mxu0 %v5089
    %5111 = vmatprep.subr.bf16.mxu0 0
    %5112 = vmatpush1.bf16.msra.mxu0 %v5090
    %5113 = vmatprep.subr.bf16.mxu0 0
    %5114 = vmatpush1.bf16.msra.mxu0 %v5091
    %5115 = vmatprep.subr.bf16.mxu0 0
    %5116 = vmatpush1.bf16.msra.mxu0 %v5092
    %5117 = vmatprep.subr.bf16.mxu0 0
    %5118 = vmatpush1.bf16.msra.mxu0 0
    %5119 = vmatprep.subr.bf16.mxu0 0
    %5120 = vmatpush1.bf16.msra.mxu0 0
    %5121 = vmatprep.subr.bf16.mxu0 0
    %5122 = vmatpush1.bf16.msra.mxu0 0
    %5123 = vmatprep.subr.bf16.mxu0 0
    %5124 = vmatpush1.bf16.msra.mxu0 0
    %5125 = vmatprep.subr.bf16.mxu0 0
    %5126 = vmatpush1.bf16.msra.mxu0 0
    %5127 = vmatprep.subr.bf16.mxu0 0
    %5128 = vmatpush1.bf16.msra.mxu0 0
    %5129 = vmatprep.subr.bf16.mxu0 0
    %5130 = vmatpush1.bf16.msra.mxu0 0
    %5131 = vmatprep.subr.bf16.mxu0 0
    %5132 = vmatpush1.bf16.msra.mxu0 0
    %5133 = vmatprep.mubr.bf16.mxu0 0
    %5134 = vmatmul.mubr.bf16.gmra.mrb[0].mxu0 %v5022
    %v5135 = vpop.f32.mrb[0].mxu0
    %v5136 = vadd.f32 0.0, %v5135
    %v5137 = vpop.f32.mrb[0].mxu0
    %v5138 = vpop.f32.mrb[0].mxu0
    %v5139 = vadd.f32 0.0, %v5138
    %v5140 = vpop.f32.mrb[0].mxu0
    %5141 = vmatprep.mubr.bf16.mxu0 0
    %5142 = vmatmul.mubr.bf16.gmra.mrb[0].mxu0 %v5023
    %v5143 = vpop.f32.mrb[0].mxu0
    %v5144 = vadd.f32 0.0, %v5143
    %v5145 = vpop.f32.mrb[0].mxu0
    %v5146 = vpop.f32.mrb[0].mxu0
    %v5147 = vadd.f32 0.0, %v5146
    %v5148 = vpop.f32.mrb[0].mxu0
    %5149 = vmatprep.mubr.bf16.mxu0 0
    %5150 = vmatmul.mubr.bf16.gmra.mrb[0].mxu0 %v5024
    %v5151 = vpop.f32.mrb[0].mxu0
    %v5152 = vadd.f32 0.0, %v5151
    %v5153 = vpop.f32.mrb[0].mxu0
    %v5154 = vpop.f32.mrb[0].mxu0
    %v5155 = vadd.f32 0.0, %v5154
    %v5156 = vpop.f32.mrb[0].mxu0
    %5157 = vmatprep.mubr.bf16.mxu0 0
    %5158 = vmatmul.mubr.bf16.gmra.mrb[0].mxu0 %v5025
    %v5159 = vpop.f32.mrb[0].mxu0
    %v5160 = vadd.f32 0.0, %v5159
    %v5161 = vpop.f32.mrb[0].mxu0
    %v5162 = vpop.f32.mrb[0].mxu0
    %v5163 = vadd.f32 0.0, %v5162
    %v5164 = vpop.f32.mrb[0].mxu0
    %5165 = vmatprep.mubr.bf16.mxu0 0
    %5166 = vmatmul.mubr.bf16.gmra.mrb[0].mxu0 %v5026
    %v5167 = vpop.f32.mrb[0].mxu0
    %v5168 = vadd.f32 0.0, %v5167
    %v5169 = vpop.f32.mrb[0].mxu0
    %v5170 = vpop.f32.mrb[0].mxu0
    %v5171 = vadd.f32 0.0, %v5170
    %v5172 = vpop.f32.mrb[0].mxu0
    %5173 = vmatprep.mubr.bf16.mxu0 0
    %5174 = vmatmul.mubr.bf16.gmra.mrb[0].mxu0 %v5027
    %v5175 = vpop.f32.mrb[0].mxu0
    %v5176 = vadd.f32 0.0, %v5175
    %v5177 = vpop.f32.mrb[0].mxu0
    %v5178 = vpop.f32.mrb[0].mxu0
    %v5179 = vadd.f32 0.0, %v5178
    %v5180 = vpop.f32.mrb[0].mxu0
    %5181 = vmatprep.mubr.bf16.mxu0 0
    %5182 = vmatmul.mubr.bf16.gmra.mrb[0].mxu0 %v5028
    %v5183 = vpop.f32.mrb[0].mxu0
    %v5184 = vadd.f32 0.0, %v5183
    %v5185 = vpop.f32.mrb[0].mxu0
    %v5186 = vpop.f32.mrb[0].mxu0
    %v5187 = vadd.f32 0.0, %v5186
    %v5188 = vpop.f32.mrb[0].mxu0
    %5189 = vmatprep.mubr.bf16.mxu0 0
    %5190 = vmatmul.mubr.bf16.gmra.mrb[0].mxu0 %v5029
    %v5191 = vpop.f32.mrb[0].mxu0
    %v5192 = vadd.f32 0.0, %v5191
    %v5193 = vpop.f32.mrb[0].mxu0
    %v5194 = vpop.f32.mrb[0].mxu0
    %v5195 = vadd.f32 0.0, %v5194
    %v5196 = vpop.f32.mrb[0].mxu0
    %5197 = vmatprep.mubr.bf16.mxu0 0
    %5198 = vmatmul.mubr.bf16.gmra.mrb[0].mxu0 %v5030
    %v5199 = vpop.f32.mrb[0].mxu0
    %v5200 = vadd.f32 0.0, %v5199
    %v5201 = vpop.f32.mrb[0].mxu0
    %v5202 = vpop.f32.mrb[0].mxu0
    %v5203 = vadd.f32 0.0, %v5202
    %v5204 = vpop.f32.mrb[0].mxu0
    %5205 = vmatprep.mubr.bf16.mxu0 0
    %5206 = vmatmul.mubr.bf16.gmra.mrb[0].mxu0 %v5031
    %v5207 = vpop.f32.mrb[0].mxu0
    %v5208 = vadd.f32 0.0, %v5207
    %v5209 = vpop.f32.mrb[0].mxu0
    %v5210 = vpop.f32.mrb[0].mxu0
    %v5211 = vadd.f32 0.0, %v5210
    %v5212 = vpop.f32.mrb[0].mxu0
    %5213 = vmatprep.mubr.bf16.mxu0 0
    %5214 = vmatmul.mubr.bf16.gmra.mrb[0].mxu0 %v5032
    %v5215 = vpop.f32.mrb[0].mxu0
    %v5216 = vadd.f32 0.0, %v5215
    %v5217 = vpop.f32.mrb[0].mxu0
    %v5218 = vpop.f32.mrb[0].mxu0
    %v5219 = vadd.f32 0.0, %v5218
    %v5220 = vpop.f32.mrb[0].mxu0
    %5221 = vmatprep.mubr.bf16.mxu0 0
    %5222 = vmatmul.mubr.bf16.gmra.mrb[0].mxu0 %v5033
    %v5223 = vpop.f32.mrb[0].mxu0
    %v5224 = vadd.f32 0.0, %v5223
    %v5225 = vpop.f32.mrb[0].mxu0
    %v5226 = vpop.f32.mrb[0].mxu0
    %v5227 = vadd.f32 0.0, %v5226
    %v5228 = vpop.f32.mrb[0].mxu0
    %5229 = vmatprep.mubr.bf16.mxu0 0
    %5230 = vmatmul.mubr.bf16.gmra.mrb[0].mxu0 %v5034
    %v5231 = vpop.f32.mrb[0].mxu0
    %v5232 = vadd.f32 0.0, %v5231
    %v5233 = vpop.f32.mrb[0].mxu0
    %v5234 = vpop.f32.mrb[0].mxu0
    %v5235 = vadd.f32 0.0, %v5234
    %v5236 = vpop.f32.mrb[0].mxu0
    %5237 = vmatprep.mubr.bf16.mxu0 0
    %5238 = vmatmul.mubr.bf16.gmra.mrb[0].mxu0 %v5035
    %v5239 = vpop.f32.mrb[0].mxu0
    %v5240 = vadd.f32 0.0, %v5239
    %v5241 = vpop.f32.mrb[0].mxu0
    %v5242 = vpop.f32.mrb[0].mxu0
    %v5243 = vadd.f32 0.0, %v5242
    %v5244 = vpop.f32.mrb[0].mxu0
    %5245 = vdwg.mxu0
    %v5246 = vadd.f32 %v4966, %v5136
    %v5247 = vadd.f32 %v4967, %v5139
    %v5248 = vadd.f32 %v4968, %v5144
    %v5249 = vadd.f32 %v4969, %v5147
    %v5250 = vadd.f32 %v4970, %v5152
    %v5251 = vadd.f32 %v4971, %v5155
    %v5252 = vadd.f32 %v4972, %v5160
    %v5253 = vadd.f32 %v4973, %v5163
    %v5254 = vadd.f32 %v4974, %v5168
    %v5255 = vadd.f32 %v4975, %v5171
    %v5256 = vadd.f32 %v4976, %v5176
    %v5257 = vadd.f32 %v4977, %v5179
    %v5258 = vadd.f32 %v4978, %v5184
    %v5259 = vadd.f32 %v4979, %v5187
    %v5260 = vadd.f32 %v4980, %v5192
    %v5261 = vadd.f32 %v4981, %v5195
    %v5262 = vadd.f32 %v4982, %v5200
    %v5263 = vadd.f32 %v4983, %v5203
    %v5264 = vadd.f32 %v4984, %v5208
    %v5265 = vadd.f32 %v4985, %v5211
    %v5266 = vadd.f32 %v4986, %v5216
    %v5267 = vadd.f32 %v4987, %v5219
    %v5268 = vadd.f32 %v4988, %v5224
    %v5269 = vadd.f32 %v4989, %v5227
    %v5270 = vadd.f32 %v4990, %v5232
    %v5271 = vadd.f32 %v4991, %v5235
    %v5272 = vadd.f32 %v4992, %v5240
    %v5273 = vadd.f32 %v4993, %v5243
    %v5274 = vld [vmem:[#allocation2 + $0x210] sm:$0xff]
    %v5275 = vld [vmem:[#allocation2 + $0x218] sm:$0xff]
    %v5276 = vld [vmem:[#allocation2 + $0x220] sm:$0xff]
    %v5277 = vld [vmem:[#allocation2 + $0x228] sm:$0xff]
    %v5278 = vld [vmem:[#allocation2 + $0x230] sm:$0xff]
    %v5279 = vld [vmem:[#allocation2 + $0x238] sm:$0xff]
    %v5280 = vld [vmem:[#allocation2 + $0x240] sm:$0xff]
    %v5281 = vld [vmem:[#allocation2 + $0x248] sm:$0xff]
    %v5282 = vld [vmem:[#allocation2 + $0x250] sm:$0xff]
    %v5283 = vld [vmem:[#allocation2 + $0x258] sm:$0xff]
    %v5284 = vld [vmem:[#allocation2 + $0x260] sm:$0xff]
    %v5285 = vld [vmem:[#allocation2 + $0x268] sm:$0xff]
    %v5286 = vld [vmem:[#allocation2 + $0x270] sm:$0xff]
    %v5287 = vld [vmem:[#allocation2 + $0x278] sm:$0xff]
    %v5288 = vld [vmem:[#allocation2 + $0x280] sm:$0xff]
    %v5289 = vld [vmem:[#allocation2 + $0x288] sm:$0xff]
    %v5290 = vld [vmem:[#allocation2 + $0x290] sm:$0xff]
    %v5291 = vld [vmem:[#allocation2 + $0x298] sm:$0xff]
    %v5292 = vld [vmem:[#allocation2 + $0x2a0] sm:$0xff]
    %v5293 = vld [vmem:[#allocation2 + $0x2a8] sm:$0xff]
    %v5294 = vld [vmem:[#allocation2 + $0x2b0] sm:$0xff]
    %v5295 = vld [vmem:[#allocation2 + $0x2b8] sm:$0xff]
    %v5296 = vld [vmem:[#allocation2 + $0x2c0] sm:$0xff]
    %v5297 = vld [vmem:[#allocation2 + $0x2c8] sm:$0xff]
    %v5298 = vld [vmem:[#allocation2 + $0x2d0] sm:$0xff]
    %v5299 = vld [vmem:[#allocation2 + $0x2d8] sm:$0xff]
    %v5300 = vld [vmem:[#allocation2 + $0x2e0] sm:$0xff]
    %v5301 = vld [vmem:[#allocation2 + $0x2e8] sm:$0xff]
    %v5302 = vpack.c.bf16 %v5275, %v5274
    %v5303 = vpack.c.bf16 %v5277, %v5276
    %v5304 = vpack.c.bf16 %v5279, %v5278
    %v5305 = vpack.c.bf16 %v5281, %v5280
    %v5306 = vpack.c.bf16 %v5283, %v5282
    %v5307 = vpack.c.bf16 %v5285, %v5284
    %v5308 = vpack.c.bf16 %v5287, %v5286
    %v5309 = vpack.c.bf16 %v5289, %v5288
    %v5310 = vpack.c.bf16 %v5291, %v5290
    %v5311 = vpack.c.bf16 %v5293, %v5292
    %v5312 = vpack.c.bf16 %v5295, %v5294
    %v5313 = vpack.c.bf16 %v5297, %v5296
    %v5314 = vpack.c.bf16 %v5299, %v5298
    %v5315 = vpack.c.bf16 %v5301, %v5300
    %s5316 = scalar_lea.vmem %s3, 768
    %v5317 = vld [vmem:[%s5316] sm:$0xf]
    %v5318 = vld [vmem:[%s5316 + $0x4] sm:$0xf]
    %v5319 = vld [vmem:[%s5316 + $0x8] sm:$0xf]
    %v5320 = vld [vmem:[%s5316 + $0xc] sm:$0xf]
    %v5321 = vld [vmem:[%s5316 + $0x10] sm:$0xf]
    %v5322 = vld [vmem:[%s5316 + $0x14] sm:$0xf]
    %v5323 = vld [vmem:[%s5316 + $0x18] sm:$0xf]
    %v5324 = vld [vmem:[%s5316 + $0x1c] sm:$0xf]
    %v5325 = vld [vmem:[%s5316 + $0x20] sm:$0xf]
    %v5326 = vld [vmem:[%s5316 + $0x24] sm:$0xf]
    %v5327 = vld [vmem:[%s5316 + $0x28] sm:$0xf]
    %v5328 = vld [vmem:[%s5316 + $0x2c] sm:$0xf]
    %v5329 = vld [vmem:[%s5316 + $0x30] sm:$0xf]
    %v5330 = vld [vmem:[%s5316 + $0x34] sm:$0xf]
    %v5331 = vld [vmem:[%s5316 + $0x38] sm:$0xf]
    %v5332 = vld [vmem:[%s5316 + $0x3c] sm:$0xf]
    %v5349 = vunpack.c.l.b16 %v5317
    %v5350 = vunpack.c.l.b16 %v5318
    %v5351 = vunpack.c.l.b16 %v5319
    %v5352 = vunpack.c.l.b16 %v5320
    %v5353 = vunpack.c.l.b16 %v5321
    %v5354 = vunpack.c.l.b16 %v5322
    %v5355 = vunpack.c.l.b16 %v5323
    %v5356 = vunpack.c.l.b16 %v5324
    %v5357 = vunpack.c.l.b16 %v5325
    %v5358 = vunpack.c.l.b16 %v5326
    %v5359 = vunpack.c.l.b16 %v5327
    %v5360 = vunpack.c.l.b16 %v5328
    %v5361 = vunpack.c.l.b16 %v5329
    %v5362 = vunpack.c.l.b16 %v5330
    %v5363 = vunpack.c.l.b16 %v5331
    %v5364 = vunpack.c.l.b16 %v5332
    %v5365 = vpack.c.b16 %v5350, %v5349
    %v5366 = vpack.c.b16 %v5352, %v5351
    %v5367 = vpack.c.b16 %v5354, %v5353
    %v5368 = vpack.c.b16 %v5356, %v5355
    %v5369 = vpack.c.b16 %v5358, %v5357
    %v5370 = vpack.c.b16 %v5360, %v5359
    %v5371 = vpack.c.b16 %v5362, %v5361
    %v5372 = vpack.c.b16 %v5364, %v5363
    %5381 = vmatprep.subr.bf16.mxu0 0
    %5382 = vmatpush1.bf16.msra.mxu0 %v5365
    %5383 = vmatprep.subr.bf16.mxu0 0
    %5384 = vmatpush1.bf16.msra.mxu0 %v5366
    %5385 = vmatprep.subr.bf16.mxu0 0
    %5386 = vmatpush1.bf16.msra.mxu0 %v5367
    %5387 = vmatprep.subr.bf16.mxu0 0
    %5388 = vmatpush1.bf16.msra.mxu0 %v5368
    %5389 = vmatprep.subr.bf16.mxu0 0
    %5390 = vmatpush1.bf16.msra.mxu0 %v5369
    %5391 = vmatprep.subr.bf16.mxu0 0
    %5392 = vmatpush1.bf16.msra.mxu0 %v5370
    %5393 = vmatprep.subr.bf16.mxu0 0
    %5394 = vmatpush1.bf16.msra.mxu0 %v5371
    %5395 = vmatprep.subr.bf16.mxu0 0
    %5396 = vmatpush1.bf16.msra.mxu0 %v5372
    %5397 = vmatprep.subr.bf16.mxu0 0
    %5398 = vmatpush1.bf16.msra.mxu0 0
    %5399 = vmatprep.subr.bf16.mxu0 0
    %5400 = vmatpush1.bf16.msra.mxu0 0
    %5401 = vmatprep.subr.bf16.mxu0 0
    %5402 = vmatpush1.bf16.msra.mxu0 0
    %5403 = vmatprep.subr.bf16.mxu0 0
    %5404 = vmatpush1.bf16.msra.mxu0 0
    %5405 = vmatprep.subr.bf16.mxu0 0
    %5406 = vmatpush1.bf16.msra.mxu0 0
    %5407 = vmatprep.subr.bf16.mxu0 0
    %5408 = vmatpush1.bf16.msra.mxu0 0
    %5409 = vmatprep.subr.bf16.mxu0 0
    %5410 = vmatpush1.bf16.msra.mxu0 0
    %5411 = vmatprep.subr.bf16.mxu0 0
    %5412 = vmatpush1.bf16.msra.mxu0 0
    %5413 = vmatprep.mubr.bf16.mxu0 0
    %5414 = vmatmul.mubr.bf16.gmra.mrb[0].mxu0 %v5302
    %v5415 = vpop.f32.mrb[0].mxu0
    %v5416 = vadd.f32 0.0, %v5415
    %v5417 = vpop.f32.mrb[0].mxu0
    %v5418 = vpop.f32.mrb[0].mxu0
    %v5419 = vadd.f32 0.0, %v5418
    %v5420 = vpop.f32.mrb[0].mxu0
    %5421 = vmatprep.mubr.bf16.mxu0 0
    %5422 = vmatmul.mubr.bf16.gmra.mrb[0].mxu0 %v5303
    %v5423 = vpop.f32.mrb[0].mxu0
    %v5424 = vadd.f32 0.0, %v5423
    %v5425 = vpop.f32.mrb[0].mxu0
    %v5426 = vpop.f32.mrb[0].mxu0
    %v5427 = vadd.f32 0.0, %v5426
    %v5428 = vpop.f32.mrb[0].mxu0
    %5429 = vmatprep.mubr.bf16.mxu0 0
    %5430 = vmatmul.mubr.bf16.gmra.mrb[0].mxu0 %v5304
    %v5431 = vpop.f32.mrb[0].mxu0
    %v5432 = vadd.f32 0.0, %v5431
    %v5433 = vpop.f32.mrb[0].mxu0
    %v5434 = vpop.f32.mrb[0].mxu0
    %v5435 = vadd.f32 0.0, %v5434
    %v5436 = vpop.f32.mrb[0].mxu0
    %5437 = vmatprep.mubr.bf16.mxu0 0
    %5438 = vmatmul.mubr.bf16.gmra.mrb[0].mxu0 %v5305
    %v5439 = vpop.f32.mrb[0].mxu0
    %v5440 = vadd.f32 0.0, %v5439
    %v5441 = vpop.f32.mrb[0].mxu0
    %v5442 = vpop.f32.mrb[0].mxu0
    %v5443 = vadd.f32 0.0, %v5442
    %v5444 = vpop.f32.mrb[0].mxu0
    %5445 = vmatprep.mubr.bf16.mxu0 0
    %5446 = vmatmul.mubr.bf16.gmra.mrb[0].mxu0 %v5306
    %v5447 = vpop.f32.mrb[0].mxu0
    %v5448 = vadd.f32 0.0, %v5447
    %v5449 = vpop.f32.mrb[0].mxu0
    %v5450 = vpop.f32.mrb[0].mxu0
    %v5451 = vadd.f32 0.0, %v5450
    %v5452 = vpop.f32.mrb[0].mxu0
    %5453 = vmatprep.mubr.bf16.mxu0 0
    %5454 = vmatmul.mubr.bf16.gmra.mrb[0].mxu0 %v5307
    %v5455 = vpop.f32.mrb[0].mxu0
    %v5456 = vadd.f32 0.0, %v5455
    %v5457 = vpop.f32.mrb[0].mxu0
    %v5458 = vpop.f32.mrb[0].mxu0
    %v5459 = vadd.f32 0.0, %v5458
    %v5460 = vpop.f32.mrb[0].mxu0
    %5461 = vmatprep.mubr.bf16.mxu0 0
    %5462 = vmatmul.mubr.bf16.gmra.mrb[0].mxu0 %v5308
    %v5463 = vpop.f32.mrb[0].mxu0
    %v5464 = vadd.f32 0.0, %v5463
    %v5465 = vpop.f32.mrb[0].mxu0
    %v5466 = vpop.f32.mrb[0].mxu0
    %v5467 = vadd.f32 0.0, %v5466
    %v5468 = vpop.f32.mrb[0].mxu0
    %5469 = vmatprep.mubr.bf16.mxu0 0
    %5470 = vmatmul.mubr.bf16.gmra.mrb[0].mxu0 %v5309
    %v5471 = vpop.f32.mrb[0].mxu0
    %v5472 = vadd.f32 0.0, %v5471
    %v5473 = vpop.f32.mrb[0].mxu0
    %v5474 = vpop.f32.mrb[0].mxu0
    %v5475 = vadd.f32 0.0, %v5474
    %v5476 = vpop.f32.mrb[0].mxu0
    %5477 = vmatprep.mubr.bf16.mxu0 0
    %5478 = vmatmul.mubr.bf16.gmra.mrb[0].mxu0 %v5310
    %v5479 = vpop.f32.mrb[0].mxu0
    %v5480 = vadd.f32 0.0, %v5479
    %v5481 = vpop.f32.mrb[0].mxu0
    %v5482 = vpop.f32.mrb[0].mxu0
    %v5483 = vadd.f32 0.0, %v5482
    %v5484 = vpop.f32.mrb[0].mxu0
    %5485 = vmatprep.mubr.bf16.mxu0 0
    %5486 = vmatmul.mubr.bf16.gmra.mrb[0].mxu0 %v5311
    %v5487 = vpop.f32.mrb[0].mxu0
    %v5488 = vadd.f32 0.0, %v5487
    %v5489 = vpop.f32.mrb[0].mxu0
    %v5490 = vpop.f32.mrb[0].mxu0
    %v5491 = vadd.f32 0.0, %v5490
    %v5492 = vpop.f32.mrb[0].mxu0
    %5493 = vmatprep.mubr.bf16.mxu0 0
    %5494 = vmatmul.mubr.bf16.gmra.mrb[0].mxu0 %v5312
    %v5495 = vpop.f32.mrb[0].mxu0
    %v5496 = vadd.f32 0.0, %v5495
    %v5497 = vpop.f32.mrb[0].mxu0
    %v5498 = vpop.f32.mrb[0].mxu0
    %v5499 = vadd.f32 0.0, %v5498
    %v5500 = vpop.f32.mrb[0].mxu0
    %5501 = vmatprep.mubr.bf16.mxu0 0
    %5502 = vmatmul.mubr.bf16.gmra.mrb[0].mxu0 %v5313
    %v5503 = vpop.f32.mrb[0].mxu0
    %v5504 = vadd.f32 0.0, %v5503
    %v5505 = vpop.f32.mrb[0].mxu0
    %v5506 = vpop.f32.mrb[0].mxu0
    %v5507 = vadd.f32 0.0, %v5506
    %v5508 = vpop.f32.mrb[0].mxu0
    %5509 = vmatprep.mubr.bf16.mxu0 0
    %5510 = vmatmul.mubr.bf16.gmra.mrb[0].mxu0 %v5314
    %v5511 = vpop.f32.mrb[0].mxu0
    %v5512 = vadd.f32 0.0, %v5511
    %v5513 = vpop.f32.mrb[0].mxu0
    %v5514 = vpop.f32.mrb[0].mxu0
    %v5515 = vadd.f32 0.0, %v5514
    %v5516 = vpop.f32.mrb[0].mxu0
    %5517 = vmatprep.mubr.bf16.mxu0 0
    %5518 = vmatmul.mubr.bf16.gmra.mrb[0].mxu0 %v5315
    %v5519 = vpop.f32.mrb[0].mxu0
    %v5520 = vadd.f32 0.0, %v5519
    %v5521 = vpop.f32.mrb[0].mxu0
    %v5522 = vpop.f32.mrb[0].mxu0
    %v5523 = vadd.f32 0.0, %v5522
    %v5524 = vpop.f32.mrb[0].mxu0
    %5525 = vdwg.mxu0
    %v5526 = vadd.f32 %v5246, %v5416
    %v5527 = vadd.f32 %v5247, %v5419
    %v5528 = vadd.f32 %v5248, %v5424
    %v5529 = vadd.f32 %v5249, %v5427
    %v5530 = vadd.f32 %v5250, %v5432
    %v5531 = vadd.f32 %v5251, %v5435
    %v5532 = vadd.f32 %v5252, %v5440
    %v5533 = vadd.f32 %v5253, %v5443
    %v5534 = vadd.f32 %v5254, %v5448
    %v5535 = vadd.f32 %v5255, %v5451
    %v5536 = vadd.f32 %v5256, %v5456
    %v5537 = vadd.f32 %v5257, %v5459
    %v5538 = vadd.f32 %v5258, %v5464
    %v5539 = vadd.f32 %v5259, %v5467
    %v5540 = vadd.f32 %v5260, %v5472
    %v5541 = vadd.f32 %v5261, %v5475
    %v5542 = vadd.f32 %v5262, %v5480
    %v5543 = vadd.f32 %v5263, %v5483
    %v5544 = vadd.f32 %v5264, %v5488
    %v5545 = vadd.f32 %v5265, %v5491
    %v5546 = vadd.f32 %v5266, %v5496
    %v5547 = vadd.f32 %v5267, %v5499
    %v5548 = vadd.f32 %v5268, %v5504
    %v5549 = vadd.f32 %v5269, %v5507
    %v5550 = vadd.f32 %v5270, %v5512
    %v5551 = vadd.f32 %v5271, %v5515
    %v5552 = vadd.f32 %v5272, %v5520
    %v5553 = vadd.f32 %v5273, %v5523
    %v5554 = vld [vmem:[#allocation2 + $0x310] sm:$0xff]
    %v5555 = vld [vmem:[#allocation2 + $0x318] sm:$0xff]
    %v5556 = vld [vmem:[#allocation2 + $0x320] sm:$0xff]
    %v5557 = vld [vmem:[#allocation2 + $0x328] sm:$0xff]
    %v5558 = vld [vmem:[#allocation2 + $0x330] sm:$0xff]
    %v5559 = vld [vmem:[#allocation2 + $0x338] sm:$0xff]
    %v5560 = vld [vmem:[#allocation2 + $0x340] sm:$0xff]
    %v5561 = vld [vmem:[#allocation2 + $0x348] sm:$0xff]
    %v5562 = vld [vmem:[#allocation2 + $0x350] sm:$0xff]
    %v5563 = vld [vmem:[#allocation2 + $0x358] sm:$0xff]
    %v5564 = vld [vmem:[#allocation2 + $0x360] sm:$0xff]
    %v5565 = vld [vmem:[#allocation2 + $0x368] sm:$0xff]
    %v5566 = vld [vmem:[#allocation2 + $0x370] sm:$0xff]
    %v5567 = vld [vmem:[#allocation2 + $0x378] sm:$0xff]
    %v5568 = vld [vmem:[#allocation2 + $0x380] sm:$0xff]
    %v5569 = vld [vmem:[#allocation2 + $0x388] sm:$0xff]
    %v5570 = vld [vmem:[#allocation2 + $0x390] sm:$0xff]
    %v5571 = vld [vmem:[#allocation2 + $0x398] sm:$0xff]
    %v5572 = vld [vmem:[#allocation2 + $0x3a0] sm:$0xff]
    %v5573 = vld [vmem:[#allocation2 + $0x3a8] sm:$0xff]
    %v5574 = vld [vmem:[#allocation2 + $0x3b0] sm:$0xff]
    %v5575 = vld [vmem:[#allocation2 + $0x3b8] sm:$0xff]
    %v5576 = vld [vmem:[#allocation2 + $0x3c0] sm:$0xff]
    %v5577 = vld [vmem:[#allocation2 + $0x3c8] sm:$0xff]
    %v5578 = vld [vmem:[#allocation2 + $0x3d0] sm:$0xff]
    %v5579 = vld [vmem:[#allocation2 + $0x3d8] sm:$0xff]
    %v5580 = vld [vmem:[#allocation2 + $0x3e0] sm:$0xff]
    %v5581 = vld [vmem:[#allocation2 + $0x3e8] sm:$0xff]
    %v5582 = vpack.c.bf16 %v5555, %v5554
    %v5583 = vpack.c.bf16 %v5557, %v5556
    %v5584 = vpack.c.bf16 %v5559, %v5558
    %v5585 = vpack.c.bf16 %v5561, %v5560
    %v5586 = vpack.c.bf16 %v5563, %v5562
    %v5587 = vpack.c.bf16 %v5565, %v5564
    %v5588 = vpack.c.bf16 %v5567, %v5566
    %v5589 = vpack.c.bf16 %v5569, %v5568
    %v5590 = vpack.c.bf16 %v5571, %v5570
    %v5591 = vpack.c.bf16 %v5573, %v5572
    %v5592 = vpack.c.bf16 %v5575, %v5574
    %v5593 = vpack.c.bf16 %v5577, %v5576
    %v5594 = vpack.c.bf16 %v5579, %v5578
    %v5595 = vpack.c.bf16 %v5581, %v5580
    %s5596 = scalar_lea.vmem %s3, 832
    %v5597 = vld [vmem:[%s5596] sm:$0xf]
    %v5598 = vld [vmem:[%s5596 + $0x4] sm:$0xf]
    %v5599 = vld [vmem:[%s5596 + $0x8] sm:$0xf]
    %v5600 = vld [vmem:[%s5596 + $0xc] sm:$0xf]
    %v5601 = vld [vmem:[%s5596 + $0x10] sm:$0xf]
    %v5602 = vld [vmem:[%s5596 + $0x14] sm:$0xf]
    %v5603 = vld [vmem:[%s5596 + $0x18] sm:$0xf]
    %v5604 = vld [vmem:[%s5596 + $0x1c] sm:$0xf]
    %v5605 = vld [vmem:[%s5596 + $0x20] sm:$0xf]
    %v5606 = vld [vmem:[%s5596 + $0x24] sm:$0xf]
    %v5607 = vld [vmem:[%s5596 + $0x28] sm:$0xf]
    %v5608 = vld [vmem:[%s5596 + $0x2c] sm:$0xf]
    %v5609 = vld [vmem:[%s5596 + $0x30] sm:$0xf]
    %v5610 = vld [vmem:[%s5596 + $0x34] sm:$0xf]
    %v5611 = vld [vmem:[%s5596 + $0x38] sm:$0xf]
    %v5612 = vld [vmem:[%s5596 + $0x3c] sm:$0xf]
    %v5629 = vunpack.c.l.b16 %v5597
    %v5630 = vunpack.c.l.b16 %v5598
    %v5631 = vunpack.c.l.b16 %v5599
    %v5632 = vunpack.c.l.b16 %v5600
    %v5633 = vunpack.c.l.b16 %v5601
    %v5634 = vunpack.c.l.b16 %v5602
    %v5635 = vunpack.c.l.b16 %v5603
    %v5636 = vunpack.c.l.b16 %v5604
    %v5637 = vunpack.c.l.b16 %v5605
    %v5638 = vunpack.c.l.b16 %v5606
    %v5639 = vunpack.c.l.b16 %v5607
    %v5640 = vunpack.c.l.b16 %v5608
    %v5641 = vunpack.c.l.b16 %v5609
    %v5642 = vunpack.c.l.b16 %v5610
    %v5643 = vunpack.c.l.b16 %v5611
    %v5644 = vunpack.c.l.b16 %v5612
    %v5645 = vpack.c.b16 %v5630, %v5629
    %v5646 = vpack.c.b16 %v5632, %v5631
    %v5647 = vpack.c.b16 %v5634, %v5633
    %v5648 = vpack.c.b16 %v5636, %v5635
    %v5649 = vpack.c.b16 %v5638, %v5637
    %v5650 = vpack.c.b16 %v5640, %v5639
    %v5651 = vpack.c.b16 %v5642, %v5641
    %v5652 = vpack.c.b16 %v5644, %v5643
    %5661 = vmatprep.subr.bf16.mxu0 0
    %5662 = vmatpush1.bf16.msra.mxu0 %v5645
    %5663 = vmatprep.subr.bf16.mxu0 0
    %5664 = vmatpush1.bf16.msra.mxu0 %v5646
    %5665 = vmatprep.subr.bf16.mxu0 0
    %5666 = vmatpush1.bf16.msra.mxu0 %v5647
    %5667 = vmatprep.subr.bf16.mxu0 0
    %5668 = vmatpush1.bf16.msra.mxu0 %v5648
    %5669 = vmatprep.subr.bf16.mxu0 0
    %5670 = vmatpush1.bf16.msra.mxu0 %v5649
    %5671 = vmatprep.subr.bf16.mxu0 0
    %5672 = vmatpush1.bf16.msra.mxu0 %v5650
    %5673 = vmatprep.subr.bf16.mxu0 0
    %5674 = vmatpush1.bf16.msra.mxu0 %v5651
    %5675 = vmatprep.subr.bf16.mxu0 0
    %5676 = vmatpush1.bf16.msra.mxu0 %v5652
    %5677 = vmatprep.subr.bf16.mxu0 0
    %5678 = vmatpush1.bf16.msra.mxu0 0
    %5679 = vmatprep.subr.bf16.mxu0 0
    %5680 = vmatpush1.bf16.msra.mxu0 0
    %5681 = vmatprep.subr.bf16.mxu0 0
    %5682 = vmatpush1.bf16.msra.mxu0 0
    %5683 = vmatprep.subr.bf16.mxu0 0
    %5684 = vmatpush1.bf16.msra.mxu0 0
    %5685 = vmatprep.subr.bf16.mxu0 0
    %5686 = vmatpush1.bf16.msra.mxu0 0
    %5687 = vmatprep.subr.bf16.mxu0 0
    %5688 = vmatpush1.bf16.msra.mxu0 0
    %5689 = vmatprep.subr.bf16.mxu0 0
    %5690 = vmatpush1.bf16.msra.mxu0 0
    %5691 = vmatprep.subr.bf16.mxu0 0
    %5692 = vmatpush1.bf16.msra.mxu0 0
    %5693 = vmatprep.mubr.bf16.mxu0 0
    %5694 = vmatmul.mubr.bf16.gmra.mrb[0].mxu0 %v5582
    %v5695 = vpop.f32.mrb[0].mxu0
    %v5696 = vadd.f32 0.0, %v5695
    %v5697 = vpop.f32.mrb[0].mxu0
    %v5698 = vpop.f32.mrb[0].mxu0
    %v5699 = vadd.f32 0.0, %v5698
    %v5700 = vpop.f32.mrb[0].mxu0
    %5701 = vmatprep.mubr.bf16.mxu0 0
    %5702 = vmatmul.mubr.bf16.gmra.mrb[0].mxu0 %v5583
    %v5703 = vpop.f32.mrb[0].mxu0
    %v5704 = vadd.f32 0.0, %v5703
    %v5705 = vpop.f32.mrb[0].mxu0
    %v5706 = vpop.f32.mrb[0].mxu0
    %v5707 = vadd.f32 0.0, %v5706
    %v5708 = vpop.f32.mrb[0].mxu0
    %5709 = vmatprep.mubr.bf16.mxu0 0
    %5710 = vmatmul.mubr.bf16.gmra.mrb[0].mxu0 %v5584
    %v5711 = vpop.f32.mrb[0].mxu0
    %v5712 = vadd.f32 0.0, %v5711
    %v5713 = vpop.f32.mrb[0].mxu0
    %v5714 = vpop.f32.mrb[0].mxu0
    %v5715 = vadd.f32 0.0, %v5714
    %v5716 = vpop.f32.mrb[0].mxu0
    %5717 = vmatprep.mubr.bf16.mxu0 0
    %5718 = vmatmul.mubr.bf16.gmra.mrb[0].mxu0 %v5585
    %v5719 = vpop.f32.mrb[0].mxu0
    %v5720 = vadd.f32 0.0, %v5719
    %v5721 = vpop.f32.mrb[0].mxu0
    %v5722 = vpop.f32.mrb[0].mxu0
    %v5723 = vadd.f32 0.0, %v5722
    %v5724 = vpop.f32.mrb[0].mxu0
    %5725 = vmatprep.mubr.bf16.mxu0 0
    %5726 = vmatmul.mubr.bf16.gmra.mrb[0].mxu0 %v5586
    %v5727 = vpop.f32.mrb[0].mxu0
    %v5728 = vadd.f32 0.0, %v5727
    %v5729 = vpop.f32.mrb[0].mxu0
    %v5730 = vpop.f32.mrb[0].mxu0
    %v5731 = vadd.f32 0.0, %v5730
    %v5732 = vpop.f32.mrb[0].mxu0
    %5733 = vmatprep.mubr.bf16.mxu0 0
    %5734 = vmatmul.mubr.bf16.gmra.mrb[0].mxu0 %v5587
    %v5735 = vpop.f32.mrb[0].mxu0
    %v5736 = vadd.f32 0.0, %v5735
    %v5737 = vpop.f32.mrb[0].mxu0
    %v5738 = vpop.f32.mrb[0].mxu0
    %v5739 = vadd.f32 0.0, %v5738
    %v5740 = vpop.f32.mrb[0].mxu0
    %5741 = vmatprep.mubr.bf16.mxu0 0
    %5742 = vmatmul.mubr.bf16.gmra.mrb[0].mxu0 %v5588
    %v5743 = vpop.f32.mrb[0].mxu0
    %v5744 = vadd.f32 0.0, %v5743
    %v5745 = vpop.f32.mrb[0].mxu0
    %v5746 = vpop.f32.mrb[0].mxu0
    %v5747 = vadd.f32 0.0, %v5746
    %v5748 = vpop.f32.mrb[0].mxu0
    %5749 = vmatprep.mubr.bf16.mxu0 0
    %5750 = vmatmul.mubr.bf16.gmra.mrb[0].mxu0 %v5589
    %v5751 = vpop.f32.mrb[0].mxu0
    %v5752 = vadd.f32 0.0, %v5751
    %v5753 = vpop.f32.mrb[0].mxu0
    %v5754 = vpop.f32.mrb[0].mxu0
    %v5755 = vadd.f32 0.0, %v5754
    %v5756 = vpop.f32.mrb[0].mxu0
    %5757 = vmatprep.mubr.bf16.mxu0 0
    %5758 = vmatmul.mubr.bf16.gmra.mrb[0].mxu0 %v5590
    %v5759 = vpop.f32.mrb[0].mxu0
    %v5760 = vadd.f32 0.0, %v5759
    %v5761 = vpop.f32.mrb[0].mxu0
    %v5762 = vpop.f32.mrb[0].mxu0
    %v5763 = vadd.f32 0.0, %v5762
    %v5764 = vpop.f32.mrb[0].mxu0
    %5765 = vmatprep.mubr.bf16.mxu0 0
    %5766 = vmatmul.mubr.bf16.gmra.mrb[0].mxu0 %v5591
    %v5767 = vpop.f32.mrb[0].mxu0
    %v5768 = vadd.f32 0.0, %v5767
    %v5769 = vpop.f32.mrb[0].mxu0
    %v5770 = vpop.f32.mrb[0].mxu0
    %v5771 = vadd.f32 0.0, %v5770
    %v5772 = vpop.f32.mrb[0].mxu0
    %5773 = vmatprep.mubr.bf16.mxu0 0
    %5774 = vmatmul.mubr.bf16.gmra.mrb[0].mxu0 %v5592
    %v5775 = vpop.f32.mrb[0].mxu0
    %v5776 = vadd.f32 0.0, %v5775
    %v5777 = vpop.f32.mrb[0].mxu0
    %v5778 = vpop.f32.mrb[0].mxu0
    %v5779 = vadd.f32 0.0, %v5778
    %v5780 = vpop.f32.mrb[0].mxu0
    %5781 = vmatprep.mubr.bf16.mxu0 0
    %5782 = vmatmul.mubr.bf16.gmra.mrb[0].mxu0 %v5593
    %v5783 = vpop.f32.mrb[0].mxu0
    %v5784 = vadd.f32 0.0, %v5783
    %v5785 = vpop.f32.mrb[0].mxu0
    %v5786 = vpop.f32.mrb[0].mxu0
    %v5787 = vadd.f32 0.0, %v5786
    %v5788 = vpop.f32.mrb[0].mxu0
    %5789 = vmatprep.mubr.bf16.mxu0 0
    %5790 = vmatmul.mubr.bf16.gmra.mrb[0].mxu0 %v5594
    %v5791 = vpop.f32.mrb[0].mxu0
    %v5792 = vadd.f32 0.0, %v5791
    %v5793 = vpop.f32.mrb[0].mxu0
    %v5794 = vpop.f32.mrb[0].mxu0
    %v5795 = vadd.f32 0.0, %v5794
    %v5796 = vpop.f32.mrb[0].mxu0
    %5797 = vmatprep.mubr.bf16.mxu0 0
    %5798 = vmatmul.mubr.bf16.gmra.mrb[0].mxu0 %v5595
    %v5799 = vpop.f32.mrb[0].mxu0
    %v5800 = vadd.f32 0.0, %v5799
    %v5801 = vpop.f32.mrb[0].mxu0
    %v5802 = vpop.f32.mrb[0].mxu0
    %v5803 = vadd.f32 0.0, %v5802
    %v5804 = vpop.f32.mrb[0].mxu0
    %5805 = vdwg.mxu0
    %v5806 = vadd.f32 %v5526, %v5696
    %v5807 = vadd.f32 %v5527, %v5699
    %v5808 = vadd.f32 %v5528, %v5704
    %v5809 = vadd.f32 %v5529, %v5707
    %v5810 = vadd.f32 %v5530, %v5712
    %v5811 = vadd.f32 %v5531, %v5715
    %v5812 = vadd.f32 %v5532, %v5720
    %v5813 = vadd.f32 %v5533, %v5723
    %v5814 = vadd.f32 %v5534, %v5728
    %v5815 = vadd.f32 %v5535, %v5731
    %v5816 = vadd.f32 %v5536, %v5736
    %v5817 = vadd.f32 %v5537, %v5739
    %v5818 = vadd.f32 %v5538, %v5744
    %v5819 = vadd.f32 %v5539, %v5747
    %v5820 = vadd.f32 %v5540, %v5752
    %v5821 = vadd.f32 %v5541, %v5755
    %v5822 = vadd.f32 %v5542, %v5760
    %v5823 = vadd.f32 %v5543, %v5763
    %v5824 = vadd.f32 %v5544, %v5768
    %v5825 = vadd.f32 %v5545, %v5771
    %v5826 = vadd.f32 %v5546, %v5776
    %v5827 = vadd.f32 %v5547, %v5779
    %v5828 = vadd.f32 %v5548, %v5784
    %v5829 = vadd.f32 %v5549, %v5787
    %v5830 = vadd.f32 %v5550, %v5792
    %v5831 = vadd.f32 %v5551, %v5795
    %v5832 = vadd.f32 %v5552, %v5800
    %v5833 = vadd.f32 %v5553, %v5803
    %v5834 = vld [vmem:[#allocation2 + $0x211] sm:$0xff]
    %v5835 = vld [vmem:[#allocation2 + $0x219] sm:$0xff]
    %v5836 = vld [vmem:[#allocation2 + $0x221] sm:$0xff]
    %v5837 = vld [vmem:[#allocation2 + $0x229] sm:$0xff]
    %v5838 = vld [vmem:[#allocation2 + $0x231] sm:$0xff]
    %v5839 = vld [vmem:[#allocation2 + $0x239] sm:$0xff]
    %v5840 = vld [vmem:[#allocation2 + $0x241] sm:$0xff]
    %v5841 = vld [vmem:[#allocation2 + $0x249] sm:$0xff]
    %v5842 = vld [vmem:[#allocation2 + $0x251] sm:$0xff]
    %v5843 = vld [vmem:[#allocation2 + $0x259] sm:$0xff]
    %v5844 = vld [vmem:[#allocation2 + $0x261] sm:$0xff]
    %v5845 = vld [vmem:[#allocation2 + $0x269] sm:$0xff]
    %v5846 = vld [vmem:[#allocation2 + $0x271] sm:$0xff]
    %v5847 = vld [vmem:[#allocation2 + $0x279] sm:$0xff]
    %v5848 = vld [vmem:[#allocation2 + $0x281] sm:$0xff]
    %v5849 = vld [vmem:[#allocation2 + $0x289] sm:$0xff]
    %v5850 = vld [vmem:[#allocation2 + $0x291] sm:$0xff]
    %v5851 = vld [vmem:[#allocation2 + $0x299] sm:$0xff]
    %v5852 = vld [vmem:[#allocation2 + $0x2a1] sm:$0xff]
    %v5853 = vld [vmem:[#allocation2 + $0x2a9] sm:$0xff]
    %v5854 = vld [vmem:[#allocation2 + $0x2b1] sm:$0xff]
    %v5855 = vld [vmem:[#allocation2 + $0x2b9] sm:$0xff]
    %v5856 = vld [vmem:[#allocation2 + $0x2c1] sm:$0xff]
    %v5857 = vld [vmem:[#allocation2 + $0x2c9] sm:$0xff]
    %v5858 = vld [vmem:[#allocation2 + $0x2d1] sm:$0xff]
    %v5859 = vld [vmem:[#allocation2 + $0x2d9] sm:$0xff]
    %v5860 = vld [vmem:[#allocation2 + $0x2e1] sm:$0xff]
    %v5861 = vld [vmem:[#allocation2 + $0x2e9] sm:$0xff]
    %v5862 = vpack.c.bf16 %v5835, %v5834
    %v5863 = vpack.c.bf16 %v5837, %v5836
    %v5864 = vpack.c.bf16 %v5839, %v5838
    %v5865 = vpack.c.bf16 %v5841, %v5840
    %v5866 = vpack.c.bf16 %v5843, %v5842
    %v5867 = vpack.c.bf16 %v5845, %v5844
    %v5868 = vpack.c.bf16 %v5847, %v5846
    %v5869 = vpack.c.bf16 %v5849, %v5848
    %v5870 = vpack.c.bf16 %v5851, %v5850
    %v5871 = vpack.c.bf16 %v5853, %v5852
    %v5872 = vpack.c.bf16 %v5855, %v5854
    %v5873 = vpack.c.bf16 %v5857, %v5856
    %v5874 = vpack.c.bf16 %v5859, %v5858
    %v5875 = vpack.c.bf16 %v5861, %v5860
    %s5876 = scalar_lea.vmem %s3, 896
    %v5877 = vld [vmem:[%s5876] sm:$0xf]
    %v5878 = vld [vmem:[%s5876 + $0x4] sm:$0xf]
    %v5879 = vld [vmem:[%s5876 + $0x8] sm:$0xf]
    %v5880 = vld [vmem:[%s5876 + $0xc] sm:$0xf]
    %v5881 = vld [vmem:[%s5876 + $0x10] sm:$0xf]
    %v5882 = vld [vmem:[%s5876 + $0x14] sm:$0xf]
    %v5883 = vld [vmem:[%s5876 + $0x18] sm:$0xf]
    %v5884 = vld [vmem:[%s5876 + $0x1c] sm:$0xf]
    %v5885 = vld [vmem:[%s5876 + $0x20] sm:$0xf]
    %v5886 = vld [vmem:[%s5876 + $0x24] sm:$0xf]
    %v5887 = vld [vmem:[%s5876 + $0x28] sm:$0xf]
    %v5888 = vld [vmem:[%s5876 + $0x2c] sm:$0xf]
    %v5889 = vld [vmem:[%s5876 + $0x30] sm:$0xf]
    %v5890 = vld [vmem:[%s5876 + $0x34] sm:$0xf]
    %v5891 = vld [vmem:[%s5876 + $0x38] sm:$0xf]
    %v5892 = vld [vmem:[%s5876 + $0x3c] sm:$0xf]
    %v5909 = vunpack.c.l.b16 %v5877
    %v5910 = vunpack.c.l.b16 %v5878
    %v5911 = vunpack.c.l.b16 %v5879
    %v5912 = vunpack.c.l.b16 %v5880
    %v5913 = vunpack.c.l.b16 %v5881
    %v5914 = vunpack.c.l.b16 %v5882
    %v5915 = vunpack.c.l.b16 %v5883
    %v5916 = vunpack.c.l.b16 %v5884
    %v5917 = vunpack.c.l.b16 %v5885
    %v5918 = vunpack.c.l.b16 %v5886
    %v5919 = vunpack.c.l.b16 %v5887
    %v5920 = vunpack.c.l.b16 %v5888
    %v5921 = vunpack.c.l.b16 %v5889
    %v5922 = vunpack.c.l.b16 %v5890
    %v5923 = vunpack.c.l.b16 %v5891
    %v5924 = vunpack.c.l.b16 %v5892
    %v5925 = vpack.c.b16 %v5910, %v5909
    %v5926 = vpack.c.b16 %v5912, %v5911
    %v5927 = vpack.c.b16 %v5914, %v5913
    %v5928 = vpack.c.b16 %v5916, %v5915
    %v5929 = vpack.c.b16 %v5918, %v5917
    %v5930 = vpack.c.b16 %v5920, %v5919
    %v5931 = vpack.c.b16 %v5922, %v5921
    %v5932 = vpack.c.b16 %v5924, %v5923
    %5941 = vmatprep.subr.bf16.mxu0 0
    %5942 = vmatpush1.bf16.msra.mxu0 %v5925
    %5943 = vmatprep.subr.bf16.mxu0 0
    %5944 = vmatpush1.bf16.msra.mxu0 %v5926
    %5945 = vmatprep.subr.bf16.mxu0 0
    %5946 = vmatpush1.bf16.msra.mxu0 %v5927
    %5947 = vmatprep.subr.bf16.mxu0 0
    %5948 = vmatpush1.bf16.msra.mxu0 %v5928
    %5949 = vmatprep.subr.bf16.mxu0 0
    %5950 = vmatpush1.bf16.msra.mxu0 %v5929
    %5951 = vmatprep.subr.bf16.mxu0 0
    %5952 = vmatpush1.bf16.msra.mxu0 %v5930
    %5953 = vmatprep.subr.bf16.mxu0 0
    %5954 = vmatpush1.bf16.msra.mxu0 %v5931
    %5955 = vmatprep.subr.bf16.mxu0 0
    %5956 = vmatpush1.bf16.msra.mxu0 %v5932
    %5957 = vmatprep.subr.bf16.mxu0 0
    %5958 = vmatpush1.bf16.msra.mxu0 0
    %5959 = vmatprep.subr.bf16.mxu0 0
    %5960 = vmatpush1.bf16.msra.mxu0 0
    %5961 = vmatprep.subr.bf16.mxu0 0
    %5962 = vmatpush1.bf16.msra.mxu0 0
    %5963 = vmatprep.subr.bf16.mxu0 0
    %5964 = vmatpush1.bf16.msra.mxu0 0
    %5965 = vmatprep.subr.bf16.mxu0 0
    %5966 = vmatpush1.bf16.msra.mxu0 0
    %5967 = vmatprep.subr.bf16.mxu0 0
    %5968 = vmatpush1.bf16.msra.mxu0 0
    %5969 = vmatprep.subr.bf16.mxu0 0
    %5970 = vmatpush1.bf16.msra.mxu0 0
    %5971 = vmatprep.subr.bf16.mxu0 0
    %5972 = vmatpush1.bf16.msra.mxu0 0
    %5973 = vmatprep.mubr.bf16.mxu0 0
    %5974 = vmatmul.mubr.bf16.gmra.mrb[0].mxu0 %v5862
    %v5975 = vpop.f32.mrb[0].mxu0
    %v5976 = vadd.f32 0.0, %v5975
    %v5977 = vpop.f32.mrb[0].mxu0
    %v5978 = vpop.f32.mrb[0].mxu0
    %v5979 = vadd.f32 0.0, %v5978
    %v5980 = vpop.f32.mrb[0].mxu0
    %5981 = vmatprep.mubr.bf16.mxu0 0
    %5982 = vmatmul.mubr.bf16.gmra.mrb[0].mxu0 %v5863
    %v5983 = vpop.f32.mrb[0].mxu0
    %v5984 = vadd.f32 0.0, %v5983
    %v5985 = vpop.f32.mrb[0].mxu0
    %v5986 = vpop.f32.mrb[0].mxu0
    %v5987 = vadd.f32 0.0, %v5986
    %v5988 = vpop.f32.mrb[0].mxu0
    %5989 = vmatprep.mubr.bf16.mxu0 0
    %5990 = vmatmul.mubr.bf16.gmra.mrb[0].mxu0 %v5864
    %v5991 = vpop.f32.mrb[0].mxu0
    %v5992 = vadd.f32 0.0, %v5991
    %v5993 = vpop.f32.mrb[0].mxu0
    %v5994 = vpop.f32.mrb[0].mxu0
    %v5995 = vadd.f32 0.0, %v5994
    %v5996 = vpop.f32.mrb[0].mxu0
    %5997 = vmatprep.mubr.bf16.mxu0 0
    %5998 = vmatmul.mubr.bf16.gmra.mrb[0].mxu0 %v5865
    %v5999 = vpop.f32.mrb[0].mxu0
    %v6000 = vadd.f32 0.0, %v5999
    %v6001 = vpop.f32.mrb[0].mxu0
    %v6002 = vpop.f32.mrb[0].mxu0
    %v6003 = vadd.f32 0.0, %v6002
    %v6004 = vpop.f32.mrb[0].mxu0
    %6005 = vmatprep.mubr.bf16.mxu0 0
    %6006 = vmatmul.mubr.bf16.gmra.mrb[0].mxu0 %v5866
    %v6007 = vpop.f32.mrb[0].mxu0
    %v6008 = vadd.f32 0.0, %v6007
    %v6009 = vpop.f32.mrb[0].mxu0
    %v6010 = vpop.f32.mrb[0].mxu0
    %v6011 = vadd.f32 0.0, %v6010
    %v6012 = vpop.f32.mrb[0].mxu0
    %6013 = vmatprep.mubr.bf16.mxu0 0
    %6014 = vmatmul.mubr.bf16.gmra.mrb[0].mxu0 %v5867
    %v6015 = vpop.f32.mrb[0].mxu0
    %v6016 = vadd.f32 0.0, %v6015
    %v6017 = vpop.f32.mrb[0].mxu0
    %v6018 = vpop.f32.mrb[0].mxu0
    %v6019 = vadd.f32 0.0, %v6018
    %v6020 = vpop.f32.mrb[0].mxu0
    %6021 = vmatprep.mubr.bf16.mxu0 0
    %6022 = vmatmul.mubr.bf16.gmra.mrb[0].mxu0 %v5868
    %v6023 = vpop.f32.mrb[0].mxu0
    %v6024 = vadd.f32 0.0, %v6023
    %v6025 = vpop.f32.mrb[0].mxu0
    %v6026 = vpop.f32.mrb[0].mxu0
    %v6027 = vadd.f32 0.0, %v6026
    %v6028 = vpop.f32.mrb[0].mxu0
    %6029 = vmatprep.mubr.bf16.mxu0 0
    %6030 = vmatmul.mubr.bf16.gmra.mrb[0].mxu0 %v5869
    %v6031 = vpop.f32.mrb[0].mxu0
    %v6032 = vadd.f32 0.0, %v6031
    %v6033 = vpop.f32.mrb[0].mxu0
    %v6034 = vpop.f32.mrb[0].mxu0
    %v6035 = vadd.f32 0.0, %v6034
    %v6036 = vpop.f32.mrb[0].mxu0
    %6037 = vmatprep.mubr.bf16.mxu0 0
    %6038 = vmatmul.mubr.bf16.gmra.mrb[0].mxu0 %v5870
    %v6039 = vpop.f32.mrb[0].mxu0
    %v6040 = vadd.f32 0.0, %v6039
    %v6041 = vpop.f32.mrb[0].mxu0
    %v6042 = vpop.f32.mrb[0].mxu0
    %v6043 = vadd.f32 0.0, %v6042
    %v6044 = vpop.f32.mrb[0].mxu0
    %6045 = vmatprep.mubr.bf16.mxu0 0
    %6046 = vmatmul.mubr.bf16.gmra.mrb[0].mxu0 %v5871
    %v6047 = vpop.f32.mrb[0].mxu0
    %v6048 = vadd.f32 0.0, %v6047
    %v6049 = vpop.f32.mrb[0].mxu0
    %v6050 = vpop.f32.mrb[0].mxu0
    %v6051 = vadd.f32 0.0, %v6050
    %v6052 = vpop.f32.mrb[0].mxu0
    %6053 = vmatprep.mubr.bf16.mxu0 0
    %6054 = vmatmul.mubr.bf16.gmra.mrb[0].mxu0 %v5872
    %v6055 = vpop.f32.mrb[0].mxu0
    %v6056 = vadd.f32 0.0, %v6055
    %v6057 = vpop.f32.mrb[0].mxu0
    %v6058 = vpop.f32.mrb[0].mxu0
    %v6059 = vadd.f32 0.0, %v6058
    %v6060 = vpop.f32.mrb[0].mxu0
    %6061 = vmatprep.mubr.bf16.mxu0 0
    %6062 = vmatmul.mubr.bf16.gmra.mrb[0].mxu0 %v5873
    %v6063 = vpop.f32.mrb[0].mxu0
    %v6064 = vadd.f32 0.0, %v6063
    %v6065 = vpop.f32.mrb[0].mxu0
    %v6066 = vpop.f32.mrb[0].mxu0
    %v6067 = vadd.f32 0.0, %v6066
    %v6068 = vpop.f32.mrb[0].mxu0
    %6069 = vmatprep.mubr.bf16.mxu0 0
    %6070 = vmatmul.mubr.bf16.gmra.mrb[0].mxu0 %v5874
    %v6071 = vpop.f32.mrb[0].mxu0
    %v6072 = vadd.f32 0.0, %v6071
    %v6073 = vpop.f32.mrb[0].mxu0
    %v6074 = vpop.f32.mrb[0].mxu0
    %v6075 = vadd.f32 0.0, %v6074
    %v6076 = vpop.f32.mrb[0].mxu0
    %6077 = vmatprep.mubr.bf16.mxu0 0
    %6078 = vmatmul.mubr.bf16.gmra.mrb[0].mxu0 %v5875
    %v6079 = vpop.f32.mrb[0].mxu0
    %v6080 = vadd.f32 0.0, %v6079
    %v6081 = vpop.f32.mrb[0].mxu0
    %v6082 = vpop.f32.mrb[0].mxu0
    %v6083 = vadd.f32 0.0, %v6082
    %v6084 = vpop.f32.mrb[0].mxu0
    %6085 = vdwg.mxu0
    %v6086 = vadd.f32 %v5806, %v5976
    %v6087 = vadd.f32 %v5807, %v5979
    %v6088 = vadd.f32 %v5808, %v5984
    %v6089 = vadd.f32 %v5809, %v5987
    %v6090 = vadd.f32 %v5810, %v5992
    %v6091 = vadd.f32 %v5811, %v5995
    %v6092 = vadd.f32 %v5812, %v6000
    %v6093 = vadd.f32 %v5813, %v6003
    %v6094 = vadd.f32 %v5814, %v6008
    %v6095 = vadd.f32 %v5815, %v6011
    %v6096 = vadd.f32 %v5816, %v6016
    %v6097 = vadd.f32 %v5817, %v6019
    %v6098 = vadd.f32 %v5818, %v6024
    %v6099 = vadd.f32 %v5819, %v6027
    %v6100 = vadd.f32 %v5820, %v6032
    %v6101 = vadd.f32 %v5821, %v6035
    %v6102 = vadd.f32 %v5822, %v6040
    %v6103 = vadd.f32 %v5823, %v6043
    %v6104 = vadd.f32 %v5824, %v6048
    %v6105 = vadd.f32 %v5825, %v6051
    %v6106 = vadd.f32 %v5826, %v6056
    %v6107 = vadd.f32 %v5827, %v6059
    %v6108 = vadd.f32 %v5828, %v6064
    %v6109 = vadd.f32 %v5829, %v6067
    %v6110 = vadd.f32 %v5830, %v6072
    %v6111 = vadd.f32 %v5831, %v6075
    %v6112 = vadd.f32 %v5832, %v6080
    %v6113 = vadd.f32 %v5833, %v6083
    %v6114 = vld [vmem:[#allocation2 + $0x311] sm:$0xff]
    %v6115 = vld [vmem:[#allocation2 + $0x319] sm:$0xff]
    %v6116 = vld [vmem:[#allocation2 + $0x321] sm:$0xff]
    %v6117 = vld [vmem:[#allocation2 + $0x329] sm:$0xff]
    %v6118 = vld [vmem:[#allocation2 + $0x331] sm:$0xff]
    %v6119 = vld [vmem:[#allocation2 + $0x339] sm:$0xff]
    %v6120 = vld [vmem:[#allocation2 + $0x341] sm:$0xff]
    %v6121 = vld [vmem:[#allocation2 + $0x349] sm:$0xff]
    %v6122 = vld [vmem:[#allocation2 + $0x351] sm:$0xff]
    %v6123 = vld [vmem:[#allocation2 + $0x359] sm:$0xff]
    %v6124 = vld [vmem:[#allocation2 + $0x361] sm:$0xff]
    %v6125 = vld [vmem:[#allocation2 + $0x369] sm:$0xff]
    %v6126 = vld [vmem:[#allocation2 + $0x371] sm:$0xff]
    %v6127 = vld [vmem:[#allocation2 + $0x379] sm:$0xff]
    %v6128 = vld [vmem:[#allocation2 + $0x381] sm:$0xff]
    %v6129 = vld [vmem:[#allocation2 + $0x389] sm:$0xff]
    %v6130 = vld [vmem:[#allocation2 + $0x391] sm:$0xff]
    %v6131 = vld [vmem:[#allocation2 + $0x399] sm:$0xff]
    %v6132 = vld [vmem:[#allocation2 + $0x3a1] sm:$0xff]
    %v6133 = vld [vmem:[#allocation2 + $0x3a9] sm:$0xff]
    %v6134 = vld [vmem:[#allocation2 + $0x3b1] sm:$0xff]
    %v6135 = vld [vmem:[#allocation2 + $0x3b9] sm:$0xff]
    %v6136 = vld [vmem:[#allocation2 + $0x3c1] sm:$0xff]
    %v6137 = vld [vmem:[#allocation2 + $0x3c9] sm:$0xff]
    %v6138 = vld [vmem:[#allocation2 + $0x3d1] sm:$0xff]
    %v6139 = vld [vmem:[#allocation2 + $0x3d9] sm:$0xff]
    %v6140 = vld [vmem:[#allocation2 + $0x3e1] sm:$0xff]
    %v6141 = vld [vmem:[#allocation2 + $0x3e9] sm:$0xff]
    %v6142 = vpack.c.bf16 %v6115, %v6114
    %v6143 = vpack.c.bf16 %v6117, %v6116
    %v6144 = vpack.c.bf16 %v6119, %v6118
    %v6145 = vpack.c.bf16 %v6121, %v6120
    %v6146 = vpack.c.bf16 %v6123, %v6122
    %v6147 = vpack.c.bf16 %v6125, %v6124
    %v6148 = vpack.c.bf16 %v6127, %v6126
    %v6149 = vpack.c.bf16 %v6129, %v6128
    %v6150 = vpack.c.bf16 %v6131, %v6130
    %v6151 = vpack.c.bf16 %v6133, %v6132
    %v6152 = vpack.c.bf16 %v6135, %v6134
    %v6153 = vpack.c.bf16 %v6137, %v6136
    %v6154 = vpack.c.bf16 %v6139, %v6138
    %v6155 = vpack.c.bf16 %v6141, %v6140
    %s6156 = scalar_lea.vmem %s3, 960
    %v6157 = vld [vmem:[%s6156] sm:$0xf]
    %v6158 = vld [vmem:[%s6156 + $0x4] sm:$0xf]
    %v6159 = vld [vmem:[%s6156 + $0x8] sm:$0xf]
    %v6160 = vld [vmem:[%s6156 + $0xc] sm:$0xf]
    %v6161 = vld [vmem:[%s6156 + $0x10] sm:$0xf]
    %v6162 = vld [vmem:[%s6156 + $0x14] sm:$0xf]
    %v6163 = vld [vmem:[%s6156 + $0x18] sm:$0xf]
    %v6164 = vld [vmem:[%s6156 + $0x1c] sm:$0xf]
    %v6165 = vld [vmem:[%s6156 + $0x20] sm:$0xf]
    %v6166 = vld [vmem:[%s6156 + $0x24] sm:$0xf]
    %v6167 = vld [vmem:[%s6156 + $0x28] sm:$0xf]
    %v6168 = vld [vmem:[%s6156 + $0x2c] sm:$0xf]
    %v6169 = vld [vmem:[%s6156 + $0x30] sm:$0xf]
    %v6170 = vld [vmem:[%s6156 + $0x34] sm:$0xf]
    %v6171 = vld [vmem:[%s6156 + $0x38] sm:$0xf]
    %v6172 = vld [vmem:[%s6156 + $0x3c] sm:$0xf]
    %v6189 = vunpack.c.l.b16 %v6157
    %v6190 = vunpack.c.l.b16 %v6158
    %v6191 = vunpack.c.l.b16 %v6159
    %v6192 = vunpack.c.l.b16 %v6160
    %v6193 = vunpack.c.l.b16 %v6161
    %v6194 = vunpack.c.l.b16 %v6162
    %v6195 = vunpack.c.l.b16 %v6163
    %v6196 = vunpack.c.l.b16 %v6164
    %v6197 = vunpack.c.l.b16 %v6165
    %v6198 = vunpack.c.l.b16 %v6166
    %v6199 = vunpack.c.l.b16 %v6167
    %v6200 = vunpack.c.l.b16 %v6168
    %v6201 = vunpack.c.l.b16 %v6169
    %v6202 = vunpack.c.l.b16 %v6170
    %v6203 = vunpack.c.l.b16 %v6171
    %v6204 = vunpack.c.l.b16 %v6172
    %v6205 = vpack.c.b16 %v6190, %v6189
    %v6206 = vpack.c.b16 %v6192, %v6191
    %v6207 = vpack.c.b16 %v6194, %v6193
    %v6208 = vpack.c.b16 %v6196, %v6195
    %v6209 = vpack.c.b16 %v6198, %v6197
    %v6210 = vpack.c.b16 %v6200, %v6199
    %v6211 = vpack.c.b16 %v6202, %v6201
    %v6212 = vpack.c.b16 %v6204, %v6203
    %6221 = vmatprep.subr.bf16.mxu0 0
    %6222 = vmatpush1.bf16.msra.mxu0 %v6205
    %6223 = vmatprep.subr.bf16.mxu0 0
    %6224 = vmatpush1.bf16.msra.mxu0 %v6206
    %6225 = vmatprep.subr.bf16.mxu0 0
    %6226 = vmatpush1.bf16.msra.mxu0 %v6207
    %6227 = vmatprep.subr.bf16.mxu0 0
    %6228 = vmatpush1.bf16.msra.mxu0 %v6208
    %6229 = vmatprep.subr.bf16.mxu0 0
    %6230 = vmatpush1.bf16.msra.mxu0 %v6209
    %6231 = vmatprep.subr.bf16.mxu0 0
    %6232 = vmatpush1.bf16.msra.mxu0 %v6210
    %6233 = vmatprep.subr.bf16.mxu0 0
    %6234 = vmatpush1.bf16.msra.mxu0 %v6211
    %6235 = vmatprep.subr.bf16.mxu0 0
    %6236 = vmatpush1.bf16.msra.mxu0 %v6212
    %6237 = vmatprep.subr.bf16.mxu0 0
    %6238 = vmatpush1.bf16.msra.mxu0 0
    %6239 = vmatprep.subr.bf16.mxu0 0
    %6240 = vmatpush1.bf16.msra.mxu0 0
    %6241 = vmatprep.subr.bf16.mxu0 0
    %6242 = vmatpush1.bf16.msra.mxu0 0
    %6243 = vmatprep.subr.bf16.mxu0 0
    %6244 = vmatpush1.bf16.msra.mxu0 0
    %6245 = vmatprep.subr.bf16.mxu0 0
    %6246 = vmatpush1.bf16.msra.mxu0 0
    %6247 = vmatprep.subr.bf16.mxu0 0
    %6248 = vmatpush1.bf16.msra.mxu0 0
    %6249 = vmatprep.subr.bf16.mxu0 0
    %6250 = vmatpush1.bf16.msra.mxu0 0
    %6251 = vmatprep.subr.bf16.mxu0 0
    %6252 = vmatpush1.bf16.msra.mxu0 0
    %6253 = vmatprep.mubr.bf16.mxu0 0
    %6254 = vmatmul.mubr.bf16.gmra.mrb[0].mxu0 %v6142
    %v6255 = vpop.f32.mrb[0].mxu0
    %v6256 = vadd.f32 0.0, %v6255
    %v6257 = vpop.f32.mrb[0].mxu0
    %v6258 = vpop.f32.mrb[0].mxu0
    %v6259 = vadd.f32 0.0, %v6258
    %v6260 = vpop.f32.mrb[0].mxu0
    %6261 = vmatprep.mubr.bf16.mxu0 0
    %6262 = vmatmul.mubr.bf16.gmra.mrb[0].mxu0 %v6143
    %v6263 = vpop.f32.mrb[0].mxu0
    %v6264 = vadd.f32 0.0, %v6263
    %v6265 = vpop.f32.mrb[0].mxu0
    %v6266 = vpop.f32.mrb[0].mxu0
    %v6267 = vadd.f32 0.0, %v6266
    %v6268 = vpop.f32.mrb[0].mxu0
    %6269 = vmatprep.mubr.bf16.mxu0 0
    %6270 = vmatmul.mubr.bf16.gmra.mrb[0].mxu0 %v6144
    %v6271 = vpop.f32.mrb[0].mxu0
    %v6272 = vadd.f32 0.0, %v6271
    %v6273 = vpop.f32.mrb[0].mxu0
    %v6274 = vpop.f32.mrb[0].mxu0
    %v6275 = vadd.f32 0.0, %v6274
    %v6276 = vpop.f32.mrb[0].mxu0
    %6277 = vmatprep.mubr.bf16.mxu0 0
    %6278 = vmatmul.mubr.bf16.gmra.mrb[0].mxu0 %v6145
    %v6279 = vpop.f32.mrb[0].mxu0
    %v6280 = vadd.f32 0.0, %v6279
    %v6281 = vpop.f32.mrb[0].mxu0
    %v6282 = vpop.f32.mrb[0].mxu0
    %v6283 = vadd.f32 0.0, %v6282
    %v6284 = vpop.f32.mrb[0].mxu0
    %6285 = vmatprep.mubr.bf16.mxu0 0
    %6286 = vmatmul.mubr.bf16.gmra.mrb[0].mxu0 %v6146
    %v6287 = vpop.f32.mrb[0].mxu0
    %v6288 = vadd.f32 0.0, %v6287
    %v6289 = vpop.f32.mrb[0].mxu0
    %v6290 = vpop.f32.mrb[0].mxu0
    %v6291 = vadd.f32 0.0, %v6290
    %v6292 = vpop.f32.mrb[0].mxu0
    %6293 = vmatprep.mubr.bf16.mxu0 0
    %6294 = vmatmul.mubr.bf16.gmra.mrb[0].mxu0 %v6147
    %v6295 = vpop.f32.mrb[0].mxu0
    %v6296 = vadd.f32 0.0, %v6295
    %v6297 = vpop.f32.mrb[0].mxu0
    %v6298 = vpop.f32.mrb[0].mxu0
    %v6299 = vadd.f32 0.0, %v6298
    %v6300 = vpop.f32.mrb[0].mxu0
    %6301 = vmatprep.mubr.bf16.mxu0 0
    %6302 = vmatmul.mubr.bf16.gmra.mrb[0].mxu0 %v6148
    %v6303 = vpop.f32.mrb[0].mxu0
    %v6304 = vadd.f32 0.0, %v6303
    %v6305 = vpop.f32.mrb[0].mxu0
    %v6306 = vpop.f32.mrb[0].mxu0
    %v6307 = vadd.f32 0.0, %v6306
    %v6308 = vpop.f32.mrb[0].mxu0
    %6309 = vmatprep.mubr.bf16.mxu0 0
    %6310 = vmatmul.mubr.bf16.gmra.mrb[0].mxu0 %v6149
    %v6311 = vpop.f32.mrb[0].mxu0
    %v6312 = vadd.f32 0.0, %v6311
    %v6313 = vpop.f32.mrb[0].mxu0
    %v6314 = vpop.f32.mrb[0].mxu0
    %v6315 = vadd.f32 0.0, %v6314
    %v6316 = vpop.f32.mrb[0].mxu0
    %6317 = vmatprep.mubr.bf16.mxu0 0
    %6318 = vmatmul.mubr.bf16.gmra.mrb[0].mxu0 %v6150
    %v6319 = vpop.f32.mrb[0].mxu0
    %v6320 = vadd.f32 0.0, %v6319
    %v6321 = vpop.f32.mrb[0].mxu0
    %v6322 = vpop.f32.mrb[0].mxu0
    %v6323 = vadd.f32 0.0, %v6322
    %v6324 = vpop.f32.mrb[0].mxu0
    %6325 = vmatprep.mubr.bf16.mxu0 0
    %6326 = vmatmul.mubr.bf16.gmra.mrb[0].mxu0 %v6151
    %v6327 = vpop.f32.mrb[0].mxu0
    %v6328 = vadd.f32 0.0, %v6327
    %v6329 = vpop.f32.mrb[0].mxu0
    %v6330 = vpop.f32.mrb[0].mxu0
    %v6331 = vadd.f32 0.0, %v6330
    %v6332 = vpop.f32.mrb[0].mxu0
    %6333 = vmatprep.mubr.bf16.mxu0 0
    %6334 = vmatmul.mubr.bf16.gmra.mrb[0].mxu0 %v6152
    %v6335 = vpop.f32.mrb[0].mxu0
    %v6336 = vadd.f32 0.0, %v6335
    %v6337 = vpop.f32.mrb[0].mxu0
    %v6338 = vpop.f32.mrb[0].mxu0
    %v6339 = vadd.f32 0.0, %v6338
    %v6340 = vpop.f32.mrb[0].mxu0
    %6341 = vmatprep.mubr.bf16.mxu0 0
    %6342 = vmatmul.mubr.bf16.gmra.mrb[0].mxu0 %v6153
    %v6343 = vpop.f32.mrb[0].mxu0
    %v6344 = vadd.f32 0.0, %v6343
    %v6345 = vpop.f32.mrb[0].mxu0
    %v6346 = vpop.f32.mrb[0].mxu0
    %v6347 = vadd.f32 0.0, %v6346
    %v6348 = vpop.f32.mrb[0].mxu0
    %6349 = vmatprep.mubr.bf16.mxu0 0
    %6350 = vmatmul.mubr.bf16.gmra.mrb[0].mxu0 %v6154
    %v6351 = vpop.f32.mrb[0].mxu0
    %v6352 = vadd.f32 0.0, %v6351
    %v6353 = vpop.f32.mrb[0].mxu0
    %v6354 = vpop.f32.mrb[0].mxu0
    %v6355 = vadd.f32 0.0, %v6354
    %v6356 = vpop.f32.mrb[0].mxu0
    %6357 = vmatprep.mubr.bf16.mxu0 0
    %6358 = vmatmul.mubr.bf16.gmra.mrb[0].mxu0 %v6155
    %v6359 = vpop.f32.mrb[0].mxu0
    %v6360 = vadd.f32 0.0, %v6359
    %v6361 = vpop.f32.mrb[0].mxu0
    %v6362 = vpop.f32.mrb[0].mxu0
    %v6363 = vadd.f32 0.0, %v6362
    %v6364 = vpop.f32.mrb[0].mxu0
    %6365 = vdwg.mxu0
    %v6366 = vadd.f32 %v6086, %v6256
    %v6367 = vadd.f32 %v6087, %v6259
    %v6368 = vadd.f32 %v6088, %v6264
    %v6369 = vadd.f32 %v6089, %v6267
    %v6370 = vadd.f32 %v6090, %v6272
    %v6371 = vadd.f32 %v6091, %v6275
    %v6372 = vadd.f32 %v6092, %v6280
    %v6373 = vadd.f32 %v6093, %v6283
    %v6374 = vadd.f32 %v6094, %v6288
    %v6375 = vadd.f32 %v6095, %v6291
    %v6376 = vadd.f32 %v6096, %v6296
    %v6377 = vadd.f32 %v6097, %v6299
    %v6378 = vadd.f32 %v6098, %v6304
    %v6379 = vadd.f32 %v6099, %v6307
    %v6380 = vadd.f32 %v6100, %v6312
    %v6381 = vadd.f32 %v6101, %v6315
    %v6382 = vadd.f32 %v6102, %v6320
    %v6383 = vadd.f32 %v6103, %v6323
    %v6384 = vadd.f32 %v6104, %v6328
    %v6385 = vadd.f32 %v6105, %v6331
    %v6386 = vadd.f32 %v6106, %v6336
    %v6387 = vadd.f32 %v6107, %v6339
    %v6388 = vadd.f32 %v6108, %v6344
    %v6389 = vadd.f32 %v6109, %v6347
    %v6390 = vadd.f32 %v6110, %v6352
    %v6391 = vadd.f32 %v6111, %v6355
    %v6392 = vadd.f32 %v6112, %v6360
    %v6393 = vadd.f32 %v6113, %v6363
    %v6394 = vld [vmem:[%s4] sm:$0x1]
    %v6396 = vlaneseq
    %v6397 = vshrl.u32 %v6396, 7
    %v6398 = vsub.s32 0, %v6397
    %v6399 = vrot.slane %v6394, %v6398
    %v6401 = vadd.f32 %v6366, %v6399
    %v6402 = vadd.f32 %v6367, %v6399
    %v6403 = vadd.f32 %v6368, %v6399
    %v6404 = vadd.f32 %v6369, %v6399
    %v6405 = vadd.f32 %v6370, %v6399
    %v6406 = vadd.f32 %v6371, %v6399
    %v6407 = vadd.f32 %v6372, %v6399
    %v6408 = vadd.f32 %v6373, %v6399
    %v6409 = vadd.f32 %v6374, %v6399
    %v6410 = vadd.f32 %v6375, %v6399
    %v6411 = vadd.f32 %v6376, %v6399
    %v6412 = vadd.f32 %v6377, %v6399
    %v6413 = vadd.f32 %v6378, %v6399
    %v6414 = vadd.f32 %v6379, %v6399
    %v6415 = vadd.f32 %v6380, %v6399
    %v6416 = vadd.f32 %v6381, %v6399
    %v6417 = vadd.f32 %v6382, %v6399
    %v6418 = vadd.f32 %v6383, %v6399
    %v6419 = vadd.f32 %v6384, %v6399
    %v6420 = vadd.f32 %v6385, %v6399
    %v6421 = vadd.f32 %v6386, %v6399
    %v6422 = vadd.f32 %v6387, %v6399
    %v6423 = vadd.f32 %v6388, %v6399
    %v6424 = vadd.f32 %v6389, %v6399
    %v6425 = vadd.f32 %v6390, %v6399
    %v6426 = vadd.f32 %v6391, %v6399
    %v6427 = vadd.f32 %v6392, %v6399
    %v6428 = vadd.f32 %v6393, %v6399
    %v6429 = vmax.f32 %v6401, 0.0
    %v6430 = vmax.f32 %v6402, 0.0
    %v6431 = vmax.f32 %v6403, 0.0
    %v6432 = vmax.f32 %v6404, 0.0
    %v6433 = vmax.f32 %v6405, 0.0
    %v6434 = vmax.f32 %v6406, 0.0
    %v6435 = vmax.f32 %v6407, 0.0
    %v6436 = vmax.f32 %v6408, 0.0
    %v6437 = vmax.f32 %v6409, 0.0
    %v6438 = vmax.f32 %v6410, 0.0
    %v6439 = vmax.f32 %v6411, 0.0
    %v6440 = vmax.f32 %v6412, 0.0
    %v6441 = vmax.f32 %v6413, 0.0
    %v6442 = vmax.f32 %v6414, 0.0
    %v6443 = vmax.f32 %v6415, 0.0
    %v6444 = vmax.f32 %v6416, 0.0
    %v6445 = vmax.f32 %v6417, 0.0
    %v6446 = vmax.f32 %v6418, 0.0
    %v6447 = vmax.f32 %v6419, 0.0
    %v6448 = vmax.f32 %v6420, 0.0
    %v6449 = vmax.f32 %v6421, 0.0
    %v6450 = vmax.f32 %v6422, 0.0
    %v6451 = vmax.f32 %v6423, 0.0
    %v6452 = vmax.f32 %v6424, 0.0
    %v6453 = vmax.f32 %v6425, 0.0
    %v6454 = vmax.f32 %v6426, 0.0
    %v6455 = vmax.f32 %v6427, 0.0
    %v6456 = vmax.f32 %v6428, 0.0
    %6457 = vst [vmem:[#allocation3] sm:$0xff] %v6429
    %6458 = vst [vmem:[#allocation3 + $0x8] sm:$0xff] %v6430
    %6459 = vst [vmem:[#allocation3 + $0x10] sm:$0xff] %v6431
    %6460 = vst [vmem:[#allocation3 + $0x18] sm:$0xff] %v6432
    %6461 = vst [vmem:[#allocation3 + $0x20] sm:$0xff] %v6433
    %6462 = vst [vmem:[#allocation3 + $0x28] sm:$0xff] %v6434
    %6463 = vst [vmem:[#allocation3 + $0x30] sm:$0xff] %v6435
    %6464 = vst [vmem:[#allocation3 + $0x38] sm:$0xff] %v6436
    %6465 = vst [vmem:[#allocation3 + $0x40] sm:$0xff] %v6437
    %6466 = vst [vmem:[#allocation3 + $0x48] sm:$0xff] %v6438
    %6467 = vst [vmem:[#allocation3 + $0x50] sm:$0xff] %v6439
    %6468 = vst [vmem:[#allocation3 + $0x58] sm:$0xff] %v6440
    %6469 = vst [vmem:[#allocation3 + $0x60] sm:$0xff] %v6441
    %6470 = vst [vmem:[#allocation3 + $0x68] sm:$0xff] %v6442
    %6471 = vst [vmem:[#allocation3 + $0x70] sm:$0xff] %v6443
    %6472 = vst [vmem:[#allocation3 + $0x78] sm:$0xff] %v6444
    %6473 = vst [vmem:[#allocation3 + $0x80] sm:$0xff] %v6445
    %6474 = vst [vmem:[#allocation3 + $0x88] sm:$0xff] %v6446
    %6475 = vst [vmem:[#allocation3 + $0x90] sm:$0xff] %v6447
    %6476 = vst [vmem:[#allocation3 + $0x98] sm:$0xff] %v6448
    %6477 = vst [vmem:[#allocation3 + $0xa0] sm:$0xff] %v6449
    %6478 = vst [vmem:[#allocation3 + $0xa8] sm:$0xff] %v6450
    %6479 = vst [vmem:[#allocation3 + $0xb0] sm:$0xff] %v6451
    %6480 = vst [vmem:[#allocation3 + $0xb8] sm:$0xff] %v6452
    %6481 = vst [vmem:[#allocation3 + $0xc0] sm:$0xff] %v6453
    %6482 = vst [vmem:[#allocation3 + $0xc8] sm:$0xff] %v6454
    %6483 = vst [vmem:[#allocation3 + $0xd0] sm:$0xff] %v6455
    %6484 = vst [vmem:[#allocation3 + $0xd8] sm:$0xff] %v6456
    %6485 = vst [vmem:[#allocation3 + $0xe0] sm:$0xff] 0.0
    %6486 = vst [vmem:[#allocation3 + $0xe8] sm:$0xff] 0.0
    %v6487 = vld [vmem:[#allocation3] sm:$0xff]
    %v6488 = vld [vmem:[#allocation3 + $0x8] sm:$0xff]
    %v6489 = vld [vmem:[#allocation3 + $0x10] sm:$0xff]
    %v6490 = vld [vmem:[#allocation3 + $0x18] sm:$0xff]
    %v6491 = vld [vmem:[#allocation3 + $0x20] sm:$0xff]
    %v6492 = vld [vmem:[#allocation3 + $0x28] sm:$0xff]
    %v6493 = vld [vmem:[#allocation3 + $0x30] sm:$0xff]
    %v6494 = vld [vmem:[#allocation3 + $0x38] sm:$0xff]
    %v6495 = vld [vmem:[#allocation3 + $0x40] sm:$0xff]
    %v6496 = vld [vmem:[#allocation3 + $0x48] sm:$0xff]
    %v6497 = vld [vmem:[#allocation3 + $0x50] sm:$0xff]
    %v6498 = vld [vmem:[#allocation3 + $0x58] sm:$0xff]
    %v6499 = vld [vmem:[#allocation3 + $0x60] sm:$0xff]
    %v6500 = vld [vmem:[#allocation3 + $0x68] sm:$0xff]
    %v6501 = vld [vmem:[#allocation3 + $0x70] sm:$0xff]
    %v6502 = vld [vmem:[#allocation3 + $0x78] sm:$0xff]
    %v6503 = vld [vmem:[#allocation3 + $0x80] sm:$0xff]
    %v6504 = vld [vmem:[#allocation3 + $0x88] sm:$0xff]
    %v6505 = vld [vmem:[#allocation3 + $0x90] sm:$0xff]
    %v6506 = vld [vmem:[#allocation3 + $0x98] sm:$0xff]
    %v6507 = vld [vmem:[#allocation3 + $0xa0] sm:$0xff]
    %v6508 = vld [vmem:[#allocation3 + $0xa8] sm:$0xff]
    %v6509 = vld [vmem:[#allocation3 + $0xb0] sm:$0xff]
    %v6510 = vld [vmem:[#allocation3 + $0xb8] sm:$0xff]
    %v6511 = vpack.c.bf16 %v6488, %v6487
    %v6512 = vpack.c.bf16 %v6490, %v6489
    %v6513 = vpack.c.bf16 %v6492, %v6491
    %v6514 = vpack.c.bf16 %v6494, %v6493
    %v6515 = vpack.c.bf16 %v6496, %v6495
    %v6516 = vpack.c.bf16 %v6498, %v6497
    %v6517 = vpack.c.bf16 %v6500, %v6499
    %v6518 = vpack.c.bf16 %v6502, %v6501
    %v6519 = vpack.c.bf16 %v6504, %v6503
    %v6520 = vpack.c.bf16 %v6506, %v6505
    %v6521 = vpack.c.bf16 %v6508, %v6507
    %v6522 = vpack.c.bf16 %v6510, %v6509
    %v6523 = vld [vmem:[%s5] sm:$0xf]
    %v6524 = vld [vmem:[%s5 + $0x4] sm:$0xf]
    %v6525 = vld [vmem:[%s5 + $0x8] sm:$0xf]
    %v6526 = vld [vmem:[%s5 + $0xc] sm:$0xf]
    %v6527 = vld [vmem:[%s5 + $0x10] sm:$0xf]
    %v6528 = vld [vmem:[%s5 + $0x14] sm:$0xf]
    %v6529 = vld [vmem:[%s5 + $0x18] sm:$0xf]
    %v6530 = vld [vmem:[%s5 + $0x1c] sm:$0xf]
    %v6531 = vld [vmem:[%s5 + $0x20] sm:$0xf]
    %v6532 = vld [vmem:[%s5 + $0x24] sm:$0xf]
    %v6533 = vld [vmem:[%s5 + $0x28] sm:$0xf]
    %v6534 = vld [vmem:[%s5 + $0x2c] sm:$0xf]
    %v6535 = vld [vmem:[%s5 + $0x30] sm:$0xf]
    %v6536 = vld [vmem:[%s5 + $0x34] sm:$0xf]
    %v6537 = vld [vmem:[%s5 + $0x38] sm:$0xf]
    %v6538 = vld [vmem:[%s5 + $0x3c] sm:$0xf]
    %v6539 = vld [vmem:[#allocation3 + $0x1] sm:$0xff]
    %v6540 = vld [vmem:[#allocation3 + $0x9] sm:$0xff]
    %v6541 = vld [vmem:[#allocation3 + $0x11] sm:$0xff]
    %v6542 = vld [vmem:[#allocation3 + $0x19] sm:$0xff]
    %v6543 = vld [vmem:[#allocation3 + $0x21] sm:$0xff]
    %v6544 = vld [vmem:[#allocation3 + $0x29] sm:$0xff]
    %v6545 = vld [vmem:[#allocation3 + $0x31] sm:$0xff]
    %v6546 = vld [vmem:[#allocation3 + $0x39] sm:$0xff]
    %v6547 = vld [vmem:[#allocation3 + $0x41] sm:$0xff]
    %v6548 = vld [vmem:[#allocation3 + $0x49] sm:$0xff]
    %v6549 = vld [vmem:[#allocation3 + $0x51] sm:$0xff]
    %v6550 = vld [vmem:[#allocation3 + $0x59] sm:$0xff]
    %v6551 = vld [vmem:[#allocation3 + $0x61] sm:$0xff]
    %v6552 = vld [vmem:[#allocation3 + $0x69] sm:$0xff]
    %v6553 = vld [vmem:[#allocation3 + $0x71] sm:$0xff]
    %v6554 = vld [vmem:[#allocation3 + $0x79] sm:$0xff]
    %v6555 = vld [vmem:[#allocation3 + $0x81] sm:$0xff]
    %v6556 = vld [vmem:[#allocation3 + $0x89] sm:$0xff]
    %v6557 = vld [vmem:[#allocation3 + $0x91] sm:$0xff]
    %v6558 = vld [vmem:[#allocation3 + $0x99] sm:$0xff]
    %v6559 = vld [vmem:[#allocation3 + $0xa1] sm:$0xff]
    %v6560 = vld [vmem:[#allocation3 + $0xa9] sm:$0xff]
    %v6561 = vld [vmem:[#allocation3 + $0xb1] sm:$0xff]
    %v6562 = vld [vmem:[#allocation3 + $0xb9] sm:$0xff]
    %v6563 = vpack.c.bf16 %v6540, %v6539
    %v6564 = vpack.c.bf16 %v6542, %v6541
    %v6565 = vpack.c.bf16 %v6544, %v6543
    %v6566 = vpack.c.bf16 %v6546, %v6545
    %v6567 = vpack.c.bf16 %v6548, %v6547
    %v6568 = vpack.c.bf16 %v6550, %v6549
    %v6569 = vpack.c.bf16 %v6552, %v6551
    %v6570 = vpack.c.bf16 %v6554, %v6553
    %v6571 = vpack.c.bf16 %v6556, %v6555
    %v6572 = vpack.c.bf16 %v6558, %v6557
    %v6573 = vpack.c.bf16 %v6560, %v6559
    %v6574 = vpack.c.bf16 %v6562, %v6561
    %s6575 = scalar_lea.vmem %s5, 64
    %v6576 = vld [vmem:[%s6575] sm:$0xf]
    %v6577 = vld [vmem:[%s6575 + $0x4] sm:$0xf]
    %v6578 = vld [vmem:[%s6575 + $0x8] sm:$0xf]
    %v6579 = vld [vmem:[%s6575 + $0xc] sm:$0xf]
    %v6580 = vld [vmem:[%s6575 + $0x10] sm:$0xf]
    %v6581 = vld [vmem:[%s6575 + $0x14] sm:$0xf]
    %v6582 = vld [vmem:[%s6575 + $0x18] sm:$0xf]
    %v6583 = vld [vmem:[%s6575 + $0x1c] sm:$0xf]
    %v6584 = vld [vmem:[%s6575 + $0x20] sm:$0xf]
    %v6585 = vld [vmem:[%s6575 + $0x24] sm:$0xf]
    %v6586 = vld [vmem:[%s6575 + $0x28] sm:$0xf]
    %v6587 = vld [vmem:[%s6575 + $0x2c] sm:$0xf]
    %v6588 = vld [vmem:[%s6575 + $0x30] sm:$0xf]
    %v6589 = vld [vmem:[%s6575 + $0x34] sm:$0xf]
    %v6590 = vld [vmem:[%s6575 + $0x38] sm:$0xf]
    %v6591 = vld [vmem:[%s6575 + $0x3c] sm:$0xf]
    %v6608 = vunpack.c.l.b16 %v6576
    %v6609 = vunpack.c.l.b16 %v6577
    %v6610 = vunpack.c.l.b16 %v6578
    %v6611 = vunpack.c.l.b16 %v6579
    %v6612 = vunpack.c.l.b16 %v6580
    %v6613 = vunpack.c.l.b16 %v6581
    %v6614 = vunpack.c.l.b16 %v6582
    %v6615 = vunpack.c.l.b16 %v6583
    %v6616 = vunpack.c.l.b16 %v6584
    %v6617 = vunpack.c.l.b16 %v6585
    %v6618 = vunpack.c.l.b16 %v6586
    %v6619 = vunpack.c.l.b16 %v6587
    %v6620 = vunpack.c.l.b16 %v6588
    %v6621 = vunpack.c.l.b16 %v6589
    %v6622 = vunpack.c.l.b16 %v6590
    %v6623 = vunpack.c.l.b16 %v6591
    %v6624 = vpack.c.b16 %v6609, %v6608
    %v6625 = vpack.c.b16 %v6611, %v6610
    %v6626 = vpack.c.b16 %v6613, %v6612
    %v6627 = vpack.c.b16 %v6615, %v6614
    %v6628 = vpack.c.b16 %v6617, %v6616
    %v6629 = vpack.c.b16 %v6619, %v6618
    %v6630 = vpack.c.b16 %v6621, %v6620
    %v6631 = vpack.c.b16 %v6623, %v6622
    %6640 = vmatprep.subr.bf16.mxu0 0
    %6641 = vmatpush1.bf16.msra.mxu0 %v6624
    %6642 = vmatprep.subr.bf16.mxu0 0
    %6643 = vmatpush1.bf16.msra.mxu0 %v6625
    %6644 = vmatprep.subr.bf16.mxu0 0
    %6645 = vmatpush1.bf16.msra.mxu0 %v6626
    %6646 = vmatprep.subr.bf16.mxu0 0
    %6647 = vmatpush1.bf16.msra.mxu0 %v6627
    %6648 = vmatprep.subr.bf16.mxu0 0
    %6649 = vmatpush1.bf16.msra.mxu0 %v6628
    %6650 = vmatprep.subr.bf16.mxu0 0
    %6651 = vmatpush1.bf16.msra.mxu0 %v6629
    %6652 = vmatprep.subr.bf16.mxu0 0
    %6653 = vmatpush1.bf16.msra.mxu0 %v6630
    %6654 = vmatprep.subr.bf16.mxu0 0
    %6655 = vmatpush1.bf16.msra.mxu0 %v6631
    %6656 = vmatprep.subr.bf16.mxu0 0
    %6657 = vmatpush1.bf16.msra.mxu0 0
    %6658 = vmatprep.subr.bf16.mxu0 0
    %6659 = vmatpush1.bf16.msra.mxu0 0
    %6660 = vmatprep.subr.bf16.mxu0 0
    %6661 = vmatpush1.bf16.msra.mxu0 0
    %6662 = vmatprep.subr.bf16.mxu0 0
    %6663 = vmatpush1.bf16.msra.mxu0 0
    %6664 = vmatprep.subr.bf16.mxu0 0
    %6665 = vmatpush1.bf16.msra.mxu0 0
    %6666 = vmatprep.subr.bf16.mxu0 0
    %6667 = vmatpush1.bf16.msra.mxu0 0
    %6668 = vmatprep.subr.bf16.mxu0 0
    %6669 = vmatpush1.bf16.msra.mxu0 0
    %6670 = vmatprep.subr.bf16.mxu0 0
    %6671 = vmatpush1.bf16.msra.mxu0 0
    %6672 = vmatprep.mubr.bf16.mxu0 0
    %6673 = vmatmul.mubr.bf16.gmra.mrb[0].mxu0 %v6563
    %v6674 = vpop.f32.mrb[0].mxu0
    %v6675 = vadd.f32 0.0, %v6674
    %v6676 = vpop.f32.mrb[0].mxu0
    %v6677 = vpop.f32.mrb[0].mxu0
    %v6678 = vadd.f32 0.0, %v6677
    %v6679 = vpop.f32.mrb[0].mxu0
    %6680 = vmatprep.mubr.bf16.mxu0 0
    %6681 = vmatmul.mubr.bf16.gmra.mrb[0].mxu0 %v6564
    %v6682 = vpop.f32.mrb[0].mxu0
    %v6683 = vadd.f32 0.0, %v6682
    %v6684 = vpop.f32.mrb[0].mxu0
    %v6685 = vpop.f32.mrb[0].mxu0
    %v6686 = vadd.f32 0.0, %v6685
    %v6687 = vpop.f32.mrb[0].mxu0
    %6688 = vmatprep.mubr.bf16.mxu0 0
    %6689 = vmatmul.mubr.bf16.gmra.mrb[0].mxu0 %v6565
    %v6690 = vpop.f32.mrb[0].mxu0
    %v6691 = vadd.f32 0.0, %v6690
    %v6692 = vpop.f32.mrb[0].mxu0
    %v6693 = vpop.f32.mrb[0].mxu0
    %v6694 = vadd.f32 0.0, %v6693
    %v6695 = vpop.f32.mrb[0].mxu0
    %6696 = vmatprep.mubr.bf16.mxu0 0
    %6697 = vmatmul.mubr.bf16.gmra.mrb[0].mxu0 %v6566
    %v6698 = vpop.f32.mrb[0].mxu0
    %v6699 = vadd.f32 0.0, %v6698
    %v6700 = vpop.f32.mrb[0].mxu0
    %v6701 = vpop.f32.mrb[0].mxu0
    %v6702 = vadd.f32 0.0, %v6701
    %v6703 = vpop.f32.mrb[0].mxu0
    %6704 = vmatprep.mubr.bf16.mxu0 0
    %6705 = vmatmul.mubr.bf16.gmra.mrb[0].mxu0 %v6567
    %v6706 = vpop.f32.mrb[0].mxu0
    %v6707 = vadd.f32 0.0, %v6706
    %v6708 = vpop.f32.mrb[0].mxu0
    %v6709 = vpop.f32.mrb[0].mxu0
    %v6710 = vadd.f32 0.0, %v6709
    %v6711 = vpop.f32.mrb[0].mxu0
    %6712 = vmatprep.mubr.bf16.mxu0 0
    %6713 = vmatmul.mubr.bf16.gmra.mrb[0].mxu0 %v6568
    %v6714 = vpop.f32.mrb[0].mxu0
    %v6715 = vadd.f32 0.0, %v6714
    %v6716 = vpop.f32.mrb[0].mxu0
    %v6717 = vpop.f32.mrb[0].mxu0
    %v6718 = vadd.f32 0.0, %v6717
    %v6719 = vpop.f32.mrb[0].mxu0
    %6720 = vmatprep.mubr.bf16.mxu0 0
    %6721 = vmatmul.mubr.bf16.gmra.mrb[0].mxu0 %v6569
    %v6722 = vpop.f32.mrb[0].mxu0
    %v6723 = vadd.f32 0.0, %v6722
    %v6724 = vpop.f32.mrb[0].mxu0
    %v6725 = vpop.f32.mrb[0].mxu0
    %v6726 = vadd.f32 0.0, %v6725
    %v6727 = vpop.f32.mrb[0].mxu0
    %6728 = vmatprep.mubr.bf16.mxu0 0
    %6729 = vmatmul.mubr.bf16.gmra.mrb[0].mxu0 %v6570
    %v6730 = vpop.f32.mrb[0].mxu0
    %v6731 = vadd.f32 0.0, %v6730
    %v6732 = vpop.f32.mrb[0].mxu0
    %v6733 = vpop.f32.mrb[0].mxu0
    %v6734 = vadd.f32 0.0, %v6733
    %v6735 = vpop.f32.mrb[0].mxu0
    %6736 = vmatprep.mubr.bf16.mxu0 0
    %6737 = vmatmul.mubr.bf16.gmra.mrb[0].mxu0 %v6571
    %v6738 = vpop.f32.mrb[0].mxu0
    %v6739 = vadd.f32 0.0, %v6738
    %v6740 = vpop.f32.mrb[0].mxu0
    %v6741 = vpop.f32.mrb[0].mxu0
    %v6742 = vadd.f32 0.0, %v6741
    %v6743 = vpop.f32.mrb[0].mxu0
    %6744 = vmatprep.mubr.bf16.mxu0 0
    %6745 = vmatmul.mubr.bf16.gmra.mrb[0].mxu0 %v6572
    %v6746 = vpop.f32.mrb[0].mxu0
    %v6747 = vadd.f32 0.0, %v6746
    %v6748 = vpop.f32.mrb[0].mxu0
    %v6749 = vpop.f32.mrb[0].mxu0
    %v6750 = vadd.f32 0.0, %v6749
    %v6751 = vpop.f32.mrb[0].mxu0
    %6752 = vmatprep.mubr.bf16.mxu0 0
    %6753 = vmatmul.mubr.bf16.gmra.mrb[0].mxu0 %v6573
    %v6754 = vpop.f32.mrb[0].mxu0
    %v6755 = vadd.f32 0.0, %v6754
    %v6756 = vpop.f32.mrb[0].mxu0
    %v6757 = vpop.f32.mrb[0].mxu0
    %v6758 = vadd.f32 0.0, %v6757
    %v6759 = vpop.f32.mrb[0].mxu0
    %6760 = vmatprep.mubr.bf16.mxu0 0
    %6761 = vmatmul.mubr.bf16.gmra.mrb[0].mxu0 %v6574
    %v6762 = vpop.f32.mrb[0].mxu0
    %v6763 = vadd.f32 0.0, %v6762
    %v6764 = vpop.f32.mrb[0].mxu0
    %v6765 = vpop.f32.mrb[0].mxu0
    %v6766 = vadd.f32 0.0, %v6765
    %v6767 = vpop.f32.mrb[0].mxu0
    %6768 = vdwg.mxu0
    %v6785 = vunpack.c.l.b16 %v6523
    %v6786 = vunpack.c.l.b16 %v6524
    %v6787 = vunpack.c.l.b16 %v6525
    %v6788 = vunpack.c.l.b16 %v6526
    %v6789 = vunpack.c.l.b16 %v6527
    %v6790 = vunpack.c.l.b16 %v6528
    %v6791 = vunpack.c.l.b16 %v6529
    %v6792 = vunpack.c.l.b16 %v6530
    %v6793 = vunpack.c.l.b16 %v6531
    %v6794 = vunpack.c.l.b16 %v6532
    %v6795 = vunpack.c.l.b16 %v6533
    %v6796 = vunpack.c.l.b16 %v6534
    %v6797 = vunpack.c.l.b16 %v6535
    %v6798 = vunpack.c.l.b16 %v6536
    %v6799 = vunpack.c.l.b16 %v6537
    %v6800 = vunpack.c.l.b16 %v6538
    %v6801 = vpack.c.b16 %v6786, %v6785
    %v6802 = vpack.c.b16 %v6788, %v6787
    %v6803 = vpack.c.b16 %v6790, %v6789
    %v6804 = vpack.c.b16 %v6792, %v6791
    %v6805 = vpack.c.b16 %v6794, %v6793
    %v6806 = vpack.c.b16 %v6796, %v6795
    %v6807 = vpack.c.b16 %v6798, %v6797
    %v6808 = vpack.c.b16 %v6800, %v6799
    %6817 = vmatprep.subr.bf16.mxu0 0
    %6818 = vmatpush1.bf16.msra.mxu0 %v6801
    %6819 = vmatprep.subr.bf16.mxu0 0
    %6820 = vmatpush1.bf16.msra.mxu0 %v6802
    %6821 = vmatprep.subr.bf16.mxu0 0
    %6822 = vmatpush1.bf16.msra.mxu0 %v6803
    %6823 = vmatprep.subr.bf16.mxu0 0
    %6824 = vmatpush1.bf16.msra.mxu0 %v6804
    %6825 = vmatprep.subr.bf16.mxu0 0
    %6826 = vmatpush1.bf16.msra.mxu0 %v6805
    %6827 = vmatprep.subr.bf16.mxu0 0
    %6828 = vmatpush1.bf16.msra.mxu0 %v6806
    %6829 = vmatprep.subr.bf16.mxu0 0
    %6830 = vmatpush1.bf16.msra.mxu0 %v6807
    %6831 = vmatprep.subr.bf16.mxu0 0
    %6832 = vmatpush1.bf16.msra.mxu0 %v6808
    %6833 = vmatprep.subr.bf16.mxu0 0
    %6834 = vmatpush1.bf16.msra.mxu0 0
    %6835 = vmatprep.subr.bf16.mxu0 0
    %6836 = vmatpush1.bf16.msra.mxu0 0
    %6837 = vmatprep.subr.bf16.mxu0 0
    %6838 = vmatpush1.bf16.msra.mxu0 0
    %6839 = vmatprep.subr.bf16.mxu0 0
    %6840 = vmatpush1.bf16.msra.mxu0 0
    %6841 = vmatprep.subr.bf16.mxu0 0
    %6842 = vmatpush1.bf16.msra.mxu0 0
    %6843 = vmatprep.subr.bf16.mxu0 0
    %6844 = vmatpush1.bf16.msra.mxu0 0
    %6845 = vmatprep.subr.bf16.mxu0 0
    %6846 = vmatpush1.bf16.msra.mxu0 0
    %6847 = vmatprep.subr.bf16.mxu0 0
    %6848 = vmatpush1.bf16.msra.mxu0 0
    %6849 = vmatprep.mubr.bf16.mxu0 0
    %6850 = vmatmul.mubr.bf16.gmra.mrb[0].mxu0 %v6511
    %v6851 = vpop.f32.mrb[0].mxu0
    %v6852 = vadd.f32 %v6675, %v6851
    %v6853 = vpop.f32.mrb[0].mxu0
    %v6854 = vpop.f32.mrb[0].mxu0
    %v6855 = vadd.f32 %v6678, %v6854
    %v6856 = vpop.f32.mrb[0].mxu0
    %6857 = vmatprep.mubr.bf16.mxu0 0
    %6858 = vmatmul.mubr.bf16.gmra.mrb[0].mxu0 %v6512
    %v6859 = vpop.f32.mrb[0].mxu0
    %v6860 = vadd.f32 %v6683, %v6859
    %v6861 = vpop.f32.mrb[0].mxu0
    %v6862 = vpop.f32.mrb[0].mxu0
    %v6863 = vadd.f32 %v6686, %v6862
    %v6864 = vpop.f32.mrb[0].mxu0
    %6865 = vmatprep.mubr.bf16.mxu0 0
    %6866 = vmatmul.mubr.bf16.gmra.mrb[0].mxu0 %v6513
    %v6867 = vpop.f32.mrb[0].mxu0
    %v6868 = vadd.f32 %v6691, %v6867
    %v6869 = vpop.f32.mrb[0].mxu0
    %v6870 = vpop.f32.mrb[0].mxu0
    %v6871 = vadd.f32 %v6694, %v6870
    %v6872 = vpop.f32.mrb[0].mxu0
    %6873 = vmatprep.mubr.bf16.mxu0 0
    %6874 = vmatmul.mubr.bf16.gmra.mrb[0].mxu0 %v6514
    %v6875 = vpop.f32.mrb[0].mxu0
    %v6876 = vadd.f32 %v6699, %v6875
    %v6877 = vpop.f32.mrb[0].mxu0
    %v6878 = vpop.f32.mrb[0].mxu0
    %v6879 = vadd.f32 %v6702, %v6878
    %v6880 = vpop.f32.mrb[0].mxu0
    %6881 = vmatprep.mubr.bf16.mxu0 0
    %6882 = vmatmul.mubr.bf16.gmra.mrb[0].mxu0 %v6515
    %v6883 = vpop.f32.mrb[0].mxu0
    %v6884 = vadd.f32 %v6707, %v6883
    %v6885 = vpop.f32.mrb[0].mxu0
    %v6886 = vpop.f32.mrb[0].mxu0
    %v6887 = vadd.f32 %v6710, %v6886
    %v6888 = vpop.f32.mrb[0].mxu0
    %6889 = vmatprep.mubr.bf16.mxu0 0
    %6890 = vmatmul.mubr.bf16.gmra.mrb[0].mxu0 %v6516
    %v6891 = vpop.f32.mrb[0].mxu0
    %v6892 = vadd.f32 %v6715, %v6891
    %v6893 = vpop.f32.mrb[0].mxu0
    %v6894 = vpop.f32.mrb[0].mxu0
    %v6895 = vadd.f32 %v6718, %v6894
    %v6896 = vpop.f32.mrb[0].mxu0
    %6897 = vmatprep.mubr.bf16.mxu0 0
    %6898 = vmatmul.mubr.bf16.gmra.mrb[0].mxu0 %v6517
    %v6899 = vpop.f32.mrb[0].mxu0
    %v6900 = vadd.f32 %v6723, %v6899
    %v6901 = vpop.f32.mrb[0].mxu0
    %v6902 = vpop.f32.mrb[0].mxu0
    %v6903 = vadd.f32 %v6726, %v6902
    %v6904 = vpop.f32.mrb[0].mxu0
    %6905 = vmatprep.mubr.bf16.mxu0 0
    %6906 = vmatmul.mubr.bf16.gmra.mrb[0].mxu0 %v6518
    %v6907 = vpop.f32.mrb[0].mxu0
    %v6908 = vadd.f32 %v6731, %v6907
    %v6909 = vpop.f32.mrb[0].mxu0
    %v6910 = vpop.f32.mrb[0].mxu0
    %v6911 = vadd.f32 %v6734, %v6910
    %v6912 = vpop.f32.mrb[0].mxu0
    %6913 = vmatprep.mubr.bf16.mxu0 0
    %6914 = vmatmul.mubr.bf16.gmra.mrb[0].mxu0 %v6519
    %v6915 = vpop.f32.mrb[0].mxu0
    %v6916 = vadd.f32 %v6739, %v6915
    %v6917 = vpop.f32.mrb[0].mxu0
    %v6918 = vpop.f32.mrb[0].mxu0
    %v6919 = vadd.f32 %v6742, %v6918
    %v6920 = vpop.f32.mrb[0].mxu0
    %6921 = vmatprep.mubr.bf16.mxu0 0
    %6922 = vmatmul.mubr.bf16.gmra.mrb[0].mxu0 %v6520
    %v6923 = vpop.f32.mrb[0].mxu0
    %v6924 = vadd.f32 %v6747, %v6923
    %v6925 = vpop.f32.mrb[0].mxu0
    %v6926 = vpop.f32.mrb[0].mxu0
    %v6927 = vadd.f32 %v6750, %v6926
    %v6928 = vpop.f32.mrb[0].mxu0
    %6929 = vmatprep.mubr.bf16.mxu0 0
    %6930 = vmatmul.mubr.bf16.gmra.mrb[0].mxu0 %v6521
    %v6931 = vpop.f32.mrb[0].mxu0
    %v6932 = vadd.f32 %v6755, %v6931
    %v6933 = vpop.f32.mrb[0].mxu0
    %v6934 = vpop.f32.mrb[0].mxu0
    %v6935 = vadd.f32 %v6758, %v6934
    %v6936 = vpop.f32.mrb[0].mxu0
    %6937 = vmatprep.mubr.bf16.mxu0 0
    %6938 = vmatmul.mubr.bf16.gmra.mrb[0].mxu0 %v6522
    %v6939 = vpop.f32.mrb[0].mxu0
    %v6940 = vadd.f32 %v6763, %v6939
    %v6941 = vpop.f32.mrb[0].mxu0
    %v6942 = vpop.f32.mrb[0].mxu0
    %v6943 = vadd.f32 %v6766, %v6942
    %v6944 = vpop.f32.mrb[0].mxu0
    %6945 = vdwg.mxu0
    %v6946 = vld [vmem:[#allocation3 + $0x2] sm:$0xff]
    %v6947 = vld [vmem:[#allocation3 + $0xa] sm:$0xff]
    %v6948 = vld [vmem:[#allocation3 + $0x12] sm:$0xff]
    %v6949 = vld [vmem:[#allocation3 + $0x1a] sm:$0xff]
    %v6950 = vld [vmem:[#allocation3 + $0x22] sm:$0xff]
    %v6951 = vld [vmem:[#allocation3 + $0x2a] sm:$0xff]
    %v6952 = vld [vmem:[#allocation3 + $0x32] sm:$0xff]
    %v6953 = vld [vmem:[#allocation3 + $0x3a] sm:$0xff]
    %v6954 = vld [vmem:[#allocation3 + $0x42] sm:$0xff]
    %v6955 = vld [vmem:[#allocation3 + $0x4a] sm:$0xff]
    %v6956 = vld [vmem:[#allocation3 + $0x52] sm:$0xff]
    %v6957 = vld [vmem:[#allocation3 + $0x5a] sm:$0xff]
    %v6958 = vld [vmem:[#allocation3 + $0x62] sm:$0xff]
    %v6959 = vld [vmem:[#allocation3 + $0x6a] sm:$0xff]
    %v6960 = vld [vmem:[#allocation3 + $0x72] sm:$0xff]
    %v6961 = vld [vmem:[#allocation3 + $0x7a] sm:$0xff]
    %v6962 = vld [vmem:[#allocation3 + $0x82] sm:$0xff]
    %v6963 = vld [vmem:[#allocation3 + $0x8a] sm:$0xff]
    %v6964 = vld [vmem:[#allocation3 + $0x92] sm:$0xff]
    %v6965 = vld [vmem:[#allocation3 + $0x9a] sm:$0xff]
    %v6966 = vld [vmem:[#allocation3 + $0xa2] sm:$0xff]
    %v6967 = vld [vmem:[#allocation3 + $0xaa] sm:$0xff]
    %v6968 = vld [vmem:[#allocation3 + $0xb2] sm:$0xff]
    %v6969 = vld [vmem:[#allocation3 + $0xba] sm:$0xff]
    %v6970 = vpack.c.bf16 %v6947, %v6946
    %v6971 = vpack.c.bf16 %v6949, %v6948
    %v6972 = vpack.c.bf16 %v6951, %v6950
    %v6973 = vpack.c.bf16 %v6953, %v6952
    %v6974 = vpack.c.bf16 %v6955, %v6954
    %v6975 = vpack.c.bf16 %v6957, %v6956
    %v6976 = vpack.c.bf16 %v6959, %v6958
    %v6977 = vpack.c.bf16 %v6961, %v6960
    %v6978 = vpack.c.bf16 %v6963, %v6962
    %v6979 = vpack.c.bf16 %v6965, %v6964
    %v6980 = vpack.c.bf16 %v6967, %v6966
    %v6981 = vpack.c.bf16 %v6969, %v6968
    %s6982 = scalar_lea.vmem %s5, 128
    %v6983 = vld [vmem:[%s6982] sm:$0xf]
    %v6984 = vld [vmem:[%s6982 + $0x4] sm:$0xf]
    %v6985 = vld [vmem:[%s6982 + $0x8] sm:$0xf]
    %v6986 = vld [vmem:[%s6982 + $0xc] sm:$0xf]
    %v6987 = vld [vmem:[%s6982 + $0x10] sm:$0xf]
    %v6988 = vld [vmem:[%s6982 + $0x14] sm:$0xf]
    %v6989 = vld [vmem:[%s6982 + $0x18] sm:$0xf]
    %v6990 = vld [vmem:[%s6982 + $0x1c] sm:$0xf]
    %v6991 = vld [vmem:[%s6982 + $0x20] sm:$0xf]
    %v6992 = vld [vmem:[%s6982 + $0x24] sm:$0xf]
    %v6993 = vld [vmem:[%s6982 + $0x28] sm:$0xf]
    %v6994 = vld [vmem:[%s6982 + $0x2c] sm:$0xf]
    %v6995 = vld [vmem:[%s6982 + $0x30] sm:$0xf]
    %v6996 = vld [vmem:[%s6982 + $0x34] sm:$0xf]
    %v6997 = vld [vmem:[%s6982 + $0x38] sm:$0xf]
    %v6998 = vld [vmem:[%s6982 + $0x3c] sm:$0xf]
    %v7015 = vunpack.c.l.b16 %v6983
    %v7016 = vunpack.c.l.b16 %v6984
    %v7017 = vunpack.c.l.b16 %v6985
    %v7018 = vunpack.c.l.b16 %v6986
    %v7019 = vunpack.c.l.b16 %v6987
    %v7020 = vunpack.c.l.b16 %v6988
    %v7021 = vunpack.c.l.b16 %v6989
    %v7022 = vunpack.c.l.b16 %v6990
    %v7023 = vunpack.c.l.b16 %v6991
    %v7024 = vunpack.c.l.b16 %v6992
    %v7025 = vunpack.c.l.b16 %v6993
    %v7026 = vunpack.c.l.b16 %v6994
    %v7027 = vunpack.c.l.b16 %v6995
    %v7028 = vunpack.c.l.b16 %v6996
    %v7029 = vunpack.c.l.b16 %v6997
    %v7030 = vunpack.c.l.b16 %v6998
    %v7031 = vpack.c.b16 %v7016, %v7015
    %v7032 = vpack.c.b16 %v7018, %v7017
    %v7033 = vpack.c.b16 %v7020, %v7019
    %v7034 = vpack.c.b16 %v7022, %v7021
    %v7035 = vpack.c.b16 %v7024, %v7023
    %v7036 = vpack.c.b16 %v7026, %v7025
    %v7037 = vpack.c.b16 %v7028, %v7027
    %v7038 = vpack.c.b16 %v7030, %v7029
    %7047 = vmatprep.subr.bf16.mxu0 0
    %7048 = vmatpush1.bf16.msra.mxu0 %v7031
    %7049 = vmatprep.subr.bf16.mxu0 0
    %7050 = vmatpush1.bf16.msra.mxu0 %v7032
    %7051 = vmatprep.subr.bf16.mxu0 0
    %7052 = vmatpush1.bf16.msra.mxu0 %v7033
    %7053 = vmatprep.subr.bf16.mxu0 0
    %7054 = vmatpush1.bf16.msra.mxu0 %v7034
    %7055 = vmatprep.subr.bf16.mxu0 0
    %7056 = vmatpush1.bf16.msra.mxu0 %v7035
    %7057 = vmatprep.subr.bf16.mxu0 0
    %7058 = vmatpush1.bf16.msra.mxu0 %v7036
    %7059 = vmatprep.subr.bf16.mxu0 0
    %7060 = vmatpush1.bf16.msra.mxu0 %v7037
    %7061 = vmatprep.subr.bf16.mxu0 0
    %7062 = vmatpush1.bf16.msra.mxu0 %v7038
    %7063 = vmatprep.subr.bf16.mxu0 0
    %7064 = vmatpush1.bf16.msra.mxu0 0
    %7065 = vmatprep.subr.bf16.mxu0 0
    %7066 = vmatpush1.bf16.msra.mxu0 0
    %7067 = vmatprep.subr.bf16.mxu0 0
    %7068 = vmatpush1.bf16.msra.mxu0 0
    %7069 = vmatprep.subr.bf16.mxu0 0
    %7070 = vmatpush1.bf16.msra.mxu0 0
    %7071 = vmatprep.subr.bf16.mxu0 0
    %7072 = vmatpush1.bf16.msra.mxu0 0
    %7073 = vmatprep.subr.bf16.mxu0 0
    %7074 = vmatpush1.bf16.msra.mxu0 0
    %7075 = vmatprep.subr.bf16.mxu0 0
    %7076 = vmatpush1.bf16.msra.mxu0 0
    %7077 = vmatprep.subr.bf16.mxu0 0
    %7078 = vmatpush1.bf16.msra.mxu0 0
    %7079 = vmatprep.mubr.bf16.mxu0 0
    %7080 = vmatmul.mubr.bf16.gmra.mrb[0].mxu0 %v6970
    %v7081 = vpop.f32.mrb[0].mxu0
    %v7082 = vadd.f32 0.0, %v7081
    %v7083 = vpop.f32.mrb[0].mxu0
    %v7084 = vpop.f32.mrb[0].mxu0
    %v7085 = vadd.f32 0.0, %v7084
    %v7086 = vpop.f32.mrb[0].mxu0
    %7087 = vmatprep.mubr.bf16.mxu0 0
    %7088 = vmatmul.mubr.bf16.gmra.mrb[0].mxu0 %v6971
    %v7089 = vpop.f32.mrb[0].mxu0
    %v7090 = vadd.f32 0.0, %v7089
    %v7091 = vpop.f32.mrb[0].mxu0
    %v7092 = vpop.f32.mrb[0].mxu0
    %v7093 = vadd.f32 0.0, %v7092
    %v7094 = vpop.f32.mrb[0].mxu0
    %7095 = vmatprep.mubr.bf16.mxu0 0
    %7096 = vmatmul.mubr.bf16.gmra.mrb[0].mxu0 %v6972
    %v7097 = vpop.f32.mrb[0].mxu0
    %v7098 = vadd.f32 0.0, %v7097
    %v7099 = vpop.f32.mrb[0].mxu0
    %v7100 = vpop.f32.mrb[0].mxu0
    %v7101 = vadd.f32 0.0, %v7100
    %v7102 = vpop.f32.mrb[0].mxu0
    %7103 = vmatprep.mubr.bf16.mxu0 0
    %7104 = vmatmul.mubr.bf16.gmra.mrb[0].mxu0 %v6973
    %v7105 = vpop.f32.mrb[0].mxu0
    %v7106 = vadd.f32 0.0, %v7105
    %v7107 = vpop.f32.mrb[0].mxu0
    %v7108 = vpop.f32.mrb[0].mxu0
    %v7109 = vadd.f32 0.0, %v7108
    %v7110 = vpop.f32.mrb[0].mxu0
    %7111 = vmatprep.mubr.bf16.mxu0 0
    %7112 = vmatmul.mubr.bf16.gmra.mrb[0].mxu0 %v6974
    %v7113 = vpop.f32.mrb[0].mxu0
    %v7114 = vadd.f32 0.0, %v7113
    %v7115 = vpop.f32.mrb[0].mxu0
    %v7116 = vpop.f32.mrb[0].mxu0
    %v7117 = vadd.f32 0.0, %v7116
    %v7118 = vpop.f32.mrb[0].mxu0
    %7119 = vmatprep.mubr.bf16.mxu0 0
    %7120 = vmatmul.mubr.bf16.gmra.mrb[0].mxu0 %v6975
    %v7121 = vpop.f32.mrb[0].mxu0
    %v7122 = vadd.f32 0.0, %v7121
    %v7123 = vpop.f32.mrb[0].mxu0
    %v7124 = vpop.f32.mrb[0].mxu0
    %v7125 = vadd.f32 0.0, %v7124
    %v7126 = vpop.f32.mrb[0].mxu0
    %7127 = vmatprep.mubr.bf16.mxu0 0
    %7128 = vmatmul.mubr.bf16.gmra.mrb[0].mxu0 %v6976
    %v7129 = vpop.f32.mrb[0].mxu0
    %v7130 = vadd.f32 0.0, %v7129
    %v7131 = vpop.f32.mrb[0].mxu0
    %v7132 = vpop.f32.mrb[0].mxu0
    %v7133 = vadd.f32 0.0, %v7132
    %v7134 = vpop.f32.mrb[0].mxu0
    %7135 = vmatprep.mubr.bf16.mxu0 0
    %7136 = vmatmul.mubr.bf16.gmra.mrb[0].mxu0 %v6977
    %v7137 = vpop.f32.mrb[0].mxu0
    %v7138 = vadd.f32 0.0, %v7137
    %v7139 = vpop.f32.mrb[0].mxu0
    %v7140 = vpop.f32.mrb[0].mxu0
    %v7141 = vadd.f32 0.0, %v7140
    %v7142 = vpop.f32.mrb[0].mxu0
    %7143 = vmatprep.mubr.bf16.mxu0 0
    %7144 = vmatmul.mubr.bf16.gmra.mrb[0].mxu0 %v6978
    %v7145 = vpop.f32.mrb[0].mxu0
    %v7146 = vadd.f32 0.0, %v7145
    %v7147 = vpop.f32.mrb[0].mxu0
    %v7148 = vpop.f32.mrb[0].mxu0
    %v7149 = vadd.f32 0.0, %v7148
    %v7150 = vpop.f32.mrb[0].mxu0
    %7151 = vmatprep.mubr.bf16.mxu0 0
    %7152 = vmatmul.mubr.bf16.gmra.mrb[0].mxu0 %v6979
    %v7153 = vpop.f32.mrb[0].mxu0
    %v7154 = vadd.f32 0.0, %v7153
    %v7155 = vpop.f32.mrb[0].mxu0
    %v7156 = vpop.f32.mrb[0].mxu0
    %v7157 = vadd.f32 0.0, %v7156
    %v7158 = vpop.f32.mrb[0].mxu0
    %7159 = vmatprep.mubr.bf16.mxu0 0
    %7160 = vmatmul.mubr.bf16.gmra.mrb[0].mxu0 %v6980
    %v7161 = vpop.f32.mrb[0].mxu0
    %v7162 = vadd.f32 0.0, %v7161
    %v7163 = vpop.f32.mrb[0].mxu0
    %v7164 = vpop.f32.mrb[0].mxu0
    %v7165 = vadd.f32 0.0, %v7164
    %v7166 = vpop.f32.mrb[0].mxu0
    %7167 = vmatprep.mubr.bf16.mxu0 0
    %7168 = vmatmul.mubr.bf16.gmra.mrb[0].mxu0 %v6981
    %v7169 = vpop.f32.mrb[0].mxu0
    %v7170 = vadd.f32 0.0, %v7169
    %v7171 = vpop.f32.mrb[0].mxu0
    %v7172 = vpop.f32.mrb[0].mxu0
    %v7173 = vadd.f32 0.0, %v7172
    %v7174 = vpop.f32.mrb[0].mxu0
    %7175 = vdwg.mxu0
    %v7176 = vadd.f32 %v6852, %v7082
    %v7177 = vadd.f32 %v6855, %v7085
    %v7178 = vadd.f32 %v6860, %v7090
    %v7179 = vadd.f32 %v6863, %v7093
    %v7180 = vadd.f32 %v6868, %v7098
    %v7181 = vadd.f32 %v6871, %v7101
    %v7182 = vadd.f32 %v6876, %v7106
    %v7183 = vadd.f32 %v6879, %v7109
    %v7184 = vadd.f32 %v6884, %v7114
    %v7185 = vadd.f32 %v6887, %v7117
    %v7186 = vadd.f32 %v6892, %v7122
    %v7187 = vadd.f32 %v6895, %v7125
    %v7188 = vadd.f32 %v6900, %v7130
    %v7189 = vadd.f32 %v6903, %v7133
    %v7190 = vadd.f32 %v6908, %v7138
    %v7191 = vadd.f32 %v6911, %v7141
    %v7192 = vadd.f32 %v6916, %v7146
    %v7193 = vadd.f32 %v6919, %v7149
    %v7194 = vadd.f32 %v6924, %v7154
    %v7195 = vadd.f32 %v6927, %v7157
    %v7196 = vadd.f32 %v6932, %v7162
    %v7197 = vadd.f32 %v6935, %v7165
    %v7198 = vadd.f32 %v6940, %v7170
    %v7199 = vadd.f32 %v6943, %v7173
    %v7200 = vld [vmem:[#allocation3 + $0x10] sm:$0xff]
    %v7201 = vld [vmem:[#allocation3 + $0x18] sm:$0xff]
    %v7202 = vld [vmem:[#allocation3 + $0x20] sm:$0xff]
    %v7203 = vld [vmem:[#allocation3 + $0x28] sm:$0xff]
    %v7204 = vld [vmem:[#allocation3 + $0x30] sm:$0xff]
    %v7205 = vld [vmem:[#allocation3 + $0x38] sm:$0xff]
    %v7206 = vld [vmem:[#allocation3 + $0x40] sm:$0xff]
    %v7207 = vld [vmem:[#allocation3 + $0x48] sm:$0xff]
    %v7208 = vld [vmem:[#allocation3 + $0x50] sm:$0xff]
    %v7209 = vld [vmem:[#allocation3 + $0x58] sm:$0xff]
    %v7210 = vld [vmem:[#allocation3 + $0x60] sm:$0xff]
    %v7211 = vld [vmem:[#allocation3 + $0x68] sm:$0xff]
    %v7212 = vld [vmem:[#allocation3 + $0x70] sm:$0xff]
    %v7213 = vld [vmem:[#allocation3 + $0x78] sm:$0xff]
    %v7214 = vld [vmem:[#allocation3 + $0x80] sm:$0xff]
    %v7215 = vld [vmem:[#allocation3 + $0x88] sm:$0xff]
    %v7216 = vld [vmem:[#allocation3 + $0x90] sm:$0xff]
    %v7217 = vld [vmem:[#allocation3 + $0x98] sm:$0xff]
    %v7218 = vld [vmem:[#allocation3 + $0xa0] sm:$0xff]
    %v7219 = vld [vmem:[#allocation3 + $0xa8] sm:$0xff]
    %v7220 = vld [vmem:[#allocation3 + $0xb0] sm:$0xff]
    %v7221 = vld [vmem:[#allocation3 + $0xb8] sm:$0xff]
    %v7222 = vld [vmem:[#allocation3 + $0xc0] sm:$0xff]
    %v7223 = vld [vmem:[#allocation3 + $0xc8] sm:$0xff]
    %v7224 = vpack.c.bf16 %v7201, %v7200
    %v7225 = vpack.c.bf16 %v7203, %v7202
    %v7226 = vpack.c.bf16 %v7205, %v7204
    %v7227 = vpack.c.bf16 %v7207, %v7206
    %v7228 = vpack.c.bf16 %v7209, %v7208
    %v7229 = vpack.c.bf16 %v7211, %v7210
    %v7230 = vpack.c.bf16 %v7213, %v7212
    %v7231 = vpack.c.bf16 %v7215, %v7214
    %v7232 = vpack.c.bf16 %v7217, %v7216
    %v7233 = vpack.c.bf16 %v7219, %v7218
    %v7234 = vpack.c.bf16 %v7221, %v7220
    %v7235 = vpack.c.bf16 %v7223, %v7222
    %s7236 = scalar_lea.vmem %s5, 192
    %v7237 = vld [vmem:[%s7236] sm:$0xf]
    %v7238 = vld [vmem:[%s7236 + $0x4] sm:$0xf]
    %v7239 = vld [vmem:[%s7236 + $0x8] sm:$0xf]
    %v7240 = vld [vmem:[%s7236 + $0xc] sm:$0xf]
    %v7241 = vld [vmem:[%s7236 + $0x10] sm:$0xf]
    %v7242 = vld [vmem:[%s7236 + $0x14] sm:$0xf]
    %v7243 = vld [vmem:[%s7236 + $0x18] sm:$0xf]
    %v7244 = vld [vmem:[%s7236 + $0x1c] sm:$0xf]
    %v7245 = vld [vmem:[%s7236 + $0x20] sm:$0xf]
    %v7246 = vld [vmem:[%s7236 + $0x24] sm:$0xf]
    %v7247 = vld [vmem:[%s7236 + $0x28] sm:$0xf]
    %v7248 = vld [vmem:[%s7236 + $0x2c] sm:$0xf]
    %v7249 = vld [vmem:[%s7236 + $0x30] sm:$0xf]
    %v7250 = vld [vmem:[%s7236 + $0x34] sm:$0xf]
    %v7251 = vld [vmem:[%s7236 + $0x38] sm:$0xf]
    %v7252 = vld [vmem:[%s7236 + $0x3c] sm:$0xf]
    %v7269 = vunpack.c.l.b16 %v7237
    %v7270 = vunpack.c.l.b16 %v7238
    %v7271 = vunpack.c.l.b16 %v7239
    %v7272 = vunpack.c.l.b16 %v7240
    %v7273 = vunpack.c.l.b16 %v7241
    %v7274 = vunpack.c.l.b16 %v7242
    %v7275 = vunpack.c.l.b16 %v7243
    %v7276 = vunpack.c.l.b16 %v7244
    %v7277 = vunpack.c.l.b16 %v7245
    %v7278 = vunpack.c.l.b16 %v7246
    %v7279 = vunpack.c.l.b16 %v7247
    %v7280 = vunpack.c.l.b16 %v7248
    %v7281 = vunpack.c.l.b16 %v7249
    %v7282 = vunpack.c.l.b16 %v7250
    %v7283 = vunpack.c.l.b16 %v7251
    %v7284 = vunpack.c.l.b16 %v7252
    %v7285 = vpack.c.b16 %v7270, %v7269
    %v7286 = vpack.c.b16 %v7272, %v7271
    %v7287 = vpack.c.b16 %v7274, %v7273
    %v7288 = vpack.c.b16 %v7276, %v7275
    %v7289 = vpack.c.b16 %v7278, %v7277
    %v7290 = vpack.c.b16 %v7280, %v7279
    %v7291 = vpack.c.b16 %v7282, %v7281
    %v7292 = vpack.c.b16 %v7284, %v7283
    %7301 = vmatprep.subr.bf16.mxu0 0
    %7302 = vmatpush1.bf16.msra.mxu0 %v7285
    %7303 = vmatprep.subr.bf16.mxu0 0
    %7304 = vmatpush1.bf16.msra.mxu0 %v7286
    %7305 = vmatprep.subr.bf16.mxu0 0
    %7306 = vmatpush1.bf16.msra.mxu0 %v7287
    %7307 = vmatprep.subr.bf16.mxu0 0
    %7308 = vmatpush1.bf16.msra.mxu0 %v7288
    %7309 = vmatprep.subr.bf16.mxu0 0
    %7310 = vmatpush1.bf16.msra.mxu0 %v7289
    %7311 = vmatprep.subr.bf16.mxu0 0
    %7312 = vmatpush1.bf16.msra.mxu0 %v7290
    %7313 = vmatprep.subr.bf16.mxu0 0
    %7314 = vmatpush1.bf16.msra.mxu0 %v7291
    %7315 = vmatprep.subr.bf16.mxu0 0
    %7316 = vmatpush1.bf16.msra.mxu0 %v7292
    %7317 = vmatprep.subr.bf16.mxu0 0
    %7318 = vmatpush1.bf16.msra.mxu0 0
    %7319 = vmatprep.subr.bf16.mxu0 0
    %7320 = vmatpush1.bf16.msra.mxu0 0
    %7321 = vmatprep.subr.bf16.mxu0 0
    %7322 = vmatpush1.bf16.msra.mxu0 0
    %7323 = vmatprep.subr.bf16.mxu0 0
    %7324 = vmatpush1.bf16.msra.mxu0 0
    %7325 = vmatprep.subr.bf16.mxu0 0
    %7326 = vmatpush1.bf16.msra.mxu0 0
    %7327 = vmatprep.subr.bf16.mxu0 0
    %7328 = vmatpush1.bf16.msra.mxu0 0
    %7329 = vmatprep.subr.bf16.mxu0 0
    %7330 = vmatpush1.bf16.msra.mxu0 0
    %7331 = vmatprep.subr.bf16.mxu0 0
    %7332 = vmatpush1.bf16.msra.mxu0 0
    %7333 = vmatprep.mubr.bf16.mxu0 0
    %7334 = vmatmul.mubr.bf16.gmra.mrb[0].mxu0 %v7224
    %v7335 = vpop.f32.mrb[0].mxu0
    %v7336 = vadd.f32 0.0, %v7335
    %v7337 = vpop.f32.mrb[0].mxu0
    %v7338 = vpop.f32.mrb[0].mxu0
    %v7339 = vadd.f32 0.0, %v7338
    %v7340 = vpop.f32.mrb[0].mxu0
    %7341 = vmatprep.mubr.bf16.mxu0 0
    %7342 = vmatmul.mubr.bf16.gmra.mrb[0].mxu0 %v7225
    %v7343 = vpop.f32.mrb[0].mxu0
    %v7344 = vadd.f32 0.0, %v7343
    %v7345 = vpop.f32.mrb[0].mxu0
    %v7346 = vpop.f32.mrb[0].mxu0
    %v7347 = vadd.f32 0.0, %v7346
    %v7348 = vpop.f32.mrb[0].mxu0
    %7349 = vmatprep.mubr.bf16.mxu0 0
    %7350 = vmatmul.mubr.bf16.gmra.mrb[0].mxu0 %v7226
    %v7351 = vpop.f32.mrb[0].mxu0
    %v7352 = vadd.f32 0.0, %v7351
    %v7353 = vpop.f32.mrb[0].mxu0
    %v7354 = vpop.f32.mrb[0].mxu0
    %v7355 = vadd.f32 0.0, %v7354
    %v7356 = vpop.f32.mrb[0].mxu0
    %7357 = vmatprep.mubr.bf16.mxu0 0
    %7358 = vmatmul.mubr.bf16.gmra.mrb[0].mxu0 %v7227
    %v7359 = vpop.f32.mrb[0].mxu0
    %v7360 = vadd.f32 0.0, %v7359
    %v7361 = vpop.f32.mrb[0].mxu0
    %v7362 = vpop.f32.mrb[0].mxu0
    %v7363 = vadd.f32 0.0, %v7362
    %v7364 = vpop.f32.mrb[0].mxu0
    %7365 = vmatprep.mubr.bf16.mxu0 0
    %7366 = vmatmul.mubr.bf16.gmra.mrb[0].mxu0 %v7228
    %v7367 = vpop.f32.mrb[0].mxu0
    %v7368 = vadd.f32 0.0, %v7367
    %v7369 = vpop.f32.mrb[0].mxu0
    %v7370 = vpop.f32.mrb[0].mxu0
    %v7371 = vadd.f32 0.0, %v7370
    %v7372 = vpop.f32.mrb[0].mxu0
    %7373 = vmatprep.mubr.bf16.mxu0 0
    %7374 = vmatmul.mubr.bf16.gmra.mrb[0].mxu0 %v7229
    %v7375 = vpop.f32.mrb[0].mxu0
    %v7376 = vadd.f32 0.0, %v7375
    %v7377 = vpop.f32.mrb[0].mxu0
    %v7378 = vpop.f32.mrb[0].mxu0
    %v7379 = vadd.f32 0.0, %v7378
    %v7380 = vpop.f32.mrb[0].mxu0
    %7381 = vmatprep.mubr.bf16.mxu0 0
    %7382 = vmatmul.mubr.bf16.gmra.mrb[0].mxu0 %v7230
    %v7383 = vpop.f32.mrb[0].mxu0
    %v7384 = vadd.f32 0.0, %v7383
    %v7385 = vpop.f32.mrb[0].mxu0
    %v7386 = vpop.f32.mrb[0].mxu0
    %v7387 = vadd.f32 0.0, %v7386
    %v7388 = vpop.f32.mrb[0].mxu0
    %7389 = vmatprep.mubr.bf16.mxu0 0
    %7390 = vmatmul.mubr.bf16.gmra.mrb[0].mxu0 %v7231
    %v7391 = vpop.f32.mrb[0].mxu0
    %v7392 = vadd.f32 0.0, %v7391
    %v7393 = vpop.f32.mrb[0].mxu0
    %v7394 = vpop.f32.mrb[0].mxu0
    %v7395 = vadd.f32 0.0, %v7394
    %v7396 = vpop.f32.mrb[0].mxu0
    %7397 = vmatprep.mubr.bf16.mxu0 0
    %7398 = vmatmul.mubr.bf16.gmra.mrb[0].mxu0 %v7232
    %v7399 = vpop.f32.mrb[0].mxu0
    %v7400 = vadd.f32 0.0, %v7399
    %v7401 = vpop.f32.mrb[0].mxu0
    %v7402 = vpop.f32.mrb[0].mxu0
    %v7403 = vadd.f32 0.0, %v7402
    %v7404 = vpop.f32.mrb[0].mxu0
    %7405 = vmatprep.mubr.bf16.mxu0 0
    %7406 = vmatmul.mubr.bf16.gmra.mrb[0].mxu0 %v7233
    %v7407 = vpop.f32.mrb[0].mxu0
    %v7408 = vadd.f32 0.0, %v7407
    %v7409 = vpop.f32.mrb[0].mxu0
    %v7410 = vpop.f32.mrb[0].mxu0
    %v7411 = vadd.f32 0.0, %v7410
    %v7412 = vpop.f32.mrb[0].mxu0
    %7413 = vmatprep.mubr.bf16.mxu0 0
    %7414 = vmatmul.mubr.bf16.gmra.mrb[0].mxu0 %v7234
    %v7415 = vpop.f32.mrb[0].mxu0
    %v7416 = vadd.f32 0.0, %v7415
    %v7417 = vpop.f32.mrb[0].mxu0
    %v7418 = vpop.f32.mrb[0].mxu0
    %v7419 = vadd.f32 0.0, %v7418
    %v7420 = vpop.f32.mrb[0].mxu0
    %7421 = vmatprep.mubr.bf16.mxu0 0
    %7422 = vmatmul.mubr.bf16.gmra.mrb[0].mxu0 %v7235
    %v7423 = vpop.f32.mrb[0].mxu0
    %v7424 = vadd.f32 0.0, %v7423
    %v7425 = vpop.f32.mrb[0].mxu0
    %v7426 = vpop.f32.mrb[0].mxu0
    %v7427 = vadd.f32 0.0, %v7426
    %v7428 = vpop.f32.mrb[0].mxu0
    %7429 = vdwg.mxu0
    %v7430 = vadd.f32 %v7176, %v7336
    %v7431 = vadd.f32 %v7177, %v7339
    %v7432 = vadd.f32 %v7178, %v7344
    %v7433 = vadd.f32 %v7179, %v7347
    %v7434 = vadd.f32 %v7180, %v7352
    %v7435 = vadd.f32 %v7181, %v7355
    %v7436 = vadd.f32 %v7182, %v7360
    %v7437 = vadd.f32 %v7183, %v7363
    %v7438 = vadd.f32 %v7184, %v7368
    %v7439 = vadd.f32 %v7185, %v7371
    %v7440 = vadd.f32 %v7186, %v7376
    %v7441 = vadd.f32 %v7187, %v7379
    %v7442 = vadd.f32 %v7188, %v7384
    %v7443 = vadd.f32 %v7189, %v7387
    %v7444 = vadd.f32 %v7190, %v7392
    %v7445 = vadd.f32 %v7191, %v7395
    %v7446 = vadd.f32 %v7192, %v7400
    %v7447 = vadd.f32 %v7193, %v7403
    %v7448 = vadd.f32 %v7194, %v7408
    %v7449 = vadd.f32 %v7195, %v7411
    %v7450 = vadd.f32 %v7196, %v7416
    %v7451 = vadd.f32 %v7197, %v7419
    %v7452 = vadd.f32 %v7198, %v7424
    %v7453 = vadd.f32 %v7199, %v7427
    %v7454 = vld [vmem:[#allocation3 + $0x11] sm:$0xff]
    %v7455 = vld [vmem:[#allocation3 + $0x19] sm:$0xff]
    %v7456 = vld [vmem:[#allocation3 + $0x21] sm:$0xff]
    %v7457 = vld [vmem:[#allocation3 + $0x29] sm:$0xff]
    %v7458 = vld [vmem:[#allocation3 + $0x31] sm:$0xff]
    %v7459 = vld [vmem:[#allocation3 + $0x39] sm:$0xff]
    %v7460 = vld [vmem:[#allocation3 + $0x41] sm:$0xff]
    %v7461 = vld [vmem:[#allocation3 + $0x49] sm:$0xff]
    %v7462 = vld [vmem:[#allocation3 + $0x51] sm:$0xff]
    %v7463 = vld [vmem:[#allocation3 + $0x59] sm:$0xff]
    %v7464 = vld [vmem:[#allocation3 + $0x61] sm:$0xff]
    %v7465 = vld [vmem:[#allocation3 + $0x69] sm:$0xff]
    %v7466 = vld [vmem:[#allocation3 + $0x71] sm:$0xff]
    %v7467 = vld [vmem:[#allocation3 + $0x79] sm:$0xff]
    %v7468 = vld [vmem:[#allocation3 + $0x81] sm:$0xff]
    %v7469 = vld [vmem:[#allocation3 + $0x89] sm:$0xff]
    %v7470 = vld [vmem:[#allocation3 + $0x91] sm:$0xff]
    %v7471 = vld [vmem:[#allocation3 + $0x99] sm:$0xff]
    %v7472 = vld [vmem:[#allocation3 + $0xa1] sm:$0xff]
    %v7473 = vld [vmem:[#allocation3 + $0xa9] sm:$0xff]
    %v7474 = vld [vmem:[#allocation3 + $0xb1] sm:$0xff]
    %v7475 = vld [vmem:[#allocation3 + $0xb9] sm:$0xff]
    %v7476 = vld [vmem:[#allocation3 + $0xc1] sm:$0xff]
    %v7477 = vld [vmem:[#allocation3 + $0xc9] sm:$0xff]
    %v7478 = vpack.c.bf16 %v7455, %v7454
    %v7479 = vpack.c.bf16 %v7457, %v7456
    %v7480 = vpack.c.bf16 %v7459, %v7458
    %v7481 = vpack.c.bf16 %v7461, %v7460
    %v7482 = vpack.c.bf16 %v7463, %v7462
    %v7483 = vpack.c.bf16 %v7465, %v7464
    %v7484 = vpack.c.bf16 %v7467, %v7466
    %v7485 = vpack.c.bf16 %v7469, %v7468
    %v7486 = vpack.c.bf16 %v7471, %v7470
    %v7487 = vpack.c.bf16 %v7473, %v7472
    %v7488 = vpack.c.bf16 %v7475, %v7474
    %v7489 = vpack.c.bf16 %v7477, %v7476
    %s7490 = scalar_lea.vmem %s5, 256
    %v7491 = vld [vmem:[%s7490] sm:$0xf]
    %v7492 = vld [vmem:[%s7490 + $0x4] sm:$0xf]
    %v7493 = vld [vmem:[%s7490 + $0x8] sm:$0xf]
    %v7494 = vld [vmem:[%s7490 + $0xc] sm:$0xf]
    %v7495 = vld [vmem:[%s7490 + $0x10] sm:$0xf]
    %v7496 = vld [vmem:[%s7490 + $0x14] sm:$0xf]
    %v7497 = vld [vmem:[%s7490 + $0x18] sm:$0xf]
    %v7498 = vld [vmem:[%s7490 + $0x1c] sm:$0xf]
    %v7499 = vld [vmem:[%s7490 + $0x20] sm:$0xf]
    %v7500 = vld [vmem:[%s7490 + $0x24] sm:$0xf]
    %v7501 = vld [vmem:[%s7490 + $0x28] sm:$0xf]
    %v7502 = vld [vmem:[%s7490 + $0x2c] sm:$0xf]
    %v7503 = vld [vmem:[%s7490 + $0x30] sm:$0xf]
    %v7504 = vld [vmem:[%s7490 + $0x34] sm:$0xf]
    %v7505 = vld [vmem:[%s7490 + $0x38] sm:$0xf]
    %v7506 = vld [vmem:[%s7490 + $0x3c] sm:$0xf]
    %v7523 = vunpack.c.l.b16 %v7491
    %v7524 = vunpack.c.l.b16 %v7492
    %v7525 = vunpack.c.l.b16 %v7493
    %v7526 = vunpack.c.l.b16 %v7494
    %v7527 = vunpack.c.l.b16 %v7495
    %v7528 = vunpack.c.l.b16 %v7496
    %v7529 = vunpack.c.l.b16 %v7497
    %v7530 = vunpack.c.l.b16 %v7498
    %v7531 = vunpack.c.l.b16 %v7499
    %v7532 = vunpack.c.l.b16 %v7500
    %v7533 = vunpack.c.l.b16 %v7501
    %v7534 = vunpack.c.l.b16 %v7502
    %v7535 = vunpack.c.l.b16 %v7503
    %v7536 = vunpack.c.l.b16 %v7504
    %v7537 = vunpack.c.l.b16 %v7505
    %v7538 = vunpack.c.l.b16 %v7506
    %v7539 = vpack.c.b16 %v7524, %v7523
    %v7540 = vpack.c.b16 %v7526, %v7525
    %v7541 = vpack.c.b16 %v7528, %v7527
    %v7542 = vpack.c.b16 %v7530, %v7529
    %v7543 = vpack.c.b16 %v7532, %v7531
    %v7544 = vpack.c.b16 %v7534, %v7533
    %v7545 = vpack.c.b16 %v7536, %v7535
    %v7546 = vpack.c.b16 %v7538, %v7537
    %7555 = vmatprep.subr.bf16.mxu0 0
    %7556 = vmatpush1.bf16.msra.mxu0 %v7539
    %7557 = vmatprep.subr.bf16.mxu0 0
    %7558 = vmatpush1.bf16.msra.mxu0 %v7540
    %7559 = vmatprep.subr.bf16.mxu0 0
    %7560 = vmatpush1.bf16.msra.mxu0 %v7541
    %7561 = vmatprep.subr.bf16.mxu0 0
    %7562 = vmatpush1.bf16.msra.mxu0 %v7542
    %7563 = vmatprep.subr.bf16.mxu0 0
    %7564 = vmatpush1.bf16.msra.mxu0 %v7543
    %7565 = vmatprep.subr.bf16.mxu0 0
    %7566 = vmatpush1.bf16.msra.mxu0 %v7544
    %7567 = vmatprep.subr.bf16.mxu0 0
    %7568 = vmatpush1.bf16.msra.mxu0 %v7545
    %7569 = vmatprep.subr.bf16.mxu0 0
    %7570 = vmatpush1.bf16.msra.mxu0 %v7546
    %7571 = vmatprep.subr.bf16.mxu0 0
    %7572 = vmatpush1.bf16.msra.mxu0 0
    %7573 = vmatprep.subr.bf16.mxu0 0
    %7574 = vmatpush1.bf16.msra.mxu0 0
    %7575 = vmatprep.subr.bf16.mxu0 0
    %7576 = vmatpush1.bf16.msra.mxu0 0
    %7577 = vmatprep.subr.bf16.mxu0 0
    %7578 = vmatpush1.bf16.msra.mxu0 0
    %7579 = vmatprep.subr.bf16.mxu0 0
    %7580 = vmatpush1.bf16.msra.mxu0 0
    %7581 = vmatprep.subr.bf16.mxu0 0
    %7582 = vmatpush1.bf16.msra.mxu0 0
    %7583 = vmatprep.subr.bf16.mxu0 0
    %7584 = vmatpush1.bf16.msra.mxu0 0
    %7585 = vmatprep.subr.bf16.mxu0 0
    %7586 = vmatpush1.bf16.msra.mxu0 0
    %7587 = vmatprep.mubr.bf16.mxu0 0
    %7588 = vmatmul.mubr.bf16.gmra.mrb[0].mxu0 %v7478
    %v7589 = vpop.f32.mrb[0].mxu0
    %v7590 = vadd.f32 0.0, %v7589
    %v7591 = vpop.f32.mrb[0].mxu0
    %v7592 = vpop.f32.mrb[0].mxu0
    %v7593 = vadd.f32 0.0, %v7592
    %v7594 = vpop.f32.mrb[0].mxu0
    %7595 = vmatprep.mubr.bf16.mxu0 0
    %7596 = vmatmul.mubr.bf16.gmra.mrb[0].mxu0 %v7479
    %v7597 = vpop.f32.mrb[0].mxu0
    %v7598 = vadd.f32 0.0, %v7597
    %v7599 = vpop.f32.mrb[0].mxu0
    %v7600 = vpop.f32.mrb[0].mxu0
    %v7601 = vadd.f32 0.0, %v7600
    %v7602 = vpop.f32.mrb[0].mxu0
    %7603 = vmatprep.mubr.bf16.mxu0 0
    %7604 = vmatmul.mubr.bf16.gmra.mrb[0].mxu0 %v7480
    %v7605 = vpop.f32.mrb[0].mxu0
    %v7606 = vadd.f32 0.0, %v7605
    %v7607 = vpop.f32.mrb[0].mxu0
    %v7608 = vpop.f32.mrb[0].mxu0
    %v7609 = vadd.f32 0.0, %v7608
    %v7610 = vpop.f32.mrb[0].mxu0
    %7611 = vmatprep.mubr.bf16.mxu0 0
    %7612 = vmatmul.mubr.bf16.gmra.mrb[0].mxu0 %v7481
    %v7613 = vpop.f32.mrb[0].mxu0
    %v7614 = vadd.f32 0.0, %v7613
    %v7615 = vpop.f32.mrb[0].mxu0
    %v7616 = vpop.f32.mrb[0].mxu0
    %v7617 = vadd.f32 0.0, %v7616
    %v7618 = vpop.f32.mrb[0].mxu0
    %7619 = vmatprep.mubr.bf16.mxu0 0
    %7620 = vmatmul.mubr.bf16.gmra.mrb[0].mxu0 %v7482
    %v7621 = vpop.f32.mrb[0].mxu0
    %v7622 = vadd.f32 0.0, %v7621
    %v7623 = vpop.f32.mrb[0].mxu0
    %v7624 = vpop.f32.mrb[0].mxu0
    %v7625 = vadd.f32 0.0, %v7624
    %v7626 = vpop.f32.mrb[0].mxu0
    %7627 = vmatprep.mubr.bf16.mxu0 0
    %7628 = vmatmul.mubr.bf16.gmra.mrb[0].mxu0 %v7483
    %v7629 = vpop.f32.mrb[0].mxu0
    %v7630 = vadd.f32 0.0, %v7629
    %v7631 = vpop.f32.mrb[0].mxu0
    %v7632 = vpop.f32.mrb[0].mxu0
    %v7633 = vadd.f32 0.0, %v7632
    %v7634 = vpop.f32.mrb[0].mxu0
    %7635 = vmatprep.mubr.bf16.mxu0 0
    %7636 = vmatmul.mubr.bf16.gmra.mrb[0].mxu0 %v7484
    %v7637 = vpop.f32.mrb[0].mxu0
    %v7638 = vadd.f32 0.0, %v7637
    %v7639 = vpop.f32.mrb[0].mxu0
    %v7640 = vpop.f32.mrb[0].mxu0
    %v7641 = vadd.f32 0.0, %v7640
    %v7642 = vpop.f32.mrb[0].mxu0
    %7643 = vmatprep.mubr.bf16.mxu0 0
    %7644 = vmatmul.mubr.bf16.gmra.mrb[0].mxu0 %v7485
    %v7645 = vpop.f32.mrb[0].mxu0
    %v7646 = vadd.f32 0.0, %v7645
    %v7647 = vpop.f32.mrb[0].mxu0
    %v7648 = vpop.f32.mrb[0].mxu0
    %v7649 = vadd.f32 0.0, %v7648
    %v7650 = vpop.f32.mrb[0].mxu0
    %7651 = vmatprep.mubr.bf16.mxu0 0
    %7652 = vmatmul.mubr.bf16.gmra.mrb[0].mxu0 %v7486
    %v7653 = vpop.f32.mrb[0].mxu0
    %v7654 = vadd.f32 0.0, %v7653
    %v7655 = vpop.f32.mrb[0].mxu0
    %v7656 = vpop.f32.mrb[0].mxu0
    %v7657 = vadd.f32 0.0, %v7656
    %v7658 = vpop.f32.mrb[0].mxu0
    %7659 = vmatprep.mubr.bf16.mxu0 0
    %7660 = vmatmul.mubr.bf16.gmra.mrb[0].mxu0 %v7487
    %v7661 = vpop.f32.mrb[0].mxu0
    %v7662 = vadd.f32 0.0, %v7661
    %v7663 = vpop.f32.mrb[0].mxu0
    %v7664 = vpop.f32.mrb[0].mxu0
    %v7665 = vadd.f32 0.0, %v7664
    %v7666 = vpop.f32.mrb[0].mxu0
    %7667 = vmatprep.mubr.bf16.mxu0 0
    %7668 = vmatmul.mubr.bf16.gmra.mrb[0].mxu0 %v7488
    %v7669 = vpop.f32.mrb[0].mxu0
    %v7670 = vadd.f32 0.0, %v7669
    %v7671 = vpop.f32.mrb[0].mxu0
    %v7672 = vpop.f32.mrb[0].mxu0
    %v7673 = vadd.f32 0.0, %v7672
    %v7674 = vpop.f32.mrb[0].mxu0
    %7675 = vmatprep.mubr.bf16.mxu0 0
    %7676 = vmatmul.mubr.bf16.gmra.mrb[0].mxu0 %v7489
    %v7677 = vpop.f32.mrb[0].mxu0
    %v7678 = vadd.f32 0.0, %v7677
    %v7679 = vpop.f32.mrb[0].mxu0
    %v7680 = vpop.f32.mrb[0].mxu0
    %v7681 = vadd.f32 0.0, %v7680
    %v7682 = vpop.f32.mrb[0].mxu0
    %7683 = vdwg.mxu0
    %v7684 = vadd.f32 %v7430, %v7590
    %v7685 = vadd.f32 %v7431, %v7593
    %v7686 = vadd.f32 %v7432, %v7598
    %v7687 = vadd.f32 %v7433, %v7601
    %v7688 = vadd.f32 %v7434, %v7606
    %v7689 = vadd.f32 %v7435, %v7609
    %v7690 = vadd.f32 %v7436, %v7614
    %v7691 = vadd.f32 %v7437, %v7617
    %v7692 = vadd.f32 %v7438, %v7622
    %v7693 = vadd.f32 %v7439, %v7625
    %v7694 = vadd.f32 %v7440, %v7630
    %v7695 = vadd.f32 %v7441, %v7633
    %v7696 = vadd.f32 %v7442, %v7638
    %v7697 = vadd.f32 %v7443, %v7641
    %v7698 = vadd.f32 %v7444, %v7646
    %v7699 = vadd.f32 %v7445, %v7649
    %v7700 = vadd.f32 %v7446, %v7654
    %v7701 = vadd.f32 %v7447, %v7657
    %v7702 = vadd.f32 %v7448, %v7662
    %v7703 = vadd.f32 %v7449, %v7665
    %v7704 = vadd.f32 %v7450, %v7670
    %v7705 = vadd.f32 %v7451, %v7673
    %v7706 = vadd.f32 %v7452, %v7678
    %v7707 = vadd.f32 %v7453, %v7681
    %v7708 = vld [vmem:[#allocation3 + $0x12] sm:$0xff]
    %v7709 = vld [vmem:[#allocation3 + $0x1a] sm:$0xff]
    %v7710 = vld [vmem:[#allocation3 + $0x22] sm:$0xff]
    %v7711 = vld [vmem:[#allocation3 + $0x2a] sm:$0xff]
    %v7712 = vld [vmem:[#allocation3 + $0x32] sm:$0xff]
    %v7713 = vld [vmem:[#allocation3 + $0x3a] sm:$0xff]
    %v7714 = vld [vmem:[#allocation3 + $0x42] sm:$0xff]
    %v7715 = vld [vmem:[#allocation3 + $0x4a] sm:$0xff]
    %v7716 = vld [vmem:[#allocation3 + $0x52] sm:$0xff]
    %v7717 = vld [vmem:[#allocation3 + $0x5a] sm:$0xff]
    %v7718 = vld [vmem:[#allocation3 + $0x62] sm:$0xff]
    %v7719 = vld [vmem:[#allocation3 + $0x6a] sm:$0xff]
    %v7720 = vld [vmem:[#allocation3 + $0x72] sm:$0xff]
    %v7721 = vld [vmem:[#allocation3 + $0x7a] sm:$0xff]
    %v7722 = vld [vmem:[#allocation3 + $0x82] sm:$0xff]
    %v7723 = vld [vmem:[#allocation3 + $0x8a] sm:$0xff]
    %v7724 = vld [vmem:[#allocation3 + $0x92] sm:$0xff]
    %v7725 = vld [vmem:[#allocation3 + $0x9a] sm:$0xff]
    %v7726 = vld [vmem:[#allocation3 + $0xa2] sm:$0xff]
    %v7727 = vld [vmem:[#allocation3 + $0xaa] sm:$0xff]
    %v7728 = vld [vmem:[#allocation3 + $0xb2] sm:$0xff]
    %v7729 = vld [vmem:[#allocation3 + $0xba] sm:$0xff]
    %v7730 = vld [vmem:[#allocation3 + $0xc2] sm:$0xff]
    %v7731 = vld [vmem:[#allocation3 + $0xca] sm:$0xff]
    %v7732 = vpack.c.bf16 %v7709, %v7708
    %v7733 = vpack.c.bf16 %v7711, %v7710
    %v7734 = vpack.c.bf16 %v7713, %v7712
    %v7735 = vpack.c.bf16 %v7715, %v7714
    %v7736 = vpack.c.bf16 %v7717, %v7716
    %v7737 = vpack.c.bf16 %v7719, %v7718
    %v7738 = vpack.c.bf16 %v7721, %v7720
    %v7739 = vpack.c.bf16 %v7723, %v7722
    %v7740 = vpack.c.bf16 %v7725, %v7724
    %v7741 = vpack.c.bf16 %v7727, %v7726
    %v7742 = vpack.c.bf16 %v7729, %v7728
    %v7743 = vpack.c.bf16 %v7731, %v7730
    %s7744 = scalar_lea.vmem %s5, 320
    %v7745 = vld [vmem:[%s7744] sm:$0xf]
    %v7746 = vld [vmem:[%s7744 + $0x4] sm:$0xf]
    %v7747 = vld [vmem:[%s7744 + $0x8] sm:$0xf]
    %v7748 = vld [vmem:[%s7744 + $0xc] sm:$0xf]
    %v7749 = vld [vmem:[%s7744 + $0x10] sm:$0xf]
    %v7750 = vld [vmem:[%s7744 + $0x14] sm:$0xf]
    %v7751 = vld [vmem:[%s7744 + $0x18] sm:$0xf]
    %v7752 = vld [vmem:[%s7744 + $0x1c] sm:$0xf]
    %v7753 = vld [vmem:[%s7744 + $0x20] sm:$0xf]
    %v7754 = vld [vmem:[%s7744 + $0x24] sm:$0xf]
    %v7755 = vld [vmem:[%s7744 + $0x28] sm:$0xf]
    %v7756 = vld [vmem:[%s7744 + $0x2c] sm:$0xf]
    %v7757 = vld [vmem:[%s7744 + $0x30] sm:$0xf]
    %v7758 = vld [vmem:[%s7744 + $0x34] sm:$0xf]
    %v7759 = vld [vmem:[%s7744 + $0x38] sm:$0xf]
    %v7760 = vld [vmem:[%s7744 + $0x3c] sm:$0xf]
    %v7777 = vunpack.c.l.b16 %v7745
    %v7778 = vunpack.c.l.b16 %v7746
    %v7779 = vunpack.c.l.b16 %v7747
    %v7780 = vunpack.c.l.b16 %v7748
    %v7781 = vunpack.c.l.b16 %v7749
    %v7782 = vunpack.c.l.b16 %v7750
    %v7783 = vunpack.c.l.b16 %v7751
    %v7784 = vunpack.c.l.b16 %v7752
    %v7785 = vunpack.c.l.b16 %v7753
    %v7786 = vunpack.c.l.b16 %v7754
    %v7787 = vunpack.c.l.b16 %v7755
    %v7788 = vunpack.c.l.b16 %v7756
    %v7789 = vunpack.c.l.b16 %v7757
    %v7790 = vunpack.c.l.b16 %v7758
    %v7791 = vunpack.c.l.b16 %v7759
    %v7792 = vunpack.c.l.b16 %v7760
    %v7793 = vpack.c.b16 %v7778, %v7777
    %v7794 = vpack.c.b16 %v7780, %v7779
    %v7795 = vpack.c.b16 %v7782, %v7781
    %v7796 = vpack.c.b16 %v7784, %v7783
    %v7797 = vpack.c.b16 %v7786, %v7785
    %v7798 = vpack.c.b16 %v7788, %v7787
    %v7799 = vpack.c.b16 %v7790, %v7789
    %v7800 = vpack.c.b16 %v7792, %v7791
    %7809 = vmatprep.subr.bf16.mxu0 0
    %7810 = vmatpush1.bf16.msra.mxu0 %v7793
    %7811 = vmatprep.subr.bf16.mxu0 0
    %7812 = vmatpush1.bf16.msra.mxu0 %v7794
    %7813 = vmatprep.subr.bf16.mxu0 0
    %7814 = vmatpush1.bf16.msra.mxu0 %v7795
    %7815 = vmatprep.subr.bf16.mxu0 0
    %7816 = vmatpush1.bf16.msra.mxu0 %v7796
    %7817 = vmatprep.subr.bf16.mxu0 0
    %7818 = vmatpush1.bf16.msra.mxu0 %v7797
    %7819 = vmatprep.subr.bf16.mxu0 0
    %7820 = vmatpush1.bf16.msra.mxu0 %v7798
    %7821 = vmatprep.subr.bf16.mxu0 0
    %7822 = vmatpush1.bf16.msra.mxu0 %v7799
    %7823 = vmatprep.subr.bf16.mxu0 0
    %7824 = vmatpush1.bf16.msra.mxu0 %v7800
    %7825 = vmatprep.subr.bf16.mxu0 0
    %7826 = vmatpush1.bf16.msra.mxu0 0
    %7827 = vmatprep.subr.bf16.mxu0 0
    %7828 = vmatpush1.bf16.msra.mxu0 0
    %7829 = vmatprep.subr.bf16.mxu0 0
    %7830 = vmatpush1.bf16.msra.mxu0 0
    %7831 = vmatprep.subr.bf16.mxu0 0
    %7832 = vmatpush1.bf16.msra.mxu0 0
    %7833 = vmatprep.subr.bf16.mxu0 0
    %7834 = vmatpush1.bf16.msra.mxu0 0
    %7835 = vmatprep.subr.bf16.mxu0 0
    %7836 = vmatpush1.bf16.msra.mxu0 0
    %7837 = vmatprep.subr.bf16.mxu0 0
    %7838 = vmatpush1.bf16.msra.mxu0 0
    %7839 = vmatprep.subr.bf16.mxu0 0
    %7840 = vmatpush1.bf16.msra.mxu0 0
    %7841 = vmatprep.mubr.bf16.mxu0 0
    %7842 = vmatmul.mubr.bf16.gmra.mrb[0].mxu0 %v7732
    %v7843 = vpop.f32.mrb[0].mxu0
    %v7844 = vadd.f32 0.0, %v7843
    %v7845 = vpop.f32.mrb[0].mxu0
    %v7846 = vpop.f32.mrb[0].mxu0
    %v7847 = vadd.f32 0.0, %v7846
    %v7848 = vpop.f32.mrb[0].mxu0
    %7849 = vmatprep.mubr.bf16.mxu0 0
    %7850 = vmatmul.mubr.bf16.gmra.mrb[0].mxu0 %v7733
    %v7851 = vpop.f32.mrb[0].mxu0
    %v7852 = vadd.f32 0.0, %v7851
    %v7853 = vpop.f32.mrb[0].mxu0
    %v7854 = vpop.f32.mrb[0].mxu0
    %v7855 = vadd.f32 0.0, %v7854
    %v7856 = vpop.f32.mrb[0].mxu0
    %7857 = vmatprep.mubr.bf16.mxu0 0
    %7858 = vmatmul.mubr.bf16.gmra.mrb[0].mxu0 %v7734
    %v7859 = vpop.f32.mrb[0].mxu0
    %v7860 = vadd.f32 0.0, %v7859
    %v7861 = vpop.f32.mrb[0].mxu0
    %v7862 = vpop.f32.mrb[0].mxu0
    %v7863 = vadd.f32 0.0, %v7862
    %v7864 = vpop.f32.mrb[0].mxu0
    %7865 = vmatprep.mubr.bf16.mxu0 0
    %7866 = vmatmul.mubr.bf16.gmra.mrb[0].mxu0 %v7735
    %v7867 = vpop.f32.mrb[0].mxu0
    %v7868 = vadd.f32 0.0, %v7867
    %v7869 = vpop.f32.mrb[0].mxu0
    %v7870 = vpop.f32.mrb[0].mxu0
    %v7871 = vadd.f32 0.0, %v7870
    %v7872 = vpop.f32.mrb[0].mxu0
    %7873 = vmatprep.mubr.bf16.mxu0 0
    %7874 = vmatmul.mubr.bf16.gmra.mrb[0].mxu0 %v7736
    %v7875 = vpop.f32.mrb[0].mxu0
    %v7876 = vadd.f32 0.0, %v7875
    %v7877 = vpop.f32.mrb[0].mxu0
    %v7878 = vpop.f32.mrb[0].mxu0
    %v7879 = vadd.f32 0.0, %v7878
    %v7880 = vpop.f32.mrb[0].mxu0
    %7881 = vmatprep.mubr.bf16.mxu0 0
    %7882 = vmatmul.mubr.bf16.gmra.mrb[0].mxu0 %v7737
    %v7883 = vpop.f32.mrb[0].mxu0
    %v7884 = vadd.f32 0.0, %v7883
    %v7885 = vpop.f32.mrb[0].mxu0
    %v7886 = vpop.f32.mrb[0].mxu0
    %v7887 = vadd.f32 0.0, %v7886
    %v7888 = vpop.f32.mrb[0].mxu0
    %7889 = vmatprep.mubr.bf16.mxu0 0
    %7890 = vmatmul.mubr.bf16.gmra.mrb[0].mxu0 %v7738
    %v7891 = vpop.f32.mrb[0].mxu0
    %v7892 = vadd.f32 0.0, %v7891
    %v7893 = vpop.f32.mrb[0].mxu0
    %v7894 = vpop.f32.mrb[0].mxu0
    %v7895 = vadd.f32 0.0, %v7894
    %v7896 = vpop.f32.mrb[0].mxu0
    %7897 = vmatprep.mubr.bf16.mxu0 0
    %7898 = vmatmul.mubr.bf16.gmra.mrb[0].mxu0 %v7739
    %v7899 = vpop.f32.mrb[0].mxu0
    %v7900 = vadd.f32 0.0, %v7899
    %v7901 = vpop.f32.mrb[0].mxu0
    %v7902 = vpop.f32.mrb[0].mxu0
    %v7903 = vadd.f32 0.0, %v7902
    %v7904 = vpop.f32.mrb[0].mxu0
    %7905 = vmatprep.mubr.bf16.mxu0 0
    %7906 = vmatmul.mubr.bf16.gmra.mrb[0].mxu0 %v7740
    %v7907 = vpop.f32.mrb[0].mxu0
    %v7908 = vadd.f32 0.0, %v7907
    %v7909 = vpop.f32.mrb[0].mxu0
    %v7910 = vpop.f32.mrb[0].mxu0
    %v7911 = vadd.f32 0.0, %v7910
    %v7912 = vpop.f32.mrb[0].mxu0
    %7913 = vmatprep.mubr.bf16.mxu0 0
    %7914 = vmatmul.mubr.bf16.gmra.mrb[0].mxu0 %v7741
    %v7915 = vpop.f32.mrb[0].mxu0
    %v7916 = vadd.f32 0.0, %v7915
    %v7917 = vpop.f32.mrb[0].mxu0
    %v7918 = vpop.f32.mrb[0].mxu0
    %v7919 = vadd.f32 0.0, %v7918
    %v7920 = vpop.f32.mrb[0].mxu0
    %7921 = vmatprep.mubr.bf16.mxu0 0
    %7922 = vmatmul.mubr.bf16.gmra.mrb[0].mxu0 %v7742
    %v7923 = vpop.f32.mrb[0].mxu0
    %v7924 = vadd.f32 0.0, %v7923
    %v7925 = vpop.f32.mrb[0].mxu0
    %v7926 = vpop.f32.mrb[0].mxu0
    %v7927 = vadd.f32 0.0, %v7926
    %v7928 = vpop.f32.mrb[0].mxu0
    %7929 = vmatprep.mubr.bf16.mxu0 0
    %7930 = vmatmul.mubr.bf16.gmra.mrb[0].mxu0 %v7743
    %v7931 = vpop.f32.mrb[0].mxu0
    %v7932 = vadd.f32 0.0, %v7931
    %v7933 = vpop.f32.mrb[0].mxu0
    %v7934 = vpop.f32.mrb[0].mxu0
    %v7935 = vadd.f32 0.0, %v7934
    %v7936 = vpop.f32.mrb[0].mxu0
    %7937 = vdwg.mxu0
    %v7938 = vadd.f32 %v7684, %v7844
    %v7939 = vadd.f32 %v7685, %v7847
    %v7940 = vadd.f32 %v7686, %v7852
    %v7941 = vadd.f32 %v7687, %v7855
    %v7942 = vadd.f32 %v7688, %v7860
    %v7943 = vadd.f32 %v7689, %v7863
    %v7944 = vadd.f32 %v7690, %v7868
    %v7945 = vadd.f32 %v7691, %v7871
    %v7946 = vadd.f32 %v7692, %v7876
    %v7947 = vadd.f32 %v7693, %v7879
    %v7948 = vadd.f32 %v7694, %v7884
    %v7949 = vadd.f32 %v7695, %v7887
    %v7950 = vadd.f32 %v7696, %v7892
    %v7951 = vadd.f32 %v7697, %v7895
    %v7952 = vadd.f32 %v7698, %v7900
    %v7953 = vadd.f32 %v7699, %v7903
    %v7954 = vadd.f32 %v7700, %v7908
    %v7955 = vadd.f32 %v7701, %v7911
    %v7956 = vadd.f32 %v7702, %v7916
    %v7957 = vadd.f32 %v7703, %v7919
    %v7958 = vadd.f32 %v7704, %v7924
    %v7959 = vadd.f32 %v7705, %v7927
    %v7960 = vadd.f32 %v7706, %v7932
    %v7961 = vadd.f32 %v7707, %v7935
    %v7962 = vld [vmem:[#allocation3 + $0x20] sm:$0xff]
    %v7963 = vld [vmem:[#allocation3 + $0x28] sm:$0xff]
    %v7964 = vld [vmem:[#allocation3 + $0x30] sm:$0xff]
    %v7965 = vld [vmem:[#allocation3 + $0x38] sm:$0xff]
    %v7966 = vld [vmem:[#allocation3 + $0x40] sm:$0xff]
    %v7967 = vld [vmem:[#allocation3 + $0x48] sm:$0xff]
    %v7968 = vld [vmem:[#allocation3 + $0x50] sm:$0xff]
    %v7969 = vld [vmem:[#allocation3 + $0x58] sm:$0xff]
    %v7970 = vld [vmem:[#allocation3 + $0x60] sm:$0xff]
    %v7971 = vld [vmem:[#allocation3 + $0x68] sm:$0xff]
    %v7972 = vld [vmem:[#allocation3 + $0x70] sm:$0xff]
    %v7973 = vld [vmem:[#allocation3 + $0x78] sm:$0xff]
    %v7974 = vld [vmem:[#allocation3 + $0x80] sm:$0xff]
    %v7975 = vld [vmem:[#allocation3 + $0x88] sm:$0xff]
    %v7976 = vld [vmem:[#allocation3 + $0x90] sm:$0xff]
    %v7977 = vld [vmem:[#allocation3 + $0x98] sm:$0xff]
    %v7978 = vld [vmem:[#allocation3 + $0xa0] sm:$0xff]
    %v7979 = vld [vmem:[#allocation3 + $0xa8] sm:$0xff]
    %v7980 = vld [vmem:[#allocation3 + $0xb0] sm:$0xff]
    %v7981 = vld [vmem:[#allocation3 + $0xb8] sm:$0xff]
    %v7982 = vld [vmem:[#allocation3 + $0xc0] sm:$0xff]
    %v7983 = vld [vmem:[#allocation3 + $0xc8] sm:$0xff]
    %v7984 = vld [vmem:[#allocation3 + $0xd0] sm:$0xff]
    %v7985 = vld [vmem:[#allocation3 + $0xd8] sm:$0xff]
    %v7986 = vpack.c.bf16 %v7963, %v7962
    %v7987 = vpack.c.bf16 %v7965, %v7964
    %v7988 = vpack.c.bf16 %v7967, %v7966
    %v7989 = vpack.c.bf16 %v7969, %v7968
    %v7990 = vpack.c.bf16 %v7971, %v7970
    %v7991 = vpack.c.bf16 %v7973, %v7972
    %v7992 = vpack.c.bf16 %v7975, %v7974
    %v7993 = vpack.c.bf16 %v7977, %v7976
    %v7994 = vpack.c.bf16 %v7979, %v7978
    %v7995 = vpack.c.bf16 %v7981, %v7980
    %v7996 = vpack.c.bf16 %v7983, %v7982
    %v7997 = vpack.c.bf16 %v7985, %v7984
    %s7998 = scalar_lea.vmem %s5, 384
    %v7999 = vld [vmem:[%s7998] sm:$0xf]
    %v8000 = vld [vmem:[%s7998 + $0x4] sm:$0xf]
    %v8001 = vld [vmem:[%s7998 + $0x8] sm:$0xf]
    %v8002 = vld [vmem:[%s7998 + $0xc] sm:$0xf]
    %v8003 = vld [vmem:[%s7998 + $0x10] sm:$0xf]
    %v8004 = vld [vmem:[%s7998 + $0x14] sm:$0xf]
    %v8005 = vld [vmem:[%s7998 + $0x18] sm:$0xf]
    %v8006 = vld [vmem:[%s7998 + $0x1c] sm:$0xf]
    %v8007 = vld [vmem:[%s7998 + $0x20] sm:$0xf]
    %v8008 = vld [vmem:[%s7998 + $0x24] sm:$0xf]
    %v8009 = vld [vmem:[%s7998 + $0x28] sm:$0xf]
    %v8010 = vld [vmem:[%s7998 + $0x2c] sm:$0xf]
    %v8011 = vld [vmem:[%s7998 + $0x30] sm:$0xf]
    %v8012 = vld [vmem:[%s7998 + $0x34] sm:$0xf]
    %v8013 = vld [vmem:[%s7998 + $0x38] sm:$0xf]
    %v8014 = vld [vmem:[%s7998 + $0x3c] sm:$0xf]
    %v8031 = vunpack.c.l.b16 %v7999
    %v8032 = vunpack.c.l.b16 %v8000
    %v8033 = vunpack.c.l.b16 %v8001
    %v8034 = vunpack.c.l.b16 %v8002
    %v8035 = vunpack.c.l.b16 %v8003
    %v8036 = vunpack.c.l.b16 %v8004
    %v8037 = vunpack.c.l.b16 %v8005
    %v8038 = vunpack.c.l.b16 %v8006
    %v8039 = vunpack.c.l.b16 %v8007
    %v8040 = vunpack.c.l.b16 %v8008
    %v8041 = vunpack.c.l.b16 %v8009
    %v8042 = vunpack.c.l.b16 %v8010
    %v8043 = vunpack.c.l.b16 %v8011
    %v8044 = vunpack.c.l.b16 %v8012
    %v8045 = vunpack.c.l.b16 %v8013
    %v8046 = vunpack.c.l.b16 %v8014
    %v8047 = vpack.c.b16 %v8032, %v8031
    %v8048 = vpack.c.b16 %v8034, %v8033
    %v8049 = vpack.c.b16 %v8036, %v8035
    %v8050 = vpack.c.b16 %v8038, %v8037
    %v8051 = vpack.c.b16 %v8040, %v8039
    %v8052 = vpack.c.b16 %v8042, %v8041
    %v8053 = vpack.c.b16 %v8044, %v8043
    %v8054 = vpack.c.b16 %v8046, %v8045
    %8063 = vmatprep.subr.bf16.mxu0 0
    %8064 = vmatpush1.bf16.msra.mxu0 %v8047
    %8065 = vmatprep.subr.bf16.mxu0 0
    %8066 = vmatpush1.bf16.msra.mxu0 %v8048
    %8067 = vmatprep.subr.bf16.mxu0 0
    %8068 = vmatpush1.bf16.msra.mxu0 %v8049
    %8069 = vmatprep.subr.bf16.mxu0 0
    %8070 = vmatpush1.bf16.msra.mxu0 %v8050
    %8071 = vmatprep.subr.bf16.mxu0 0
    %8072 = vmatpush1.bf16.msra.mxu0 %v8051
    %8073 = vmatprep.subr.bf16.mxu0 0
    %8074 = vmatpush1.bf16.msra.mxu0 %v8052
    %8075 = vmatprep.subr.bf16.mxu0 0
    %8076 = vmatpush1.bf16.msra.mxu0 %v8053
    %8077 = vmatprep.subr.bf16.mxu0 0
    %8078 = vmatpush1.bf16.msra.mxu0 %v8054
    %8079 = vmatprep.subr.bf16.mxu0 0
    %8080 = vmatpush1.bf16.msra.mxu0 0
    %8081 = vmatprep.subr.bf16.mxu0 0
    %8082 = vmatpush1.bf16.msra.mxu0 0
    %8083 = vmatprep.subr.bf16.mxu0 0
    %8084 = vmatpush1.bf16.msra.mxu0 0
    %8085 = vmatprep.subr.bf16.mxu0 0
    %8086 = vmatpush1.bf16.msra.mxu0 0
    %8087 = vmatprep.subr.bf16.mxu0 0
    %8088 = vmatpush1.bf16.msra.mxu0 0
    %8089 = vmatprep.subr.bf16.mxu0 0
    %8090 = vmatpush1.bf16.msra.mxu0 0
    %8091 = vmatprep.subr.bf16.mxu0 0
    %8092 = vmatpush1.bf16.msra.mxu0 0
    %8093 = vmatprep.subr.bf16.mxu0 0
    %8094 = vmatpush1.bf16.msra.mxu0 0
    %8095 = vmatprep.mubr.bf16.mxu0 0
    %8096 = vmatmul.mubr.bf16.gmra.mrb[0].mxu0 %v7986
    %v8097 = vpop.f32.mrb[0].mxu0
    %v8098 = vadd.f32 0.0, %v8097
    %v8099 = vpop.f32.mrb[0].mxu0
    %v8100 = vpop.f32.mrb[0].mxu0
    %v8101 = vadd.f32 0.0, %v8100
    %v8102 = vpop.f32.mrb[0].mxu0
    %8103 = vmatprep.mubr.bf16.mxu0 0
    %8104 = vmatmul.mubr.bf16.gmra.mrb[0].mxu0 %v7987
    %v8105 = vpop.f32.mrb[0].mxu0
    %v8106 = vadd.f32 0.0, %v8105
    %v8107 = vpop.f32.mrb[0].mxu0
    %v8108 = vpop.f32.mrb[0].mxu0
    %v8109 = vadd.f32 0.0, %v8108
    %v8110 = vpop.f32.mrb[0].mxu0
    %8111 = vmatprep.mubr.bf16.mxu0 0
    %8112 = vmatmul.mubr.bf16.gmra.mrb[0].mxu0 %v7988
    %v8113 = vpop.f32.mrb[0].mxu0
    %v8114 = vadd.f32 0.0, %v8113
    %v8115 = vpop.f32.mrb[0].mxu0
    %v8116 = vpop.f32.mrb[0].mxu0
    %v8117 = vadd.f32 0.0, %v8116
    %v8118 = vpop.f32.mrb[0].mxu0
    %8119 = vmatprep.mubr.bf16.mxu0 0
    %8120 = vmatmul.mubr.bf16.gmra.mrb[0].mxu0 %v7989
    %v8121 = vpop.f32.mrb[0].mxu0
    %v8122 = vadd.f32 0.0, %v8121
    %v8123 = vpop.f32.mrb[0].mxu0
    %v8124 = vpop.f32.mrb[0].mxu0
    %v8125 = vadd.f32 0.0, %v8124
    %v8126 = vpop.f32.mrb[0].mxu0
    %8127 = vmatprep.mubr.bf16.mxu0 0
    %8128 = vmatmul.mubr.bf16.gmra.mrb[0].mxu0 %v7990
    %v8129 = vpop.f32.mrb[0].mxu0
    %v8130 = vadd.f32 0.0, %v8129
    %v8131 = vpop.f32.mrb[0].mxu0
    %v8132 = vpop.f32.mrb[0].mxu0
    %v8133 = vadd.f32 0.0, %v8132
    %v8134 = vpop.f32.mrb[0].mxu0
    %8135 = vmatprep.mubr.bf16.mxu0 0
    %8136 = vmatmul.mubr.bf16.gmra.mrb[0].mxu0 %v7991
    %v8137 = vpop.f32.mrb[0].mxu0
    %v8138 = vadd.f32 0.0, %v8137
    %v8139 = vpop.f32.mrb[0].mxu0
    %v8140 = vpop.f32.mrb[0].mxu0
    %v8141 = vadd.f32 0.0, %v8140
    %v8142 = vpop.f32.mrb[0].mxu0
    %8143 = vmatprep.mubr.bf16.mxu0 0
    %8144 = vmatmul.mubr.bf16.gmra.mrb[0].mxu0 %v7992
    %v8145 = vpop.f32.mrb[0].mxu0
    %v8146 = vadd.f32 0.0, %v8145
    %v8147 = vpop.f32.mrb[0].mxu0
    %v8148 = vpop.f32.mrb[0].mxu0
    %v8149 = vadd.f32 0.0, %v8148
    %v8150 = vpop.f32.mrb[0].mxu0
    %8151 = vmatprep.mubr.bf16.mxu0 0
    %8152 = vmatmul.mubr.bf16.gmra.mrb[0].mxu0 %v7993
    %v8153 = vpop.f32.mrb[0].mxu0
    %v8154 = vadd.f32 0.0, %v8153
    %v8155 = vpop.f32.mrb[0].mxu0
    %v8156 = vpop.f32.mrb[0].mxu0
    %v8157 = vadd.f32 0.0, %v8156
    %v8158 = vpop.f32.mrb[0].mxu0
    %8159 = vmatprep.mubr.bf16.mxu0 0
    %8160 = vmatmul.mubr.bf16.gmra.mrb[0].mxu0 %v7994
    %v8161 = vpop.f32.mrb[0].mxu0
    %v8162 = vadd.f32 0.0, %v8161
    %v8163 = vpop.f32.mrb[0].mxu0
    %v8164 = vpop.f32.mrb[0].mxu0
    %v8165 = vadd.f32 0.0, %v8164
    %v8166 = vpop.f32.mrb[0].mxu0
    %8167 = vmatprep.mubr.bf16.mxu0 0
    %8168 = vmatmul.mubr.bf16.gmra.mrb[0].mxu0 %v7995
    %v8169 = vpop.f32.mrb[0].mxu0
    %v8170 = vadd.f32 0.0, %v8169
    %v8171 = vpop.f32.mrb[0].mxu0
    %v8172 = vpop.f32.mrb[0].mxu0
    %v8173 = vadd.f32 0.0, %v8172
    %v8174 = vpop.f32.mrb[0].mxu0
    %8175 = vmatprep.mubr.bf16.mxu0 0
    %8176 = vmatmul.mubr.bf16.gmra.mrb[0].mxu0 %v7996
    %v8177 = vpop.f32.mrb[0].mxu0
    %v8178 = vadd.f32 0.0, %v8177
    %v8179 = vpop.f32.mrb[0].mxu0
    %v8180 = vpop.f32.mrb[0].mxu0
    %v8181 = vadd.f32 0.0, %v8180
    %v8182 = vpop.f32.mrb[0].mxu0
    %8183 = vmatprep.mubr.bf16.mxu0 0
    %8184 = vmatmul.mubr.bf16.gmra.mrb[0].mxu0 %v7997
    %v8185 = vpop.f32.mrb[0].mxu0
    %v8186 = vadd.f32 0.0, %v8185
    %v8187 = vpop.f32.mrb[0].mxu0
    %v8188 = vpop.f32.mrb[0].mxu0
    %v8189 = vadd.f32 0.0, %v8188
    %v8190 = vpop.f32.mrb[0].mxu0
    %8191 = vdwg.mxu0
    %v8192 = vadd.f32 %v7938, %v8098
    %v8193 = vadd.f32 %v7939, %v8101
    %v8194 = vadd.f32 %v7940, %v8106
    %v8195 = vadd.f32 %v7941, %v8109
    %v8196 = vadd.f32 %v7942, %v8114
    %v8197 = vadd.f32 %v7943, %v8117
    %v8198 = vadd.f32 %v7944, %v8122
    %v8199 = vadd.f32 %v7945, %v8125
    %v8200 = vadd.f32 %v7946, %v8130
    %v8201 = vadd.f32 %v7947, %v8133
    %v8202 = vadd.f32 %v7948, %v8138
    %v8203 = vadd.f32 %v7949, %v8141
    %v8204 = vadd.f32 %v7950, %v8146
    %v8205 = vadd.f32 %v7951, %v8149
    %v8206 = vadd.f32 %v7952, %v8154
    %v8207 = vadd.f32 %v7953, %v8157
    %v8208 = vadd.f32 %v7954, %v8162
    %v8209 = vadd.f32 %v7955, %v8165
    %v8210 = vadd.f32 %v7956, %v8170
    %v8211 = vadd.f32 %v7957, %v8173
    %v8212 = vadd.f32 %v7958, %v8178
    %v8213 = vadd.f32 %v7959, %v8181
    %v8214 = vadd.f32 %v7960, %v8186
    %v8215 = vadd.f32 %v7961, %v8189
    %v8216 = vld [vmem:[#allocation3 + $0x21] sm:$0xff]
    %v8217 = vld [vmem:[#allocation3 + $0x29] sm:$0xff]
    %v8218 = vld [vmem:[#allocation3 + $0x31] sm:$0xff]
    %v8219 = vld [vmem:[#allocation3 + $0x39] sm:$0xff]
    %v8220 = vld [vmem:[#allocation3 + $0x41] sm:$0xff]
    %v8221 = vld [vmem:[#allocation3 + $0x49] sm:$0xff]
    %v8222 = vld [vmem:[#allocation3 + $0x51] sm:$0xff]
    %v8223 = vld [vmem:[#allocation3 + $0x59] sm:$0xff]
    %v8224 = vld [vmem:[#allocation3 + $0x61] sm:$0xff]
    %v8225 = vld [vmem:[#allocation3 + $0x69] sm:$0xff]
    %v8226 = vld [vmem:[#allocation3 + $0x71] sm:$0xff]
    %v8227 = vld [vmem:[#allocation3 + $0x79] sm:$0xff]
    %v8228 = vld [vmem:[#allocation3 + $0x81] sm:$0xff]
    %v8229 = vld [vmem:[#allocation3 + $0x89] sm:$0xff]
    %v8230 = vld [vmem:[#allocation3 + $0x91] sm:$0xff]
    %v8231 = vld [vmem:[#allocation3 + $0x99] sm:$0xff]
    %v8232 = vld [vmem:[#allocation3 + $0xa1] sm:$0xff]
    %v8233 = vld [vmem:[#allocation3 + $0xa9] sm:$0xff]
    %v8234 = vld [vmem:[#allocation3 + $0xb1] sm:$0xff]
    %v8235 = vld [vmem:[#allocation3 + $0xb9] sm:$0xff]
    %v8236 = vld [vmem:[#allocation3 + $0xc1] sm:$0xff]
    %v8237 = vld [vmem:[#allocation3 + $0xc9] sm:$0xff]
    %v8238 = vld [vmem:[#allocation3 + $0xd1] sm:$0xff]
    %v8239 = vld [vmem:[#allocation3 + $0xd9] sm:$0xff]
    %v8240 = vpack.c.bf16 %v8217, %v8216
    %v8241 = vpack.c.bf16 %v8219, %v8218
    %v8242 = vpack.c.bf16 %v8221, %v8220
    %v8243 = vpack.c.bf16 %v8223, %v8222
    %v8244 = vpack.c.bf16 %v8225, %v8224
    %v8245 = vpack.c.bf16 %v8227, %v8226
    %v8246 = vpack.c.bf16 %v8229, %v8228
    %v8247 = vpack.c.bf16 %v8231, %v8230
    %v8248 = vpack.c.bf16 %v8233, %v8232
    %v8249 = vpack.c.bf16 %v8235, %v8234
    %v8250 = vpack.c.bf16 %v8237, %v8236
    %v8251 = vpack.c.bf16 %v8239, %v8238
    %s8252 = scalar_lea.vmem %s5, 448
    %v8253 = vld [vmem:[%s8252] sm:$0xf]
    %v8254 = vld [vmem:[%s8252 + $0x4] sm:$0xf]
    %v8255 = vld [vmem:[%s8252 + $0x8] sm:$0xf]
    %v8256 = vld [vmem:[%s8252 + $0xc] sm:$0xf]
    %v8257 = vld [vmem:[%s8252 + $0x10] sm:$0xf]
    %v8258 = vld [vmem:[%s8252 + $0x14] sm:$0xf]
    %v8259 = vld [vmem:[%s8252 + $0x18] sm:$0xf]
    %v8260 = vld [vmem:[%s8252 + $0x1c] sm:$0xf]
    %v8261 = vld [vmem:[%s8252 + $0x20] sm:$0xf]
    %v8262 = vld [vmem:[%s8252 + $0x24] sm:$0xf]
    %v8263 = vld [vmem:[%s8252 + $0x28] sm:$0xf]
    %v8264 = vld [vmem:[%s8252 + $0x2c] sm:$0xf]
    %v8265 = vld [vmem:[%s8252 + $0x30] sm:$0xf]
    %v8266 = vld [vmem:[%s8252 + $0x34] sm:$0xf]
    %v8267 = vld [vmem:[%s8252 + $0x38] sm:$0xf]
    %v8268 = vld [vmem:[%s8252 + $0x3c] sm:$0xf]
    %v8285 = vunpack.c.l.b16 %v8253
    %v8286 = vunpack.c.l.b16 %v8254
    %v8287 = vunpack.c.l.b16 %v8255
    %v8288 = vunpack.c.l.b16 %v8256
    %v8289 = vunpack.c.l.b16 %v8257
    %v8290 = vunpack.c.l.b16 %v8258
    %v8291 = vunpack.c.l.b16 %v8259
    %v8292 = vunpack.c.l.b16 %v8260
    %v8293 = vunpack.c.l.b16 %v8261
    %v8294 = vunpack.c.l.b16 %v8262
    %v8295 = vunpack.c.l.b16 %v8263
    %v8296 = vunpack.c.l.b16 %v8264
    %v8297 = vunpack.c.l.b16 %v8265
    %v8298 = vunpack.c.l.b16 %v8266
    %v8299 = vunpack.c.l.b16 %v8267
    %v8300 = vunpack.c.l.b16 %v8268
    %v8301 = vpack.c.b16 %v8286, %v8285
    %v8302 = vpack.c.b16 %v8288, %v8287
    %v8303 = vpack.c.b16 %v8290, %v8289
    %v8304 = vpack.c.b16 %v8292, %v8291
    %v8305 = vpack.c.b16 %v8294, %v8293
    %v8306 = vpack.c.b16 %v8296, %v8295
    %v8307 = vpack.c.b16 %v8298, %v8297
    %v8308 = vpack.c.b16 %v8300, %v8299
    %8317 = vmatprep.subr.bf16.mxu0 0
    %8318 = vmatpush1.bf16.msra.mxu0 %v8301
    %8319 = vmatprep.subr.bf16.mxu0 0
    %8320 = vmatpush1.bf16.msra.mxu0 %v8302
    %8321 = vmatprep.subr.bf16.mxu0 0
    %8322 = vmatpush1.bf16.msra.mxu0 %v8303
    %8323 = vmatprep.subr.bf16.mxu0 0
    %8324 = vmatpush1.bf16.msra.mxu0 %v8304
    %8325 = vmatprep.subr.bf16.mxu0 0
    %8326 = vmatpush1.bf16.msra.mxu0 %v8305
    %8327 = vmatprep.subr.bf16.mxu0 0
    %8328 = vmatpush1.bf16.msra.mxu0 %v8306
    %8329 = vmatprep.subr.bf16.mxu0 0
    %8330 = vmatpush1.bf16.msra.mxu0 %v8307
    %8331 = vmatprep.subr.bf16.mxu0 0
    %8332 = vmatpush1.bf16.msra.mxu0 %v8308
    %8333 = vmatprep.subr.bf16.mxu0 0
    %8334 = vmatpush1.bf16.msra.mxu0 0
    %8335 = vmatprep.subr.bf16.mxu0 0
    %8336 = vmatpush1.bf16.msra.mxu0 0
    %8337 = vmatprep.subr.bf16.mxu0 0
    %8338 = vmatpush1.bf16.msra.mxu0 0
    %8339 = vmatprep.subr.bf16.mxu0 0
    %8340 = vmatpush1.bf16.msra.mxu0 0
    %8341 = vmatprep.subr.bf16.mxu0 0
    %8342 = vmatpush1.bf16.msra.mxu0 0
    %8343 = vmatprep.subr.bf16.mxu0 0
    %8344 = vmatpush1.bf16.msra.mxu0 0
    %8345 = vmatprep.subr.bf16.mxu0 0
    %8346 = vmatpush1.bf16.msra.mxu0 0
    %8347 = vmatprep.subr.bf16.mxu0 0
    %8348 = vmatpush1.bf16.msra.mxu0 0
    %8349 = vmatprep.mubr.bf16.mxu0 0
    %8350 = vmatmul.mubr.bf16.gmra.mrb[0].mxu0 %v8240
    %v8351 = vpop.f32.mrb[0].mxu0
    %v8352 = vadd.f32 0.0, %v8351
    %v8353 = vpop.f32.mrb[0].mxu0
    %v8354 = vpop.f32.mrb[0].mxu0
    %v8355 = vadd.f32 0.0, %v8354
    %v8356 = vpop.f32.mrb[0].mxu0
    %8357 = vmatprep.mubr.bf16.mxu0 0
    %8358 = vmatmul.mubr.bf16.gmra.mrb[0].mxu0 %v8241
    %v8359 = vpop.f32.mrb[0].mxu0
    %v8360 = vadd.f32 0.0, %v8359
    %v8361 = vpop.f32.mrb[0].mxu0
    %v8362 = vpop.f32.mrb[0].mxu0
    %v8363 = vadd.f32 0.0, %v8362
    %v8364 = vpop.f32.mrb[0].mxu0
    %8365 = vmatprep.mubr.bf16.mxu0 0
    %8366 = vmatmul.mubr.bf16.gmra.mrb[0].mxu0 %v8242
    %v8367 = vpop.f32.mrb[0].mxu0
    %v8368 = vadd.f32 0.0, %v8367
    %v8369 = vpop.f32.mrb[0].mxu0
    %v8370 = vpop.f32.mrb[0].mxu0
    %v8371 = vadd.f32 0.0, %v8370
    %v8372 = vpop.f32.mrb[0].mxu0
    %8373 = vmatprep.mubr.bf16.mxu0 0
    %8374 = vmatmul.mubr.bf16.gmra.mrb[0].mxu0 %v8243
    %v8375 = vpop.f32.mrb[0].mxu0
    %v8376 = vadd.f32 0.0, %v8375
    %v8377 = vpop.f32.mrb[0].mxu0
    %v8378 = vpop.f32.mrb[0].mxu0
    %v8379 = vadd.f32 0.0, %v8378
    %v8380 = vpop.f32.mrb[0].mxu0
    %8381 = vmatprep.mubr.bf16.mxu0 0
    %8382 = vmatmul.mubr.bf16.gmra.mrb[0].mxu0 %v8244
    %v8383 = vpop.f32.mrb[0].mxu0
    %v8384 = vadd.f32 0.0, %v8383
    %v8385 = vpop.f32.mrb[0].mxu0
    %v8386 = vpop.f32.mrb[0].mxu0
    %v8387 = vadd.f32 0.0, %v8386
    %v8388 = vpop.f32.mrb[0].mxu0
    %8389 = vmatprep.mubr.bf16.mxu0 0
    %8390 = vmatmul.mubr.bf16.gmra.mrb[0].mxu0 %v8245
    %v8391 = vpop.f32.mrb[0].mxu0
    %v8392 = vadd.f32 0.0, %v8391
    %v8393 = vpop.f32.mrb[0].mxu0
    %v8394 = vpop.f32.mrb[0].mxu0
    %v8395 = vadd.f32 0.0, %v8394
    %v8396 = vpop.f32.mrb[0].mxu0
    %8397 = vmatprep.mubr.bf16.mxu0 0
    %8398 = vmatmul.mubr.bf16.gmra.mrb[0].mxu0 %v8246
    %v8399 = vpop.f32.mrb[0].mxu0
    %v8400 = vadd.f32 0.0, %v8399
    %v8401 = vpop.f32.mrb[0].mxu0
    %v8402 = vpop.f32.mrb[0].mxu0
    %v8403 = vadd.f32 0.0, %v8402
    %v8404 = vpop.f32.mrb[0].mxu0
    %8405 = vmatprep.mubr.bf16.mxu0 0
    %8406 = vmatmul.mubr.bf16.gmra.mrb[0].mxu0 %v8247
    %v8407 = vpop.f32.mrb[0].mxu0
    %v8408 = vadd.f32 0.0, %v8407
    %v8409 = vpop.f32.mrb[0].mxu0
    %v8410 = vpop.f32.mrb[0].mxu0
    %v8411 = vadd.f32 0.0, %v8410
    %v8412 = vpop.f32.mrb[0].mxu0
    %8413 = vmatprep.mubr.bf16.mxu0 0
    %8414 = vmatmul.mubr.bf16.gmra.mrb[0].mxu0 %v8248
    %v8415 = vpop.f32.mrb[0].mxu0
    %v8416 = vadd.f32 0.0, %v8415
    %v8417 = vpop.f32.mrb[0].mxu0
    %v8418 = vpop.f32.mrb[0].mxu0
    %v8419 = vadd.f32 0.0, %v8418
    %v8420 = vpop.f32.mrb[0].mxu0
    %8421 = vmatprep.mubr.bf16.mxu0 0
    %8422 = vmatmul.mubr.bf16.gmra.mrb[0].mxu0 %v8249
    %v8423 = vpop.f32.mrb[0].mxu0
    %v8424 = vadd.f32 0.0, %v8423
    %v8425 = vpop.f32.mrb[0].mxu0
    %v8426 = vpop.f32.mrb[0].mxu0
    %v8427 = vadd.f32 0.0, %v8426
    %v8428 = vpop.f32.mrb[0].mxu0
    %8429 = vmatprep.mubr.bf16.mxu0 0
    %8430 = vmatmul.mubr.bf16.gmra.mrb[0].mxu0 %v8250
    %v8431 = vpop.f32.mrb[0].mxu0
    %v8432 = vadd.f32 0.0, %v8431
    %v8433 = vpop.f32.mrb[0].mxu0
    %v8434 = vpop.f32.mrb[0].mxu0
    %v8435 = vadd.f32 0.0, %v8434
    %v8436 = vpop.f32.mrb[0].mxu0
    %8437 = vmatprep.mubr.bf16.mxu0 0
    %8438 = vmatmul.mubr.bf16.gmra.mrb[0].mxu0 %v8251
    %v8439 = vpop.f32.mrb[0].mxu0
    %v8440 = vadd.f32 0.0, %v8439
    %v8441 = vpop.f32.mrb[0].mxu0
    %v8442 = vpop.f32.mrb[0].mxu0
    %v8443 = vadd.f32 0.0, %v8442
    %v8444 = vpop.f32.mrb[0].mxu0
    %8445 = vdwg.mxu0
    %v8446 = vadd.f32 %v8192, %v8352
    %v8447 = vadd.f32 %v8193, %v8355
    %v8448 = vadd.f32 %v8194, %v8360
    %v8449 = vadd.f32 %v8195, %v8363
    %v8450 = vadd.f32 %v8196, %v8368
    %v8451 = vadd.f32 %v8197, %v8371
    %v8452 = vadd.f32 %v8198, %v8376
    %v8453 = vadd.f32 %v8199, %v8379
    %v8454 = vadd.f32 %v8200, %v8384
    %v8455 = vadd.f32 %v8201, %v8387
    %v8456 = vadd.f32 %v8202, %v8392
    %v8457 = vadd.f32 %v8203, %v8395
    %v8458 = vadd.f32 %v8204, %v8400
    %v8459 = vadd.f32 %v8205, %v8403
    %v8460 = vadd.f32 %v8206, %v8408
    %v8461 = vadd.f32 %v8207, %v8411
    %v8462 = vadd.f32 %v8208, %v8416
    %v8463 = vadd.f32 %v8209, %v8419
    %v8464 = vadd.f32 %v8210, %v8424
    %v8465 = vadd.f32 %v8211, %v8427
    %v8466 = vadd.f32 %v8212, %v8432
    %v8467 = vadd.f32 %v8213, %v8435
    %v8468 = vadd.f32 %v8214, %v8440
    %v8469 = vadd.f32 %v8215, %v8443
    %v8470 = vld [vmem:[#allocation3 + $0x22] sm:$0xff]
    %v8471 = vld [vmem:[#allocation3 + $0x2a] sm:$0xff]
    %v8472 = vld [vmem:[#allocation3 + $0x32] sm:$0xff]
    %v8473 = vld [vmem:[#allocation3 + $0x3a] sm:$0xff]
    %v8474 = vld [vmem:[#allocation3 + $0x42] sm:$0xff]
    %v8475 = vld [vmem:[#allocation3 + $0x4a] sm:$0xff]
    %v8476 = vld [vmem:[#allocation3 + $0x52] sm:$0xff]
    %v8477 = vld [vmem:[#allocation3 + $0x5a] sm:$0xff]
    %v8478 = vld [vmem:[#allocation3 + $0x62] sm:$0xff]
    %v8479 = vld [vmem:[#allocation3 + $0x6a] sm:$0xff]
    %v8480 = vld [vmem:[#allocation3 + $0x72] sm:$0xff]
    %v8481 = vld [vmem:[#allocation3 + $0x7a] sm:$0xff]
    %v8482 = vld [vmem:[#allocation3 + $0x82] sm:$0xff]
    %v8483 = vld [vmem:[#allocation3 + $0x8a] sm:$0xff]
    %v8484 = vld [vmem:[#allocation3 + $0x92] sm:$0xff]
    %v8485 = vld [vmem:[#allocation3 + $0x9a] sm:$0xff]
    %v8486 = vld [vmem:[#allocation3 + $0xa2] sm:$0xff]
    %v8487 = vld [vmem:[#allocation3 + $0xaa] sm:$0xff]
    %v8488 = vld [vmem:[#allocation3 + $0xb2] sm:$0xff]
    %v8489 = vld [vmem:[#allocation3 + $0xba] sm:$0xff]
    %v8490 = vld [vmem:[#allocation3 + $0xc2] sm:$0xff]
    %v8491 = vld [vmem:[#allocation3 + $0xca] sm:$0xff]
    %v8492 = vld [vmem:[#allocation3 + $0xd2] sm:$0xff]
    %v8493 = vld [vmem:[#allocation3 + $0xda] sm:$0xff]
    %v8494 = vpack.c.bf16 %v8471, %v8470
    %v8495 = vpack.c.bf16 %v8473, %v8472
    %v8496 = vpack.c.bf16 %v8475, %v8474
    %v8497 = vpack.c.bf16 %v8477, %v8476
    %v8498 = vpack.c.bf16 %v8479, %v8478
    %v8499 = vpack.c.bf16 %v8481, %v8480
    %v8500 = vpack.c.bf16 %v8483, %v8482
    %v8501 = vpack.c.bf16 %v8485, %v8484
    %v8502 = vpack.c.bf16 %v8487, %v8486
    %v8503 = vpack.c.bf16 %v8489, %v8488
    %v8504 = vpack.c.bf16 %v8491, %v8490
    %v8505 = vpack.c.bf16 %v8493, %v8492
    %s8506 = scalar_lea.vmem %s5, 512
    %v8507 = vld [vmem:[%s8506] sm:$0xf]
    %v8508 = vld [vmem:[%s8506 + $0x4] sm:$0xf]
    %v8509 = vld [vmem:[%s8506 + $0x8] sm:$0xf]
    %v8510 = vld [vmem:[%s8506 + $0xc] sm:$0xf]
    %v8511 = vld [vmem:[%s8506 + $0x10] sm:$0xf]
    %v8512 = vld [vmem:[%s8506 + $0x14] sm:$0xf]
    %v8513 = vld [vmem:[%s8506 + $0x18] sm:$0xf]
    %v8514 = vld [vmem:[%s8506 + $0x1c] sm:$0xf]
    %v8515 = vld [vmem:[%s8506 + $0x20] sm:$0xf]
    %v8516 = vld [vmem:[%s8506 + $0x24] sm:$0xf]
    %v8517 = vld [vmem:[%s8506 + $0x28] sm:$0xf]
    %v8518 = vld [vmem:[%s8506 + $0x2c] sm:$0xf]
    %v8519 = vld [vmem:[%s8506 + $0x30] sm:$0xf]
    %v8520 = vld [vmem:[%s8506 + $0x34] sm:$0xf]
    %v8521 = vld [vmem:[%s8506 + $0x38] sm:$0xf]
    %v8522 = vld [vmem:[%s8506 + $0x3c] sm:$0xf]
    %v8539 = vunpack.c.l.b16 %v8507
    %v8540 = vunpack.c.l.b16 %v8508
    %v8541 = vunpack.c.l.b16 %v8509
    %v8542 = vunpack.c.l.b16 %v8510
    %v8543 = vunpack.c.l.b16 %v8511
    %v8544 = vunpack.c.l.b16 %v8512
    %v8545 = vunpack.c.l.b16 %v8513
    %v8546 = vunpack.c.l.b16 %v8514
    %v8547 = vunpack.c.l.b16 %v8515
    %v8548 = vunpack.c.l.b16 %v8516
    %v8549 = vunpack.c.l.b16 %v8517
    %v8550 = vunpack.c.l.b16 %v8518
    %v8551 = vunpack.c.l.b16 %v8519
    %v8552 = vunpack.c.l.b16 %v8520
    %v8553 = vunpack.c.l.b16 %v8521
    %v8554 = vunpack.c.l.b16 %v8522
    %v8555 = vpack.c.b16 %v8540, %v8539
    %v8556 = vpack.c.b16 %v8542, %v8541
    %v8557 = vpack.c.b16 %v8544, %v8543
    %v8558 = vpack.c.b16 %v8546, %v8545
    %v8559 = vpack.c.b16 %v8548, %v8547
    %v8560 = vpack.c.b16 %v8550, %v8549
    %v8561 = vpack.c.b16 %v8552, %v8551
    %v8562 = vpack.c.b16 %v8554, %v8553
    %8571 = vmatprep.subr.bf16.mxu0 0
    %8572 = vmatpush1.bf16.msra.mxu0 %v8555
    %8573 = vmatprep.subr.bf16.mxu0 0
    %8574 = vmatpush1.bf16.msra.mxu0 %v8556
    %8575 = vmatprep.subr.bf16.mxu0 0
    %8576 = vmatpush1.bf16.msra.mxu0 %v8557
    %8577 = vmatprep.subr.bf16.mxu0 0
    %8578 = vmatpush1.bf16.msra.mxu0 %v8558
    %8579 = vmatprep.subr.bf16.mxu0 0
    %8580 = vmatpush1.bf16.msra.mxu0 %v8559
    %8581 = vmatprep.subr.bf16.mxu0 0
    %8582 = vmatpush1.bf16.msra.mxu0 %v8560
    %8583 = vmatprep.subr.bf16.mxu0 0
    %8584 = vmatpush1.bf16.msra.mxu0 %v8561
    %8585 = vmatprep.subr.bf16.mxu0 0
    %8586 = vmatpush1.bf16.msra.mxu0 %v8562
    %8587 = vmatprep.subr.bf16.mxu0 0
    %8588 = vmatpush1.bf16.msra.mxu0 0
    %8589 = vmatprep.subr.bf16.mxu0 0
    %8590 = vmatpush1.bf16.msra.mxu0 0
    %8591 = vmatprep.subr.bf16.mxu0 0
    %8592 = vmatpush1.bf16.msra.mxu0 0
    %8593 = vmatprep.subr.bf16.mxu0 0
    %8594 = vmatpush1.bf16.msra.mxu0 0
    %8595 = vmatprep.subr.bf16.mxu0 0
    %8596 = vmatpush1.bf16.msra.mxu0 0
    %8597 = vmatprep.subr.bf16.mxu0 0
    %8598 = vmatpush1.bf16.msra.mxu0 0
    %8599 = vmatprep.subr.bf16.mxu0 0
    %8600 = vmatpush1.bf16.msra.mxu0 0
    %8601 = vmatprep.subr.bf16.mxu0 0
    %8602 = vmatpush1.bf16.msra.mxu0 0
    %8603 = vmatprep.mubr.bf16.mxu0 0
    %8604 = vmatmul.mubr.bf16.gmra.mrb[0].mxu0 %v8494
    %v8605 = vpop.f32.mrb[0].mxu0
    %v8606 = vadd.f32 0.0, %v8605
    %v8607 = vpop.f32.mrb[0].mxu0
    %v8608 = vpop.f32.mrb[0].mxu0
    %v8609 = vadd.f32 0.0, %v8608
    %v8610 = vpop.f32.mrb[0].mxu0
    %8611 = vmatprep.mubr.bf16.mxu0 0
    %8612 = vmatmul.mubr.bf16.gmra.mrb[0].mxu0 %v8495
    %v8613 = vpop.f32.mrb[0].mxu0
    %v8614 = vadd.f32 0.0, %v8613
    %v8615 = vpop.f32.mrb[0].mxu0
    %v8616 = vpop.f32.mrb[0].mxu0
    %v8617 = vadd.f32 0.0, %v8616
    %v8618 = vpop.f32.mrb[0].mxu0
    %8619 = vmatprep.mubr.bf16.mxu0 0
    %8620 = vmatmul.mubr.bf16.gmra.mrb[0].mxu0 %v8496
    %v8621 = vpop.f32.mrb[0].mxu0
    %v8622 = vadd.f32 0.0, %v8621
    %v8623 = vpop.f32.mrb[0].mxu0
    %v8624 = vpop.f32.mrb[0].mxu0
    %v8625 = vadd.f32 0.0, %v8624
    %v8626 = vpop.f32.mrb[0].mxu0
    %8627 = vmatprep.mubr.bf16.mxu0 0
    %8628 = vmatmul.mubr.bf16.gmra.mrb[0].mxu0 %v8497
    %v8629 = vpop.f32.mrb[0].mxu0
    %v8630 = vadd.f32 0.0, %v8629
    %v8631 = vpop.f32.mrb[0].mxu0
    %v8632 = vpop.f32.mrb[0].mxu0
    %v8633 = vadd.f32 0.0, %v8632
    %v8634 = vpop.f32.mrb[0].mxu0
    %8635 = vmatprep.mubr.bf16.mxu0 0
    %8636 = vmatmul.mubr.bf16.gmra.mrb[0].mxu0 %v8498
    %v8637 = vpop.f32.mrb[0].mxu0
    %v8638 = vadd.f32 0.0, %v8637
    %v8639 = vpop.f32.mrb[0].mxu0
    %v8640 = vpop.f32.mrb[0].mxu0
    %v8641 = vadd.f32 0.0, %v8640
    %v8642 = vpop.f32.mrb[0].mxu0
    %8643 = vmatprep.mubr.bf16.mxu0 0
    %8644 = vmatmul.mubr.bf16.gmra.mrb[0].mxu0 %v8499
    %v8645 = vpop.f32.mrb[0].mxu0
    %v8646 = vadd.f32 0.0, %v8645
    %v8647 = vpop.f32.mrb[0].mxu0
    %v8648 = vpop.f32.mrb[0].mxu0
    %v8649 = vadd.f32 0.0, %v8648
    %v8650 = vpop.f32.mrb[0].mxu0
    %8651 = vmatprep.mubr.bf16.mxu0 0
    %8652 = vmatmul.mubr.bf16.gmra.mrb[0].mxu0 %v8500
    %v8653 = vpop.f32.mrb[0].mxu0
    %v8654 = vadd.f32 0.0, %v8653
    %v8655 = vpop.f32.mrb[0].mxu0
    %v8656 = vpop.f32.mrb[0].mxu0
    %v8657 = vadd.f32 0.0, %v8656
    %v8658 = vpop.f32.mrb[0].mxu0
    %8659 = vmatprep.mubr.bf16.mxu0 0
    %8660 = vmatmul.mubr.bf16.gmra.mrb[0].mxu0 %v8501
    %v8661 = vpop.f32.mrb[0].mxu0
    %v8662 = vadd.f32 0.0, %v8661
    %v8663 = vpop.f32.mrb[0].mxu0
    %v8664 = vpop.f32.mrb[0].mxu0
    %v8665 = vadd.f32 0.0, %v8664
    %v8666 = vpop.f32.mrb[0].mxu0
    %8667 = vmatprep.mubr.bf16.mxu0 0
    %8668 = vmatmul.mubr.bf16.gmra.mrb[0].mxu0 %v8502
    %v8669 = vpop.f32.mrb[0].mxu0
    %v8670 = vadd.f32 0.0, %v8669
    %v8671 = vpop.f32.mrb[0].mxu0
    %v8672 = vpop.f32.mrb[0].mxu0
    %v8673 = vadd.f32 0.0, %v8672
    %v8674 = vpop.f32.mrb[0].mxu0
    %8675 = vmatprep.mubr.bf16.mxu0 0
    %8676 = vmatmul.mubr.bf16.gmra.mrb[0].mxu0 %v8503
    %v8677 = vpop.f32.mrb[0].mxu0
    %v8678 = vadd.f32 0.0, %v8677
    %v8679 = vpop.f32.mrb[0].mxu0
    %v8680 = vpop.f32.mrb[0].mxu0
    %v8681 = vadd.f32 0.0, %v8680
    %v8682 = vpop.f32.mrb[0].mxu0
    %8683 = vmatprep.mubr.bf16.mxu0 0
    %8684 = vmatmul.mubr.bf16.gmra.mrb[0].mxu0 %v8504
    %v8685 = vpop.f32.mrb[0].mxu0
    %v8686 = vadd.f32 0.0, %v8685
    %v8687 = vpop.f32.mrb[0].mxu0
    %v8688 = vpop.f32.mrb[0].mxu0
    %v8689 = vadd.f32 0.0, %v8688
    %v8690 = vpop.f32.mrb[0].mxu0
    %8691 = vmatprep.mubr.bf16.mxu0 0
    %8692 = vmatmul.mubr.bf16.gmra.mrb[0].mxu0 %v8505
    %v8693 = vpop.f32.mrb[0].mxu0
    %v8694 = vadd.f32 0.0, %v8693
    %v8695 = vpop.f32.mrb[0].mxu0
    %v8696 = vpop.f32.mrb[0].mxu0
    %v8697 = vadd.f32 0.0, %v8696
    %v8698 = vpop.f32.mrb[0].mxu0
    %8699 = vdwg.mxu0
    %v8700 = vadd.f32 %v8446, %v8606
    %v8701 = vadd.f32 %v8447, %v8609
    %v8702 = vadd.f32 %v8448, %v8614
    %v8703 = vadd.f32 %v8449, %v8617
    %v8704 = vadd.f32 %v8450, %v8622
    %v8705 = vadd.f32 %v8451, %v8625
    %v8706 = vadd.f32 %v8452, %v8630
    %v8707 = vadd.f32 %v8453, %v8633
    %v8708 = vadd.f32 %v8454, %v8638
    %v8709 = vadd.f32 %v8455, %v8641
    %v8710 = vadd.f32 %v8456, %v8646
    %v8711 = vadd.f32 %v8457, %v8649
    %v8712 = vadd.f32 %v8458, %v8654
    %v8713 = vadd.f32 %v8459, %v8657
    %v8714 = vadd.f32 %v8460, %v8662
    %v8715 = vadd.f32 %v8461, %v8665
    %v8716 = vadd.f32 %v8462, %v8670
    %v8717 = vadd.f32 %v8463, %v8673
    %v8718 = vadd.f32 %v8464, %v8678
    %v8719 = vadd.f32 %v8465, %v8681
    %v8720 = vadd.f32 %v8466, %v8686
    %v8721 = vadd.f32 %v8467, %v8689
    %v8722 = vadd.f32 %v8468, %v8694
    %v8723 = vadd.f32 %v8469, %v8697
    %v8724 = vld [vmem:[%s6] sm:$0x1]
    %v8726 = vlaneseq
    %v8727 = vshrl.u32 %v8726, 7
    %v8728 = vsub.s32 0, %v8727
    %v8729 = vrot.slane %v8724, %v8728
    %v8731 = vadd.f32 %v8700, %v8729
    %v8732 = vadd.f32 %v8701, %v8729
    %v8733 = vadd.f32 %v8702, %v8729
    %v8734 = vadd.f32 %v8703, %v8729
    %v8735 = vadd.f32 %v8704, %v8729
    %v8736 = vadd.f32 %v8705, %v8729
    %v8737 = vadd.f32 %v8706, %v8729
    %v8738 = vadd.f32 %v8707, %v8729
    %v8739 = vadd.f32 %v8708, %v8729
    %v8740 = vadd.f32 %v8709, %v8729
    %v8741 = vadd.f32 %v8710, %v8729
    %v8742 = vadd.f32 %v8711, %v8729
    %v8743 = vadd.f32 %v8712, %v8729
    %v8744 = vadd.f32 %v8713, %v8729
    %v8745 = vadd.f32 %v8714, %v8729
    %v8746 = vadd.f32 %v8715, %v8729
    %v8747 = vadd.f32 %v8716, %v8729
    %v8748 = vadd.f32 %v8717, %v8729
    %v8749 = vadd.f32 %v8718, %v8729
    %v8750 = vadd.f32 %v8719, %v8729
    %v8751 = vadd.f32 %v8720, %v8729
    %v8752 = vadd.f32 %v8721, %v8729
    %v8753 = vadd.f32 %v8722, %v8729
    %v8754 = vadd.f32 %v8723, %v8729
    %v8755 = vmax.f32 %v8731, 0.0
    %v8756 = vmax.f32 %v8732, 0.0
    %v8757 = vmax.f32 %v8733, 0.0
    %v8758 = vmax.f32 %v8734, 0.0
    %v8759 = vmax.f32 %v8735, 0.0
    %v8760 = vmax.f32 %v8736, 0.0
    %v8761 = vmax.f32 %v8737, 0.0
    %v8762 = vmax.f32 %v8738, 0.0
    %v8763 = vmax.f32 %v8739, 0.0
    %v8764 = vmax.f32 %v8740, 0.0
    %v8765 = vmax.f32 %v8741, 0.0
    %v8766 = vmax.f32 %v8742, 0.0
    %v8767 = vmax.f32 %v8743, 0.0
    %v8768 = vmax.f32 %v8744, 0.0
    %v8769 = vmax.f32 %v8745, 0.0
    %v8770 = vmax.f32 %v8746, 0.0
    %v8771 = vmax.f32 %v8747, 0.0
    %v8772 = vmax.f32 %v8748, 0.0
    %v8773 = vmax.f32 %v8749, 0.0
    %v8774 = vmax.f32 %v8750, 0.0
    %v8775 = vmax.f32 %v8751, 0.0
    %v8776 = vmax.f32 %v8752, 0.0
    %v8777 = vmax.f32 %v8753, 0.0
    %v8778 = vmax.f32 %v8754, 0.0
    %v8779 = vld [vmem:[%s7] sm:$0xff]
    %v8780 = vld [vmem:[%s7 + $0x8] sm:$0xff]
    %v8781 = vld [vmem:[%s7 + $0x10] sm:$0xff]
    %v8782 = vld [vmem:[%s7 + $0x18] sm:$0xff]
    %v8783 = vld [vmem:[%s7 + $0x20] sm:$0xff]
    %v8784 = vld [vmem:[%s7 + $0x28] sm:$0xff]
    %v8785 = vld [vmem:[%s7 + $0x30] sm:$0xff]
    %v8786 = vld [vmem:[%s7 + $0x38] sm:$0xff]
    %v8787 = vld [vmem:[%s7 + $0x40] sm:$0xff]
    %v8788 = vld [vmem:[%s7 + $0x48] sm:$0xff]
    %v8789 = vld [vmem:[%s7 + $0x50] sm:$0xff]
    %v8790 = vld [vmem:[%s7 + $0x58] sm:$0xff]
    %v8791 = vld [vmem:[%s7 + $0x60] sm:$0xff]
    %v8792 = vld [vmem:[%s7 + $0x68] sm:$0xff]
    %v8793 = vld [vmem:[%s7 + $0x70] sm:$0xff]
    %v8794 = vld [vmem:[%s7 + $0x78] sm:$0xff]
    %v8795 = vld [vmem:[%s7 + $0x80] sm:$0xff]
    %v8796 = vld [vmem:[%s7 + $0x88] sm:$0xff]
    %v8797 = vld [vmem:[%s7 + $0x90] sm:$0xff]
    %v8798 = vld [vmem:[%s7 + $0x98] sm:$0xff]
    %v8799 = vld [vmem:[%s7 + $0xa0] sm:$0xff]
    %v8800 = vld [vmem:[%s7 + $0xa8] sm:$0xff]
    %v8801 = vld [vmem:[%s7 + $0xb0] sm:$0xff]
    %v8802 = vld [vmem:[%s7 + $0xb8] sm:$0xff]
    %v8803 = vmul.f32 %v8755, %v8779
    %v8804 = vmul.f32 %v8756, %v8780
    %v8805 = vmul.f32 %v8757, %v8781
    %v8806 = vmul.f32 %v8758, %v8782
    %v8807 = vmul.f32 %v8759, %v8783
    %v8808 = vmul.f32 %v8760, %v8784
    %v8809 = vmul.f32 %v8761, %v8785
    %v8810 = vmul.f32 %v8762, %v8786
    %v8811 = vmul.f32 %v8763, %v8787
    %v8812 = vmul.f32 %v8764, %v8788
    %v8813 = vmul.f32 %v8765, %v8789
    %v8814 = vmul.f32 %v8766, %v8790
    %v8815 = vmul.f32 %v8767, %v8791
    %v8816 = vmul.f32 %v8768, %v8792
    %v8817 = vmul.f32 %v8769, %v8793
    %v8818 = vmul.f32 %v8770, %v8794
    %v8819 = vmul.f32 %v8771, %v8795
    %v8820 = vmul.f32 %v8772, %v8796
    %v8821 = vmul.f32 %v8773, %v8797
    %v8822 = vmul.f32 %v8774, %v8798
    %v8823 = vmul.f32 %v8775, %v8799
    %v8824 = vmul.f32 %v8776, %v8800
    %v8825 = vmul.f32 %v8777, %v8801
    %v8826 = vmul.f32 %v8778, %v8802
    %v8827 = vadd.f32 %v8803, %v8804
    %v8828 = vadd.f32 %v8827, %v8805
    %v8829 = vadd.f32 %v8828, %v8806
    %v8830 = vadd.f32 %v8829, %v8807
    %v8831 = vadd.f32 %v8830, %v8808
    %v8832 = vadd.f32 %v8831, %v8809
    %v8833 = vadd.f32 %v8832, %v8810
    %v8834 = vadd.f32 %v8833, %v8811
    %v8835 = vadd.f32 %v8834, %v8812
    %v8836 = vadd.f32 %v8835, %v8813
    %v8837 = vadd.f32 %v8836, %v8814
    %v8838 = vadd.f32 %v8837, %v8815
    %v8839 = vadd.f32 %v8838, %v8816
    %v8840 = vadd.f32 %v8839, %v8817
    %v8841 = vadd.f32 %v8840, %v8818
    %v8842 = vadd.f32 %v8841, %v8819
    %v8843 = vadd.f32 %v8842, %v8820
    %v8844 = vadd.f32 %v8843, %v8821
    %v8845 = vadd.f32 %v8844, %v8822
    %v8846 = vadd.f32 %v8845, %v8823
    %v8847 = vadd.f32 %v8846, %v8824
    %v8848 = vadd.f32 %v8847, %v8825
    %v8849 = vadd.f32 %v8848, %v8826
    %v8850 = vrot.slane %v8849, 4
    %v8851 = vadd.f32 %v8849, %v8850
    %v8852 = vrot.slane %v8851, 2
    %v8853 = vadd.f32 %v8851, %v8852
    %v8854 = vrot.slane %v8853, 1
    %v8855 = vadd.f32 %v8853, %v8854
    %8856 = vadd.xlane.f32.xlu0 %v8855
    %v8857 = vpop.xlane.xlu0 %8856
    %v8858 = vld [vmem:[#allocation4] sm:$0x1]
    %v8859 = vadd.f32 %v8857, %v8858
    %vm8860 = vcmask 0
    %8861 = vst.msk [vmem:[#allocation5] sm:$0x1] %vm8860, %v8859
    // Predicated region
    $region38: #{critic_forward.1} parent=1 // pred_check
      _
    $region39: #{critic_forward.1} parent=1 // pred_check_branch
      %8863 = sbr.rel (0) target = $region41
    $region40: #{critic_forward.1} parent=1 // pred_region
      %s8865 = ssub.s32 16, 16
      %8866 = vsyncadd [#allocation6], %s8865
      %s8868 = sshll.u32 [#allocation5], 4
      %s8869 = int_to_ptr.vmem [resolvable:$true] %s8868
      %8871 = dma.vmem_to_hbm [thread:$0]  %s8869, 16, %s9, [#allocation6]
    $region41: #{critic_forward.1} parent=1 // pred_fallthru
      _
    // Predicated region
    $region42: #{critic_forward.1} parent=1 // pred_check
      _
    $region43: #{critic_forward.1} parent=1 // pred_check_branch
      %8873 = sbr.rel (0) target = $region45
    $region44: #{critic_forward.1} parent=1 // pred_region
      %8874 = dma.done [#allocation6], 16
    $region45: #{critic_forward.1} parent=1 // pred_fallthru
      _
    %8875 = vsyncpa [#allocation6], 1

</llo_original>
